<compile_context>
chip_gen: v7x
topology: tpu7x:2x2x1
jax: 0.10.0
libtpu: 0.0.40
codegen_flags: <defaults>
</compile_context>

<pallas_src>
import math
from functools import partial

import numpy as np

import jax
import jax.numpy as jnp
from jax.experimental import pallas as pl
from jax.experimental.pallas import tpu as pltpu

_NEG_BIG = -1e30        # "minus infinity" bias for padded class columns (keeps f32 math NaN-free)
_FINITE_LIM = 3.0e38    # |x| >= this (or NaN) counts as non-finite


def _round_up(v, m):
    return ((v + m - 1) // m) * m


def _pad2(a, rows, cols):
    pr, pc = rows - a.shape[0], cols - a.shape[1]
    if pr == 0 and pc == 0:
        return a
    return jnp.pad(a, ((0, pr), (0, pc)))


def _pick_batch_tile(batch):
    """Batch tile: 128 on v5e (4x128 MXU rows already full; 16 MiB scoped VMEM),
    up to 512 on v6e/v7x (256-wide MXU, fewer grid steps), never larger than the
    128-rounded batch so tiny batches do not pay for wasted rows."""
    need = _round_up(max(int(batch), 1), 128)
    try:
        kind = jax.devices()[0].device_kind.lower()
    except Exception:
        kind = ""
    is_v5e = "v5e" in kind or ("v5" in kind and "lite" in kind)
    cap = 128 if is_v5e else 512
    return int(min(cap, need))


def alrao_kernel(x_ref, w1_ref, b1_ref, wll_ref, bll_ref, post_ref,
                 out_ref, z_ref, llout_ref, fin_ref):
    """One batch tile of the AlraoModel forward, fully resident in VMEM.

    x_ref:     (TB, Dp)    bf16  flattened input tile
    w1_ref:    (Dp, Hp)    bf16  internal-NN linear weight (zero padded)
    b1_ref:    (1, Hp)     f32   internal-NN bias (zero padded)
    wll_ref:   (Hp, K*Cp)  bf16  K last-layer weights fused along lanes (zero padded)
    bll_ref:   (1, K*Cp)   f32   fused biases; padded class columns = -1e30
    post_ref:  (1, K*Cp)   f32   exp(logposterior_k) broadcast per 128-lane block
    out_ref:   (TB, Cp)    f32   switch-averaged log-probabilities (module return value)
    z_ref:     (TB, Hp)    bf16  internal-NN output (self.last_x)
    llout_ref: (TB, K*Cp)  bf16  per-last-layer log-probs (self.last_lst_ll_out)
    fin_ref:   (8, 128)    f32   1.0 iff every element of z in this tile is finite
    """
    # ---- internal NN: Linear + ReLU (bf16 MXU operands, f32 accumulate & VPU math) ----
    z = jnp.dot(x_ref[...], w1_ref[...], preferred_element_type=jnp.float32)
    z = jnp.maximum(z + b1_ref[...], 0.0)
    z_ref[...] = z.astype(z_ref.dtype)

    # ---- torch.isfinite(z).all(), computed in-kernel (no wrapper-side re-read of z) ----
    # NaN compares False and |inf| >= _FINITE_LIM -> 0.0; cheap VPU/XLU work under slack.
    ok = jnp.where(jnp.abs(z) < _FINITE_LIM, 1.0, 0.0)
    fin = jnp.min(jnp.min(ok, axis=1, keepdims=True), axis=0, keepdims=True)   # (1, 1)
    fin_ref[...] = jnp.broadcast_to(fin, fin_ref.shape)

    zb = z.astype(wll_ref.dtype)              # one bf16 cast, reused by all K dots

    cp = out_ref.shape[-1]                    # padded per-layer class width (128)
    k_last = llout_ref.shape[-1] // cp        # number of parallel last layers

    # ---- fused per-last-layer pass (K is small & static -> unrolled) ----
    # softmax:  pk = exp(lk - mk), sk = sum(pk), logp_k = lk - (mk + log sk)
    # switch :  exp(logp_k + logposterior_k) = post_k * pk / sk    (reuses pk; no new
    #           full-tile exp).  Every term is <= post_k <= 1, so the running sum S
    #           cannot overflow;  out = log(S)  matches logsumexp_k(logpost_k + logp_k).
    s_sw = jnp.zeros(out_ref.shape, jnp.float32)
    for k in range(k_last):
        lo = k * cp
        lk = jnp.dot(zb, wll_ref[:, lo:lo + cp],
                     preferred_element_type=jnp.float32) + bll_ref[:, lo:lo + cp]
        mk = jnp.max(lk, axis=-1, keepdims=True)             # (TB, 1)
        pk = jnp.exp(lk - mk)                                 # only full-tile exp per layer
        sk = jnp.sum(pk, axis=-1, keepdims=True)              # (TB, 1), always >= 1
        logp = lk - (mk + jnp.log(sk))                        # log_softmax
        llout_ref[:, lo:lo + cp] = logp.astype(llout_ref.dtype)
        inv_sk = 1.0 / sk                                     # (TB, 1) reciprocal
        s_sw = s_sw + (pk * inv_sk) * post_ref[:, lo:lo + cp]
    out_ref[...] = jnp.log(s_sw)              # Switch.forward model averaging


@partial(jax.jit, static_argnames=("tb", "single_buffer_weights"))
def _alrao_forward_impl(x_nchw, w1, b1, wll, bll, logpost, *, tb, single_buffer_weights):
    B = x_nchw.shape[0]
    x_flat = x_nchw.reshape(B, -1)            # glue: NCHW -> (B, C*H*W)
    D = x_flat.shape[1]
    H = w1.shape[1]
    K, _, C = wll.shape

    TB = tb
    CP = 128                                  # per-last-layer padded class width (lane-dense)
    DP = _round_up(D, 128)
    HP = _round_up(H, 128)
    BP = _round_up(max(B, 1), TB)
    KCP = K * CP
    nb = BP // TB
    # TODO(synk): when B <= TB there is a single grid step, so one of v7x's two
    # TensorCores idles; splitting the K lane slabs over a second axis would turn the
    # switch logsumexp into a cross-step reduction and is left out here.

    # ---- pad / fuse parameters directly in bf16 (no full-size f32 staging copies) ----
    x_p = _pad2(x_flat.astype(jnp.bfloat16), BP, DP)
    w1_p = _pad2(w1.astype(jnp.bfloat16), DP, HP)
    b1_p = _pad2(b1.astype(jnp.float32), 1, HP)
    wll_p = jnp.pad(wll.astype(jnp.bfloat16), ((0, 0), (0, HP - H), (0, CP - C)))
    wll_p = wll_p.transpose(1, 0, 2).reshape(HP, KCP)                   # (Hp, K*Cp)
    bll_p = jnp.pad(bll.astype(jnp.float32), ((0, 0), (0, 0), (0, CP - C)),
                    constant_values=_NEG_BIG)
    bll_p = bll_p.transpose(1, 0, 2).reshape(1, KCP)
    post_p = jnp.broadcast_to(jnp.exp(logpost.astype(jnp.float32))[:, None, None],
                              (K, 1, CP)).transpose(1, 0, 2).reshape(1, KCP)

    # Constant-index-map inputs stay VMEM-resident; single-buffering halves their VMEM
    # footprint (most valuable on v7x's 64 MiB VMEM and v5e's 16 MiB scoped default).
    def w_spec(shape):
        if single_buffer_weights:
            return pl.BlockSpec(shape, lambda i: (0, 0), pipeline_mode=pl.Buffered(1))
        return pl.BlockSpec(shape, lambda i: (0, 0))

    # NOTE: with K*C <= 128 the llout slab could be packed into a single 128-lane block
    # (another ~2.5x writeback cut), but that needs unaligned lane-slice stores; bf16
    # storage (2x cut, done here) is the portable choice.
    out_p, z_p, llout_p, fin_p = pl.pallas_call(
        alrao_kernel,
        out_shape=(
            jax.ShapeDtypeStruct((BP, CP), jnp.float32),       # switch-averaged log-probs
            jax.ShapeDtypeStruct((BP, HP), jnp.bfloat16),      # internal-NN output
            jax.ShapeDtypeStruct((BP, KCP), jnp.bfloat16),     # per-last-layer log-probs
            jax.ShapeDtypeStruct((nb * 8, 128), jnp.float32),  # per-tile finiteness flag
        ),
        grid=(nb,),
        in_specs=[
            pl.BlockSpec((TB, DP), lambda i: (i, 0)),
            w_spec((DP, HP)),
            w_spec((1, HP)),
            w_spec((HP, KCP)),
            w_spec((1, KCP)),
            w_spec((1, KCP)),
        ],
        out_specs=(
            pl.BlockSpec((TB, CP), lambda i: (i, 0)),
            pl.BlockSpec((TB, HP), lambda i: (i, 0)),
            pl.BlockSpec((TB, KCP), lambda i: (i, 0)),
            pl.BlockSpec((8, 128), lambda i: (i, 0)),
        ),
        compiler_params=pltpu.CompilerParams(
            dimension_semantics=("parallel",)),
    )(x_p, w1_p, b1_p, wll_p, bll_p, post_p)

    # ---- crop / reshape back to the module's outputs (cheap XLA glue on tiny arrays) ----
    out = out_p[:B, :C]
    z = z_p[:B, :H].astype(jnp.float32)
    llout = (llout_p[:B].reshape(B, K, CP)[:, :, :C]
             .transpose(1, 0, 2).astype(jnp.float32))                  # (K, B, C)
    finite = jnp.all(fin_p > 0.5)
    return out, z, llout, finite


def alrao_forward(x_nchw, w1, b1, wll, bll, logpost):
    """AlraoModel.forward.  Returns (out, last_x, last_lst_ll_out, finite_flag).

    The `raise ValueError` on a non-finite internal-NN output is data-dependent Python
    control flow; the flag is computed on-device and the caller raises after a single
    scalar readback (no mid-wrapper sync)."""
    tb = _pick_batch_tile(x_nchw.shape[0])
    try:
        return _alrao_forward_impl(x_nchw, w1, b1, wll, bll, logpost,
                                   tb=tb, single_buffer_weights=True)
    except Exception:
        # Fallback for jax/libtpu versions without pl.Buffered(1) single-buffering.
        return _alrao_forward_impl(x_nchw, w1, b1, wll, bll, logpost,
                                   tb=tb, single_buffer_weights=False)


def reference(x_nchw, w1, b1, wll, bll, logpost):
    """Pure-JAX reference with the same bf16-operand / f32-accumulate matmul contract."""
    B = x_nchw.shape[0]
    xf = x_nchw.reshape(B, -1).astype(jnp.float32)
    z = jnp.dot(xf.astype(jnp.bfloat16), w1.astype(jnp.bfloat16),
                preferred_element_type=jnp.float32) + b1
    z = jnp.maximum(z, 0.0)
    logits = jnp.einsum('bh,khc->kbc', z.astype(jnp.bfloat16), wll.astype(jnp.bfloat16),
                        preferred_element_type=jnp.float32) + bll           # (K, B, C)
    logp = jax.nn.log_softmax(logits, axis=-1)
    out = jax.scipy.special.logsumexp(logp + logpost[:, None, None], axis=0)
    return out, z, logp


if __name__ == "__main__":
    # Small deterministic configuration.
    B, Cin, Himg, Wimg = 2, 4, 16, 16      # input: NCHW
    D = Cin * Himg * Wimg                  # 1024 flattened features
    HID = 32                               # internal NN hidden size
    NCLS = 10                              # n_classes
    K = 5                                  # n_last_layers

    key = jax.random.PRNGKey(0)
    kx, kw1, kb1, kwll, kbll = jax.random.split(key, 5)

    x = jax.random.normal(kx, (B, Cin, Himg, Wimg), dtype=jnp.float32)

    # PyTorch-style uniform(-1/sqrt(fan_in), 1/sqrt(fan_in)) init, deterministic.
    lim1 = 1.0 / math.sqrt(D)
    w1 = jax.random.uniform(kw1, (D, HID), jnp.float32, -lim1, lim1)
    b1 = jax.random.uniform(kb1, (1, HID), jnp.float32, -lim1, lim1)
    lim2 = 1.0 / math.sqrt(HID)
    wll = jax.random.uniform(kwll, (K, HID, NCLS), jnp.float32, -lim2, lim2)
    bll = jax.random.uniform(kbll, (K, 1, NCLS), jnp.float32, -lim2, lim2)

    # Switch initial log-posterior: uniform over the K last layers.
    logpost = jnp.full((K,), -math.log(K), dtype=jnp.float32)

    out, z, llout, finite = alrao_forward(x, w1, b1, wll, bll, logpost)
    jax.block_until_ready((out, z, llout, finite))

    # AlraoModel.forward: raise ValueError if the internal NN output is non-finite
    # (single scalar readback after results are already materialized on device).
    if not bool(finite):
        raise ValueError

    ref_out, ref_z, ref_llout = reference(x, w1, b1, wll, bll, logpost)
    # `out` (the module's return value) is f32 end-to-end -> tight tolerance.
    np.testing.assert_allclose(np.asarray(out), np.asarray(ref_out), rtol=2e-4, atol=2e-4)
    # z / per-last-layer log-probs are stored through bf16 -> bf16-level tolerance.
    np.testing.assert_allclose(np.asarray(z), np.asarray(ref_z), rtol=2e-2, atol=2e-2)
    np.testing.assert_allclose(np.asarray(llout), np.asarray(ref_llout), rtol=2e-2, atol=2e-2)

    print("KERNEL_OK")
</pallas_src>

<mosaic_0001>
module attributes {stable_mosaic.version = 11 : i64} {
  func.func @alrao_kernel(%arg0: i32, %arg1: memref<128x1024xbf16, #tpu.memory_space<vmem>>, %arg2: memref<1024x128xbf16, #tpu.memory_space<vmem>>, %arg3: memref<1x128xf32, #tpu.memory_space<vmem>>, %arg4: memref<128x640xbf16, #tpu.memory_space<vmem>>, %arg5: memref<1x640xf32, #tpu.memory_space<vmem>>, %arg6: memref<1x640xf32, #tpu.memory_space<vmem>>, %arg7: memref<128x128xf32, #tpu.memory_space<vmem>>, %arg8: memref<128x128xbf16, #tpu.memory_space<vmem>>, %arg9: memref<128x640xbf16, #tpu.memory_space<vmem>>, %arg10: memref<8x128xf32, #tpu.memory_space<vmem>>) attributes {dimension_semantics = [#tpu.dimension_semantics<parallel>], iteration_bounds = array<i64: 1>, scalar_prefetch = 0 : i64, scratch_operands = 0 : i64, tpu.core_type = #tpu.core_type<tc>, window_params = [{transform_indices = @transform_0, window_bounds = array<i64: 128, 1024>}, {pipeline_mode = #tpu.pipeline_mode<synchronous>, transform_indices = @transform_1, window_bounds = array<i64: 1024, 128>}, {pipeline_mode = #tpu.pipeline_mode<synchronous>, transform_indices = @transform_2, window_bounds = array<i64: 1, 128>}, {pipeline_mode = #tpu.pipeline_mode<synchronous>, transform_indices = @transform_3, window_bounds = array<i64: 128, 640>}, {pipeline_mode = #tpu.pipeline_mode<synchronous>, transform_indices = @transform_4, window_bounds = array<i64: 1, 640>}, {pipeline_mode = #tpu.pipeline_mode<synchronous>, transform_indices = @transform_5, window_bounds = array<i64: 1, 640>}, {transform_indices = @transform_6, window_bounds = array<i64: 128, 128>}, {transform_indices = @transform_7, window_bounds = array<i64: 128, 128>}, {transform_indices = @transform_8, window_bounds = array<i64: 128, 640>}, {transform_indices = @transform_9, window_bounds = array<i64: 8, 128>}]} {
    %c0 = arith.constant 0 : index
    %c0_0 = arith.constant 0 : index
    %0 = vector.load %arg1[%c0, %c0_0] : memref<128x1024xbf16, #tpu.memory_space<vmem>>, vector<128x1024xbf16>
    %c0_1 = arith.constant 0 : index
    %c0_2 = arith.constant 0 : index
    %1 = vector.load %arg2[%c0_1, %c0_2] : memref<1024x128xbf16, #tpu.memory_space<vmem>>, vector<1024x128xbf16>
    %cst = arith.constant dense<0.000000e+00> : vector<128x128xf32>
    %2 = tpu.matmul %0, %1, %cst {dimension_numbers = #tpu.dot_dimension_numbers<[1], [0], [0], [1], [0, 0, 1, 1], [], []>} : vector<128x1024xbf16>, vector<1024x128xbf16>, vector<128x128xf32> -> vector<128x128xf32>
    %c0_3 = arith.constant 0 : index
    %c0_4 = arith.constant 0 : index
    %3 = vector.load %arg3[%c0_3, %c0_4] : memref<1x128xf32, #tpu.memory_space<vmem>>, vector<1x128xf32>
    %4 = vector.broadcast %3 : vector<1x128xf32> to vector<128x128xf32>
    %5 = arith.addf %2, %4 : vector<128x128xf32>
    %cst_5 = arith.constant 0.000000e+00 : f32
    %6 = vector.broadcast %cst_5 : f32 to vector<128x128xf32>
    %7 = arith.maximumf %5, %6 : vector<128x128xf32>
    %8 = arith.truncf %7 : vector<128x128xf32> to vector<128x128xbf16>
    %c0_6 = arith.constant 0 : index
    %c0_7 = arith.constant 0 : index
    %9 = vector.load %arg8[%c0_6, %c0_7] : memref<128x128xbf16, #tpu.memory_space<vmem>>, vector<128x128xbf16>
    tpu.vector_store %arg8[%c0_6, %c0_7], %8 {strides = array<i32>} : memref<128x128xbf16, #tpu.memory_space<vmem>>, vector<128x128xbf16>,
    %10 = math.absf %7 : vector<128x128xf32>
    %cst_8 = arith.constant 3.000000e+38 : f32
    %11 = vector.broadcast %cst_8 : f32 to vector<128x128xf32>
    %12 = arith.cmpf olt, %10, %11 : vector<128x128xf32>
    %cst_9 = arith.constant 1.000000e+00 : f32
    %cst_10 = arith.constant 0.000000e+00 : f32
    %13 = vector.broadcast %cst_9 : f32 to vector<128x128xf32>
    %14 = vector.broadcast %cst_10 : f32 to vector<128x128xf32>
    %15 = arith.select %12, %13, %14 : vector<128x128xi1>, vector<128x128xf32>
    %cst_11 = arith.constant dense<0x7F800000> : vector<128xf32>
    %16 = vector.multi_reduction <minimumf>, %15, %cst_11 [1] : vector<128x128xf32> to vector<128xf32>
    %17 = vector.shape_cast %16 : vector<128xf32> to vector<128x1xf32>
    %cst_12 = arith.constant dense<0x7F800000> : vector<1xf32>
    %18 = vector.multi_reduction <minimumf>, %17, %cst_12 [0] : vector<128x1xf32> to vector<1xf32>
    %19 = vector.shape_cast %18 : vector<1xf32> to vector<1x1xf32>
    %20 = vector.shape_cast %19 : vector<1x1xf32> to vector<1x1xf32>
    %21 = vector.broadcast %20 : vector<1x1xf32> to vector<8x128xf32>
    %c0_13 = arith.constant 0 : index
    %c0_14 = arith.constant 0 : index
    %22 = vector.load %arg10[%c0_13, %c0_14] : memref<8x128xf32, #tpu.memory_space<vmem>>, vector<8x128xf32>
    tpu.vector_store %arg10[%c0_13, %c0_14], %21 {strides = array<i32>} : memref<8x128xf32, #tpu.memory_space<vmem>>, vector<8x128xf32>,
    %23 = arith.truncf %7 : vector<128x128xf32> to vector<128x128xbf16>
    %cst_15 = arith.constant 0.000000e+00 : f32
    %24 = vector.broadcast %cst_15 : f32 to vector<128x128xf32>
    %c0_16 = arith.constant 0 : index
    %c0_17 = arith.constant 0 : index
    %25 = vector.load %arg4[%c0_16, %c0_17] : memref<128x640xbf16, #tpu.memory_space<vmem>>, vector<128x128xbf16>
    %cst_18 = arith.constant dense<0.000000e+00> : vector<128x128xf32>
    %26 = tpu.matmul %23, %25, %cst_18 {dimension_numbers = #tpu.dot_dimension_numbers<[1], [0], [0], [1], [0, 0, 1, 1], [], []>} : vector<128x128xbf16>, vector<128x128xbf16>, vector<128x128xf32> -> vector<128x128xf32>
    %c0_19 = arith.constant 0 : index
    %c0_20 = arith.constant 0 : index
    %27 = vector.load %arg5[%c0_19, %c0_20] : memref<1x640xf32, #tpu.memory_space<vmem>>, vector<1x128xf32>
    %28 = vector.broadcast %27 : vector<1x128xf32> to vector<128x128xf32>
    %29 = arith.addf %26, %28 : vector<128x128xf32>
    %cst_21 = arith.constant dense<0xFF800000> : vector<128xf32>
    %30 = vector.multi_reduction <maximumf>, %29, %cst_21 [1] : vector<128x128xf32> to vector<128xf32>
    %31 = vector.shape_cast %30 : vector<128xf32> to vector<128x1xf32>
    %32 = vector.broadcast %31 : vector<128x1xf32> to vector<128x128xf32>
    %33 = arith.subf %29, %32 : vector<128x128xf32>
    %34 = math.exp %33 : vector<128x128xf32>
    %cst_22 = arith.constant dense<0.000000e+00> : vector<128xf32>
    %35 = vector.multi_reduction <add>, %34, %cst_22 [1] : vector<128x128xf32> to vector<128xf32>
    %36 = vector.shape_cast %35 : vector<128xf32> to vector<128x1xf32>
    %37 = math.log %36 : vector<128x1xf32>
    %38 = arith.addf %31, %37 : vector<128x1xf32>
    %39 = vector.broadcast %38 : vector<128x1xf32> to vector<128x128xf32>
    %40 = arith.subf %29, %39 : vector<128x128xf32>
    %41 = arith.truncf %40 : vector<128x128xf32> to vector<128x128xbf16>
    %c0_23 = arith.constant 0 : index
    %c0_24 = arith.constant 0 : index
    %42 = vector.load %arg9[%c0_23, %c0_24] : memref<128x640xbf16, #tpu.memory_space<vmem>>, vector<128x128xbf16>
    tpu.vector_store %arg9[%c0_23, %c0_24], %41 {strides = array<i32>} : memref<128x640xbf16, #tpu.memory_space<vmem>>, vector<128x128xbf16>,
    %cst_25 = arith.constant 1.000000e+00 : f32
    %43 = vector.broadcast %cst_25 : f32 to vector<128x1xf32>
    %44 = arith.divf %43, %36 : vector<128x1xf32>
    %45 = vector.broadcast %44 : vector<128x1xf32> to vector<128x128xf32>
    %46 = arith.mulf %34, %45 : vector<128x128xf32>
    %c0_26 = arith.constant 0 : index
    %c0_27 = arith.constant 0 : index
    %47 = vector.load %arg6[%c0_26, %c0_27] : memref<1x640xf32, #tpu.memory_space<vmem>>, vector<1x128xf32>
    %48 = vector.broadcast %47 : vector<1x128xf32> to vector<128x128xf32>
    %49 = arith.mulf %46, %48 : vector<128x128xf32>
    %50 = arith.addf %24, %49 : vector<128x128xf32>
    %c0_28 = arith.constant 0 : index
    %c128 = arith.constant 128 : index
    %51 = vector.load %arg4[%c0_28, %c128] : memref<128x640xbf16, #tpu.memory_space<vmem>>, vector<128x128xbf16>
    %cst_29 = arith.constant dense<0.000000e+00> : vector<128x128xf32>
    %52 = tpu.matmul %23, %51, %cst_29 {dimension_numbers = #tpu.dot_dimension_numbers<[1], [0], [0], [1], [0, 0, 1, 1], [], []>} : vector<128x128xbf16>, vector<128x128xbf16>, vector<128x128xf32> -> vector<128x128xf32>
    %c0_30 = arith.constant 0 : index
    %c128_31 = arith.constant 128 : index
    %53 = vector.load %arg5[%c0_30, %c128_31] : memref<1x640xf32, #tpu.memory_space<vmem>>, vector<1x128xf32>
    %54 = vector.broadcast %53 : vector<1x128xf32> to vector<128x128xf32>
    %55 = arith.addf %52, %54 : vector<128x128xf32>
    %cst_32 = arith.constant dense<0xFF800000> : vector<128xf32>
    %56 = vector.multi_reduction <maximumf>, %55, %cst_32 [1] : vector<128x128xf32> to vector<128xf32>
    %57 = vector.shape_cast %56 : vector<128xf32> to vector<128x1xf32>
    %58 = vector.broadcast %57 : vector<128x1xf32> to vector<128x128xf32>
    %59 = arith.subf %55, %58 : vector<128x128xf32>
    %60 = math.exp %59 : vector<128x128xf32>
    %cst_33 = arith.constant dense<0.000000e+00> : vector<128xf32>
    %61 = vector.multi_reduction <add>, %60, %cst_33 [1] : vector<128x128xf32> to vector<128xf32>
    %62 = vector.shape_cast %61 : vector<128xf32> to vector<128x1xf32>
    %63 = math.log %62 : vector<128x1xf32>
    %64 = arith.addf %57, %63 : vector<128x1xf32>
    %65 = vector.broadcast %64 : vector<128x1xf32> to vector<128x128xf32>
    %66 = arith.subf %55, %65 : vector<128x128xf32>
    %67 = arith.truncf %66 : vector<128x128xf32> to vector<128x128xbf16>
    %c0_34 = arith.constant 0 : index
    %c128_35 = arith.constant 128 : index
    %68 = vector.load %arg9[%c0_34, %c128_35] : memref<128x640xbf16, #tpu.memory_space<vmem>>, vector<128x128xbf16>
    tpu.vector_store %arg9[%c0_34, %c128_35], %67 {strides = array<i32>} : memref<128x640xbf16, #tpu.memory_space<vmem>>, vector<128x128xbf16>,
    %cst_36 = arith.constant 1.000000e+00 : f32
    %69 = vector.broadcast %cst_36 : f32 to vector<128x1xf32>
    %70 = arith.divf %69, %62 : vector<128x1xf32>
    %71 = vector.broadcast %70 : vector<128x1xf32> to vector<128x128xf32>
    %72 = arith.mulf %60, %71 : vector<128x128xf32>
    %c0_37 = arith.constant 0 : index
    %c128_38 = arith.constant 128 : index
    %73 = vector.load %arg6[%c0_37, %c128_38] : memref<1x640xf32, #tpu.memory_space<vmem>>, vector<1x128xf32>
    %74 = vector.broadcast %73 : vector<1x128xf32> to vector<128x128xf32>
    %75 = arith.mulf %72, %74 : vector<128x128xf32>
    %76 = arith.addf %50, %75 : vector<128x128xf32>
    %c0_39 = arith.constant 0 : index
    %c256 = arith.constant 256 : index
    %77 = vector.load %arg4[%c0_39, %c256] : memref<128x640xbf16, #tpu.memory_space<vmem>>, vector<128x128xbf16>
    %cst_40 = arith.constant dense<0.000000e+00> : vector<128x128xf32>
    %78 = tpu.matmul %23, %77, %cst_40 {dimension_numbers = #tpu.dot_dimension_numbers<[1], [0], [0], [1], [0, 0, 1, 1], [], []>} : vector<128x128xbf16>, vector<128x128xbf16>, vector<128x128xf32> -> vector<128x128xf32>
    %c0_41 = arith.constant 0 : index
    %c256_42 = arith.constant 256 : index
    %79 = vector.load %arg5[%c0_41, %c256_42] : memref<1x640xf32, #tpu.memory_space<vmem>>, vector<1x128xf32>
    %80 = vector.broadcast %79 : vector<1x128xf32> to vector<128x128xf32>
    %81 = arith.addf %78, %80 : vector<128x128xf32>
    %cst_43 = arith.constant dense<0xFF800000> : vector<128xf32>
    %82 = vector.multi_reduction <maximumf>, %81, %cst_43 [1] : vector<128x128xf32> to vector<128xf32>
    %83 = vector.shape_cast %82 : vector<128xf32> to vector<128x1xf32>
    %84 = vector.broadcast %83 : vector<128x1xf32> to vector<128x128xf32>
    %85 = arith.subf %81, %84 : vector<128x128xf32>
    %86 = math.exp %85 : vector<128x128xf32>
    %cst_44 = arith.constant dense<0.000000e+00> : vector<128xf32>
    %87 = vector.multi_reduction <add>, %86, %cst_44 [1] : vector<128x128xf32> to vector<128xf32>
    %88 = vector.shape_cast %87 : vector<128xf32> to vector<128x1xf32>
    %89 = math.log %88 : vector<128x1xf32>
    %90 = arith.addf %83, %89 : vector<128x1xf32>
    %91 = vector.broadcast %90 : vector<128x1xf32> to vector<128x128xf32>
    %92 = arith.subf %81, %91 : vector<128x128xf32>
    %93 = arith.truncf %92 : vector<128x128xf32> to vector<128x128xbf16>
    %c0_45 = arith.constant 0 : index
    %c256_46 = arith.constant 256 : index
    %94 = vector.load %arg9[%c0_45, %c256_46] : memref<128x640xbf16, #tpu.memory_space<vmem>>, vector<128x128xbf16>
    tpu.vector_store %arg9[%c0_45, %c256_46], %93 {strides = array<i32>} : memref<128x640xbf16, #tpu.memory_space<vmem>>, vector<128x128xbf16>,
    %cst_47 = arith.constant 1.000000e+00 : f32
    %95 = vector.broadcast %cst_47 : f32 to vector<128x1xf32>
    %96 = arith.divf %95, %88 : vector<128x1xf32>
    %97 = vector.broadcast %96 : vector<128x1xf32> to vector<128x128xf32>
    %98 = arith.mulf %86, %97 : vector<128x128xf32>
    %c0_48 = arith.constant 0 : index
    %c256_49 = arith.constant 256 : index
    %99 = vector.load %arg6[%c0_48, %c256_49] : memref<1x640xf32, #tpu.memory_space<vmem>>, vector<1x128xf32>
    %100 = vector.broadcast %99 : vector<1x128xf32> to vector<128x128xf32>
    %101 = arith.mulf %98, %100 : vector<128x128xf32>
    %102 = arith.addf %76, %101 : vector<128x128xf32>
    %c0_50 = arith.constant 0 : index
    %c384 = arith.constant 384 : index
    %103 = vector.load %arg4[%c0_50, %c384] : memref<128x640xbf16, #tpu.memory_space<vmem>>, vector<128x128xbf16>
    %cst_51 = arith.constant dense<0.000000e+00> : vector<128x128xf32>
    %104 = tpu.matmul %23, %103, %cst_51 {dimension_numbers = #tpu.dot_dimension_numbers<[1], [0], [0], [1], [0, 0, 1, 1], [], []>} : vector<128x128xbf16>, vector<128x128xbf16>, vector<128x128xf32> -> vector<128x128xf32>
    %c0_52 = arith.constant 0 : index
    %c384_53 = arith.constant 384 : index
    %105 = vector.load %arg5[%c0_52, %c384_53] : memref<1x640xf32, #tpu.memory_space<vmem>>, vector<1x128xf32>
    %106 = vector.broadcast %105 : vector<1x128xf32> to vector<128x128xf32>
    %107 = arith.addf %104, %106 : vector<128x128xf32>
    %cst_54 = arith.constant dense<0xFF800000> : vector<128xf32>
    %108 = vector.multi_reduction <maximumf>, %107, %cst_54 [1] : vector<128x128xf32> to vector<128xf32>
    %109 = vector.shape_cast %108 : vector<128xf32> to vector<128x1xf32>
    %110 = vector.broadcast %109 : vector<128x1xf32> to vector<128x128xf32>
    %111 = arith.subf %107, %110 : vector<128x128xf32>
    %112 = math.exp %111 : vector<128x128xf32>
    %cst_55 = arith.constant dense<0.000000e+00> : vector<128xf32>
    %113 = vector.multi_reduction <add>, %112, %cst_55 [1] : vector<128x128xf32> to vector<128xf32>
    %114 = vector.shape_cast %113 : vector<128xf32> to vector<128x1xf32>
    %115 = math.log %114 : vector<128x1xf32>
    %116 = arith.addf %109, %115 : vector<128x1xf32>
    %117 = vector.broadcast %116 : vector<128x1xf32> to vector<128x128xf32>
    %118 = arith.subf %107, %117 : vector<128x128xf32>
    %119 = arith.truncf %118 : vector<128x128xf32> to vector<128x128xbf16>
    %c0_56 = arith.constant 0 : index
    %c384_57 = arith.constant 384 : index
    %120 = vector.load %arg9[%c0_56, %c384_57] : memref<128x640xbf16, #tpu.memory_space<vmem>>, vector<128x128xbf16>
    tpu.vector_store %arg9[%c0_56, %c384_57], %119 {strides = array<i32>} : memref<128x640xbf16, #tpu.memory_space<vmem>>, vector<128x128xbf16>,
    %cst_58 = arith.constant 1.000000e+00 : f32
    %121 = vector.broadcast %cst_58 : f32 to vector<128x1xf32>
    %122 = arith.divf %121, %114 : vector<128x1xf32>
    %123 = vector.broadcast %122 : vector<128x1xf32> to vector<128x128xf32>
    %124 = arith.mulf %112, %123 : vector<128x128xf32>
    %c0_59 = arith.constant 0 : index
    %c384_60 = arith.constant 384 : index
    %125 = vector.load %arg6[%c0_59, %c384_60] : memref<1x640xf32, #tpu.memory_space<vmem>>, vector<1x128xf32>
    %126 = vector.broadcast %125 : vector<1x128xf32> to vector<128x128xf32>
    %127 = arith.mulf %124, %126 : vector<128x128xf32>
    %128 = arith.addf %102, %127 : vector<128x128xf32>
    %c0_61 = arith.constant 0 : index
    %c512 = arith.constant 512 : index
    %129 = vector.load %arg4[%c0_61, %c512] : memref<128x640xbf16, #tpu.memory_space<vmem>>, vector<128x128xbf16>
    %cst_62 = arith.constant dense<0.000000e+00> : vector<128x128xf32>
    %130 = tpu.matmul %23, %129, %cst_62 {dimension_numbers = #tpu.dot_dimension_numbers<[1], [0], [0], [1], [0, 0, 1, 1], [], []>} : vector<128x128xbf16>, vector<128x128xbf16>, vector<128x128xf32> -> vector<128x128xf32>
    %c0_63 = arith.constant 0 : index
    %c512_64 = arith.constant 512 : index
    %131 = vector.load %arg5[%c0_63, %c512_64] : memref<1x640xf32, #tpu.memory_space<vmem>>, vector<1x128xf32>
    %132 = vector.broadcast %131 : vector<1x128xf32> to vector<128x128xf32>
    %133 = arith.addf %130, %132 : vector<128x128xf32>
    %cst_65 = arith.constant dense<0xFF800000> : vector<128xf32>
    %134 = vector.multi_reduction <maximumf>, %133, %cst_65 [1] : vector<128x128xf32> to vector<128xf32>
    %135 = vector.shape_cast %134 : vector<128xf32> to vector<128x1xf32>
    %136 = vector.broadcast %135 : vector<128x1xf32> to vector<128x128xf32>
    %137 = arith.subf %133, %136 : vector<128x128xf32>
    %138 = math.exp %137 : vector<128x128xf32>
    %cst_66 = arith.constant dense<0.000000e+00> : vector<128xf32>
    %139 = vector.multi_reduction <add>, %138, %cst_66 [1] : vector<128x128xf32> to vector<128xf32>
    %140 = vector.shape_cast %139 : vector<128xf32> to vector<128x1xf32>
    %141 = math.log %140 : vector<128x1xf32>
    %142 = arith.addf %135, %141 : vector<128x1xf32>
    %143 = vector.broadcast %142 : vector<128x1xf32> to vector<128x128xf32>
    %144 = arith.subf %133, %143 : vector<128x128xf32>
    %145 = arith.truncf %144 : vector<128x128xf32> to vector<128x128xbf16>
    %c0_67 = arith.constant 0 : index
    %c512_68 = arith.constant 512 : index
    %146 = vector.load %arg9[%c0_67, %c512_68] : memref<128x640xbf16, #tpu.memory_space<vmem>>, vector<128x128xbf16>
    tpu.vector_store %arg9[%c0_67, %c512_68], %145 {strides = array<i32>} : memref<128x640xbf16, #tpu.memory_space<vmem>>, vector<128x128xbf16>,
    %cst_69 = arith.constant 1.000000e+00 : f32
    %147 = vector.broadcast %cst_69 : f32 to vector<128x1xf32>
    %148 = arith.divf %147, %140 : vector<128x1xf32>
    %149 = vector.broadcast %148 : vector<128x1xf32> to vector<128x128xf32>
    %150 = arith.mulf %138, %149 : vector<128x128xf32>
    %c0_70 = arith.constant 0 : index
    %c512_71 = arith.constant 512 : index
    %151 = vector.load %arg6[%c0_70, %c512_71] : memref<1x640xf32, #tpu.memory_space<vmem>>, vector<1x128xf32>
    %152 = vector.broadcast %151 : vector<1x128xf32> to vector<128x128xf32>
    %153 = arith.mulf %150, %152 : vector<128x128xf32>
    %154 = arith.addf %128, %153 : vector<128x128xf32>
    %155 = math.log %154 : vector<128x128xf32>
    %c0_72 = arith.constant 0 : index
    %c0_73 = arith.constant 0 : index
    %156 = vector.load %arg7[%c0_72, %c0_73] : memref<128x128xf32, #tpu.memory_space<vmem>>, vector<128x128xf32>
    tpu.vector_store %arg7[%c0_72, %c0_73], %155 {strides = array<i32>} : memref<128x128xf32, #tpu.memory_space<vmem>>, vector<128x128xf32>,
    return
  }
  func.func @transform_0(%arg0: i32) -> (i32, i32) {
    %c0_i32 = arith.constant 0 : i32
    %c0_i32_0 = arith.constant 0 : i32
    return %arg0, %c0_i32 : i32, i32
  }
  func.func @transform_1(%arg0: i32) -> (i32, i32) {
    %c0_i32 = arith.constant 0 : i32
    %c0_i32_0 = arith.constant 0 : i32
    %c0_i32_1 = arith.constant 0 : i32
    return %c0_i32, %c0_i32_0 : i32, i32
  }
  func.func @transform_2(%arg0: i32) -> (i32, i32) {
    %c0_i32 = arith.constant 0 : i32
    %c0_i32_0 = arith.constant 0 : i32
    %c0_i32_1 = arith.constant 0 : i32
    return %c0_i32, %c0_i32_0 : i32, i32
  }
  func.func @transform_3(%arg0: i32) -> (i32, i32) {
    %c0_i32 = arith.constant 0 : i32
    %c0_i32_0 = arith.constant 0 : i32
    %c0_i32_1 = arith.constant 0 : i32
    return %c0_i32, %c0_i32_0 : i32, i32
  }
  func.func @transform_4(%arg0: i32) -> (i32, i32) {
    %c0_i32 = arith.constant 0 : i32
    %c0_i32_0 = arith.constant 0 : i32
    %c0_i32_1 = arith.constant 0 : i32
    return %c0_i32, %c0_i32_0 : i32, i32
  }
  func.func @transform_5(%arg0: i32) -> (i32, i32) {
    %c0_i32 = arith.constant 0 : i32
    %c0_i32_0 = arith.constant 0 : i32
    %c0_i32_1 = arith.constant 0 : i32
    return %c0_i32, %c0_i32_0 : i32, i32
  }
  func.func @transform_6(%arg0: i32) -> (i32, i32) {
    %c0_i32 = arith.constant 0 : i32
    %c0_i32_0 = arith.constant 0 : i32
    return %arg0, %c0_i32 : i32, i32
  }
  func.func @transform_7(%arg0: i32) -> (i32, i32) {
    %c0_i32 = arith.constant 0 : i32
    %c0_i32_0 = arith.constant 0 : i32
    return %arg0, %c0_i32 : i32, i32
  }
  func.func @transform_8(%arg0: i32) -> (i32, i32) {
    %c0_i32 = arith.constant 0 : i32
    %c0_i32_0 = arith.constant 0 : i32
    return %arg0, %c0_i32 : i32, i32
  }
  func.func @transform_9(%arg0: i32) -> (i32, i32) {
    %c0_i32 = arith.constant 0 : i32
    %c0_i32_0 = arith.constant 0 : i32
    return %arg0, %c0_i32 : i32, i32
  }
}

module attributes {stable_mosaic.version = 11 : i64} {
  func.func @alrao_kernel(%arg0: i32, %arg1: memref<128x1024xbf16, #tpu.memory_space<vmem>>, %arg2: memref<1024x128xbf16, #tpu.memory_space<vmem>>, %arg3: memref<1x128xf32, #tpu.memory_space<vmem>>, %arg4: memref<128x640xbf16, #tpu.memory_space<vmem>>, %arg5: memref<1x640xf32, #tpu.memory_space<vmem>>, %arg6: memref<1x640xf32, #tpu.memory_space<vmem>>, %arg7: memref<128x128xf32, #tpu.memory_space<vmem>>, %arg8: memref<128x128xbf16, #tpu.memory_space<vmem>>, %arg9: memref<128x640xbf16, #tpu.memory_space<vmem>>, %arg10: memref<8x128xf32, #tpu.memory_space<vmem>>) attributes {dimension_semantics = [#tpu.dimension_semantics<parallel>], iteration_bounds = array<i64: 1>, scalar_prefetch = 0 : i64, scratch_operands = 0 : i64, tpu.core_type = #tpu.core_type<tc>, window_params = [{transform_indices = @transform_0, window_bounds = array<i64: 128, 1024>}, {pipeline_mode = #tpu.pipeline_mode<synchronous>, transform_indices = @transform_1, window_bounds = array<i64: 1024, 128>}, {pipeline_mode = #tpu.pipeline_mode<synchronous>, transform_indices = @transform_2, window_bounds = array<i64: 1, 128>}, {pipeline_mode = #tpu.pipeline_mode<synchronous>, transform_indices = @transform_3, window_bounds = array<i64: 128, 640>}, {pipeline_mode = #tpu.pipeline_mode<synchronous>, transform_indices = @transform_4, window_bounds = array<i64: 1, 640>}, {pipeline_mode = #tpu.pipeline_mode<synchronous>, transform_indices = @transform_5, window_bounds = array<i64: 1, 640>}, {transform_indices = @transform_6, window_bounds = array<i64: 128, 128>}, {transform_indices = @transform_7, window_bounds = array<i64: 128, 128>}, {transform_indices = @transform_8, window_bounds = array<i64: 128, 640>}, {transform_indices = @transform_9, window_bounds = array<i64: 8, 128>}]} {
    %c0 = arith.constant 0 : index
    %c0_0 = arith.constant 0 : index
    %0 = vector.load %arg1[%c0, %c0_0] : memref<128x1024xbf16, #tpu.memory_space<vmem>>, vector<128x1024xbf16>
    %c0_1 = arith.constant 0 : index
    %c0_2 = arith.constant 0 : index
    %1 = vector.load %arg2[%c0_1, %c0_2] : memref<1024x128xbf16, #tpu.memory_space<vmem>>, vector<1024x128xbf16>
    %cst = arith.constant dense<0.000000e+00> : vector<128x128xf32>
    %2 = tpu.matmul %0, %1, %cst {dimension_numbers = #tpu.dot_dimension_numbers<[1], [0], [0], [1], [0, 0, 1, 1], [], []>} : vector<128x1024xbf16>, vector<1024x128xbf16>, vector<128x128xf32> -> vector<128x128xf32>
    %c0_3 = arith.constant 0 : index
    %c0_4 = arith.constant 0 : index
    %3 = vector.load %arg3[%c0_3, %c0_4] : memref<1x128xf32, #tpu.memory_space<vmem>>, vector<1x128xf32>
    %4 = vector.broadcast %3 : vector<1x128xf32> to vector<128x128xf32>
    %5 = arith.addf %2, %4 : vector<128x128xf32>
    %cst_5 = arith.constant 0.000000e+00 : f32
    %6 = vector.broadcast %cst_5 : f32 to vector<128x128xf32>
    %7 = arith.maximumf %5, %6 : vector<128x128xf32>
    %8 = arith.truncf %7 : vector<128x128xf32> to vector<128x128xbf16>
    %c0_6 = arith.constant 0 : index
    %c0_7 = arith.constant 0 : index
    %9 = vector.load %arg8[%c0_6, %c0_7] : memref<128x128xbf16, #tpu.memory_space<vmem>>, vector<128x128xbf16>
    tpu.vector_store %arg8[%c0_6, %c0_7], %8 {strides = array<i32>} : memref<128x128xbf16, #tpu.memory_space<vmem>>, vector<128x128xbf16>,
    %10 = math.absf %7 : vector<128x128xf32>
    %cst_8 = arith.constant 3.000000e+38 : f32
    %11 = vector.broadcast %cst_8 : f32 to vector<128x128xf32>
    %12 = arith.cmpf olt, %10, %11 : vector<128x128xf32>
    %cst_9 = arith.constant 1.000000e+00 : f32
    %cst_10 = arith.constant 0.000000e+00 : f32
    %13 = vector.broadcast %cst_9 : f32 to vector<128x128xf32>
    %14 = vector.broadcast %cst_10 : f32 to vector<128x128xf32>
    %15 = arith.select %12, %13, %14 : vector<128x128xi1>, vector<128x128xf32>
    %cst_11 = arith.constant dense<0x7F800000> : vector<128xf32>
    %16 = vector.multi_reduction <minimumf>, %15, %cst_11 [1] : vector<128x128xf32> to vector<128xf32>
    %17 = vector.shape_cast %16 : vector<128xf32> to vector<128x1xf32>
    %cst_12 = arith.constant dense<0x7F800000> : vector<1xf32>
    %18 = vector.multi_reduction <minimumf>, %17, %cst_12 [0] : vector<128x1xf32> to vector<1xf32>
    %19 = vector.shape_cast %18 : vector<1xf32> to vector<1x1xf32>
    %20 = vector.shape_cast %19 : vector<1x1xf32> to vector<1x1xf32>
    %21 = vector.broadcast %20 : vector<1x1xf32> to vector<8x128xf32>
    %c0_13 = arith.constant 0 : index
    %c0_14 = arith.constant 0 : index
    %22 = vector.load %arg10[%c0_13, %c0_14] : memref<8x128xf32, #tpu.memory_space<vmem>>, vector<8x128xf32>
    tpu.vector_store %arg10[%c0_13, %c0_14], %21 {strides = array<i32>} : memref<8x128xf32, #tpu.memory_space<vmem>>, vector<8x128xf32>,
    %23 = arith.truncf %7 : vector<128x128xf32> to vector<128x128xbf16>
    %cst_15 = arith.constant 0.000000e+00 : f32
    %24 = vector.broadcast %cst_15 : f32 to vector<128x128xf32>
    %c0_16 = arith.constant 0 : index
    %c0_17 = arith.constant 0 : index
    %25 = vector.load %arg4[%c0_16, %c0_17] : memref<128x640xbf16, #tpu.memory_space<vmem>>, vector<128x128xbf16>
    %cst_18 = arith.constant dense<0.000000e+00> : vector<128x128xf32>
    %26 = tpu.matmul %23, %25, %cst_18 {dimension_numbers = #tpu.dot_dimension_numbers<[1], [0], [0], [1], [0, 0, 1, 1], [], []>} : vector<128x128xbf16>, vector<128x128xbf16>, vector<128x128xf32> -> vector<128x128xf32>
    %c0_19 = arith.constant 0 : index
    %c0_20 = arith.constant 0 : index
    %27 = vector.load %arg5[%c0_19, %c0_20] : memref<1x640xf32, #tpu.memory_space<vmem>>, vector<1x128xf32>
    %28 = vector.broadcast %27 : vector<1x128xf32> to vector<128x128xf32>
    %29 = arith.addf %26, %28 : vector<128x128xf32>
    %cst_21 = arith.constant dense<0xFF800000> : vector<128xf32>
    %30 = vector.multi_reduction <maximumf>, %29, %cst_21 [1] : vector<128x128xf32> to vector<128xf32>
    %31 = vector.shape_cast %30 : vector<128xf32> to vector<128x1xf32>
    %32 = vector.broadcast %31 : vector<128x1xf32> to vector<128x128xf32>
    %33 = arith.subf %29, %32 : vector<128x128xf32>
    %34 = math.exp %33 : vector<128x128xf32>
    %cst_22 = arith.constant dense<0.000000e+00> : vector<128xf32>
    %35 = vector.multi_reduction <add>, %34, %cst_22 [1] : vector<128x128xf32> to vector<128xf32>
    %36 = vector.shape_cast %35 : vector<128xf32> to vector<128x1xf32>
    %37 = math.log %36 : vector<128x1xf32>
    %38 = arith.addf %31, %37 : vector<128x1xf32>
    %39 = vector.broadcast %38 : vector<128x1xf32> to vector<128x128xf32>
    %40 = arith.subf %29, %39 : vector<128x128xf32>
    %41 = arith.truncf %40 : vector<128x128xf32> to vector<128x128xbf16>
    %c0_23 = arith.constant 0 : index
    %c0_24 = arith.constant 0 : index
    %42 = vector.load %arg9[%c0_23, %c0_24] : memref<128x640xbf16, #tpu.memory_space<vmem>>, vector<128x128xbf16>
    tpu.vector_store %arg9[%c0_23, %c0_24], %41 {strides = array<i32>} : memref<128x640xbf16, #tpu.memory_space<vmem>>, vector<128x128xbf16>,
    %cst_25 = arith.constant 1.000000e+00 : f32
    %43 = vector.broadcast %cst_25 : f32 to vector<128x1xf32>
    %44 = arith.divf %43, %36 : vector<128x1xf32>
    %45 = vector.broadcast %44 : vector<128x1xf32> to vector<128x128xf32>
    %46 = arith.mulf %34, %45 : vector<128x128xf32>
    %c0_26 = arith.constant 0 : index
    %c0_27 = arith.constant 0 : index
    %47 = vector.load %arg6[%c0_26, %c0_27] : memref<1x640xf32, #tpu.memory_space<vmem>>, vector<1x128xf32>
    %48 = vector.broadcast %47 : vector<1x128xf32> to vector<128x128xf32>
    %49 = arith.mulf %46, %48 : vector<128x128xf32>
    %50 = arith.addf %24, %49 : vector<128x128xf32>
    %c0_28 = arith.constant 0 : index
    %c128 = arith.constant 128 : index
    %51 = vector.load %arg4[%c0_28, %c128] : memref<128x640xbf16, #tpu.memory_space<vmem>>, vector<128x128xbf16>
    %cst_29 = arith.constant dense<0.000000e+00> : vector<128x128xf32>
    %52 = tpu.matmul %23, %51, %cst_29 {dimension_numbers = #tpu.dot_dimension_numbers<[1], [0], [0], [1], [0, 0, 1, 1], [], []>} : vector<128x128xbf16>, vector<128x128xbf16>, vector<128x128xf32> -> vector<128x128xf32>
    %c0_30 = arith.constant 0 : index
    %c128_31 = arith.constant 128 : index
    %53 = vector.load %arg5[%c0_30, %c128_31] : memref<1x640xf32, #tpu.memory_space<vmem>>, vector<1x128xf32>
    %54 = vector.broadcast %53 : vector<1x128xf32> to vector<128x128xf32>
    %55 = arith.addf %52, %54 : vector<128x128xf32>
    %cst_32 = arith.constant dense<0xFF800000> : vector<128xf32>
    %56 = vector.multi_reduction <maximumf>, %55, %cst_32 [1] : vector<128x128xf32> to vector<128xf32>
    %57 = vector.shape_cast %56 : vector<128xf32> to vector<128x1xf32>
    %58 = vector.broadcast %57 : vector<128x1xf32> to vector<128x128xf32>
    %59 = arith.subf %55, %58 : vector<128x128xf32>
    %60 = math.exp %59 : vector<128x128xf32>
    %cst_33 = arith.constant dense<0.000000e+00> : vector<128xf32>
    %61 = vector.multi_reduction <add>, %60, %cst_33 [1] : vector<128x128xf32> to vector<128xf32>
    %62 = vector.shape_cast %61 : vector<128xf32> to vector<128x1xf32>
    %63 = math.log %62 : vector<128x1xf32>
    %64 = arith.addf %57, %63 : vector<128x1xf32>
    %65 = vector.broadcast %64 : vector<128x1xf32> to vector<128x128xf32>
    %66 = arith.subf %55, %65 : vector<128x128xf32>
    %67 = arith.truncf %66 : vector<128x128xf32> to vector<128x128xbf16>
    %c0_34 = arith.constant 0 : index
    %c128_35 = arith.constant 128 : index
    %68 = vector.load %arg9[%c0_34, %c128_35] : memref<128x640xbf16, #tpu.memory_space<vmem>>, vector<128x128xbf16>
    tpu.vector_store %arg9[%c0_34, %c128_35], %67 {strides = array<i32>} : memref<128x640xbf16, #tpu.memory_space<vmem>>, vector<128x128xbf16>,
    %cst_36 = arith.constant 1.000000e+00 : f32
    %69 = vector.broadcast %cst_36 : f32 to vector<128x1xf32>
    %70 = arith.divf %69, %62 : vector<128x1xf32>
    %71 = vector.broadcast %70 : vector<128x1xf32> to vector<128x128xf32>
    %72 = arith.mulf %60, %71 : vector<128x128xf32>
    %c0_37 = arith.constant 0 : index
    %c128_38 = arith.constant 128 : index
    %73 = vector.load %arg6[%c0_37, %c128_38] : memref<1x640xf32, #tpu.memory_space<vmem>>, vector<1x128xf32>
    %74 = vector.broadcast %73 : vector<1x128xf32> to vector<128x128xf32>
    %75 = arith.mulf %72, %74 : vector<128x128xf32>
    %76 = arith.addf %50, %75 : vector<128x128xf32>
    %c0_39 = arith.constant 0 : index
    %c256 = arith.constant 256 : index
    %77 = vector.load %arg4[%c0_39, %c256] : memref<128x640xbf16, #tpu.memory_space<vmem>>, vector<128x128xbf16>
    %cst_40 = arith.constant dense<0.000000e+00> : vector<128x128xf32>
    %78 = tpu.matmul %23, %77, %cst_40 {dimension_numbers = #tpu.dot_dimension_numbers<[1], [0], [0], [1], [0, 0, 1, 1], [], []>} : vector<128x128xbf16>, vector<128x128xbf16>, vector<128x128xf32> -> vector<128x128xf32>
    %c0_41 = arith.constant 0 : index
    %c256_42 = arith.constant 256 : index
    %79 = vector.load %arg5[%c0_41, %c256_42] : memref<1x640xf32, #tpu.memory_space<vmem>>, vector<1x128xf32>
    %80 = vector.broadcast %79 : vector<1x128xf32> to vector<128x128xf32>
    %81 = arith.addf %78, %80 : vector<128x128xf32>
    %cst_43 = arith.constant dense<0xFF800000> : vector<128xf32>
    %82 = vector.multi_reduction <maximumf>, %81, %cst_43 [1] : vector<128x128xf32> to vector<128xf32>
    %83 = vector.shape_cast %82 : vector<128xf32> to vector<128x1xf32>
    %84 = vector.broadcast %83 : vector<128x1xf32> to vector<128x128xf32>
    %85 = arith.subf %81, %84 : vector<128x128xf32>
    %86 = math.exp %85 : vector<128x128xf32>
    %cst_44 = arith.constant dense<0.000000e+00> : vector<128xf32>
    %87 = vector.multi_reduction <add>, %86, %cst_44 [1] : vector<128x128xf32> to vector<128xf32>
    %88 = vector.shape_cast %87 : vector<128xf32> to vector<128x1xf32>
    %89 = math.log %88 : vector<128x1xf32>
    %90 = arith.addf %83, %89 : vector<128x1xf32>
    %91 = vector.broadcast %90 : vector<128x1xf32> to vector<128x128xf32>
    %92 = arith.subf %81, %91 : vector<128x128xf32>
    %93 = arith.truncf %92 : vector<128x128xf32> to vector<128x128xbf16>
    %c0_45 = arith.constant 0 : index
    %c256_46 = arith.constant 256 : index
    %94 = vector.load %arg9[%c0_45, %c256_46] : memref<128x640xbf16, #tpu.memory_space<vmem>>, vector<128x128xbf16>
    tpu.vector_store %arg9[%c0_45, %c256_46], %93 {strides = array<i32>} : memref<128x640xbf16, #tpu.memory_space<vmem>>, vector<128x128xbf16>,
    %cst_47 = arith.constant 1.000000e+00 : f32
    %95 = vector.broadcast %cst_47 : f32 to vector<128x1xf32>
    %96 = arith.divf %95, %88 : vector<128x1xf32>
    %97 = vector.broadcast %96 : vector<128x1xf32> to vector<128x128xf32>
    %98 = arith.mulf %86, %97 : vector<128x128xf32>
    %c0_48 = arith.constant 0 : index
    %c256_49 = arith.constant 256 : index
    %99 = vector.load %arg6[%c0_48, %c256_49] : memref<1x640xf32, #tpu.memory_space<vmem>>, vector<1x128xf32>
    %100 = vector.broadcast %99 : vector<1x128xf32> to vector<128x128xf32>
    %101 = arith.mulf %98, %100 : vector<128x128xf32>
    %102 = arith.addf %76, %101 : vector<128x128xf32>
    %c0_50 = arith.constant 0 : index
    %c384 = arith.constant 384 : index
    %103 = vector.load %arg4[%c0_50, %c384] : memref<128x640xbf16, #tpu.memory_space<vmem>>, vector<128x128xbf16>
    %cst_51 = arith.constant dense<0.000000e+00> : vector<128x128xf32>
    %104 = tpu.matmul %23, %103, %cst_51 {dimension_numbers = #tpu.dot_dimension_numbers<[1], [0], [0], [1], [0, 0, 1, 1], [], []>} : vector<128x128xbf16>, vector<128x128xbf16>, vector<128x128xf32> -> vector<128x128xf32>
    %c0_52 = arith.constant 0 : index
    %c384_53 = arith.constant 384 : index
    %105 = vector.load %arg5[%c0_52, %c384_53] : memref<1x640xf32, #tpu.memory_space<vmem>>, vector<1x128xf32>
    %106 = vector.broadcast %105 : vector<1x128xf32> to vector<128x128xf32>
    %107 = arith.addf %104, %106 : vector<128x128xf32>
    %cst_54 = arith.constant dense<0xFF800000> : vector<128xf32>
    %108 = vector.multi_reduction <maximumf>, %107, %cst_54 [1] : vector<128x128xf32> to vector<128xf32>
    %109 = vector.shape_cast %108 : vector<128xf32> to vector<128x1xf32>
    %110 = vector.broadcast %109 : vector<128x1xf32> to vector<128x128xf32>
    %111 = arith.subf %107, %110 : vector<128x128xf32>
    %112 = math.exp %111 : vector<128x128xf32>
    %cst_55 = arith.constant dense<0.000000e+00> : vector<128xf32>
    %113 = vector.multi_reduction <add>, %112, %cst_55 [1] : vector<128x128xf32> to vector<128xf32>
    %114 = vector.shape_cast %113 : vector<128xf32> to vector<128x1xf32>
    %115 = math.log %114 : vector<128x1xf32>
    %116 = arith.addf %109, %115 : vector<128x1xf32>
    %117 = vector.broadcast %116 : vector<128x1xf32> to vector<128x128xf32>
    %118 = arith.subf %107, %117 : vector<128x128xf32>
    %119 = arith.truncf %118 : vector<128x128xf32> to vector<128x128xbf16>
    %c0_56 = arith.constant 0 : index
    %c384_57 = arith.constant 384 : index
    %120 = vector.load %arg9[%c0_56, %c384_57] : memref<128x640xbf16, #tpu.memory_space<vmem>>, vector<128x128xbf16>
    tpu.vector_store %arg9[%c0_56, %c384_57], %119 {strides = array<i32>} : memref<128x640xbf16, #tpu.memory_space<vmem>>, vector<128x128xbf16>,
    %cst_58 = arith.constant 1.000000e+00 : f32
    %121 = vector.broadcast %cst_58 : f32 to vector<128x1xf32>
    %122 = arith.divf %121, %114 : vector<128x1xf32>
    %123 = vector.broadcast %122 : vector<128x1xf32> to vector<128x128xf32>
    %124 = arith.mulf %112, %123 : vector<128x128xf32>
    %c0_59 = arith.constant 0 : index
    %c384_60 = arith.constant 384 : index
    %125 = vector.load %arg6[%c0_59, %c384_60] : memref<1x640xf32, #tpu.memory_space<vmem>>, vector<1x128xf32>
    %126 = vector.broadcast %125 : vector<1x128xf32> to vector<128x128xf32>
    %127 = arith.mulf %124, %126 : vector<128x128xf32>
    %128 = arith.addf %102, %127 : vector<128x128xf32>
    %c0_61 = arith.constant 0 : index
    %c512 = arith.constant 512 : index
    %129 = vector.load %arg4[%c0_61, %c512] : memref<128x640xbf16, #tpu.memory_space<vmem>>, vector<128x128xbf16>
    %cst_62 = arith.constant dense<0.000000e+00> : vector<128x128xf32>
    %130 = tpu.matmul %23, %129, %cst_62 {dimension_numbers = #tpu.dot_dimension_numbers<[1], [0], [0], [1], [0, 0, 1, 1], [], []>} : vector<128x128xbf16>, vector<128x128xbf16>, vector<128x128xf32> -> vector<128x128xf32>
    %c0_63 = arith.constant 0 : index
    %c512_64 = arith.constant 512 : index
    %131 = vector.load %arg5[%c0_63, %c512_64] : memref<1x640xf32, #tpu.memory_space<vmem>>, vector<1x128xf32>
    %132 = vector.broadcast %131 : vector<1x128xf32> to vector<128x128xf32>
    %133 = arith.addf %130, %132 : vector<128x128xf32>
    %cst_65 = arith.constant dense<0xFF800000> : vector<128xf32>
    %134 = vector.multi_reduction <maximumf>, %133, %cst_65 [1] : vector<128x128xf32> to vector<128xf32>
    %135 = vector.shape_cast %134 : vector<128xf32> to vector<128x1xf32>
    %136 = vector.broadcast %135 : vector<128x1xf32> to vector<128x128xf32>
    %137 = arith.subf %133, %136 : vector<128x128xf32>
    %138 = math.exp %137 : vector<128x128xf32>
    %cst_66 = arith.constant dense<0.000000e+00> : vector<128xf32>
    %139 = vector.multi_reduction <add>, %138, %cst_66 [1] : vector<128x128xf32> to vector<128xf32>
    %140 = vector.shape_cast %139 : vector<128xf32> to vector<128x1xf32>
    %141 = math.log %140 : vector<128x1xf32>
    %142 = arith.addf %135, %141 : vector<128x1xf32>
    %143 = vector.broadcast %142 : vector<128x1xf32> to vector<128x128xf32>
    %144 = arith.subf %133, %143 : vector<128x128xf32>
    %145 = arith.truncf %144 : vector<128x128xf32> to vector<128x128xbf16>
    %c0_67 = arith.constant 0 : index
    %c512_68 = arith.constant 512 : index
    %146 = vector.load %arg9[%c0_67, %c512_68] : memref<128x640xbf16, #tpu.memory_space<vmem>>, vector<128x128xbf16>
    tpu.vector_store %arg9[%c0_67, %c512_68], %145 {strides = array<i32>} : memref<128x640xbf16, #tpu.memory_space<vmem>>, vector<128x128xbf16>,
    %cst_69 = arith.constant 1.000000e+00 : f32
    %147 = vector.broadcast %cst_69 : f32 to vector<128x1xf32>
    %148 = arith.divf %147, %140 : vector<128x1xf32>
    %149 = vector.broadcast %148 : vector<128x1xf32> to vector<128x128xf32>
    %150 = arith.mulf %138, %149 : vector<128x128xf32>
    %c0_70 = arith.constant 0 : index
    %c512_71 = arith.constant 512 : index
    %151 = vector.load %arg6[%c0_70, %c512_71] : memref<1x640xf32, #tpu.memory_space<vmem>>, vector<1x128xf32>
    %152 = vector.broadcast %151 : vector<1x128xf32> to vector<128x128xf32>
    %153 = arith.mulf %150, %152 : vector<128x128xf32>
    %154 = arith.addf %128, %153 : vector<128x128xf32>
    %155 = math.log %154 : vector<128x128xf32>
    %c0_72 = arith.constant 0 : index
    %c0_73 = arith.constant 0 : index
    %156 = vector.load %arg7[%c0_72, %c0_73] : memref<128x128xf32, #tpu.memory_space<vmem>>, vector<128x128xf32>
    tpu.vector_store %arg7[%c0_72, %c0_73], %155 {strides = array<i32>} : memref<128x128xf32, #tpu.memory_space<vmem>>, vector<128x128xf32>,
    return
  }
  func.func @transform_0(%arg0: i32) -> (i32, i32) {
    %c0_i32 = arith.constant 0 : i32
    %c0_i32_0 = arith.constant 0 : i32
    return %arg0, %c0_i32 : i32, i32
  }
  func.func @transform_1(%arg0: i32) -> (i32, i32) {
    %c0_i32 = arith.constant 0 : i32
    %c0_i32_0 = arith.constant 0 : i32
    %c0_i32_1 = arith.constant 0 : i32
    return %c0_i32, %c0_i32_0 : i32, i32
  }
  func.func @transform_2(%arg0: i32) -> (i32, i32) {
    %c0_i32 = arith.constant 0 : i32
    %c0_i32_0 = arith.constant 0 : i32
    %c0_i32_1 = arith.constant 0 : i32
    return %c0_i32, %c0_i32_0 : i32, i32
  }
  func.func @transform_3(%arg0: i32) -> (i32, i32) {
    %c0_i32 = arith.constant 0 : i32
    %c0_i32_0 = arith.constant 0 : i32
    %c0_i32_1 = arith.constant 0 : i32
    return %c0_i32, %c0_i32_0 : i32, i32
  }
  func.func @transform_4(%arg0: i32) -> (i32, i32) {
    %c0_i32 = arith.constant 0 : i32
    %c0_i32_0 = arith.constant 0 : i32
    %c0_i32_1 = arith.constant 0 : i32
    return %c0_i32, %c0_i32_0 : i32, i32
  }
  func.func @transform_5(%arg0: i32) -> (i32, i32) {
    %c0_i32 = arith.constant 0 : i32
    %c0_i32_0 = arith.constant 0 : i32
    %c0_i32_1 = arith.constant 0 : i32
    return %c0_i32, %c0_i32_0 : i32, i32
  }
  func.func @transform_6(%arg0: i32) -> (i32, i32) {
    %c0_i32 = arith.constant 0 : i32
    %c0_i32_0 = arith.constant 0 : i32
    return %arg0, %c0_i32 : i32, i32
  }
  func.func @transform_7(%arg0: i32) -> (i32, i32) {
    %c0_i32 = arith.constant 0 : i32
    %c0_i32_0 = arith.constant 0 : i32
    return %arg0, %c0_i32 : i32, i32
  }
  func.func @transform_8(%arg0: i32) -> (i32, i32) {
    %c0_i32 = arith.constant 0 : i32
    %c0_i32_0 = arith.constant 0 : i32
    return %arg0, %c0_i32 : i32, i32
  }
  func.func @transform_9(%arg0: i32) -> (i32, i32) {
    %c0_i32 = arith.constant 0 : i32
    %c0_i32_0 = arith.constant 0 : i32
    return %arg0, %c0_i32 : i32, i32
  }
}

</mosaic_0001>

<llo_original>
// kernel: _alrao_forward_impl.1
$region0: #{_alrao_forward_impl.1}
  #allocation0 [shape = 'u32[]', space=smem, size = 0x4, offset = 0x4, fixed_abs, tag = 'smem constant byte address 0x4 - core index']
  #allocation1 [shape = 'u32[144,128]{1,0:T(1,128)}', space=vmem, size = 0x12000, scoped, tag = 'internal scratch']
  %s0 = inlined_call_operand.vmem [shape: bf16[128,1024], index: 0, kind: input, shape index: {}]
  %s1 = inlined_call_operand.vmem [shape: bf16[1024,128], index: 1, kind: input, shape index: {}]
  %s2 = inlined_call_operand.vmem [shape: f32[1,128], index: 2, kind: input, shape index: {}]
  %s3 = inlined_call_operand.vmem [shape: bf16[128,640], index: 3, kind: input, shape index: {}]
  %s4 = inlined_call_operand.vmem [shape: f32[1,640], index: 4, kind: input, shape index: {}]
  %s5 = inlined_call_operand.vmem [shape: f32[1,640], index: 5, kind: input, shape index: {}]
  %s6 = inlined_call_operand.vmem [shape: f32[128,128], index: 6, kind: output, shape index: {0}]
  %s7 = inlined_call_operand.vmem [shape: bf16[128,128], index: 7, kind: output, shape index: {1}]
  %s8 = inlined_call_operand.vmem [shape: bf16[128,640], index: 8, kind: output, shape index: {2}]
  %s9 = inlined_call_operand.vmem [shape: f32[8,128], index: 9, kind: output, shape index: {3}]
  %10 = xla_tuple %s6, %s7, %s8, %s9
  %s11 = sld [smem:[#allocation0]]
  $region58: #{_alrao_forward_impl.1} parent=0
    _
  %s13 = ssub.s32 1, %s11
  %s14 = scalar_select 0, %s13, %s11
  // Predicated region
  $region2: #{_alrao_forward_impl.1} parent=0 // pred_check
    _
  $region3: #{_alrao_forward_impl.1} parent=0 // pred_check_branch
    %16 = sbr.rel (0) target = $region5
  $region4: #{_alrao_forward_impl.1} parent=0 // pred_region
    _
  $region5: #{_alrao_forward_impl.1} parent=0 // pred_fallthru
    _
  // Predicated region
  $region6: #{_alrao_forward_impl.1} parent=0 // pred_check
    _
  $region7: #{_alrao_forward_impl.1} parent=0 // pred_check_branch
    %18 = sbr.rel (0) target = $region9
  $region8: #{_alrao_forward_impl.1} parent=0 // pred_region
    _
  $region9: #{_alrao_forward_impl.1} parent=0 // pred_fallthru
    _
  // Predicated region
  $region10: #{_alrao_forward_impl.1} parent=0 // pred_check
    _
  $region11: #{_alrao_forward_impl.1} parent=0 // pred_check_branch
    %20 = sbr.rel (0) target = $region13
  $region12: #{_alrao_forward_impl.1} parent=0 // pred_region
    _
  $region13: #{_alrao_forward_impl.1} parent=0 // pred_fallthru
    _
  // Predicated region
  $region14: #{_alrao_forward_impl.1} parent=0 // pred_check
    _
  $region15: #{_alrao_forward_impl.1} parent=0 // pred_check_branch
    %22 = sbr.rel (0) target = $region17
  $region16: #{_alrao_forward_impl.1} parent=0 // pred_region
    _
  $region17: #{_alrao_forward_impl.1} parent=0 // pred_fallthru
    _
  // Predicated region
  $region18: #{_alrao_forward_impl.1} parent=0 // pred_check
    _
  $region19: #{_alrao_forward_impl.1} parent=0 // pred_check_branch
    %24 = sbr.rel (0) target = $region21
  $region20: #{_alrao_forward_impl.1} parent=0 // pred_region
    _
  $region21: #{_alrao_forward_impl.1} parent=0 // pred_fallthru
    _
  // Predicated region
  $region22: #{_alrao_forward_impl.1} parent=0 // pred_check
    _
  $region23: #{_alrao_forward_impl.1} parent=0 // pred_check_branch
    %26 = sbr.rel (0) target = $region25
  $region24: #{_alrao_forward_impl.1} parent=0 // pred_region
    _
  $region25: #{_alrao_forward_impl.1} parent=0 // pred_fallthru
    _
  %v28 = vld [vmem:[%s0] sm:$0xff]
  %v29 = vld [vmem:[%s0 + $0x8] sm:$0xff]
  %v30 = vld [vmem:[%s0 + $0x10] sm:$0xff]
  %v31 = vld [vmem:[%s0 + $0x18] sm:$0xff]
  %v32 = vld [vmem:[%s0 + $0x20] sm:$0xff]
  %v33 = vld [vmem:[%s0 + $0x28] sm:$0xff]
  %v34 = vld [vmem:[%s0 + $0x30] sm:$0xff]
  %v35 = vld [vmem:[%s0 + $0x38] sm:$0xff]
  %v36 = vld [vmem:[%s0 + $0x40] sm:$0xff]
  %v37 = vld [vmem:[%s0 + $0x48] sm:$0xff]
  %v38 = vld [vmem:[%s0 + $0x50] sm:$0xff]
  %v39 = vld [vmem:[%s0 + $0x58] sm:$0xff]
  %v40 = vld [vmem:[%s0 + $0x60] sm:$0xff]
  %v41 = vld [vmem:[%s0 + $0x68] sm:$0xff]
  %v42 = vld [vmem:[%s0 + $0x70] sm:$0xff]
  %v43 = vld [vmem:[%s0 + $0x78] sm:$0xff]
  %v44 = vld [vmem:[%s0 + $0x80] sm:$0xff]
  %v45 = vld [vmem:[%s0 + $0x88] sm:$0xff]
  %v46 = vld [vmem:[%s0 + $0x90] sm:$0xff]
  %v47 = vld [vmem:[%s0 + $0x98] sm:$0xff]
  %v48 = vld [vmem:[%s0 + $0xa0] sm:$0xff]
  %v49 = vld [vmem:[%s0 + $0xa8] sm:$0xff]
  %v50 = vld [vmem:[%s0 + $0xb0] sm:$0xff]
  %v51 = vld [vmem:[%s0 + $0xb8] sm:$0xff]
  %v52 = vld [vmem:[%s0 + $0xc0] sm:$0xff]
  %v53 = vld [vmem:[%s0 + $0xc8] sm:$0xff]
  %v54 = vld [vmem:[%s0 + $0xd0] sm:$0xff]
  %v55 = vld [vmem:[%s0 + $0xd8] sm:$0xff]
  %v56 = vld [vmem:[%s0 + $0xe0] sm:$0xff]
  %v57 = vld [vmem:[%s0 + $0xe8] sm:$0xff]
  %v58 = vld [vmem:[%s0 + $0xf0] sm:$0xff]
  %v59 = vld [vmem:[%s0 + $0xf8] sm:$0xff]
  %v60 = vld [vmem:[%s0 + $0x100] sm:$0xff]
  %v61 = vld [vmem:[%s0 + $0x108] sm:$0xff]
  %v62 = vld [vmem:[%s0 + $0x110] sm:$0xff]
  %v63 = vld [vmem:[%s0 + $0x118] sm:$0xff]
  %v64 = vld [vmem:[%s0 + $0x120] sm:$0xff]
  %v65 = vld [vmem:[%s0 + $0x128] sm:$0xff]
  %v66 = vld [vmem:[%s0 + $0x130] sm:$0xff]
  %v67 = vld [vmem:[%s0 + $0x138] sm:$0xff]
  %v68 = vld [vmem:[%s0 + $0x140] sm:$0xff]
  %v69 = vld [vmem:[%s0 + $0x148] sm:$0xff]
  %v70 = vld [vmem:[%s0 + $0x150] sm:$0xff]
  %v71 = vld [vmem:[%s0 + $0x158] sm:$0xff]
  %v72 = vld [vmem:[%s0 + $0x160] sm:$0xff]
  %v73 = vld [vmem:[%s0 + $0x168] sm:$0xff]
  %v74 = vld [vmem:[%s0 + $0x170] sm:$0xff]
  %v75 = vld [vmem:[%s0 + $0x178] sm:$0xff]
  %v76 = vld [vmem:[%s0 + $0x180] sm:$0xff]
  %v77 = vld [vmem:[%s0 + $0x188] sm:$0xff]
  %v78 = vld [vmem:[%s0 + $0x190] sm:$0xff]
  %v79 = vld [vmem:[%s0 + $0x198] sm:$0xff]
  %v80 = vld [vmem:[%s0 + $0x1a0] sm:$0xff]
  %v81 = vld [vmem:[%s0 + $0x1a8] sm:$0xff]
  %v82 = vld [vmem:[%s0 + $0x1b0] sm:$0xff]
  %v83 = vld [vmem:[%s0 + $0x1b8] sm:$0xff]
  %v84 = vld [vmem:[%s0 + $0x1c0] sm:$0xff]
  %v85 = vld [vmem:[%s0 + $0x1c8] sm:$0xff]
  %v86 = vld [vmem:[%s0 + $0x1d0] sm:$0xff]
  %v87 = vld [vmem:[%s0 + $0x1d8] sm:$0xff]
  %v88 = vld [vmem:[%s0 + $0x1e0] sm:$0xff]
  %v89 = vld [vmem:[%s0 + $0x1e8] sm:$0xff]
  %v90 = vld [vmem:[%s0 + $0x1f0] sm:$0xff]
  %v91 = vld [vmem:[%s0 + $0x1f8] sm:$0xff]
  %v92 = vld [vmem:[%s1] sm:$0xf]
  %v93 = vld [vmem:[%s1 + $0x4] sm:$0xf]
  %v94 = vld [vmem:[%s1 + $0x8] sm:$0xf]
  %v95 = vld [vmem:[%s1 + $0xc] sm:$0xf]
  %v96 = vld [vmem:[%s1 + $0x10] sm:$0xf]
  %v97 = vld [vmem:[%s1 + $0x14] sm:$0xf]
  %v98 = vld [vmem:[%s1 + $0x18] sm:$0xf]
  %v99 = vld [vmem:[%s1 + $0x1c] sm:$0xf]
  %v100 = vld [vmem:[%s1 + $0x20] sm:$0xf]
  %v101 = vld [vmem:[%s1 + $0x24] sm:$0xf]
  %v102 = vld [vmem:[%s1 + $0x28] sm:$0xf]
  %v103 = vld [vmem:[%s1 + $0x2c] sm:$0xf]
  %v104 = vld [vmem:[%s1 + $0x30] sm:$0xf]
  %v105 = vld [vmem:[%s1 + $0x34] sm:$0xf]
  %v106 = vld [vmem:[%s1 + $0x38] sm:$0xf]
  %v107 = vld [vmem:[%s1 + $0x3c] sm:$0xf]
  %v108 = vld [vmem:[%s1 + $0x40] sm:$0xf]
  %v109 = vld [vmem:[%s1 + $0x44] sm:$0xf]
  %v110 = vld [vmem:[%s1 + $0x48] sm:$0xf]
  %v111 = vld [vmem:[%s1 + $0x4c] sm:$0xf]
  %v112 = vld [vmem:[%s1 + $0x50] sm:$0xf]
  %v113 = vld [vmem:[%s1 + $0x54] sm:$0xf]
  %v114 = vld [vmem:[%s1 + $0x58] sm:$0xf]
  %v115 = vld [vmem:[%s1 + $0x5c] sm:$0xf]
  %v116 = vld [vmem:[%s1 + $0x60] sm:$0xf]
  %v117 = vld [vmem:[%s1 + $0x64] sm:$0xf]
  %v118 = vld [vmem:[%s1 + $0x68] sm:$0xf]
  %v119 = vld [vmem:[%s1 + $0x6c] sm:$0xf]
  %v120 = vld [vmem:[%s1 + $0x70] sm:$0xf]
  %v121 = vld [vmem:[%s1 + $0x74] sm:$0xf]
  %v122 = vld [vmem:[%s1 + $0x78] sm:$0xf]
  %v123 = vld [vmem:[%s1 + $0x7c] sm:$0xf]
  %v124 = vld [vmem:[%s1 + $0x80] sm:$0xf]
  %v125 = vld [vmem:[%s1 + $0x84] sm:$0xf]
  %v126 = vld [vmem:[%s1 + $0x88] sm:$0xf]
  %v127 = vld [vmem:[%s1 + $0x8c] sm:$0xf]
  %v128 = vld [vmem:[%s1 + $0x90] sm:$0xf]
  %v129 = vld [vmem:[%s1 + $0x94] sm:$0xf]
  %v130 = vld [vmem:[%s1 + $0x98] sm:$0xf]
  %v131 = vld [vmem:[%s1 + $0x9c] sm:$0xf]
  %v132 = vld [vmem:[%s1 + $0xa0] sm:$0xf]
  %v133 = vld [vmem:[%s1 + $0xa4] sm:$0xf]
  %v134 = vld [vmem:[%s1 + $0xa8] sm:$0xf]
  %v135 = vld [vmem:[%s1 + $0xac] sm:$0xf]
  %v136 = vld [vmem:[%s1 + $0xb0] sm:$0xf]
  %v137 = vld [vmem:[%s1 + $0xb4] sm:$0xf]
  %v138 = vld [vmem:[%s1 + $0xb8] sm:$0xf]
  %v139 = vld [vmem:[%s1 + $0xbc] sm:$0xf]
  %v140 = vld [vmem:[%s1 + $0xc0] sm:$0xf]
  %v141 = vld [vmem:[%s1 + $0xc4] sm:$0xf]
  %v142 = vld [vmem:[%s1 + $0xc8] sm:$0xf]
  %v143 = vld [vmem:[%s1 + $0xcc] sm:$0xf]
  %v144 = vld [vmem:[%s1 + $0xd0] sm:$0xf]
  %v145 = vld [vmem:[%s1 + $0xd4] sm:$0xf]
  %v146 = vld [vmem:[%s1 + $0xd8] sm:$0xf]
  %v147 = vld [vmem:[%s1 + $0xdc] sm:$0xf]
  %v148 = vld [vmem:[%s1 + $0xe0] sm:$0xf]
  %v149 = vld [vmem:[%s1 + $0xe4] sm:$0xf]
  %v150 = vld [vmem:[%s1 + $0xe8] sm:$0xf]
  %v151 = vld [vmem:[%s1 + $0xec] sm:$0xf]
  %v152 = vld [vmem:[%s1 + $0xf0] sm:$0xf]
  %v153 = vld [vmem:[%s1 + $0xf4] sm:$0xf]
  %v154 = vld [vmem:[%s1 + $0xf8] sm:$0xf]
  %v155 = vld [vmem:[%s1 + $0xfc] sm:$0xf]
  %v156 = vld [vmem:[%s1 + $0x100] sm:$0xf]
  %v157 = vld [vmem:[%s1 + $0x104] sm:$0xf]
  %v158 = vld [vmem:[%s1 + $0x108] sm:$0xf]
  %v159 = vld [vmem:[%s1 + $0x10c] sm:$0xf]
  %v160 = vld [vmem:[%s1 + $0x110] sm:$0xf]
  %v161 = vld [vmem:[%s1 + $0x114] sm:$0xf]
  %v162 = vld [vmem:[%s1 + $0x118] sm:$0xf]
  %v163 = vld [vmem:[%s1 + $0x11c] sm:$0xf]
  %v164 = vld [vmem:[%s1 + $0x120] sm:$0xf]
  %v165 = vld [vmem:[%s1 + $0x124] sm:$0xf]
  %v166 = vld [vmem:[%s1 + $0x128] sm:$0xf]
  %v167 = vld [vmem:[%s1 + $0x12c] sm:$0xf]
  %v168 = vld [vmem:[%s1 + $0x130] sm:$0xf]
  %v169 = vld [vmem:[%s1 + $0x134] sm:$0xf]
  %v170 = vld [vmem:[%s1 + $0x138] sm:$0xf]
  %v171 = vld [vmem:[%s1 + $0x13c] sm:$0xf]
  %v172 = vld [vmem:[%s1 + $0x140] sm:$0xf]
  %v173 = vld [vmem:[%s1 + $0x144] sm:$0xf]
  %v174 = vld [vmem:[%s1 + $0x148] sm:$0xf]
  %v175 = vld [vmem:[%s1 + $0x14c] sm:$0xf]
  %v176 = vld [vmem:[%s1 + $0x150] sm:$0xf]
  %v177 = vld [vmem:[%s1 + $0x154] sm:$0xf]
  %v178 = vld [vmem:[%s1 + $0x158] sm:$0xf]
  %v179 = vld [vmem:[%s1 + $0x15c] sm:$0xf]
  %v180 = vld [vmem:[%s1 + $0x160] sm:$0xf]
  %v181 = vld [vmem:[%s1 + $0x164] sm:$0xf]
  %v182 = vld [vmem:[%s1 + $0x168] sm:$0xf]
  %v183 = vld [vmem:[%s1 + $0x16c] sm:$0xf]
  %v184 = vld [vmem:[%s1 + $0x170] sm:$0xf]
  %v185 = vld [vmem:[%s1 + $0x174] sm:$0xf]
  %v186 = vld [vmem:[%s1 + $0x178] sm:$0xf]
  %v187 = vld [vmem:[%s1 + $0x17c] sm:$0xf]
  %v188 = vld [vmem:[%s1 + $0x180] sm:$0xf]
  %v189 = vld [vmem:[%s1 + $0x184] sm:$0xf]
  %v190 = vld [vmem:[%s1 + $0x188] sm:$0xf]
  %v191 = vld [vmem:[%s1 + $0x18c] sm:$0xf]
  %v192 = vld [vmem:[%s1 + $0x190] sm:$0xf]
  %v193 = vld [vmem:[%s1 + $0x194] sm:$0xf]
  %v194 = vld [vmem:[%s1 + $0x198] sm:$0xf]
  %v195 = vld [vmem:[%s1 + $0x19c] sm:$0xf]
  %v196 = vld [vmem:[%s1 + $0x1a0] sm:$0xf]
  %v197 = vld [vmem:[%s1 + $0x1a4] sm:$0xf]
  %v198 = vld [vmem:[%s1 + $0x1a8] sm:$0xf]
  %v199 = vld [vmem:[%s1 + $0x1ac] sm:$0xf]
  %v200 = vld [vmem:[%s1 + $0x1b0] sm:$0xf]
  %v201 = vld [vmem:[%s1 + $0x1b4] sm:$0xf]
  %v202 = vld [vmem:[%s1 + $0x1b8] sm:$0xf]
  %v203 = vld [vmem:[%s1 + $0x1bc] sm:$0xf]
  %v204 = vld [vmem:[%s1 + $0x1c0] sm:$0xf]
  %v205 = vld [vmem:[%s1 + $0x1c4] sm:$0xf]
  %v206 = vld [vmem:[%s1 + $0x1c8] sm:$0xf]
  %v207 = vld [vmem:[%s1 + $0x1cc] sm:$0xf]
  %v208 = vld [vmem:[%s1 + $0x1d0] sm:$0xf]
  %v209 = vld [vmem:[%s1 + $0x1d4] sm:$0xf]
  %v210 = vld [vmem:[%s1 + $0x1d8] sm:$0xf]
  %v211 = vld [vmem:[%s1 + $0x1dc] sm:$0xf]
  %v212 = vld [vmem:[%s1 + $0x1e0] sm:$0xf]
  %v213 = vld [vmem:[%s1 + $0x1e4] sm:$0xf]
  %v214 = vld [vmem:[%s1 + $0x1e8] sm:$0xf]
  %v215 = vld [vmem:[%s1 + $0x1ec] sm:$0xf]
  %v216 = vld [vmem:[%s1 + $0x1f0] sm:$0xf]
  %v217 = vld [vmem:[%s1 + $0x1f4] sm:$0xf]
  %v218 = vld [vmem:[%s1 + $0x1f8] sm:$0xf]
  %v219 = vld [vmem:[%s1 + $0x1fc] sm:$0xf]
  %v220 = vld [vmem:[%s2] sm:$0x1]
  %v222 = vlaneseq
  %v223 = vshrl.u32 %v222, 7
  %v224 = vsub.s32 0, %v223
  %v225 = vrot.slane %v220, %v224
  %v291 = vunpack.c.l.b16 %v28
  %v292 = vunpack.c.h.b16 %v28
  %v293 = vunpack.c.l.b16 %v29
  %v294 = vunpack.c.h.b16 %v29
  %v295 = vunpack.c.l.b16 %v30
  %v296 = vunpack.c.h.b16 %v30
  %v297 = vunpack.c.l.b16 %v31
  %v298 = vunpack.c.h.b16 %v31
  %v299 = vunpack.c.l.b16 %v32
  %v300 = vunpack.c.h.b16 %v32
  %v301 = vunpack.c.l.b16 %v33
  %v302 = vunpack.c.h.b16 %v33
  %v303 = vunpack.c.l.b16 %v34
  %v304 = vunpack.c.h.b16 %v34
  %v305 = vunpack.c.l.b16 %v35
  %v306 = vunpack.c.h.b16 %v35
  %v307 = vunpack.c.l.b16 %v36
  %v308 = vunpack.c.h.b16 %v36
  %v309 = vunpack.c.l.b16 %v37
  %v310 = vunpack.c.h.b16 %v37
  %v311 = vunpack.c.l.b16 %v38
  %v312 = vunpack.c.h.b16 %v38
  %v313 = vunpack.c.l.b16 %v39
  %v314 = vunpack.c.h.b16 %v39
  %v315 = vunpack.c.l.b16 %v40
  %v316 = vunpack.c.h.b16 %v40
  %v317 = vunpack.c.l.b16 %v41
  %v318 = vunpack.c.h.b16 %v41
  %v319 = vunpack.c.l.b16 %v42
  %v320 = vunpack.c.h.b16 %v42
  %v321 = vunpack.c.l.b16 %v43
  %v322 = vunpack.c.h.b16 %v43
  %v323 = vunpack.c.l.b16 %v44
  %v324 = vunpack.c.h.b16 %v44
  %v325 = vunpack.c.l.b16 %v45
  %v326 = vunpack.c.h.b16 %v45
  %v327 = vunpack.c.l.b16 %v46
  %v328 = vunpack.c.h.b16 %v46
  %v329 = vunpack.c.l.b16 %v47
  %v330 = vunpack.c.h.b16 %v47
  %v331 = vunpack.c.l.b16 %v48
  %v332 = vunpack.c.h.b16 %v48
  %v333 = vunpack.c.l.b16 %v49
  %v334 = vunpack.c.h.b16 %v49
  %v335 = vunpack.c.l.b16 %v50
  %v336 = vunpack.c.h.b16 %v50
  %v337 = vunpack.c.l.b16 %v51
  %v338 = vunpack.c.h.b16 %v51
  %v339 = vunpack.c.l.b16 %v52
  %v340 = vunpack.c.h.b16 %v52
  %v341 = vunpack.c.l.b16 %v53
  %v342 = vunpack.c.h.b16 %v53
  %v343 = vunpack.c.l.b16 %v54
  %v344 = vunpack.c.h.b16 %v54
  %v345 = vunpack.c.l.b16 %v55
  %v346 = vunpack.c.h.b16 %v55
  %v347 = vunpack.c.l.b16 %v56
  %v348 = vunpack.c.h.b16 %v56
  %v349 = vunpack.c.l.b16 %v57
  %v350 = vunpack.c.h.b16 %v57
  %v351 = vunpack.c.l.b16 %v58
  %v352 = vunpack.c.h.b16 %v58
  %v353 = vunpack.c.l.b16 %v59
  %v354 = vunpack.c.h.b16 %v59
  %v355 = vunpack.c.l.b16 %v60
  %v356 = vunpack.c.h.b16 %v60
  %v357 = vunpack.c.l.b16 %v61
  %v358 = vunpack.c.h.b16 %v61
  %v359 = vunpack.c.l.b16 %v62
  %v360 = vunpack.c.h.b16 %v62
  %v361 = vunpack.c.l.b16 %v63
  %v362 = vunpack.c.h.b16 %v63
  %v363 = vunpack.c.l.b16 %v64
  %v364 = vunpack.c.h.b16 %v64
  %v365 = vunpack.c.l.b16 %v65
  %v366 = vunpack.c.h.b16 %v65
  %v367 = vunpack.c.l.b16 %v66
  %v368 = vunpack.c.h.b16 %v66
  %v369 = vunpack.c.l.b16 %v67
  %v370 = vunpack.c.h.b16 %v67
  %v371 = vunpack.c.l.b16 %v68
  %v372 = vunpack.c.h.b16 %v68
  %v373 = vunpack.c.l.b16 %v69
  %v374 = vunpack.c.h.b16 %v69
  %v375 = vunpack.c.l.b16 %v70
  %v376 = vunpack.c.h.b16 %v70
  %v377 = vunpack.c.l.b16 %v71
  %v378 = vunpack.c.h.b16 %v71
  %v379 = vunpack.c.l.b16 %v72
  %v380 = vunpack.c.h.b16 %v72
  %v381 = vunpack.c.l.b16 %v73
  %v382 = vunpack.c.h.b16 %v73
  %v383 = vunpack.c.l.b16 %v74
  %v384 = vunpack.c.h.b16 %v74
  %v385 = vunpack.c.l.b16 %v75
  %v386 = vunpack.c.h.b16 %v75
  %v387 = vunpack.c.l.b16 %v76
  %v388 = vunpack.c.h.b16 %v76
  %v389 = vunpack.c.l.b16 %v77
  %v390 = vunpack.c.h.b16 %v77
  %v391 = vunpack.c.l.b16 %v78
  %v392 = vunpack.c.h.b16 %v78
  %v393 = vunpack.c.l.b16 %v79
  %v394 = vunpack.c.h.b16 %v79
  %v395 = vunpack.c.l.b16 %v80
  %v396 = vunpack.c.h.b16 %v80
  %v397 = vunpack.c.l.b16 %v81
  %v398 = vunpack.c.h.b16 %v81
  %v399 = vunpack.c.l.b16 %v82
  %v400 = vunpack.c.h.b16 %v82
  %v401 = vunpack.c.l.b16 %v83
  %v402 = vunpack.c.h.b16 %v83
  %v403 = vunpack.c.l.b16 %v84
  %v404 = vunpack.c.h.b16 %v84
  %v405 = vunpack.c.l.b16 %v85
  %v406 = vunpack.c.h.b16 %v85
  %v407 = vunpack.c.l.b16 %v86
  %v408 = vunpack.c.h.b16 %v86
  %v409 = vunpack.c.l.b16 %v87
  %v410 = vunpack.c.h.b16 %v87
  %v411 = vunpack.c.l.b16 %v88
  %v412 = vunpack.c.h.b16 %v88
  %v413 = vunpack.c.l.b16 %v89
  %v414 = vunpack.c.h.b16 %v89
  %v415 = vunpack.c.l.b16 %v90
  %v416 = vunpack.c.h.b16 %v90
  %v417 = vunpack.c.l.b16 %v91
  %v418 = vunpack.c.h.b16 %v91
  %v419 = vpack.c.b16 %v299, %v291
  %v420 = vpack.c.b16 %v300, %v292
  %v421 = vpack.c.b16 %v301, %v293
  %v422 = vpack.c.b16 %v302, %v294
  %v423 = vpack.c.b16 %v303, %v295
  %v424 = vpack.c.b16 %v304, %v296
  %v425 = vpack.c.b16 %v305, %v297
  %v426 = vpack.c.b16 %v306, %v298
  %v427 = vpack.c.b16 %v315, %v307
  %v428 = vpack.c.b16 %v316, %v308
  %v429 = vpack.c.b16 %v317, %v309
  %v430 = vpack.c.b16 %v318, %v310
  %v431 = vpack.c.b16 %v319, %v311
  %v432 = vpack.c.b16 %v320, %v312
  %v433 = vpack.c.b16 %v321, %v313
  %v434 = vpack.c.b16 %v322, %v314
  %v435 = vpack.c.b16 %v331, %v323
  %v436 = vpack.c.b16 %v332, %v324
  %v437 = vpack.c.b16 %v333, %v325
  %v438 = vpack.c.b16 %v334, %v326
  %v439 = vpack.c.b16 %v335, %v327
  %v440 = vpack.c.b16 %v336, %v328
  %v441 = vpack.c.b16 %v337, %v329
  %v442 = vpack.c.b16 %v338, %v330
  %v443 = vpack.c.b16 %v347, %v339
  %v444 = vpack.c.b16 %v348, %v340
  %v445 = vpack.c.b16 %v349, %v341
  %v446 = vpack.c.b16 %v350, %v342
  %v447 = vpack.c.b16 %v351, %v343
  %v448 = vpack.c.b16 %v352, %v344
  %v449 = vpack.c.b16 %v353, %v345
  %v450 = vpack.c.b16 %v354, %v346
  %v451 = vpack.c.b16 %v363, %v355
  %v452 = vpack.c.b16 %v364, %v356
  %v453 = vpack.c.b16 %v365, %v357
  %v454 = vpack.c.b16 %v366, %v358
  %v455 = vpack.c.b16 %v367, %v359
  %v456 = vpack.c.b16 %v368, %v360
  %v457 = vpack.c.b16 %v369, %v361
  %v458 = vpack.c.b16 %v370, %v362
  %v459 = vpack.c.b16 %v379, %v371
  %v460 = vpack.c.b16 %v380, %v372
  %v461 = vpack.c.b16 %v381, %v373
  %v462 = vpack.c.b16 %v382, %v374
  %v463 = vpack.c.b16 %v383, %v375
  %v464 = vpack.c.b16 %v384, %v376
  %v465 = vpack.c.b16 %v385, %v377
  %v466 = vpack.c.b16 %v386, %v378
  %v467 = vpack.c.b16 %v395, %v387
  %v468 = vpack.c.b16 %v396, %v388
  %v469 = vpack.c.b16 %v397, %v389
  %v470 = vpack.c.b16 %v398, %v390
  %v471 = vpack.c.b16 %v399, %v391
  %v472 = vpack.c.b16 %v400, %v392
  %v473 = vpack.c.b16 %v401, %v393
  %v474 = vpack.c.b16 %v402, %v394
  %v475 = vpack.c.b16 %v411, %v403
  %v476 = vpack.c.b16 %v412, %v404
  %v477 = vpack.c.b16 %v413, %v405
  %v478 = vpack.c.b16 %v414, %v406
  %v479 = vpack.c.b16 %v415, %v407
  %v480 = vpack.c.b16 %v416, %v408
  %v481 = vpack.c.b16 %v417, %v409
  %v482 = vpack.c.b16 %v418, %v410
  %v675 = vunpack.c.l.b16 %v92
  %v676 = vunpack.c.l.b16 %v93
  %v677 = vunpack.c.l.b16 %v94
  %v678 = vunpack.c.l.b16 %v95
  %v679 = vunpack.c.l.b16 %v96
  %v680 = vunpack.c.l.b16 %v97
  %v681 = vunpack.c.l.b16 %v98
  %v682 = vunpack.c.l.b16 %v99
  %v683 = vunpack.c.l.b16 %v100
  %v684 = vunpack.c.l.b16 %v101
  %v685 = vunpack.c.l.b16 %v102
  %v686 = vunpack.c.l.b16 %v103
  %v687 = vunpack.c.l.b16 %v104
  %v688 = vunpack.c.l.b16 %v105
  %v689 = vunpack.c.l.b16 %v106
  %v690 = vunpack.c.l.b16 %v107
  %v691 = vunpack.c.l.b16 %v108
  %v692 = vunpack.c.l.b16 %v109
  %v693 = vunpack.c.l.b16 %v110
  %v694 = vunpack.c.l.b16 %v111
  %v695 = vunpack.c.l.b16 %v112
  %v696 = vunpack.c.l.b16 %v113
  %v697 = vunpack.c.l.b16 %v114
  %v698 = vunpack.c.l.b16 %v115
  %v699 = vunpack.c.l.b16 %v116
  %v700 = vunpack.c.l.b16 %v117
  %v701 = vunpack.c.l.b16 %v118
  %v702 = vunpack.c.l.b16 %v119
  %v703 = vunpack.c.l.b16 %v120
  %v704 = vunpack.c.l.b16 %v121
  %v705 = vunpack.c.l.b16 %v122
  %v706 = vunpack.c.l.b16 %v123
  %v707 = vunpack.c.l.b16 %v124
  %v708 = vunpack.c.l.b16 %v125
  %v709 = vunpack.c.l.b16 %v126
  %v710 = vunpack.c.l.b16 %v127
  %v711 = vunpack.c.l.b16 %v128
  %v712 = vunpack.c.l.b16 %v129
  %v713 = vunpack.c.l.b16 %v130
  %v714 = vunpack.c.l.b16 %v131
  %v715 = vunpack.c.l.b16 %v132
  %v716 = vunpack.c.l.b16 %v133
  %v717 = vunpack.c.l.b16 %v134
  %v718 = vunpack.c.l.b16 %v135
  %v719 = vunpack.c.l.b16 %v136
  %v720 = vunpack.c.l.b16 %v137
  %v721 = vunpack.c.l.b16 %v138
  %v722 = vunpack.c.l.b16 %v139
  %v723 = vunpack.c.l.b16 %v140
  %v724 = vunpack.c.l.b16 %v141
  %v725 = vunpack.c.l.b16 %v142
  %v726 = vunpack.c.l.b16 %v143
  %v727 = vunpack.c.l.b16 %v144
  %v728 = vunpack.c.l.b16 %v145
  %v729 = vunpack.c.l.b16 %v146
  %v730 = vunpack.c.l.b16 %v147
  %v731 = vunpack.c.l.b16 %v148
  %v732 = vunpack.c.l.b16 %v149
  %v733 = vunpack.c.l.b16 %v150
  %v734 = vunpack.c.l.b16 %v151
  %v735 = vunpack.c.l.b16 %v152
  %v736 = vunpack.c.l.b16 %v153
  %v737 = vunpack.c.l.b16 %v154
  %v738 = vunpack.c.l.b16 %v155
  %v739 = vunpack.c.l.b16 %v156
  %v740 = vunpack.c.l.b16 %v157
  %v741 = vunpack.c.l.b16 %v158
  %v742 = vunpack.c.l.b16 %v159
  %v743 = vunpack.c.l.b16 %v160
  %v744 = vunpack.c.l.b16 %v161
  %v745 = vunpack.c.l.b16 %v162
  %v746 = vunpack.c.l.b16 %v163
  %v747 = vunpack.c.l.b16 %v164
  %v748 = vunpack.c.l.b16 %v165
  %v749 = vunpack.c.l.b16 %v166
  %v750 = vunpack.c.l.b16 %v167
  %v751 = vunpack.c.l.b16 %v168
  %v752 = vunpack.c.l.b16 %v169
  %v753 = vunpack.c.l.b16 %v170
  %v754 = vunpack.c.l.b16 %v171
  %v755 = vunpack.c.l.b16 %v172
  %v756 = vunpack.c.l.b16 %v173
  %v757 = vunpack.c.l.b16 %v174
  %v758 = vunpack.c.l.b16 %v175
  %v759 = vunpack.c.l.b16 %v176
  %v760 = vunpack.c.l.b16 %v177
  %v761 = vunpack.c.l.b16 %v178
  %v762 = vunpack.c.l.b16 %v179
  %v763 = vunpack.c.l.b16 %v180
  %v764 = vunpack.c.l.b16 %v181
  %v765 = vunpack.c.l.b16 %v182
  %v766 = vunpack.c.l.b16 %v183
  %v767 = vunpack.c.l.b16 %v184
  %v768 = vunpack.c.l.b16 %v185
  %v769 = vunpack.c.l.b16 %v186
  %v770 = vunpack.c.l.b16 %v187
  %v771 = vunpack.c.l.b16 %v188
  %v772 = vunpack.c.l.b16 %v189
  %v773 = vunpack.c.l.b16 %v190
  %v774 = vunpack.c.l.b16 %v191
  %v775 = vunpack.c.l.b16 %v192
  %v776 = vunpack.c.l.b16 %v193
  %v777 = vunpack.c.l.b16 %v194
  %v778 = vunpack.c.l.b16 %v195
  %v779 = vunpack.c.l.b16 %v196
  %v780 = vunpack.c.l.b16 %v197
  %v781 = vunpack.c.l.b16 %v198
  %v782 = vunpack.c.l.b16 %v199
  %v783 = vunpack.c.l.b16 %v200
  %v784 = vunpack.c.l.b16 %v201
  %v785 = vunpack.c.l.b16 %v202
  %v786 = vunpack.c.l.b16 %v203
  %v787 = vunpack.c.l.b16 %v204
  %v788 = vunpack.c.l.b16 %v205
  %v789 = vunpack.c.l.b16 %v206
  %v790 = vunpack.c.l.b16 %v207
  %v791 = vunpack.c.l.b16 %v208
  %v792 = vunpack.c.l.b16 %v209
  %v793 = vunpack.c.l.b16 %v210
  %v794 = vunpack.c.l.b16 %v211
  %v795 = vunpack.c.l.b16 %v212
  %v796 = vunpack.c.l.b16 %v213
  %v797 = vunpack.c.l.b16 %v214
  %v798 = vunpack.c.l.b16 %v215
  %v799 = vunpack.c.l.b16 %v216
  %v800 = vunpack.c.l.b16 %v217
  %v801 = vunpack.c.l.b16 %v218
  %v802 = vunpack.c.l.b16 %v219
  %v803 = vpack.c.b16 %v676, %v675
  %v804 = vpack.c.b16 %v678, %v677
  %v805 = vpack.c.b16 %v680, %v679
  %v806 = vpack.c.b16 %v682, %v681
  %v807 = vpack.c.b16 %v684, %v683
  %v808 = vpack.c.b16 %v686, %v685
  %v809 = vpack.c.b16 %v688, %v687
  %v810 = vpack.c.b16 %v690, %v689
  %v811 = vpack.c.b16 %v692, %v691
  %v812 = vpack.c.b16 %v694, %v693
  %v813 = vpack.c.b16 %v696, %v695
  %v814 = vpack.c.b16 %v698, %v697
  %v815 = vpack.c.b16 %v700, %v699
  %v816 = vpack.c.b16 %v702, %v701
  %v817 = vpack.c.b16 %v704, %v703
  %v818 = vpack.c.b16 %v706, %v705
  %v819 = vpack.c.b16 %v708, %v707
  %v820 = vpack.c.b16 %v710, %v709
  %v821 = vpack.c.b16 %v712, %v711
  %v822 = vpack.c.b16 %v714, %v713
  %v823 = vpack.c.b16 %v716, %v715
  %v824 = vpack.c.b16 %v718, %v717
  %v825 = vpack.c.b16 %v720, %v719
  %v826 = vpack.c.b16 %v722, %v721
  %v827 = vpack.c.b16 %v724, %v723
  %v828 = vpack.c.b16 %v726, %v725
  %v829 = vpack.c.b16 %v728, %v727
  %v830 = vpack.c.b16 %v730, %v729
  %v831 = vpack.c.b16 %v732, %v731
  %v832 = vpack.c.b16 %v734, %v733
  %v833 = vpack.c.b16 %v736, %v735
  %v834 = vpack.c.b16 %v738, %v737
  %v835 = vpack.c.b16 %v740, %v739
  %v836 = vpack.c.b16 %v742, %v741
  %v837 = vpack.c.b16 %v744, %v743
  %v838 = vpack.c.b16 %v746, %v745
  %v839 = vpack.c.b16 %v748, %v747
  %v840 = vpack.c.b16 %v750, %v749
  %v841 = vpack.c.b16 %v752, %v751
  %v842 = vpack.c.b16 %v754, %v753
  %v843 = vpack.c.b16 %v756, %v755
  %v844 = vpack.c.b16 %v758, %v757
  %v845 = vpack.c.b16 %v760, %v759
  %v846 = vpack.c.b16 %v762, %v761
  %v847 = vpack.c.b16 %v764, %v763
  %v848 = vpack.c.b16 %v766, %v765
  %v849 = vpack.c.b16 %v768, %v767
  %v850 = vpack.c.b16 %v770, %v769
  %v851 = vpack.c.b16 %v772, %v771
  %v852 = vpack.c.b16 %v774, %v773
  %v853 = vpack.c.b16 %v776, %v775
  %v854 = vpack.c.b16 %v778, %v777
  %v855 = vpack.c.b16 %v780, %v779
  %v856 = vpack.c.b16 %v782, %v781
  %v857 = vpack.c.b16 %v784, %v783
  %v858 = vpack.c.b16 %v786, %v785
  %v859 = vpack.c.b16 %v788, %v787
  %v860 = vpack.c.b16 %v790, %v789
  %v861 = vpack.c.b16 %v792, %v791
  %v862 = vpack.c.b16 %v794, %v793
  %v863 = vpack.c.b16 %v796, %v795
  %v864 = vpack.c.b16 %v798, %v797
  %v865 = vpack.c.b16 %v800, %v799
  %v866 = vpack.c.b16 %v802, %v801
  %931 = vmatprep.subr.bf16.mxu0 0
  %932 = vmatpush1.bf16.msra.mxu0 %v803
  %933 = vmatprep.subr.bf16.mxu0 0
  %934 = vmatpush1.bf16.msra.mxu0 %v804
  %935 = vmatprep.subr.bf16.mxu0 0
  %936 = vmatpush1.bf16.msra.mxu0 %v805
  %937 = vmatprep.subr.bf16.mxu0 0
  %938 = vmatpush1.bf16.msra.mxu0 %v806
  %939 = vmatprep.subr.bf16.mxu0 0
  %940 = vmatpush1.bf16.msra.mxu0 %v807
  %941 = vmatprep.subr.bf16.mxu0 0
  %942 = vmatpush1.bf16.msra.mxu0 %v808
  %943 = vmatprep.subr.bf16.mxu0 0
  %944 = vmatpush1.bf16.msra.mxu0 %v809
  %945 = vmatprep.subr.bf16.mxu0 0
  %946 = vmatpush1.bf16.msra.mxu0 %v810
  %947 = vmatprep.subr.bf16.mxu0 0
  %948 = vmatpush1.bf16.msra.mxu0 %v811
  %949 = vmatprep.subr.bf16.mxu0 0
  %950 = vmatpush1.bf16.msra.mxu0 %v812
  %951 = vmatprep.subr.bf16.mxu0 0
  %952 = vmatpush1.bf16.msra.mxu0 %v813
  %953 = vmatprep.subr.bf16.mxu0 0
  %954 = vmatpush1.bf16.msra.mxu0 %v814
  %955 = vmatprep.subr.bf16.mxu0 0
  %956 = vmatpush1.bf16.msra.mxu0 %v815
  %957 = vmatprep.subr.bf16.mxu0 0
  %958 = vmatpush1.bf16.msra.mxu0 %v816
  %959 = vmatprep.subr.bf16.mxu0 0
  %960 = vmatpush1.bf16.msra.mxu0 %v817
  %961 = vmatprep.subr.bf16.mxu0 0
  %962 = vmatpush1.bf16.msra.mxu0 %v818
  %963 = vmatprep.mubr.bf16.mxu0 %v420
  %964 = vmatmul.mubr.bf16.gmra.mrb[0].mxu0 %v419
  %v965 = vpop.f32.mrb[0].mxu0
  %v966 = vadd.f32 %v225, %v965
  %v967 = vpop.f32.mrb[0].mxu0
  %v968 = vpop.f32.mrb[0].mxu0
  %v969 = vadd.f32 %v225, %v968
  %v970 = vpop.f32.mrb[0].mxu0
  %971 = vmatprep.mubr.bf16.mxu0 %v428
  %972 = vmatmul.mubr.bf16.gmra.mrb[0].mxu0 %v427
  %v973 = vpop.f32.mrb[0].mxu0
  %v974 = vadd.f32 %v225, %v973
  %v975 = vpop.f32.mrb[0].mxu0
  %v976 = vpop.f32.mrb[0].mxu0
  %v977 = vadd.f32 %v225, %v976
  %v978 = vpop.f32.mrb[0].mxu0
  %979 = vmatprep.mubr.bf16.mxu0 %v436
  %980 = vmatmul.mubr.bf16.gmra.mrb[0].mxu0 %v435
  %v981 = vpop.f32.mrb[0].mxu0
  %v982 = vadd.f32 %v225, %v981
  %v983 = vpop.f32.mrb[0].mxu0
  %v984 = vpop.f32.mrb[0].mxu0
  %v985 = vadd.f32 %v225, %v984
  %v986 = vpop.f32.mrb[0].mxu0
  %987 = vmatprep.mubr.bf16.mxu0 %v444
  %988 = vmatmul.mubr.bf16.gmra.mrb[0].mxu0 %v443
  %v989 = vpop.f32.mrb[0].mxu0
  %v990 = vadd.f32 %v225, %v989
  %v991 = vpop.f32.mrb[0].mxu0
  %v992 = vpop.f32.mrb[0].mxu0
  %v993 = vadd.f32 %v225, %v992
  %v994 = vpop.f32.mrb[0].mxu0
  %995 = vmatprep.mubr.bf16.mxu0 %v452
  %996 = vmatmul.mubr.bf16.gmra.mrb[0].mxu0 %v451
  %v997 = vpop.f32.mrb[0].mxu0
  %v998 = vadd.f32 %v225, %v997
  %v999 = vpop.f32.mrb[0].mxu0
  %v1000 = vpop.f32.mrb[0].mxu0
  %v1001 = vadd.f32 %v225, %v1000
  %v1002 = vpop.f32.mrb[0].mxu0
  %1003 = vmatprep.mubr.bf16.mxu0 %v460
  %1004 = vmatmul.mubr.bf16.gmra.mrb[0].mxu0 %v459
  %v1005 = vpop.f32.mrb[0].mxu0
  %v1006 = vadd.f32 %v225, %v1005
  %v1007 = vpop.f32.mrb[0].mxu0
  %v1008 = vpop.f32.mrb[0].mxu0
  %v1009 = vadd.f32 %v225, %v1008
  %v1010 = vpop.f32.mrb[0].mxu0
  %1011 = vmatprep.mubr.bf16.mxu0 %v468
  %1012 = vmatmul.mubr.bf16.gmra.mrb[0].mxu0 %v467
  %v1013 = vpop.f32.mrb[0].mxu0
  %v1014 = vadd.f32 %v225, %v1013
  %v1015 = vpop.f32.mrb[0].mxu0
  %v1016 = vpop.f32.mrb[0].mxu0
  %v1017 = vadd.f32 %v225, %v1016
  %v1018 = vpop.f32.mrb[0].mxu0
  %1019 = vmatprep.mubr.bf16.mxu0 %v476
  %1020 = vmatmul.mubr.bf16.gmra.mrb[0].mxu0 %v475
  %v1021 = vpop.f32.mrb[0].mxu0
  %v1022 = vadd.f32 %v225, %v1021
  %v1023 = vpop.f32.mrb[0].mxu0
  %v1024 = vpop.f32.mrb[0].mxu0
  %v1025 = vadd.f32 %v225, %v1024
  %v1026 = vpop.f32.mrb[0].mxu0
  %1027 = vdwg.mxu0
  %1028 = vmatprep.subr.bf16.mxu0 0
  %1029 = vmatpush1.bf16.msra.mxu0 %v819
  %1030 = vmatprep.subr.bf16.mxu0 0
  %1031 = vmatpush1.bf16.msra.mxu0 %v820
  %1032 = vmatprep.subr.bf16.mxu0 0
  %1033 = vmatpush1.bf16.msra.mxu0 %v821
  %1034 = vmatprep.subr.bf16.mxu0 0
  %1035 = vmatpush1.bf16.msra.mxu0 %v822
  %1036 = vmatprep.subr.bf16.mxu0 0
  %1037 = vmatpush1.bf16.msra.mxu0 %v823
  %1038 = vmatprep.subr.bf16.mxu0 0
  %1039 = vmatpush1.bf16.msra.mxu0 %v824
  %1040 = vmatprep.subr.bf16.mxu0 0
  %1041 = vmatpush1.bf16.msra.mxu0 %v825
  %1042 = vmatprep.subr.bf16.mxu0 0
  %1043 = vmatpush1.bf16.msra.mxu0 %v826
  %1044 = vmatprep.subr.bf16.mxu0 0
  %1045 = vmatpush1.bf16.msra.mxu0 %v827
  %1046 = vmatprep.subr.bf16.mxu0 0
  %1047 = vmatpush1.bf16.msra.mxu0 %v828
  %1048 = vmatprep.subr.bf16.mxu0 0
  %1049 = vmatpush1.bf16.msra.mxu0 %v829
  %1050 = vmatprep.subr.bf16.mxu0 0
  %1051 = vmatpush1.bf16.msra.mxu0 %v830
  %1052 = vmatprep.subr.bf16.mxu0 0
  %1053 = vmatpush1.bf16.msra.mxu0 %v831
  %1054 = vmatprep.subr.bf16.mxu0 0
  %1055 = vmatpush1.bf16.msra.mxu0 %v832
  %1056 = vmatprep.subr.bf16.mxu0 0
  %1057 = vmatpush1.bf16.msra.mxu0 %v833
  %1058 = vmatprep.subr.bf16.mxu0 0
  %1059 = vmatpush1.bf16.msra.mxu0 %v834
  %1060 = vmatprep.mubr.bf16.mxu0 %v422
  %1061 = vmatmul.mubr.bf16.gmra.mrb[0].mxu0 %v421
  %v1062 = vpop.f32.mrb[0].mxu0
  %v1063 = vadd.f32 %v966, %v1062
  %v1064 = vpop.f32.mrb[0].mxu0
  %v1065 = vpop.f32.mrb[0].mxu0
  %v1066 = vadd.f32 %v969, %v1065
  %v1067 = vpop.f32.mrb[0].mxu0
  %1068 = vmatprep.mubr.bf16.mxu0 %v430
  %1069 = vmatmul.mubr.bf16.gmra.mrb[0].mxu0 %v429
  %v1070 = vpop.f32.mrb[0].mxu0
  %v1071 = vadd.f32 %v974, %v1070
  %v1072 = vpop.f32.mrb[0].mxu0
  %v1073 = vpop.f32.mrb[0].mxu0
  %v1074 = vadd.f32 %v977, %v1073
  %v1075 = vpop.f32.mrb[0].mxu0
  %1076 = vmatprep.mubr.bf16.mxu0 %v438
  %1077 = vmatmul.mubr.bf16.gmra.mrb[0].mxu0 %v437
  %v1078 = vpop.f32.mrb[0].mxu0
  %v1079 = vadd.f32 %v982, %v1078
  %v1080 = vpop.f32.mrb[0].mxu0
  %v1081 = vpop.f32.mrb[0].mxu0
  %v1082 = vadd.f32 %v985, %v1081
  %v1083 = vpop.f32.mrb[0].mxu0
  %1084 = vmatprep.mubr.bf16.mxu0 %v446
  %1085 = vmatmul.mubr.bf16.gmra.mrb[0].mxu0 %v445
  %v1086 = vpop.f32.mrb[0].mxu0
  %v1087 = vadd.f32 %v990, %v1086
  %v1088 = vpop.f32.mrb[0].mxu0
  %v1089 = vpop.f32.mrb[0].mxu0
  %v1090 = vadd.f32 %v993, %v1089
  %v1091 = vpop.f32.mrb[0].mxu0
  %1092 = vmatprep.mubr.bf16.mxu0 %v454
  %1093 = vmatmul.mubr.bf16.gmra.mrb[0].mxu0 %v453
  %v1094 = vpop.f32.mrb[0].mxu0
  %v1095 = vadd.f32 %v998, %v1094
  %v1096 = vpop.f32.mrb[0].mxu0
  %v1097 = vpop.f32.mrb[0].mxu0
  %v1098 = vadd.f32 %v1001, %v1097
  %v1099 = vpop.f32.mrb[0].mxu0
  %1100 = vmatprep.mubr.bf16.mxu0 %v462
  %1101 = vmatmul.mubr.bf16.gmra.mrb[0].mxu0 %v461
  %v1102 = vpop.f32.mrb[0].mxu0
  %v1103 = vadd.f32 %v1006, %v1102
  %v1104 = vpop.f32.mrb[0].mxu0
  %v1105 = vpop.f32.mrb[0].mxu0
  %v1106 = vadd.f32 %v1009, %v1105
  %v1107 = vpop.f32.mrb[0].mxu0
  %1108 = vmatprep.mubr.bf16.mxu0 %v470
  %1109 = vmatmul.mubr.bf16.gmra.mrb[0].mxu0 %v469
  %v1110 = vpop.f32.mrb[0].mxu0
  %v1111 = vadd.f32 %v1014, %v1110
  %v1112 = vpop.f32.mrb[0].mxu0
  %v1113 = vpop.f32.mrb[0].mxu0
  %v1114 = vadd.f32 %v1017, %v1113
  %v1115 = vpop.f32.mrb[0].mxu0
  %1116 = vmatprep.mubr.bf16.mxu0 %v478
  %1117 = vmatmul.mubr.bf16.gmra.mrb[0].mxu0 %v477
  %v1118 = vpop.f32.mrb[0].mxu0
  %v1119 = vadd.f32 %v1022, %v1118
  %v1120 = vpop.f32.mrb[0].mxu0
  %v1121 = vpop.f32.mrb[0].mxu0
  %v1122 = vadd.f32 %v1025, %v1121
  %v1123 = vpop.f32.mrb[0].mxu0
  %1124 = vdwg.mxu0
  %1125 = vmatprep.subr.bf16.mxu0 0
  %1126 = vmatpush1.bf16.msra.mxu0 %v835
  %1127 = vmatprep.subr.bf16.mxu0 0
  %1128 = vmatpush1.bf16.msra.mxu0 %v836
  %1129 = vmatprep.subr.bf16.mxu0 0
  %1130 = vmatpush1.bf16.msra.mxu0 %v837
  %1131 = vmatprep.subr.bf16.mxu0 0
  %1132 = vmatpush1.bf16.msra.mxu0 %v838
  %1133 = vmatprep.subr.bf16.mxu0 0
  %1134 = vmatpush1.bf16.msra.mxu0 %v839
  %1135 = vmatprep.subr.bf16.mxu0 0
  %1136 = vmatpush1.bf16.msra.mxu0 %v840
  %1137 = vmatprep.subr.bf16.mxu0 0
  %1138 = vmatpush1.bf16.msra.mxu0 %v841
  %1139 = vmatprep.subr.bf16.mxu0 0
  %1140 = vmatpush1.bf16.msra.mxu0 %v842
  %1141 = vmatprep.subr.bf16.mxu0 0
  %1142 = vmatpush1.bf16.msra.mxu0 %v843
  %1143 = vmatprep.subr.bf16.mxu0 0
  %1144 = vmatpush1.bf16.msra.mxu0 %v844
  %1145 = vmatprep.subr.bf16.mxu0 0
  %1146 = vmatpush1.bf16.msra.mxu0 %v845
  %1147 = vmatprep.subr.bf16.mxu0 0
  %1148 = vmatpush1.bf16.msra.mxu0 %v846
  %1149 = vmatprep.subr.bf16.mxu0 0
  %1150 = vmatpush1.bf16.msra.mxu0 %v847
  %1151 = vmatprep.subr.bf16.mxu0 0
  %1152 = vmatpush1.bf16.msra.mxu0 %v848
  %1153 = vmatprep.subr.bf16.mxu0 0
  %1154 = vmatpush1.bf16.msra.mxu0 %v849
  %1155 = vmatprep.subr.bf16.mxu0 0
  %1156 = vmatpush1.bf16.msra.mxu0 %v850
  %1157 = vmatprep.mubr.bf16.mxu0 %v424
  %1158 = vmatmul.mubr.bf16.gmra.mrb[0].mxu0 %v423
  %v1159 = vpop.f32.mrb[0].mxu0
  %v1160 = vadd.f32 %v1063, %v1159
  %v1161 = vpop.f32.mrb[0].mxu0
  %v1162 = vpop.f32.mrb[0].mxu0
  %v1163 = vadd.f32 %v1066, %v1162
  %v1164 = vpop.f32.mrb[0].mxu0
  %1165 = vmatprep.mubr.bf16.mxu0 %v432
  %1166 = vmatmul.mubr.bf16.gmra.mrb[0].mxu0 %v431
  %v1167 = vpop.f32.mrb[0].mxu0
  %v1168 = vadd.f32 %v1071, %v1167
  %v1169 = vpop.f32.mrb[0].mxu0
  %v1170 = vpop.f32.mrb[0].mxu0
  %v1171 = vadd.f32 %v1074, %v1170
  %v1172 = vpop.f32.mrb[0].mxu0
  %1173 = vmatprep.mubr.bf16.mxu0 %v440
  %1174 = vmatmul.mubr.bf16.gmra.mrb[0].mxu0 %v439
  %v1175 = vpop.f32.mrb[0].mxu0
  %v1176 = vadd.f32 %v1079, %v1175
  %v1177 = vpop.f32.mrb[0].mxu0
  %v1178 = vpop.f32.mrb[0].mxu0
  %v1179 = vadd.f32 %v1082, %v1178
  %v1180 = vpop.f32.mrb[0].mxu0
  %1181 = vmatprep.mubr.bf16.mxu0 %v448
  %1182 = vmatmul.mubr.bf16.gmra.mrb[0].mxu0 %v447
  %v1183 = vpop.f32.mrb[0].mxu0
  %v1184 = vadd.f32 %v1087, %v1183
  %v1185 = vpop.f32.mrb[0].mxu0
  %v1186 = vpop.f32.mrb[0].mxu0
  %v1187 = vadd.f32 %v1090, %v1186
  %v1188 = vpop.f32.mrb[0].mxu0
  %1189 = vmatprep.mubr.bf16.mxu0 %v456
  %1190 = vmatmul.mubr.bf16.gmra.mrb[0].mxu0 %v455
  %v1191 = vpop.f32.mrb[0].mxu0
  %v1192 = vadd.f32 %v1095, %v1191
  %v1193 = vpop.f32.mrb[0].mxu0
  %v1194 = vpop.f32.mrb[0].mxu0
  %v1195 = vadd.f32 %v1098, %v1194
  %v1196 = vpop.f32.mrb[0].mxu0
  %1197 = vmatprep.mubr.bf16.mxu0 %v464
  %1198 = vmatmul.mubr.bf16.gmra.mrb[0].mxu0 %v463
  %v1199 = vpop.f32.mrb[0].mxu0
  %v1200 = vadd.f32 %v1103, %v1199
  %v1201 = vpop.f32.mrb[0].mxu0
  %v1202 = vpop.f32.mrb[0].mxu0
  %v1203 = vadd.f32 %v1106, %v1202
  %v1204 = vpop.f32.mrb[0].mxu0
  %1205 = vmatprep.mubr.bf16.mxu0 %v472
  %1206 = vmatmul.mubr.bf16.gmra.mrb[0].mxu0 %v471
  %v1207 = vpop.f32.mrb[0].mxu0
  %v1208 = vadd.f32 %v1111, %v1207
  %v1209 = vpop.f32.mrb[0].mxu0
  %v1210 = vpop.f32.mrb[0].mxu0
  %v1211 = vadd.f32 %v1114, %v1210
  %v1212 = vpop.f32.mrb[0].mxu0
  %1213 = vmatprep.mubr.bf16.mxu0 %v480
  %1214 = vmatmul.mubr.bf16.gmra.mrb[0].mxu0 %v479
  %v1215 = vpop.f32.mrb[0].mxu0
  %v1216 = vadd.f32 %v1119, %v1215
  %v1217 = vpop.f32.mrb[0].mxu0
  %v1218 = vpop.f32.mrb[0].mxu0
  %v1219 = vadd.f32 %v1122, %v1218
  %v1220 = vpop.f32.mrb[0].mxu0
  %1221 = vdwg.mxu0
  %1222 = vmatprep.subr.bf16.mxu0 0
  %1223 = vmatpush1.bf16.msra.mxu0 %v851
  %1224 = vmatprep.subr.bf16.mxu0 0
  %1225 = vmatpush1.bf16.msra.mxu0 %v852
  %1226 = vmatprep.subr.bf16.mxu0 0
  %1227 = vmatpush1.bf16.msra.mxu0 %v853
  %1228 = vmatprep.subr.bf16.mxu0 0
  %1229 = vmatpush1.bf16.msra.mxu0 %v854
  %1230 = vmatprep.subr.bf16.mxu0 0
  %1231 = vmatpush1.bf16.msra.mxu0 %v855
  %1232 = vmatprep.subr.bf16.mxu0 0
  %1233 = vmatpush1.bf16.msra.mxu0 %v856
  %1234 = vmatprep.subr.bf16.mxu0 0
  %1235 = vmatpush1.bf16.msra.mxu0 %v857
  %1236 = vmatprep.subr.bf16.mxu0 0
  %1237 = vmatpush1.bf16.msra.mxu0 %v858
  %1238 = vmatprep.subr.bf16.mxu0 0
  %1239 = vmatpush1.bf16.msra.mxu0 %v859
  %1240 = vmatprep.subr.bf16.mxu0 0
  %1241 = vmatpush1.bf16.msra.mxu0 %v860
  %1242 = vmatprep.subr.bf16.mxu0 0
  %1243 = vmatpush1.bf16.msra.mxu0 %v861
  %1244 = vmatprep.subr.bf16.mxu0 0
  %1245 = vmatpush1.bf16.msra.mxu0 %v862
  %1246 = vmatprep.subr.bf16.mxu0 0
  %1247 = vmatpush1.bf16.msra.mxu0 %v863
  %1248 = vmatprep.subr.bf16.mxu0 0
  %1249 = vmatpush1.bf16.msra.mxu0 %v864
  %1250 = vmatprep.subr.bf16.mxu0 0
  %1251 = vmatpush1.bf16.msra.mxu0 %v865
  %1252 = vmatprep.subr.bf16.mxu0 0
  %1253 = vmatpush1.bf16.msra.mxu0 %v866
  %1254 = vmatprep.mubr.bf16.mxu0 %v426
  %1255 = vmatmul.mubr.bf16.gmra.mrb[0].mxu0 %v425
  %v1256 = vpop.f32.mrb[0].mxu0
  %v1257 = vadd.f32 %v1160, %v1256
  %v1258 = vpop.f32.mrb[0].mxu0
  %v1259 = vpop.f32.mrb[0].mxu0
  %v1260 = vadd.f32 %v1163, %v1259
  %v1261 = vpop.f32.mrb[0].mxu0
  %1262 = vmatprep.mubr.bf16.mxu0 %v434
  %1263 = vmatmul.mubr.bf16.gmra.mrb[0].mxu0 %v433
  %v1264 = vpop.f32.mrb[0].mxu0
  %v1265 = vadd.f32 %v1168, %v1264
  %v1266 = vpop.f32.mrb[0].mxu0
  %v1267 = vpop.f32.mrb[0].mxu0
  %v1268 = vadd.f32 %v1171, %v1267
  %v1269 = vpop.f32.mrb[0].mxu0
  %1270 = vmatprep.mubr.bf16.mxu0 %v442
  %1271 = vmatmul.mubr.bf16.gmra.mrb[0].mxu0 %v441
  %v1272 = vpop.f32.mrb[0].mxu0
  %v1273 = vadd.f32 %v1176, %v1272
  %v1274 = vpop.f32.mrb[0].mxu0
  %v1275 = vpop.f32.mrb[0].mxu0
  %v1276 = vadd.f32 %v1179, %v1275
  %v1277 = vpop.f32.mrb[0].mxu0
  %1278 = vmatprep.mubr.bf16.mxu0 %v450
  %1279 = vmatmul.mubr.bf16.gmra.mrb[0].mxu0 %v449
  %v1280 = vpop.f32.mrb[0].mxu0
  %v1281 = vadd.f32 %v1184, %v1280
  %v1282 = vpop.f32.mrb[0].mxu0
  %v1283 = vpop.f32.mrb[0].mxu0
  %v1284 = vadd.f32 %v1187, %v1283
  %v1285 = vpop.f32.mrb[0].mxu0
  %1286 = vmatprep.mubr.bf16.mxu0 %v458
  %1287 = vmatmul.mubr.bf16.gmra.mrb[0].mxu0 %v457
  %v1288 = vpop.f32.mrb[0].mxu0
  %v1289 = vadd.f32 %v1192, %v1288
  %v1290 = vpop.f32.mrb[0].mxu0
  %v1291 = vpop.f32.mrb[0].mxu0
  %v1292 = vadd.f32 %v1195, %v1291
  %v1293 = vpop.f32.mrb[0].mxu0
  %1294 = vmatprep.mubr.bf16.mxu0 %v466
  %1295 = vmatmul.mubr.bf16.gmra.mrb[0].mxu0 %v465
  %v1296 = vpop.f32.mrb[0].mxu0
  %v1297 = vadd.f32 %v1200, %v1296
  %v1298 = vpop.f32.mrb[0].mxu0
  %v1299 = vpop.f32.mrb[0].mxu0
  %v1300 = vadd.f32 %v1203, %v1299
  %v1301 = vpop.f32.mrb[0].mxu0
  %1302 = vmatprep.mubr.bf16.mxu0 %v474
  %1303 = vmatmul.mubr.bf16.gmra.mrb[0].mxu0 %v473
  %v1304 = vpop.f32.mrb[0].mxu0
  %v1305 = vadd.f32 %v1208, %v1304
  %v1306 = vpop.f32.mrb[0].mxu0
  %v1307 = vpop.f32.mrb[0].mxu0
  %v1308 = vadd.f32 %v1211, %v1307
  %v1309 = vpop.f32.mrb[0].mxu0
  %1310 = vmatprep.mubr.bf16.mxu0 %v482
  %1311 = vmatmul.mubr.bf16.gmra.mrb[0].mxu0 %v481
  %v1312 = vpop.f32.mrb[0].mxu0
  %v1313 = vadd.f32 %v1216, %v1312
  %v1314 = vpop.f32.mrb[0].mxu0
  %v1315 = vpop.f32.mrb[0].mxu0
  %v1316 = vadd.f32 %v1219, %v1315
  %v1317 = vpop.f32.mrb[0].mxu0
  %1318 = vdwg.mxu0
  %v1319 = vmax.f32 %v1257, 0.0
  %v1320 = vmax.f32 %v1260, 0.0
  %v1321 = vmax.f32 %v1265, 0.0
  %v1322 = vmax.f32 %v1268, 0.0
  %v1323 = vmax.f32 %v1273, 0.0
  %v1324 = vmax.f32 %v1276, 0.0
  %v1325 = vmax.f32 %v1281, 0.0
  %v1326 = vmax.f32 %v1284, 0.0
  %v1327 = vmax.f32 %v1289, 0.0
  %v1328 = vmax.f32 %v1292, 0.0
  %v1329 = vmax.f32 %v1297, 0.0
  %v1330 = vmax.f32 %v1300, 0.0
  %v1331 = vmax.f32 %v1305, 0.0
  %v1332 = vmax.f32 %v1308, 0.0
  %v1333 = vmax.f32 %v1313, 0.0
  %v1334 = vmax.f32 %v1316, 0.0
  %v1335 = vpack.c.bf16 %v1320, %v1319
  %v1336 = vpack.c.bf16 %v1322, %v1321
  %v1337 = vpack.c.bf16 %v1324, %v1323
  %v1338 = vpack.c.bf16 %v1326, %v1325
  %v1339 = vpack.c.bf16 %v1328, %v1327
  %v1340 = vpack.c.bf16 %v1330, %v1329
  %v1341 = vpack.c.bf16 %v1332, %v1331
  %v1342 = vpack.c.bf16 %v1334, %v1333
  %v1351 = vunpack.c.l.b16 %v1335
  %v1352 = vunpack.c.h.b16 %v1335
  %v1353 = vunpack.c.l.b16 %v1336
  %v1354 = vunpack.c.h.b16 %v1336
  %v1355 = vunpack.c.l.b16 %v1337
  %v1356 = vunpack.c.h.b16 %v1337
  %v1357 = vunpack.c.l.b16 %v1338
  %v1358 = vunpack.c.h.b16 %v1338
  %v1359 = vunpack.c.l.b16 %v1339
  %v1360 = vunpack.c.h.b16 %v1339
  %v1361 = vunpack.c.l.b16 %v1340
  %v1362 = vunpack.c.h.b16 %v1340
  %v1363 = vunpack.c.l.b16 %v1341
  %v1364 = vunpack.c.h.b16 %v1341
  %v1365 = vunpack.c.l.b16 %v1342
  %v1366 = vunpack.c.h.b16 %v1342
  %v1367 = vpack.c.b16 %v1351, %v1351
  %v1368 = vpack.c.b16 %v1352, %v1352
  %v1369 = vpack.c.b16 %v1353, %v1353
  %v1370 = vpack.c.b16 %v1354, %v1354
  %v1371 = vpack.c.b16 %v1355, %v1355
  %v1372 = vpack.c.b16 %v1356, %v1356
  %v1373 = vpack.c.b16 %v1357, %v1357
  %v1374 = vpack.c.b16 %v1358, %v1358
  %v1375 = vpack.c.b16 %v1359, %v1359
  %v1376 = vpack.c.b16 %v1360, %v1360
  %v1377 = vpack.c.b16 %v1361, %v1361
  %v1378 = vpack.c.b16 %v1362, %v1362
  %v1379 = vpack.c.b16 %v1363, %v1363
  %v1380 = vpack.c.b16 %v1364, %v1364
  %v1381 = vpack.c.b16 %v1365, %v1365
  %v1382 = vpack.c.b16 %v1366, %v1366
  %1399 = vst [vmem:[%s7] sm:$0xf] %v1367
  %1400 = vst [vmem:[%s7 + $0x4] sm:$0xf] %v1368
  %1401 = vst [vmem:[%s7 + $0x8] sm:$0xf] %v1369
  %1402 = vst [vmem:[%s7 + $0xc] sm:$0xf] %v1370
  %1403 = vst [vmem:[%s7 + $0x10] sm:$0xf] %v1371
  %1404 = vst [vmem:[%s7 + $0x14] sm:$0xf] %v1372
  %1405 = vst [vmem:[%s7 + $0x18] sm:$0xf] %v1373
  %1406 = vst [vmem:[%s7 + $0x1c] sm:$0xf] %v1374
  %1407 = vst [vmem:[%s7 + $0x20] sm:$0xf] %v1375
  %1408 = vst [vmem:[%s7 + $0x24] sm:$0xf] %v1376
  %1409 = vst [vmem:[%s7 + $0x28] sm:$0xf] %v1377
  %1410 = vst [vmem:[%s7 + $0x2c] sm:$0xf] %v1378
  %1411 = vst [vmem:[%s7 + $0x30] sm:$0xf] %v1379
  %1412 = vst [vmem:[%s7 + $0x34] sm:$0xf] %v1380
  %1413 = vst [vmem:[%s7 + $0x38] sm:$0xf] %v1381
  %1414 = vst [vmem:[%s7 + $0x3c] sm:$0xf] %v1382
  %v1415 = vand.u32 2147483647, %v1319
  %v1416 = vand.u32 2147483647, %v1320
  %v1417 = vand.u32 2147483647, %v1321
  %v1418 = vand.u32 2147483647, %v1322
  %v1419 = vand.u32 2147483647, %v1323
  %v1420 = vand.u32 2147483647, %v1324
  %v1421 = vand.u32 2147483647, %v1325
  %v1422 = vand.u32 2147483647, %v1326
  %v1423 = vand.u32 2147483647, %v1327
  %v1424 = vand.u32 2147483647, %v1328
  %v1425 = vand.u32 2147483647, %v1329
  %v1426 = vand.u32 2147483647, %v1330
  %v1427 = vand.u32 2147483647, %v1331
  %v1428 = vand.u32 2147483647, %v1332
  %v1429 = vand.u32 2147483647, %v1333
  %v1430 = vand.u32 2147483647, %v1334
  %vm1431 = vcmp.lt.f32.partialorder %v1415, 3e+38
  %vm1432 = vcmp.lt.f32.partialorder %v1416, 3e+38
  %vm1433 = vcmp.lt.f32.partialorder %v1417, 3e+38
  %vm1434 = vcmp.lt.f32.partialorder %v1418, 3e+38
  %vm1435 = vcmp.lt.f32.partialorder %v1419, 3e+38
  %vm1436 = vcmp.lt.f32.partialorder %v1420, 3e+38
  %vm1437 = vcmp.lt.f32.partialorder %v1421, 3e+38
  %vm1438 = vcmp.lt.f32.partialorder %v1422, 3e+38
  %vm1439 = vcmp.lt.f32.partialorder %v1423, 3e+38
  %vm1440 = vcmp.lt.f32.partialorder %v1424, 3e+38
  %vm1441 = vcmp.lt.f32.partialorder %v1425, 3e+38
  %vm1442 = vcmp.lt.f32.partialorder %v1426, 3e+38
  %vm1443 = vcmp.lt.f32.partialorder %v1427, 3e+38
  %vm1444 = vcmp.lt.f32.partialorder %v1428, 3e+38
  %vm1445 = vcmp.lt.f32.partialorder %v1429, 3e+38
  %vm1446 = vcmp.lt.f32.partialorder %v1430, 3e+38
  %v1447 = vsel %vm1431, 1.0, 0.0
  %v1448 = vsel %vm1432, 1.0, 0.0
  %v1449 = vsel %vm1433, 1.0, 0.0
  %v1450 = vsel %vm1434, 1.0, 0.0
  %v1451 = vsel %vm1435, 1.0, 0.0
  %v1452 = vsel %vm1436, 1.0, 0.0
  %v1453 = vsel %vm1437, 1.0, 0.0
  %v1454 = vsel %vm1438, 1.0, 0.0
  %v1455 = vsel %vm1439, 1.0, 0.0
  %v1456 = vsel %vm1440, 1.0, 0.0
  %v1457 = vsel %vm1441, 1.0, 0.0
  %v1458 = vsel %vm1442, 1.0, 0.0
  %v1459 = vsel %vm1443, 1.0, 0.0
  %v1460 = vsel %vm1444, 1.0, 0.0
  %v1461 = vsel %vm1445, 1.0, 0.0
  %v1462 = vsel %vm1446, 1.0, 0.0
  %1463 = vmin.xlane.f32.xlu0 %v1447
  %v1464 = vpop.xlane.xlu0 %1463
  %1465 = vmin.xlane.f32.xlu0 %v1448
  %v1466 = vpop.xlane.xlu0 %1465
  %1467 = vmin.xlane.f32.xlu0 %v1449
  %v1468 = vpop.xlane.xlu0 %1467
  %1469 = vmin.xlane.f32.xlu0 %v1450
  %v1470 = vpop.xlane.xlu0 %1469
  %1471 = vmin.xlane.f32.xlu0 %v1451
  %v1472 = vpop.xlane.xlu0 %1471
  %1473 = vmin.xlane.f32.xlu0 %v1452
  %v1474 = vpop.xlane.xlu0 %1473
  %1475 = vmin.xlane.f32.xlu0 %v1453
  %v1476 = vpop.xlane.xlu0 %1475
  %1477 = vmin.xlane.f32.xlu0 %v1454
  %v1478 = vpop.xlane.xlu0 %1477
  %1479 = vmin.xlane.f32.xlu0 %v1455
  %v1480 = vpop.xlane.xlu0 %1479
  %1481 = vmin.xlane.f32.xlu0 %v1456
  %v1482 = vpop.xlane.xlu0 %1481
  %1483 = vmin.xlane.f32.xlu0 %v1457
  %v1484 = vpop.xlane.xlu0 %1483
  %1485 = vmin.xlane.f32.xlu0 %v1458
  %v1486 = vpop.xlane.xlu0 %1485
  %1487 = vmin.xlane.f32.xlu0 %v1459
  %v1488 = vpop.xlane.xlu0 %1487
  %1489 = vmin.xlane.f32.xlu0 %v1460
  %v1490 = vpop.xlane.xlu0 %1489
  %1491 = vmin.xlane.f32.xlu0 %v1461
  %v1492 = vpop.xlane.xlu0 %1491
  %1493 = vmin.xlane.f32.xlu0 %v1462
  %v1494 = vpop.xlane.xlu0 %1493
  %v1495 = vmin.f32 %v1464, %v1472
  %v1496 = vmin.f32 %v1466, %v1474
  %v1497 = vmin.f32 %v1468, %v1476
  %v1498 = vmin.f32 %v1470, %v1478
  %v1499 = vmin.f32 %v1495, %v1480
  %v1500 = vmin.f32 %v1496, %v1482
  %v1501 = vmin.f32 %v1497, %v1484
  %v1502 = vmin.f32 %v1498, %v1486
  %v1503 = vmin.f32 %v1499, %v1488
  %v1504 = vmin.f32 %v1500, %v1490
  %v1505 = vmin.f32 %v1501, %v1492
  %v1506 = vmin.f32 %v1502, %v1494
  %v1507 = vmin.f32 %v1503, %v1504
  %v1508 = vmin.f32 %v1505, %v1506
  %v1509 = vmin.f32 %v1507, %v1508
  %v1510 = vrot.slane %v1509, 4
  %v1511 = vmin.f32 %v1509, %v1510
  %v1512 = vrot.slane %v1511, 2
  %v1513 = vmin.f32 %v1511, %v1512
  %v1514 = vrot.slane %v1513, 1
  %v1515 = vmin.f32 %v1513, %v1514
  %1516 = vst [vmem:[%s9] sm:$0xff] %v1515
  %v1517 = vld [vmem:[%s3] sm:$0xf]
  %v1518 = vld [vmem:[%s3 + $0x14] sm:$0xf]
  %v1519 = vld [vmem:[%s3 + $0x28] sm:$0xf]
  %v1520 = vld [vmem:[%s3 + $0x3c] sm:$0xf]
  %v1521 = vld [vmem:[%s3 + $0x50] sm:$0xf]
  %v1522 = vld [vmem:[%s3 + $0x64] sm:$0xf]
  %v1523 = vld [vmem:[%s3 + $0x78] sm:$0xf]
  %v1524 = vld [vmem:[%s3 + $0x8c] sm:$0xf]
  %v1525 = vld [vmem:[%s3 + $0xa0] sm:$0xf]
  %v1526 = vld [vmem:[%s3 + $0xb4] sm:$0xf]
  %v1527 = vld [vmem:[%s3 + $0xc8] sm:$0xf]
  %v1528 = vld [vmem:[%s3 + $0xdc] sm:$0xf]
  %v1529 = vld [vmem:[%s3 + $0xf0] sm:$0xf]
  %v1530 = vld [vmem:[%s3 + $0x104] sm:$0xf]
  %v1531 = vld [vmem:[%s3 + $0x118] sm:$0xf]
  %v1532 = vld [vmem:[%s3 + $0x12c] sm:$0xf]
  %v1533 = vld [vmem:[%s4] sm:$0x1]
  %v1535 = vlaneseq
  %v1536 = vshrl.u32 %v1535, 7
  %v1537 = vsub.s32 0, %v1536
  %v1538 = vrot.slane %v1533, %v1537
  %v1556 = vunpack.c.l.b16 %v1517
  %v1557 = vunpack.c.l.b16 %v1518
  %v1558 = vunpack.c.l.b16 %v1519
  %v1559 = vunpack.c.l.b16 %v1520
  %v1560 = vunpack.c.l.b16 %v1521
  %v1561 = vunpack.c.l.b16 %v1522
  %v1562 = vunpack.c.l.b16 %v1523
  %v1563 = vunpack.c.l.b16 %v1524
  %v1564 = vunpack.c.l.b16 %v1525
  %v1565 = vunpack.c.l.b16 %v1526
  %v1566 = vunpack.c.l.b16 %v1527
  %v1567 = vunpack.c.l.b16 %v1528
  %v1568 = vunpack.c.l.b16 %v1529
  %v1569 = vunpack.c.l.b16 %v1530
  %v1570 = vunpack.c.l.b16 %v1531
  %v1571 = vunpack.c.l.b16 %v1532
  %v1572 = vpack.c.b16 %v1557, %v1556
  %v1573 = vpack.c.b16 %v1559, %v1558
  %v1574 = vpack.c.b16 %v1561, %v1560
  %v1575 = vpack.c.b16 %v1563, %v1562
  %v1576 = vpack.c.b16 %v1565, %v1564
  %v1577 = vpack.c.b16 %v1567, %v1566
  %v1578 = vpack.c.b16 %v1569, %v1568
  %v1579 = vpack.c.b16 %v1571, %v1570
  %1588 = vmatprep.subr.bf16.mxu0 0
  %1589 = vmatpush1.bf16.msra.mxu0 %v1572
  %1590 = vmatprep.subr.bf16.mxu0 0
  %1591 = vmatpush1.bf16.msra.mxu0 %v1573
  %1592 = vmatprep.subr.bf16.mxu0 0
  %1593 = vmatpush1.bf16.msra.mxu0 %v1574
  %1594 = vmatprep.subr.bf16.mxu0 0
  %1595 = vmatpush1.bf16.msra.mxu0 %v1575
  %1596 = vmatprep.subr.bf16.mxu0 0
  %1597 = vmatpush1.bf16.msra.mxu0 %v1576
  %1598 = vmatprep.subr.bf16.mxu0 0
  %1599 = vmatpush1.bf16.msra.mxu0 %v1577
  %1600 = vmatprep.subr.bf16.mxu0 0
  %1601 = vmatpush1.bf16.msra.mxu0 %v1578
  %1602 = vmatprep.subr.bf16.mxu0 0
  %1603 = vmatpush1.bf16.msra.mxu0 %v1579
  %1604 = vmatprep.subr.bf16.mxu0 0
  %1605 = vmatpush1.bf16.msra.mxu0 0
  %1606 = vmatprep.subr.bf16.mxu0 0
  %1607 = vmatpush1.bf16.msra.mxu0 0
  %1608 = vmatprep.subr.bf16.mxu0 0
  %1609 = vmatpush1.bf16.msra.mxu0 0
  %1610 = vmatprep.subr.bf16.mxu0 0
  %1611 = vmatpush1.bf16.msra.mxu0 0
  %1612 = vmatprep.subr.bf16.mxu0 0
  %1613 = vmatpush1.bf16.msra.mxu0 0
  %1614 = vmatprep.subr.bf16.mxu0 0
  %1615 = vmatpush1.bf16.msra.mxu0 0
  %1616 = vmatprep.subr.bf16.mxu0 0
  %1617 = vmatpush1.bf16.msra.mxu0 0
  %1618 = vmatprep.subr.bf16.mxu0 0
  %1619 = vmatpush1.bf16.msra.mxu0 0
  %1620 = vmatprep.mubr.bf16.mxu0 0
  %1621 = vmatmul.mubr.bf16.gmra.mrb[0].mxu0 %v1335
  %v1622 = vpop.f32.mrb[0].mxu0
  %v1623 = vadd.f32 %v1538, %v1622
  %v1624 = vpop.f32.mrb[0].mxu0
  %v1625 = vpop.f32.mrb[0].mxu0
  %v1626 = vadd.f32 %v1538, %v1625
  %v1627 = vpop.f32.mrb[0].mxu0
  %1628 = vmatprep.mubr.bf16.mxu0 0
  %1629 = vmatmul.mubr.bf16.gmra.mrb[0].mxu0 %v1336
  %v1630 = vpop.f32.mrb[0].mxu0
  %v1631 = vadd.f32 %v1538, %v1630
  %v1632 = vpop.f32.mrb[0].mxu0
  %v1633 = vpop.f32.mrb[0].mxu0
  %v1634 = vadd.f32 %v1538, %v1633
  %v1635 = vpop.f32.mrb[0].mxu0
  %1636 = vmatprep.mubr.bf16.mxu0 0
  %1637 = vmatmul.mubr.bf16.gmra.mrb[0].mxu0 %v1337
  %v1638 = vpop.f32.mrb[0].mxu0
  %v1639 = vadd.f32 %v1538, %v1638
  %v1640 = vpop.f32.mrb[0].mxu0
  %v1641 = vpop.f32.mrb[0].mxu0
  %v1642 = vadd.f32 %v1538, %v1641
  %v1643 = vpop.f32.mrb[0].mxu0
  %1644 = vmatprep.mubr.bf16.mxu0 0
  %1645 = vmatmul.mubr.bf16.gmra.mrb[0].mxu0 %v1338
  %v1646 = vpop.f32.mrb[0].mxu0
  %v1647 = vadd.f32 %v1538, %v1646
  %v1648 = vpop.f32.mrb[0].mxu0
  %v1649 = vpop.f32.mrb[0].mxu0
  %v1650 = vadd.f32 %v1538, %v1649
  %v1651 = vpop.f32.mrb[0].mxu0
  %1652 = vmatprep.mubr.bf16.mxu0 0
  %1653 = vmatmul.mubr.bf16.gmra.mrb[0].mxu0 %v1339
  %v1654 = vpop.f32.mrb[0].mxu0
  %v1655 = vadd.f32 %v1538, %v1654
  %v1656 = vpop.f32.mrb[0].mxu0
  %v1657 = vpop.f32.mrb[0].mxu0
  %v1658 = vadd.f32 %v1538, %v1657
  %v1659 = vpop.f32.mrb[0].mxu0
  %1660 = vmatprep.mubr.bf16.mxu0 0
  %1661 = vmatmul.mubr.bf16.gmra.mrb[0].mxu0 %v1340
  %v1662 = vpop.f32.mrb[0].mxu0
  %v1663 = vadd.f32 %v1538, %v1662
  %v1664 = vpop.f32.mrb[0].mxu0
  %v1665 = vpop.f32.mrb[0].mxu0
  %v1666 = vadd.f32 %v1538, %v1665
  %v1667 = vpop.f32.mrb[0].mxu0
  %1668 = vmatprep.mubr.bf16.mxu0 0
  %1669 = vmatmul.mubr.bf16.gmra.mrb[0].mxu0 %v1341
  %v1670 = vpop.f32.mrb[0].mxu0
  %v1671 = vadd.f32 %v1538, %v1670
  %v1672 = vpop.f32.mrb[0].mxu0
  %v1673 = vpop.f32.mrb[0].mxu0
  %v1674 = vadd.f32 %v1538, %v1673
  %v1675 = vpop.f32.mrb[0].mxu0
  %1676 = vmatprep.mubr.bf16.mxu0 0
  %1677 = vmatmul.mubr.bf16.gmra.mrb[0].mxu0 %v1342
  %v1678 = vpop.f32.mrb[0].mxu0
  %v1679 = vadd.f32 %v1538, %v1678
  %v1680 = vpop.f32.mrb[0].mxu0
  %v1681 = vpop.f32.mrb[0].mxu0
  %v1682 = vadd.f32 %v1538, %v1681
  %v1683 = vpop.f32.mrb[0].mxu0
  %1684 = vdwg.mxu0
  %1685 = vmax.xlane.f32.xlu0 %v1623
  %v1686 = vpop.xlane.xlu0 %1685
  %1687 = vmax.xlane.f32.xlu0 %v1626
  %v1688 = vpop.xlane.xlu0 %1687
  %1689 = vmax.xlane.f32.xlu0 %v1631
  %v1690 = vpop.xlane.xlu0 %1689
  %1691 = vmax.xlane.f32.xlu0 %v1634
  %v1692 = vpop.xlane.xlu0 %1691
  %1693 = vmax.xlane.f32.xlu0 %v1639
  %v1694 = vpop.xlane.xlu0 %1693
  %1695 = vmax.xlane.f32.xlu0 %v1642
  %v1696 = vpop.xlane.xlu0 %1695
  %1697 = vmax.xlane.f32.xlu0 %v1647
  %v1698 = vpop.xlane.xlu0 %1697
  %1699 = vmax.xlane.f32.xlu0 %v1650
  %v1700 = vpop.xlane.xlu0 %1699
  %1701 = vmax.xlane.f32.xlu0 %v1655
  %v1702 = vpop.xlane.xlu0 %1701
  %1703 = vmax.xlane.f32.xlu0 %v1658
  %v1704 = vpop.xlane.xlu0 %1703
  %1705 = vmax.xlane.f32.xlu0 %v1663
  %v1706 = vpop.xlane.xlu0 %1705
  %1707 = vmax.xlane.f32.xlu0 %v1666
  %v1708 = vpop.xlane.xlu0 %1707
  %1709 = vmax.xlane.f32.xlu0 %v1671
  %v1710 = vpop.xlane.xlu0 %1709
  %1711 = vmax.xlane.f32.xlu0 %v1674
  %v1712 = vpop.xlane.xlu0 %1711
  %1713 = vmax.xlane.f32.xlu0 %v1679
  %v1714 = vpop.xlane.xlu0 %1713
  %1715 = vmax.xlane.f32.xlu0 %v1682
  %v1716 = vpop.xlane.xlu0 %1715
  %v1717 = vsub.f32 %v1623, %v1686
  %v1718 = vsub.f32 %v1626, %v1688
  %v1719 = vsub.f32 %v1631, %v1690
  %v1720 = vsub.f32 %v1634, %v1692
  %v1721 = vsub.f32 %v1639, %v1694
  %v1722 = vsub.f32 %v1642, %v1696
  %v1723 = vsub.f32 %v1647, %v1698
  %v1724 = vsub.f32 %v1650, %v1700
  %v1725 = vsub.f32 %v1655, %v1702
  %v1726 = vsub.f32 %v1658, %v1704
  %v1727 = vsub.f32 %v1663, %v1706
  %v1728 = vsub.f32 %v1666, %v1708
  %v1729 = vsub.f32 %v1671, %v1710
  %v1730 = vsub.f32 %v1674, %v1712
  %v1731 = vsub.f32 %v1679, %v1714
  %v1732 = vsub.f32 %v1682, %v1716
  %v1733 = vmul.f32 %v1717, 1.442695
  %v1734 = vpow.pop %v1733
  %v1735 = vmul.f32 %v1718, 1.442695
  %v1736 = vpow.pop %v1735
  %v1737 = vmul.f32 %v1719, 1.442695
  %v1738 = vpow.pop %v1737
  %v1739 = vmul.f32 %v1720, 1.442695
  %v1740 = vpow.pop %v1739
  %v1741 = vmul.f32 %v1721, 1.442695
  %v1742 = vpow.pop %v1741
  %v1743 = vmul.f32 %v1722, 1.442695
  %v1744 = vpow.pop %v1743
  %v1745 = vmul.f32 %v1723, 1.442695
  %v1746 = vpow.pop %v1745
  %v1747 = vmul.f32 %v1724, 1.442695
  %v1748 = vpow.pop %v1747
  %v1749 = vmul.f32 %v1725, 1.442695
  %v1750 = vpow.pop %v1749
  %v1751 = vmul.f32 %v1726, 1.442695
  %v1752 = vpow.pop %v1751
  %v1753 = vmul.f32 %v1727, 1.442695
  %v1754 = vpow.pop %v1753
  %v1755 = vmul.f32 %v1728, 1.442695
  %v1756 = vpow.pop %v1755
  %v1757 = vmul.f32 %v1729, 1.442695
  %v1758 = vpow.pop %v1757
  %v1759 = vmul.f32 %v1730, 1.442695
  %v1760 = vpow.pop %v1759
  %v1761 = vmul.f32 %v1731, 1.442695
  %v1762 = vpow.pop %v1761
  %v1763 = vmul.f32 %v1732, 1.442695
  %v1764 = vpow.pop %v1763
  %1765 = vadd.xlane.f32.xlu0 %v1734
  %v1766 = vpop.xlane.xlu0 %1765
  %1767 = vadd.xlane.f32.xlu0 %v1736
  %v1768 = vpop.xlane.xlu0 %1767
  %1769 = vadd.xlane.f32.xlu0 %v1738
  %v1770 = vpop.xlane.xlu0 %1769
  %1771 = vadd.xlane.f32.xlu0 %v1740
  %v1772 = vpop.xlane.xlu0 %1771
  %1773 = vadd.xlane.f32.xlu0 %v1742
  %v1774 = vpop.xlane.xlu0 %1773
  %1775 = vadd.xlane.f32.xlu0 %v1744
  %v1776 = vpop.xlane.xlu0 %1775
  %1777 = vadd.xlane.f32.xlu0 %v1746
  %v1778 = vpop.xlane.xlu0 %1777
  %1779 = vadd.xlane.f32.xlu0 %v1748
  %v1780 = vpop.xlane.xlu0 %1779
  %1781 = vadd.xlane.f32.xlu0 %v1750
  %v1782 = vpop.xlane.xlu0 %1781
  %1783 = vadd.xlane.f32.xlu0 %v1752
  %v1784 = vpop.xlane.xlu0 %1783
  %1785 = vadd.xlane.f32.xlu0 %v1754
  %v1786 = vpop.xlane.xlu0 %1785
  %1787 = vadd.xlane.f32.xlu0 %v1756
  %v1788 = vpop.xlane.xlu0 %1787
  %1789 = vadd.xlane.f32.xlu0 %v1758
  %v1790 = vpop.xlane.xlu0 %1789
  %1791 = vadd.xlane.f32.xlu0 %v1760
  %v1792 = vpop.xlane.xlu0 %1791
  %1793 = vadd.xlane.f32.xlu0 %v1762
  %v1794 = vpop.xlane.xlu0 %1793
  %1795 = vadd.xlane.f32.xlu0 %v1764
  %v1796 = vpop.xlane.xlu0 %1795
  %v1797 = vlog2.pop %v1766
  %v1798 = vmul.f32 %v1797, 0.6931472
  %v1799 = vlog2.pop %v1768
  %v1800 = vmul.f32 %v1799, 0.6931472
  %v1801 = vlog2.pop %v1770
  %v1802 = vmul.f32 %v1801, 0.6931472
  %v1803 = vlog2.pop %v1772
  %v1804 = vmul.f32 %v1803, 0.6931472
  %v1805 = vlog2.pop %v1774
  %v1806 = vmul.f32 %v1805, 0.6931472
  %v1807 = vlog2.pop %v1776
  %v1808 = vmul.f32 %v1807, 0.6931472
  %v1809 = vlog2.pop %v1778
  %v1810 = vmul.f32 %v1809, 0.6931472
  %v1811 = vlog2.pop %v1780
  %v1812 = vmul.f32 %v1811, 0.6931472
  %v1813 = vlog2.pop %v1782
  %v1814 = vmul.f32 %v1813, 0.6931472
  %v1815 = vlog2.pop %v1784
  %v1816 = vmul.f32 %v1815, 0.6931472
  %v1817 = vlog2.pop %v1786
  %v1818 = vmul.f32 %v1817, 0.6931472
  %v1819 = vlog2.pop %v1788
  %v1820 = vmul.f32 %v1819, 0.6931472
  %v1821 = vlog2.pop %v1790
  %v1822 = vmul.f32 %v1821, 0.6931472
  %v1823 = vlog2.pop %v1792
  %v1824 = vmul.f32 %v1823, 0.6931472
  %v1825 = vlog2.pop %v1794
  %v1826 = vmul.f32 %v1825, 0.6931472
  %v1827 = vlog2.pop %v1796
  %v1828 = vmul.f32 %v1827, 0.6931472
  %v1829 = vadd.f32 %v1686, %v1798
  %v1830 = vadd.f32 %v1688, %v1800
  %v1831 = vadd.f32 %v1690, %v1802
  %v1832 = vadd.f32 %v1692, %v1804
  %v1833 = vadd.f32 %v1694, %v1806
  %v1834 = vadd.f32 %v1696, %v1808
  %v1835 = vadd.f32 %v1698, %v1810
  %v1836 = vadd.f32 %v1700, %v1812
  %v1837 = vadd.f32 %v1702, %v1814
  %v1838 = vadd.f32 %v1704, %v1816
  %v1839 = vadd.f32 %v1706, %v1818
  %v1840 = vadd.f32 %v1708, %v1820
  %v1841 = vadd.f32 %v1710, %v1822
  %v1842 = vadd.f32 %v1712, %v1824
  %v1843 = vadd.f32 %v1714, %v1826
  %v1844 = vadd.f32 %v1716, %v1828
  %v1845 = vsub.f32 %v1623, %v1829
  %v1846 = vsub.f32 %v1626, %v1830
  %v1847 = vsub.f32 %v1631, %v1831
  %v1848 = vsub.f32 %v1634, %v1832
  %v1849 = vsub.f32 %v1639, %v1833
  %v1850 = vsub.f32 %v1642, %v1834
  %v1851 = vsub.f32 %v1647, %v1835
  %v1852 = vsub.f32 %v1650, %v1836
  %v1853 = vsub.f32 %v1655, %v1837
  %v1854 = vsub.f32 %v1658, %v1838
  %v1855 = vsub.f32 %v1663, %v1839
  %v1856 = vsub.f32 %v1666, %v1840
  %v1857 = vsub.f32 %v1671, %v1841
  %v1858 = vsub.f32 %v1674, %v1842
  %v1859 = vsub.f32 %v1679, %v1843
  %v1860 = vsub.f32 %v1682, %v1844
  %v1861 = vpack.c.bf16 %v1846, %v1845
  %v1862 = vpack.c.bf16 %v1848, %v1847
  %v1863 = vpack.c.bf16 %v1850, %v1849
  %v1864 = vpack.c.bf16 %v1852, %v1851
  %v1865 = vpack.c.bf16 %v1854, %v1853
  %v1866 = vpack.c.bf16 %v1856, %v1855
  %v1867 = vpack.c.bf16 %v1858, %v1857
  %v1868 = vpack.c.bf16 %v1860, %v1859
  %v1877 = vunpack.c.l.b16 %v1861
  %v1878 = vunpack.c.h.b16 %v1861
  %v1879 = vunpack.c.l.b16 %v1862
  %v1880 = vunpack.c.h.b16 %v1862
  %v1881 = vunpack.c.l.b16 %v1863
  %v1882 = vunpack.c.h.b16 %v1863
  %v1883 = vunpack.c.l.b16 %v1864
  %v1884 = vunpack.c.h.b16 %v1864
  %v1885 = vunpack.c.l.b16 %v1865
  %v1886 = vunpack.c.h.b16 %v1865
  %v1887 = vunpack.c.l.b16 %v1866
  %v1888 = vunpack.c.h.b16 %v1866
  %v1889 = vunpack.c.l.b16 %v1867
  %v1890 = vunpack.c.h.b16 %v1867
  %v1891 = vunpack.c.l.b16 %v1868
  %v1892 = vunpack.c.h.b16 %v1868
  %v1893 = vpack.c.b16 %v1877, %v1877
  %v1894 = vpack.c.b16 %v1878, %v1878
  %v1895 = vpack.c.b16 %v1879, %v1879
  %v1896 = vpack.c.b16 %v1880, %v1880
  %v1897 = vpack.c.b16 %v1881, %v1881
  %v1898 = vpack.c.b16 %v1882, %v1882
  %v1899 = vpack.c.b16 %v1883, %v1883
  %v1900 = vpack.c.b16 %v1884, %v1884
  %v1901 = vpack.c.b16 %v1885, %v1885
  %v1902 = vpack.c.b16 %v1886, %v1886
  %v1903 = vpack.c.b16 %v1887, %v1887
  %v1904 = vpack.c.b16 %v1888, %v1888
  %v1905 = vpack.c.b16 %v1889, %v1889
  %v1906 = vpack.c.b16 %v1890, %v1890
  %v1907 = vpack.c.b16 %v1891, %v1891
  %v1908 = vpack.c.b16 %v1892, %v1892
  %1925 = vst [vmem:[%s8] sm:$0xf] %v1893
  %1926 = vst [vmem:[%s8 + $0x14] sm:$0xf] %v1894
  %1927 = vst [vmem:[%s8 + $0x28] sm:$0xf] %v1895
  %1928 = vst [vmem:[%s8 + $0x3c] sm:$0xf] %v1896
  %1929 = vst [vmem:[%s8 + $0x50] sm:$0xf] %v1897
  %1930 = vst [vmem:[%s8 + $0x64] sm:$0xf] %v1898
  %1931 = vst [vmem:[%s8 + $0x78] sm:$0xf] %v1899
  %1932 = vst [vmem:[%s8 + $0x8c] sm:$0xf] %v1900
  %1933 = vst [vmem:[%s8 + $0xa0] sm:$0xf] %v1901
  %1934 = vst [vmem:[%s8 + $0xb4] sm:$0xf] %v1902
  %1935 = vst [vmem:[%s8 + $0xc8] sm:$0xf] %v1903
  %1936 = vst [vmem:[%s8 + $0xdc] sm:$0xf] %v1904
  %1937 = vst [vmem:[%s8 + $0xf0] sm:$0xf] %v1905
  %1938 = vst [vmem:[%s8 + $0x104] sm:$0xf] %v1906
  %1939 = vst [vmem:[%s8 + $0x118] sm:$0xf] %v1907
  %1940 = vst [vmem:[%s8 + $0x12c] sm:$0xf] %v1908
  %v1941 = vrcp.pop %v1766
  %v1942 = vmul.f32 1.0, %v1941
  %v1943 = vrcp.pop %v1768
  %v1944 = vmul.f32 1.0, %v1943
  %v1945 = vrcp.pop %v1770
  %v1946 = vmul.f32 1.0, %v1945
  %v1947 = vrcp.pop %v1772
  %v1948 = vmul.f32 1.0, %v1947
  %v1949 = vrcp.pop %v1774
  %v1950 = vmul.f32 1.0, %v1949
  %v1951 = vrcp.pop %v1776
  %v1952 = vmul.f32 1.0, %v1951
  %v1953 = vrcp.pop %v1778
  %v1954 = vmul.f32 1.0, %v1953
  %v1955 = vrcp.pop %v1780
  %v1956 = vmul.f32 1.0, %v1955
  %v1957 = vrcp.pop %v1782
  %v1958 = vmul.f32 1.0, %v1957
  %v1959 = vrcp.pop %v1784
  %v1960 = vmul.f32 1.0, %v1959
  %v1961 = vrcp.pop %v1786
  %v1962 = vmul.f32 1.0, %v1961
  %v1963 = vrcp.pop %v1788
  %v1964 = vmul.f32 1.0, %v1963
  %v1965 = vrcp.pop %v1790
  %v1966 = vmul.f32 1.0, %v1965
  %v1967 = vrcp.pop %v1792
  %v1968 = vmul.f32 1.0, %v1967
  %v1969 = vrcp.pop %v1794
  %v1970 = vmul.f32 1.0, %v1969
  %v1971 = vrcp.pop %v1796
  %v1972 = vmul.f32 1.0, %v1971
  %v1973 = vmul.f32 %v1734, %v1942
  %v1974 = vmul.f32 %v1736, %v1944
  %v1975 = vmul.f32 %v1738, %v1946
  %v1976 = vmul.f32 %v1740, %v1948
  %v1977 = vmul.f32 %v1742, %v1950
  %v1978 = vmul.f32 %v1744, %v1952
  %v1979 = vmul.f32 %v1746, %v1954
  %v1980 = vmul.f32 %v1748, %v1956
  %v1981 = vmul.f32 %v1750, %v1958
  %v1982 = vmul.f32 %v1752, %v1960
  %v1983 = vmul.f32 %v1754, %v1962
  %v1984 = vmul.f32 %v1756, %v1964
  %v1985 = vmul.f32 %v1758, %v1966
  %v1986 = vmul.f32 %v1760, %v1968
  %v1987 = vmul.f32 %v1762, %v1970
  %v1988 = vmul.f32 %v1764, %v1972
  %v1989 = vld [vmem:[%s5] sm:$0x1]
  %v1991 = vlaneseq
  %v1992 = vshrl.u32 %v1991, 7
  %v1993 = vsub.s32 0, %v1992
  %v1994 = vrot.slane %v1989, %v1993
  %v1996 = vmul.f32 %v1973, %v1994
  %v1997 = vmul.f32 %v1974, %v1994
  %v1998 = vmul.f32 %v1975, %v1994
  %v1999 = vmul.f32 %v1976, %v1994
  %v2000 = vmul.f32 %v1977, %v1994
  %v2001 = vmul.f32 %v1978, %v1994
  %v2002 = vmul.f32 %v1979, %v1994
  %v2003 = vmul.f32 %v1980, %v1994
  %v2004 = vmul.f32 %v1981, %v1994
  %v2005 = vmul.f32 %v1982, %v1994
  %v2006 = vmul.f32 %v1983, %v1994
  %v2007 = vmul.f32 %v1984, %v1994
  %v2008 = vmul.f32 %v1985, %v1994
  %v2009 = vmul.f32 %v1986, %v1994
  %v2010 = vmul.f32 %v1987, %v1994
  %v2011 = vmul.f32 %v1988, %v1994
  %v2012 = vadd.f32 %v1996, 0.0
  %v2013 = vadd.f32 %v1997, 0.0
  %v2014 = vadd.f32 %v1998, 0.0
  %v2015 = vadd.f32 %v1999, 0.0
  %v2016 = vadd.f32 %v2000, 0.0
  %v2017 = vadd.f32 %v2001, 0.0
  %v2018 = vadd.f32 %v2002, 0.0
  %v2019 = vadd.f32 %v2003, 0.0
  %v2020 = vadd.f32 %v2004, 0.0
  %v2021 = vadd.f32 %v2005, 0.0
  %v2022 = vadd.f32 %v2006, 0.0
  %v2023 = vadd.f32 %v2007, 0.0
  %v2024 = vadd.f32 %v2008, 0.0
  %v2025 = vadd.f32 %v2009, 0.0
  %v2026 = vadd.f32 %v2010, 0.0
  %v2027 = vadd.f32 %v2011, 0.0
  %v2028 = vld [vmem:[%s3 + $0x4] sm:$0xf]
  %v2029 = vld [vmem:[%s3 + $0x18] sm:$0xf]
  %v2030 = vld [vmem:[%s3 + $0x2c] sm:$0xf]
  %v2031 = vld [vmem:[%s3 + $0x40] sm:$0xf]
  %v2032 = vld [vmem:[%s3 + $0x54] sm:$0xf]
  %v2033 = vld [vmem:[%s3 + $0x68] sm:$0xf]
  %v2034 = vld [vmem:[%s3 + $0x7c] sm:$0xf]
  %v2035 = vld [vmem:[%s3 + $0x90] sm:$0xf]
  %v2036 = vld [vmem:[%s3 + $0xa4] sm:$0xf]
  %v2037 = vld [vmem:[%s3 + $0xb8] sm:$0xf]
  %v2038 = vld [vmem:[%s3 + $0xcc] sm:$0xf]
  %v2039 = vld [vmem:[%s3 + $0xe0] sm:$0xf]
  %v2040 = vld [vmem:[%s3 + $0xf4] sm:$0xf]
  %v2041 = vld [vmem:[%s3 + $0x108] sm:$0xf]
  %v2042 = vld [vmem:[%s3 + $0x11c] sm:$0xf]
  %v2043 = vld [vmem:[%s3 + $0x130] sm:$0xf]
  %v2044 = vld [vmem:[%s4 + $0x1] sm:$0x1]
  %v2046 = vlaneseq
  %v2047 = vshrl.u32 %v2046, 7
  %v2048 = vsub.s32 0, %v2047
  %v2049 = vrot.slane %v2044, %v2048
  %v2067 = vunpack.c.l.b16 %v2028
  %v2068 = vunpack.c.l.b16 %v2029
  %v2069 = vunpack.c.l.b16 %v2030
  %v2070 = vunpack.c.l.b16 %v2031
  %v2071 = vunpack.c.l.b16 %v2032
  %v2072 = vunpack.c.l.b16 %v2033
  %v2073 = vunpack.c.l.b16 %v2034
  %v2074 = vunpack.c.l.b16 %v2035
  %v2075 = vunpack.c.l.b16 %v2036
  %v2076 = vunpack.c.l.b16 %v2037
  %v2077 = vunpack.c.l.b16 %v2038
  %v2078 = vunpack.c.l.b16 %v2039
  %v2079 = vunpack.c.l.b16 %v2040
  %v2080 = vunpack.c.l.b16 %v2041
  %v2081 = vunpack.c.l.b16 %v2042
  %v2082 = vunpack.c.l.b16 %v2043
  %v2083 = vpack.c.b16 %v2068, %v2067
  %v2084 = vpack.c.b16 %v2070, %v2069
  %v2085 = vpack.c.b16 %v2072, %v2071
  %v2086 = vpack.c.b16 %v2074, %v2073
  %v2087 = vpack.c.b16 %v2076, %v2075
  %v2088 = vpack.c.b16 %v2078, %v2077
  %v2089 = vpack.c.b16 %v2080, %v2079
  %v2090 = vpack.c.b16 %v2082, %v2081
  %2099 = vmatprep.subr.bf16.mxu0 0
  %2100 = vmatpush1.bf16.msra.mxu0 %v2083
  %2101 = vmatprep.subr.bf16.mxu0 0
  %2102 = vmatpush1.bf16.msra.mxu0 %v2084
  %2103 = vmatprep.subr.bf16.mxu0 0
  %2104 = vmatpush1.bf16.msra.mxu0 %v2085
  %2105 = vmatprep.subr.bf16.mxu0 0
  %2106 = vmatpush1.bf16.msra.mxu0 %v2086
  %2107 = vmatprep.subr.bf16.mxu0 0
  %2108 = vmatpush1.bf16.msra.mxu0 %v2087
  %2109 = vmatprep.subr.bf16.mxu0 0
  %2110 = vmatpush1.bf16.msra.mxu0 %v2088
  %2111 = vmatprep.subr.bf16.mxu0 0
  %2112 = vmatpush1.bf16.msra.mxu0 %v2089
  %2113 = vmatprep.subr.bf16.mxu0 0
  %2114 = vmatpush1.bf16.msra.mxu0 %v2090
  %2115 = vmatprep.subr.bf16.mxu0 0
  %2116 = vmatpush1.bf16.msra.mxu0 0
  %2117 = vmatprep.subr.bf16.mxu0 0
  %2118 = vmatpush1.bf16.msra.mxu0 0
  %2119 = vmatprep.subr.bf16.mxu0 0
  %2120 = vmatpush1.bf16.msra.mxu0 0
  %2121 = vmatprep.subr.bf16.mxu0 0
  %2122 = vmatpush1.bf16.msra.mxu0 0
  %2123 = vmatprep.subr.bf16.mxu0 0
  %2124 = vmatpush1.bf16.msra.mxu0 0
  %2125 = vmatprep.subr.bf16.mxu0 0
  %2126 = vmatpush1.bf16.msra.mxu0 0
  %2127 = vmatprep.subr.bf16.mxu0 0
  %2128 = vmatpush1.bf16.msra.mxu0 0
  %2129 = vmatprep.subr.bf16.mxu0 0
  %2130 = vmatpush1.bf16.msra.mxu0 0
  %2131 = vmatprep.mubr.bf16.mxu0 0
  %2132 = vmatmul.mubr.bf16.gmra.mrb[0].mxu0 %v1335
  %v2133 = vpop.f32.mrb[0].mxu0
  %v2134 = vadd.f32 %v2049, %v2133
  %v2135 = vpop.f32.mrb[0].mxu0
  %v2136 = vpop.f32.mrb[0].mxu0
  %v2137 = vadd.f32 %v2049, %v2136
  %v2138 = vpop.f32.mrb[0].mxu0
  %2139 = vmatprep.mubr.bf16.mxu0 0
  %2140 = vmatmul.mubr.bf16.gmra.mrb[0].mxu0 %v1336
  %v2141 = vpop.f32.mrb[0].mxu0
  %v2142 = vadd.f32 %v2049, %v2141
  %v2143 = vpop.f32.mrb[0].mxu0
  %v2144 = vpop.f32.mrb[0].mxu0
  %v2145 = vadd.f32 %v2049, %v2144
  %v2146 = vpop.f32.mrb[0].mxu0
  %2147 = vmatprep.mubr.bf16.mxu0 0
  %2148 = vmatmul.mubr.bf16.gmra.mrb[0].mxu0 %v1337
  %v2149 = vpop.f32.mrb[0].mxu0
  %v2150 = vadd.f32 %v2049, %v2149
  %v2151 = vpop.f32.mrb[0].mxu0
  %v2152 = vpop.f32.mrb[0].mxu0
  %v2153 = vadd.f32 %v2049, %v2152
  %v2154 = vpop.f32.mrb[0].mxu0
  %2155 = vmatprep.mubr.bf16.mxu0 0
  %2156 = vmatmul.mubr.bf16.gmra.mrb[0].mxu0 %v1338
  %v2157 = vpop.f32.mrb[0].mxu0
  %v2158 = vadd.f32 %v2049, %v2157
  %v2159 = vpop.f32.mrb[0].mxu0
  %v2160 = vpop.f32.mrb[0].mxu0
  %v2161 = vadd.f32 %v2049, %v2160
  %v2162 = vpop.f32.mrb[0].mxu0
  %2163 = vmatprep.mubr.bf16.mxu0 0
  %2164 = vmatmul.mubr.bf16.gmra.mrb[0].mxu0 %v1339
  %v2165 = vpop.f32.mrb[0].mxu0
  %v2166 = vadd.f32 %v2049, %v2165
  %v2167 = vpop.f32.mrb[0].mxu0
  %v2168 = vpop.f32.mrb[0].mxu0
  %v2169 = vadd.f32 %v2049, %v2168
  %v2170 = vpop.f32.mrb[0].mxu0
  %2171 = vmatprep.mubr.bf16.mxu0 0
  %2172 = vmatmul.mubr.bf16.gmra.mrb[0].mxu0 %v1340
  %v2173 = vpop.f32.mrb[0].mxu0
  %v2174 = vadd.f32 %v2049, %v2173
  %v2175 = vpop.f32.mrb[0].mxu0
  %v2176 = vpop.f32.mrb[0].mxu0
  %v2177 = vadd.f32 %v2049, %v2176
  %v2178 = vpop.f32.mrb[0].mxu0
  %2179 = vmatprep.mubr.bf16.mxu0 0
  %2180 = vmatmul.mubr.bf16.gmra.mrb[0].mxu0 %v1341
  %v2181 = vpop.f32.mrb[0].mxu0
  %v2182 = vadd.f32 %v2049, %v2181
  %v2183 = vpop.f32.mrb[0].mxu0
  %v2184 = vpop.f32.mrb[0].mxu0
  %v2185 = vadd.f32 %v2049, %v2184
  %v2186 = vpop.f32.mrb[0].mxu0
  %2187 = vmatprep.mubr.bf16.mxu0 0
  %2188 = vmatmul.mubr.bf16.gmra.mrb[0].mxu0 %v1342
  %v2189 = vpop.f32.mrb[0].mxu0
  %v2190 = vadd.f32 %v2049, %v2189
  %v2191 = vpop.f32.mrb[0].mxu0
  %v2192 = vpop.f32.mrb[0].mxu0
  %v2193 = vadd.f32 %v2049, %v2192
  %v2194 = vpop.f32.mrb[0].mxu0
  %2195 = vdwg.mxu0
  %2196 = vmax.xlane.f32.xlu0 %v2134
  %v2197 = vpop.xlane.xlu0 %2196
  %2198 = vmax.xlane.f32.xlu0 %v2137
  %v2199 = vpop.xlane.xlu0 %2198
  %2200 = vmax.xlane.f32.xlu0 %v2142
  %v2201 = vpop.xlane.xlu0 %2200
  %2202 = vmax.xlane.f32.xlu0 %v2145
  %v2203 = vpop.xlane.xlu0 %2202
  %2204 = vmax.xlane.f32.xlu0 %v2150
  %v2205 = vpop.xlane.xlu0 %2204
  %2206 = vmax.xlane.f32.xlu0 %v2153
  %v2207 = vpop.xlane.xlu0 %2206
  %2208 = vmax.xlane.f32.xlu0 %v2158
  %v2209 = vpop.xlane.xlu0 %2208
  %2210 = vmax.xlane.f32.xlu0 %v2161
  %v2211 = vpop.xlane.xlu0 %2210
  %2212 = vmax.xlane.f32.xlu0 %v2166
  %v2213 = vpop.xlane.xlu0 %2212
  %2214 = vmax.xlane.f32.xlu0 %v2169
  %v2215 = vpop.xlane.xlu0 %2214
  %2216 = vmax.xlane.f32.xlu0 %v2174
  %v2217 = vpop.xlane.xlu0 %2216
  %2218 = vmax.xlane.f32.xlu0 %v2177
  %v2219 = vpop.xlane.xlu0 %2218
  %2220 = vmax.xlane.f32.xlu0 %v2182
  %v2221 = vpop.xlane.xlu0 %2220
  %2222 = vmax.xlane.f32.xlu0 %v2185
  %v2223 = vpop.xlane.xlu0 %2222
  %2224 = vmax.xlane.f32.xlu0 %v2190
  %v2225 = vpop.xlane.xlu0 %2224
  %2226 = vmax.xlane.f32.xlu0 %v2193
  %v2227 = vpop.xlane.xlu0 %2226
  %v2228 = vsub.f32 %v2134, %v2197
  %v2229 = vsub.f32 %v2137, %v2199
  %v2230 = vsub.f32 %v2142, %v2201
  %v2231 = vsub.f32 %v2145, %v2203
  %v2232 = vsub.f32 %v2150, %v2205
  %v2233 = vsub.f32 %v2153, %v2207
  %v2234 = vsub.f32 %v2158, %v2209
  %v2235 = vsub.f32 %v2161, %v2211
  %v2236 = vsub.f32 %v2166, %v2213
  %v2237 = vsub.f32 %v2169, %v2215
  %v2238 = vsub.f32 %v2174, %v2217
  %v2239 = vsub.f32 %v2177, %v2219
  %v2240 = vsub.f32 %v2182, %v2221
  %v2241 = vsub.f32 %v2185, %v2223
  %v2242 = vsub.f32 %v2190, %v2225
  %v2243 = vsub.f32 %v2193, %v2227
  %v2244 = vmul.f32 %v2228, 1.442695
  %v2245 = vpow.pop %v2244
  %v2246 = vmul.f32 %v2229, 1.442695
  %v2247 = vpow.pop %v2246
  %v2248 = vmul.f32 %v2230, 1.442695
  %v2249 = vpow.pop %v2248
  %v2250 = vmul.f32 %v2231, 1.442695
  %v2251 = vpow.pop %v2250
  %v2252 = vmul.f32 %v2232, 1.442695
  %v2253 = vpow.pop %v2252
  %v2254 = vmul.f32 %v2233, 1.442695
  %v2255 = vpow.pop %v2254
  %v2256 = vmul.f32 %v2234, 1.442695
  %v2257 = vpow.pop %v2256
  %v2258 = vmul.f32 %v2235, 1.442695
  %v2259 = vpow.pop %v2258
  %v2260 = vmul.f32 %v2236, 1.442695
  %v2261 = vpow.pop %v2260
  %v2262 = vmul.f32 %v2237, 1.442695
  %v2263 = vpow.pop %v2262
  %v2264 = vmul.f32 %v2238, 1.442695
  %v2265 = vpow.pop %v2264
  %v2266 = vmul.f32 %v2239, 1.442695
  %v2267 = vpow.pop %v2266
  %v2268 = vmul.f32 %v2240, 1.442695
  %v2269 = vpow.pop %v2268
  %v2270 = vmul.f32 %v2241, 1.442695
  %v2271 = vpow.pop %v2270
  %v2272 = vmul.f32 %v2242, 1.442695
  %v2273 = vpow.pop %v2272
  %v2274 = vmul.f32 %v2243, 1.442695
  %v2275 = vpow.pop %v2274
  %2276 = vadd.xlane.f32.xlu0 %v2245
  %v2277 = vpop.xlane.xlu0 %2276
  %2278 = vadd.xlane.f32.xlu0 %v2247
  %v2279 = vpop.xlane.xlu0 %2278
  %2280 = vadd.xlane.f32.xlu0 %v2249
  %v2281 = vpop.xlane.xlu0 %2280
  %2282 = vadd.xlane.f32.xlu0 %v2251
  %v2283 = vpop.xlane.xlu0 %2282
  %2284 = vadd.xlane.f32.xlu0 %v2253
  %v2285 = vpop.xlane.xlu0 %2284
  %2286 = vadd.xlane.f32.xlu0 %v2255
  %v2287 = vpop.xlane.xlu0 %2286
  %2288 = vadd.xlane.f32.xlu0 %v2257
  %v2289 = vpop.xlane.xlu0 %2288
  %2290 = vadd.xlane.f32.xlu0 %v2259
  %v2291 = vpop.xlane.xlu0 %2290
  %2292 = vadd.xlane.f32.xlu0 %v2261
  %v2293 = vpop.xlane.xlu0 %2292
  %2294 = vadd.xlane.f32.xlu0 %v2263
  %v2295 = vpop.xlane.xlu0 %2294
  %2296 = vadd.xlane.f32.xlu0 %v2265
  %v2297 = vpop.xlane.xlu0 %2296
  %2298 = vadd.xlane.f32.xlu0 %v2267
  %v2299 = vpop.xlane.xlu0 %2298
  %2300 = vadd.xlane.f32.xlu0 %v2269
  %v2301 = vpop.xlane.xlu0 %2300
  %2302 = vadd.xlane.f32.xlu0 %v2271
  %v2303 = vpop.xlane.xlu0 %2302
  %2304 = vadd.xlane.f32.xlu0 %v2273
  %v2305 = vpop.xlane.xlu0 %2304
  %2306 = vadd.xlane.f32.xlu0 %v2275
  %v2307 = vpop.xlane.xlu0 %2306
  %v2308 = vlog2.pop %v2277
  %v2309 = vmul.f32 %v2308, 0.6931472
  %v2310 = vlog2.pop %v2279
  %v2311 = vmul.f32 %v2310, 0.6931472
  %v2312 = vlog2.pop %v2281
  %v2313 = vmul.f32 %v2312, 0.6931472
  %v2314 = vlog2.pop %v2283
  %v2315 = vmul.f32 %v2314, 0.6931472
  %v2316 = vlog2.pop %v2285
  %v2317 = vmul.f32 %v2316, 0.6931472
  %v2318 = vlog2.pop %v2287
  %v2319 = vmul.f32 %v2318, 0.6931472
  %v2320 = vlog2.pop %v2289
  %v2321 = vmul.f32 %v2320, 0.6931472
  %v2322 = vlog2.pop %v2291
  %v2323 = vmul.f32 %v2322, 0.6931472
  %v2324 = vlog2.pop %v2293
  %v2325 = vmul.f32 %v2324, 0.6931472
  %v2326 = vlog2.pop %v2295
  %v2327 = vmul.f32 %v2326, 0.6931472
  %v2328 = vlog2.pop %v2297
  %v2329 = vmul.f32 %v2328, 0.6931472
  %v2330 = vlog2.pop %v2299
  %v2331 = vmul.f32 %v2330, 0.6931472
  %v2332 = vlog2.pop %v2301
  %v2333 = vmul.f32 %v2332, 0.6931472
  %v2334 = vlog2.pop %v2303
  %v2335 = vmul.f32 %v2334, 0.6931472
  %v2336 = vlog2.pop %v2305
  %v2337 = vmul.f32 %v2336, 0.6931472
  %v2338 = vlog2.pop %v2307
  %v2339 = vmul.f32 %v2338, 0.6931472
  %v2340 = vadd.f32 %v2197, %v2309
  %v2341 = vadd.f32 %v2199, %v2311
  %v2342 = vadd.f32 %v2201, %v2313
  %v2343 = vadd.f32 %v2203, %v2315
  %v2344 = vadd.f32 %v2205, %v2317
  %v2345 = vadd.f32 %v2207, %v2319
  %v2346 = vadd.f32 %v2209, %v2321
  %v2347 = vadd.f32 %v2211, %v2323
  %v2348 = vadd.f32 %v2213, %v2325
  %v2349 = vadd.f32 %v2215, %v2327
  %v2350 = vadd.f32 %v2217, %v2329
  %v2351 = vadd.f32 %v2219, %v2331
  %v2352 = vadd.f32 %v2221, %v2333
  %v2353 = vadd.f32 %v2223, %v2335
  %v2354 = vadd.f32 %v2225, %v2337
  %v2355 = vadd.f32 %v2227, %v2339
  %v2356 = vsub.f32 %v2134, %v2340
  %v2357 = vsub.f32 %v2137, %v2341
  %v2358 = vsub.f32 %v2142, %v2342
  %v2359 = vsub.f32 %v2145, %v2343
  %v2360 = vsub.f32 %v2150, %v2344
  %v2361 = vsub.f32 %v2153, %v2345
  %v2362 = vsub.f32 %v2158, %v2346
  %v2363 = vsub.f32 %v2161, %v2347
  %v2364 = vsub.f32 %v2166, %v2348
  %v2365 = vsub.f32 %v2169, %v2349
  %v2366 = vsub.f32 %v2174, %v2350
  %v2367 = vsub.f32 %v2177, %v2351
  %v2368 = vsub.f32 %v2182, %v2352
  %v2369 = vsub.f32 %v2185, %v2353
  %v2370 = vsub.f32 %v2190, %v2354
  %v2371 = vsub.f32 %v2193, %v2355
  %v2372 = vpack.c.bf16 %v2357, %v2356
  %v2373 = vpack.c.bf16 %v2359, %v2358
  %v2374 = vpack.c.bf16 %v2361, %v2360
  %v2375 = vpack.c.bf16 %v2363, %v2362
  %v2376 = vpack.c.bf16 %v2365, %v2364
  %v2377 = vpack.c.bf16 %v2367, %v2366
  %v2378 = vpack.c.bf16 %v2369, %v2368
  %v2379 = vpack.c.bf16 %v2371, %v2370
  %v2388 = vunpack.c.l.b16 %v2372
  %v2389 = vunpack.c.h.b16 %v2372
  %v2390 = vunpack.c.l.b16 %v2373
  %v2391 = vunpack.c.h.b16 %v2373
  %v2392 = vunpack.c.l.b16 %v2374
  %v2393 = vunpack.c.h.b16 %v2374
  %v2394 = vunpack.c.l.b16 %v2375
  %v2395 = vunpack.c.h.b16 %v2375
  %v2396 = vunpack.c.l.b16 %v2376
  %v2397 = vunpack.c.h.b16 %v2376
  %v2398 = vunpack.c.l.b16 %v2377
  %v2399 = vunpack.c.h.b16 %v2377
  %v2400 = vunpack.c.l.b16 %v2378
  %v2401 = vunpack.c.h.b16 %v2378
  %v2402 = vunpack.c.l.b16 %v2379
  %v2403 = vunpack.c.h.b16 %v2379
  %v2404 = vpack.c.b16 %v2388, %v2388
  %v2405 = vpack.c.b16 %v2389, %v2389
  %v2406 = vpack.c.b16 %v2390, %v2390
  %v2407 = vpack.c.b16 %v2391, %v2391
  %v2408 = vpack.c.b16 %v2392, %v2392
  %v2409 = vpack.c.b16 %v2393, %v2393
  %v2410 = vpack.c.b16 %v2394, %v2394
  %v2411 = vpack.c.b16 %v2395, %v2395
  %v2412 = vpack.c.b16 %v2396, %v2396
  %v2413 = vpack.c.b16 %v2397, %v2397
  %v2414 = vpack.c.b16 %v2398, %v2398
  %v2415 = vpack.c.b16 %v2399, %v2399
  %v2416 = vpack.c.b16 %v2400, %v2400
  %v2417 = vpack.c.b16 %v2401, %v2401
  %v2418 = vpack.c.b16 %v2402, %v2402
  %v2419 = vpack.c.b16 %v2403, %v2403
  %2436 = vst [vmem:[%s8 + $0x4] sm:$0xf] %v2404
  %2437 = vst [vmem:[%s8 + $0x18] sm:$0xf] %v2405
  %2438 = vst [vmem:[%s8 + $0x2c] sm:$0xf] %v2406
  %2439 = vst [vmem:[%s8 + $0x40] sm:$0xf] %v2407
  %2440 = vst [vmem:[%s8 + $0x54] sm:$0xf] %v2408
  %2441 = vst [vmem:[%s8 + $0x68] sm:$0xf] %v2409
  %2442 = vst [vmem:[%s8 + $0x7c] sm:$0xf] %v2410
  %2443 = vst [vmem:[%s8 + $0x90] sm:$0xf] %v2411
  %2444 = vst [vmem:[%s8 + $0xa4] sm:$0xf] %v2412
  %2445 = vst [vmem:[%s8 + $0xb8] sm:$0xf] %v2413
  %2446 = vst [vmem:[%s8 + $0xcc] sm:$0xf] %v2414
  %2447 = vst [vmem:[%s8 + $0xe0] sm:$0xf] %v2415
  %2448 = vst [vmem:[%s8 + $0xf4] sm:$0xf] %v2416
  %2449 = vst [vmem:[%s8 + $0x108] sm:$0xf] %v2417
  %2450 = vst [vmem:[%s8 + $0x11c] sm:$0xf] %v2418
  %2451 = vst [vmem:[%s8 + $0x130] sm:$0xf] %v2419
  %v2452 = vrcp.pop %v2277
  %v2453 = vmul.f32 1.0, %v2452
  %v2454 = vrcp.pop %v2279
  %v2455 = vmul.f32 1.0, %v2454
  %v2456 = vrcp.pop %v2281
  %v2457 = vmul.f32 1.0, %v2456
  %v2458 = vrcp.pop %v2283
  %v2459 = vmul.f32 1.0, %v2458
  %v2460 = vrcp.pop %v2285
  %v2461 = vmul.f32 1.0, %v2460
  %v2462 = vrcp.pop %v2287
  %v2463 = vmul.f32 1.0, %v2462
  %v2464 = vrcp.pop %v2289
  %v2465 = vmul.f32 1.0, %v2464
  %v2466 = vrcp.pop %v2291
  %v2467 = vmul.f32 1.0, %v2466
  %v2468 = vrcp.pop %v2293
  %v2469 = vmul.f32 1.0, %v2468
  %v2470 = vrcp.pop %v2295
  %v2471 = vmul.f32 1.0, %v2470
  %v2472 = vrcp.pop %v2297
  %v2473 = vmul.f32 1.0, %v2472
  %v2474 = vrcp.pop %v2299
  %v2475 = vmul.f32 1.0, %v2474
  %v2476 = vrcp.pop %v2301
  %v2477 = vmul.f32 1.0, %v2476
  %v2478 = vrcp.pop %v2303
  %v2479 = vmul.f32 1.0, %v2478
  %v2480 = vrcp.pop %v2305
  %v2481 = vmul.f32 1.0, %v2480
  %v2482 = vrcp.pop %v2307
  %v2483 = vmul.f32 1.0, %v2482
  %v2484 = vmul.f32 %v2245, %v2453
  %v2485 = vmul.f32 %v2247, %v2455
  %v2486 = vmul.f32 %v2249, %v2457
  %v2487 = vmul.f32 %v2251, %v2459
  %v2488 = vmul.f32 %v2253, %v2461
  %v2489 = vmul.f32 %v2255, %v2463
  %v2490 = vmul.f32 %v2257, %v2465
  %v2491 = vmul.f32 %v2259, %v2467
  %v2492 = vmul.f32 %v2261, %v2469
  %v2493 = vmul.f32 %v2263, %v2471
  %v2494 = vmul.f32 %v2265, %v2473
  %v2495 = vmul.f32 %v2267, %v2475
  %v2496 = vmul.f32 %v2269, %v2477
  %v2497 = vmul.f32 %v2271, %v2479
  %v2498 = vmul.f32 %v2273, %v2481
  %v2499 = vmul.f32 %v2275, %v2483
  %v2500 = vld [vmem:[%s5 + $0x1] sm:$0x1]
  %v2502 = vlaneseq
  %v2503 = vshrl.u32 %v2502, 7
  %v2504 = vsub.s32 0, %v2503
  %v2505 = vrot.slane %v2500, %v2504
  %v2507 = vmul.f32 %v2484, %v2505
  %v2508 = vmul.f32 %v2485, %v2505
  %v2509 = vmul.f32 %v2486, %v2505
  %v2510 = vmul.f32 %v2487, %v2505
  %v2511 = vmul.f32 %v2488, %v2505
  %v2512 = vmul.f32 %v2489, %v2505
  %v2513 = vmul.f32 %v2490, %v2505
  %v2514 = vmul.f32 %v2491, %v2505
  %v2515 = vmul.f32 %v2492, %v2505
  %v2516 = vmul.f32 %v2493, %v2505
  %v2517 = vmul.f32 %v2494, %v2505
  %v2518 = vmul.f32 %v2495, %v2505
  %v2519 = vmul.f32 %v2496, %v2505
  %v2520 = vmul.f32 %v2497, %v2505
  %v2521 = vmul.f32 %v2498, %v2505
  %v2522 = vmul.f32 %v2499, %v2505
  %v2523 = vadd.f32 %v2012, %v2507
  %v2524 = vadd.f32 %v2013, %v2508
  %v2525 = vadd.f32 %v2014, %v2509
  %v2526 = vadd.f32 %v2015, %v2510
  %v2527 = vadd.f32 %v2016, %v2511
  %v2528 = vadd.f32 %v2017, %v2512
  %v2529 = vadd.f32 %v2018, %v2513
  %v2530 = vadd.f32 %v2019, %v2514
  %v2531 = vadd.f32 %v2020, %v2515
  %v2532 = vadd.f32 %v2021, %v2516
  %v2533 = vadd.f32 %v2022, %v2517
  %v2534 = vadd.f32 %v2023, %v2518
  %v2535 = vadd.f32 %v2024, %v2519
  %v2536 = vadd.f32 %v2025, %v2520
  %v2537 = vadd.f32 %v2026, %v2521
  %v2538 = vadd.f32 %v2027, %v2522
  %v2539 = vld [vmem:[%s3 + $0x8] sm:$0xf]
  %v2540 = vld [vmem:[%s3 + $0x1c] sm:$0xf]
  %v2541 = vld [vmem:[%s3 + $0x30] sm:$0xf]
  %v2542 = vld [vmem:[%s3 + $0x44] sm:$0xf]
  %v2543 = vld [vmem:[%s3 + $0x58] sm:$0xf]
  %v2544 = vld [vmem:[%s3 + $0x6c] sm:$0xf]
  %v2545 = vld [vmem:[%s3 + $0x80] sm:$0xf]
  %v2546 = vld [vmem:[%s3 + $0x94] sm:$0xf]
  %v2547 = vld [vmem:[%s3 + $0xa8] sm:$0xf]
  %v2548 = vld [vmem:[%s3 + $0xbc] sm:$0xf]
  %v2549 = vld [vmem:[%s3 + $0xd0] sm:$0xf]
  %v2550 = vld [vmem:[%s3 + $0xe4] sm:$0xf]
  %v2551 = vld [vmem:[%s3 + $0xf8] sm:$0xf]
  %v2552 = vld [vmem:[%s3 + $0x10c] sm:$0xf]
  %v2553 = vld [vmem:[%s3 + $0x120] sm:$0xf]
  %v2554 = vld [vmem:[%s3 + $0x134] sm:$0xf]
  %v2555 = vld [vmem:[%s4 + $0x2] sm:$0x1]
  %v2557 = vlaneseq
  %v2558 = vshrl.u32 %v2557, 7
  %v2559 = vsub.s32 0, %v2558
  %v2560 = vrot.slane %v2555, %v2559
  %v2578 = vunpack.c.l.b16 %v2539
  %v2579 = vunpack.c.l.b16 %v2540
  %v2580 = vunpack.c.l.b16 %v2541
  %v2581 = vunpack.c.l.b16 %v2542
  %v2582 = vunpack.c.l.b16 %v2543
  %v2583 = vunpack.c.l.b16 %v2544
  %v2584 = vunpack.c.l.b16 %v2545
  %v2585 = vunpack.c.l.b16 %v2546
  %v2586 = vunpack.c.l.b16 %v2547
  %v2587 = vunpack.c.l.b16 %v2548
  %v2588 = vunpack.c.l.b16 %v2549
  %v2589 = vunpack.c.l.b16 %v2550
  %v2590 = vunpack.c.l.b16 %v2551
  %v2591 = vunpack.c.l.b16 %v2552
  %v2592 = vunpack.c.l.b16 %v2553
  %v2593 = vunpack.c.l.b16 %v2554
  %v2594 = vpack.c.b16 %v2579, %v2578
  %v2595 = vpack.c.b16 %v2581, %v2580
  %v2596 = vpack.c.b16 %v2583, %v2582
  %v2597 = vpack.c.b16 %v2585, %v2584
  %v2598 = vpack.c.b16 %v2587, %v2586
  %v2599 = vpack.c.b16 %v2589, %v2588
  %v2600 = vpack.c.b16 %v2591, %v2590
  %v2601 = vpack.c.b16 %v2593, %v2592
  %2610 = vmatprep.subr.bf16.mxu0 0
  %2611 = vmatpush1.bf16.msra.mxu0 %v2594
  %2612 = vmatprep.subr.bf16.mxu0 0
  %2613 = vmatpush1.bf16.msra.mxu0 %v2595
  %2614 = vmatprep.subr.bf16.mxu0 0
  %2615 = vmatpush1.bf16.msra.mxu0 %v2596
  %2616 = vmatprep.subr.bf16.mxu0 0
  %2617 = vmatpush1.bf16.msra.mxu0 %v2597
  %2618 = vmatprep.subr.bf16.mxu0 0
  %2619 = vmatpush1.bf16.msra.mxu0 %v2598
  %2620 = vmatprep.subr.bf16.mxu0 0
  %2621 = vmatpush1.bf16.msra.mxu0 %v2599
  %2622 = vmatprep.subr.bf16.mxu0 0
  %2623 = vmatpush1.bf16.msra.mxu0 %v2600
  %2624 = vmatprep.subr.bf16.mxu0 0
  %2625 = vmatpush1.bf16.msra.mxu0 %v2601
  %2626 = vmatprep.subr.bf16.mxu0 0
  %2627 = vmatpush1.bf16.msra.mxu0 0
  %2628 = vmatprep.subr.bf16.mxu0 0
  %2629 = vmatpush1.bf16.msra.mxu0 0
  %2630 = vmatprep.subr.bf16.mxu0 0
  %2631 = vmatpush1.bf16.msra.mxu0 0
  %2632 = vmatprep.subr.bf16.mxu0 0
  %2633 = vmatpush1.bf16.msra.mxu0 0
  %2634 = vmatprep.subr.bf16.mxu0 0
  %2635 = vmatpush1.bf16.msra.mxu0 0
  %2636 = vmatprep.subr.bf16.mxu0 0
  %2637 = vmatpush1.bf16.msra.mxu0 0
  %2638 = vmatprep.subr.bf16.mxu0 0
  %2639 = vmatpush1.bf16.msra.mxu0 0
  %2640 = vmatprep.subr.bf16.mxu0 0
  %2641 = vmatpush1.bf16.msra.mxu0 0
  %2642 = vmatprep.mubr.bf16.mxu0 0
  %2643 = vmatmul.mubr.bf16.gmra.mrb[0].mxu0 %v1335
  %v2644 = vpop.f32.mrb[0].mxu0
  %v2645 = vadd.f32 %v2560, %v2644
  %v2646 = vpop.f32.mrb[0].mxu0
  %v2647 = vpop.f32.mrb[0].mxu0
  %v2648 = vadd.f32 %v2560, %v2647
  %v2649 = vpop.f32.mrb[0].mxu0
  %2650 = vmatprep.mubr.bf16.mxu0 0
  %2651 = vmatmul.mubr.bf16.gmra.mrb[0].mxu0 %v1336
  %v2652 = vpop.f32.mrb[0].mxu0
  %v2653 = vadd.f32 %v2560, %v2652
  %v2654 = vpop.f32.mrb[0].mxu0
  %v2655 = vpop.f32.mrb[0].mxu0
  %v2656 = vadd.f32 %v2560, %v2655
  %v2657 = vpop.f32.mrb[0].mxu0
  %2658 = vmatprep.mubr.bf16.mxu0 0
  %2659 = vmatmul.mubr.bf16.gmra.mrb[0].mxu0 %v1337
  %v2660 = vpop.f32.mrb[0].mxu0
  %v2661 = vadd.f32 %v2560, %v2660
  %v2662 = vpop.f32.mrb[0].mxu0
  %v2663 = vpop.f32.mrb[0].mxu0
  %v2664 = vadd.f32 %v2560, %v2663
  %v2665 = vpop.f32.mrb[0].mxu0
  %2666 = vmatprep.mubr.bf16.mxu0 0
  %2667 = vmatmul.mubr.bf16.gmra.mrb[0].mxu0 %v1338
  %v2668 = vpop.f32.mrb[0].mxu0
  %v2669 = vadd.f32 %v2560, %v2668
  %v2670 = vpop.f32.mrb[0].mxu0
  %v2671 = vpop.f32.mrb[0].mxu0
  %v2672 = vadd.f32 %v2560, %v2671
  %v2673 = vpop.f32.mrb[0].mxu0
  %2674 = vmatprep.mubr.bf16.mxu0 0
  %2675 = vmatmul.mubr.bf16.gmra.mrb[0].mxu0 %v1339
  %v2676 = vpop.f32.mrb[0].mxu0
  %v2677 = vadd.f32 %v2560, %v2676
  %v2678 = vpop.f32.mrb[0].mxu0
  %v2679 = vpop.f32.mrb[0].mxu0
  %v2680 = vadd.f32 %v2560, %v2679
  %v2681 = vpop.f32.mrb[0].mxu0
  %2682 = vmatprep.mubr.bf16.mxu0 0
  %2683 = vmatmul.mubr.bf16.gmra.mrb[0].mxu0 %v1340
  %v2684 = vpop.f32.mrb[0].mxu0
  %v2685 = vadd.f32 %v2560, %v2684
  %v2686 = vpop.f32.mrb[0].mxu0
  %v2687 = vpop.f32.mrb[0].mxu0
  %v2688 = vadd.f32 %v2560, %v2687
  %v2689 = vpop.f32.mrb[0].mxu0
  %2690 = vmatprep.mubr.bf16.mxu0 0
  %2691 = vmatmul.mubr.bf16.gmra.mrb[0].mxu0 %v1341
  %v2692 = vpop.f32.mrb[0].mxu0
  %v2693 = vadd.f32 %v2560, %v2692
  %v2694 = vpop.f32.mrb[0].mxu0
  %v2695 = vpop.f32.mrb[0].mxu0
  %v2696 = vadd.f32 %v2560, %v2695
  %v2697 = vpop.f32.mrb[0].mxu0
  %2698 = vmatprep.mubr.bf16.mxu0 0
  %2699 = vmatmul.mubr.bf16.gmra.mrb[0].mxu0 %v1342
  %v2700 = vpop.f32.mrb[0].mxu0
  %v2701 = vadd.f32 %v2560, %v2700
  %v2702 = vpop.f32.mrb[0].mxu0
  %v2703 = vpop.f32.mrb[0].mxu0
  %v2704 = vadd.f32 %v2560, %v2703
  %v2705 = vpop.f32.mrb[0].mxu0
  %2706 = vdwg.mxu0
  %2707 = vmax.xlane.f32.xlu0 %v2645
  %v2708 = vpop.xlane.xlu0 %2707
  %2709 = vmax.xlane.f32.xlu0 %v2648
  %v2710 = vpop.xlane.xlu0 %2709
  %2711 = vmax.xlane.f32.xlu0 %v2653
  %v2712 = vpop.xlane.xlu0 %2711
  %2713 = vmax.xlane.f32.xlu0 %v2656
  %v2714 = vpop.xlane.xlu0 %2713
  %2715 = vmax.xlane.f32.xlu0 %v2661
  %v2716 = vpop.xlane.xlu0 %2715
  %2717 = vmax.xlane.f32.xlu0 %v2664
  %v2718 = vpop.xlane.xlu0 %2717
  %2719 = vmax.xlane.f32.xlu0 %v2669
  %v2720 = vpop.xlane.xlu0 %2719
  %2721 = vmax.xlane.f32.xlu0 %v2672
  %v2722 = vpop.xlane.xlu0 %2721
  %2723 = vmax.xlane.f32.xlu0 %v2677
  %v2724 = vpop.xlane.xlu0 %2723
  %2725 = vmax.xlane.f32.xlu0 %v2680
  %v2726 = vpop.xlane.xlu0 %2725
  %2727 = vmax.xlane.f32.xlu0 %v2685
  %v2728 = vpop.xlane.xlu0 %2727
  %2729 = vmax.xlane.f32.xlu0 %v2688
  %v2730 = vpop.xlane.xlu0 %2729
  %2731 = vmax.xlane.f32.xlu0 %v2693
  %v2732 = vpop.xlane.xlu0 %2731
  %2733 = vmax.xlane.f32.xlu0 %v2696
  %v2734 = vpop.xlane.xlu0 %2733
  %2735 = vmax.xlane.f32.xlu0 %v2701
  %v2736 = vpop.xlane.xlu0 %2735
  %2737 = vmax.xlane.f32.xlu0 %v2704
  %v2738 = vpop.xlane.xlu0 %2737
  %v2739 = vsub.f32 %v2645, %v2708
  %v2740 = vsub.f32 %v2648, %v2710
  %v2741 = vsub.f32 %v2653, %v2712
  %v2742 = vsub.f32 %v2656, %v2714
  %v2743 = vsub.f32 %v2661, %v2716
  %v2744 = vsub.f32 %v2664, %v2718
  %v2745 = vsub.f32 %v2669, %v2720
  %v2746 = vsub.f32 %v2672, %v2722
  %v2747 = vsub.f32 %v2677, %v2724
  %v2748 = vsub.f32 %v2680, %v2726
  %v2749 = vsub.f32 %v2685, %v2728
  %v2750 = vsub.f32 %v2688, %v2730
  %v2751 = vsub.f32 %v2693, %v2732
  %v2752 = vsub.f32 %v2696, %v2734
  %v2753 = vsub.f32 %v2701, %v2736
  %v2754 = vsub.f32 %v2704, %v2738
  %v2755 = vmul.f32 %v2739, 1.442695
  %v2756 = vpow.pop %v2755
  %v2757 = vmul.f32 %v2740, 1.442695
  %v2758 = vpow.pop %v2757
  %v2759 = vmul.f32 %v2741, 1.442695
  %v2760 = vpow.pop %v2759
  %v2761 = vmul.f32 %v2742, 1.442695
  %v2762 = vpow.pop %v2761
  %v2763 = vmul.f32 %v2743, 1.442695
  %v2764 = vpow.pop %v2763
  %v2765 = vmul.f32 %v2744, 1.442695
  %v2766 = vpow.pop %v2765
  %v2767 = vmul.f32 %v2745, 1.442695
  %v2768 = vpow.pop %v2767
  %v2769 = vmul.f32 %v2746, 1.442695
  %v2770 = vpow.pop %v2769
  %v2771 = vmul.f32 %v2747, 1.442695
  %v2772 = vpow.pop %v2771
  %v2773 = vmul.f32 %v2748, 1.442695
  %v2774 = vpow.pop %v2773
  %v2775 = vmul.f32 %v2749, 1.442695
  %v2776 = vpow.pop %v2775
  %v2777 = vmul.f32 %v2750, 1.442695
  %v2778 = vpow.pop %v2777
  %v2779 = vmul.f32 %v2751, 1.442695
  %v2780 = vpow.pop %v2779
  %v2781 = vmul.f32 %v2752, 1.442695
  %v2782 = vpow.pop %v2781
  %v2783 = vmul.f32 %v2753, 1.442695
  %v2784 = vpow.pop %v2783
  %v2785 = vmul.f32 %v2754, 1.442695
  %v2786 = vpow.pop %v2785
  %2787 = vadd.xlane.f32.xlu0 %v2756
  %v2788 = vpop.xlane.xlu0 %2787
  %2789 = vadd.xlane.f32.xlu0 %v2758
  %v2790 = vpop.xlane.xlu0 %2789
  %2791 = vadd.xlane.f32.xlu0 %v2760
  %v2792 = vpop.xlane.xlu0 %2791
  %2793 = vadd.xlane.f32.xlu0 %v2762
  %v2794 = vpop.xlane.xlu0 %2793
  %2795 = vadd.xlane.f32.xlu0 %v2764
  %v2796 = vpop.xlane.xlu0 %2795
  %2797 = vadd.xlane.f32.xlu0 %v2766
  %v2798 = vpop.xlane.xlu0 %2797
  %2799 = vadd.xlane.f32.xlu0 %v2768
  %v2800 = vpop.xlane.xlu0 %2799
  %2801 = vadd.xlane.f32.xlu0 %v2770
  %v2802 = vpop.xlane.xlu0 %2801
  %2803 = vadd.xlane.f32.xlu0 %v2772
  %v2804 = vpop.xlane.xlu0 %2803
  %2805 = vadd.xlane.f32.xlu0 %v2774
  %v2806 = vpop.xlane.xlu0 %2805
  %2807 = vadd.xlane.f32.xlu0 %v2776
  %v2808 = vpop.xlane.xlu0 %2807
  %2809 = vadd.xlane.f32.xlu0 %v2778
  %v2810 = vpop.xlane.xlu0 %2809
  %2811 = vadd.xlane.f32.xlu0 %v2780
  %v2812 = vpop.xlane.xlu0 %2811
  %2813 = vadd.xlane.f32.xlu0 %v2782
  %v2814 = vpop.xlane.xlu0 %2813
  %2815 = vadd.xlane.f32.xlu0 %v2784
  %v2816 = vpop.xlane.xlu0 %2815
  %2817 = vadd.xlane.f32.xlu0 %v2786
  %v2818 = vpop.xlane.xlu0 %2817
  %v2819 = vlog2.pop %v2788
  %v2820 = vmul.f32 %v2819, 0.6931472
  %v2821 = vlog2.pop %v2790
  %v2822 = vmul.f32 %v2821, 0.6931472
  %v2823 = vlog2.pop %v2792
  %v2824 = vmul.f32 %v2823, 0.6931472
  %v2825 = vlog2.pop %v2794
  %v2826 = vmul.f32 %v2825, 0.6931472
  %v2827 = vlog2.pop %v2796
  %v2828 = vmul.f32 %v2827, 0.6931472
  %v2829 = vlog2.pop %v2798
  %v2830 = vmul.f32 %v2829, 0.6931472
  %v2831 = vlog2.pop %v2800
  %v2832 = vmul.f32 %v2831, 0.6931472
  %v2833 = vlog2.pop %v2802
  %v2834 = vmul.f32 %v2833, 0.6931472
  %v2835 = vlog2.pop %v2804
  %v2836 = vmul.f32 %v2835, 0.6931472
  %v2837 = vlog2.pop %v2806
  %v2838 = vmul.f32 %v2837, 0.6931472
  %v2839 = vlog2.pop %v2808
  %v2840 = vmul.f32 %v2839, 0.6931472
  %v2841 = vlog2.pop %v2810
  %v2842 = vmul.f32 %v2841, 0.6931472
  %v2843 = vlog2.pop %v2812
  %v2844 = vmul.f32 %v2843, 0.6931472
  %v2845 = vlog2.pop %v2814
  %v2846 = vmul.f32 %v2845, 0.6931472
  %v2847 = vlog2.pop %v2816
  %v2848 = vmul.f32 %v2847, 0.6931472
  %v2849 = vlog2.pop %v2818
  %v2850 = vmul.f32 %v2849, 0.6931472
  %v2851 = vadd.f32 %v2708, %v2820
  %v2852 = vadd.f32 %v2710, %v2822
  %v2853 = vadd.f32 %v2712, %v2824
  %v2854 = vadd.f32 %v2714, %v2826
  %v2855 = vadd.f32 %v2716, %v2828
  %v2856 = vadd.f32 %v2718, %v2830
  %v2857 = vadd.f32 %v2720, %v2832
  %v2858 = vadd.f32 %v2722, %v2834
  %v2859 = vadd.f32 %v2724, %v2836
  %v2860 = vadd.f32 %v2726, %v2838
  %v2861 = vadd.f32 %v2728, %v2840
  %v2862 = vadd.f32 %v2730, %v2842
  %v2863 = vadd.f32 %v2732, %v2844
  %v2864 = vadd.f32 %v2734, %v2846
  %v2865 = vadd.f32 %v2736, %v2848
  %v2866 = vadd.f32 %v2738, %v2850
  %v2867 = vsub.f32 %v2645, %v2851
  %v2868 = vsub.f32 %v2648, %v2852
  %v2869 = vsub.f32 %v2653, %v2853
  %v2870 = vsub.f32 %v2656, %v2854
  %v2871 = vsub.f32 %v2661, %v2855
  %v2872 = vsub.f32 %v2664, %v2856
  %v2873 = vsub.f32 %v2669, %v2857
  %v2874 = vsub.f32 %v2672, %v2858
  %v2875 = vsub.f32 %v2677, %v2859
  %v2876 = vsub.f32 %v2680, %v2860
  %v2877 = vsub.f32 %v2685, %v2861
  %v2878 = vsub.f32 %v2688, %v2862
  %v2879 = vsub.f32 %v2693, %v2863
  %v2880 = vsub.f32 %v2696, %v2864
  %v2881 = vsub.f32 %v2701, %v2865
  %v2882 = vsub.f32 %v2704, %v2866
  %v2883 = vpack.c.bf16 %v2868, %v2867
  %v2884 = vpack.c.bf16 %v2870, %v2869
  %v2885 = vpack.c.bf16 %v2872, %v2871
  %v2886 = vpack.c.bf16 %v2874, %v2873
  %v2887 = vpack.c.bf16 %v2876, %v2875
  %v2888 = vpack.c.bf16 %v2878, %v2877
  %v2889 = vpack.c.bf16 %v2880, %v2879
  %v2890 = vpack.c.bf16 %v2882, %v2881
  %v2899 = vunpack.c.l.b16 %v2883
  %v2900 = vunpack.c.h.b16 %v2883
  %v2901 = vunpack.c.l.b16 %v2884
  %v2902 = vunpack.c.h.b16 %v2884
  %v2903 = vunpack.c.l.b16 %v2885
  %v2904 = vunpack.c.h.b16 %v2885
  %v2905 = vunpack.c.l.b16 %v2886
  %v2906 = vunpack.c.h.b16 %v2886
  %v2907 = vunpack.c.l.b16 %v2887
  %v2908 = vunpack.c.h.b16 %v2887
  %v2909 = vunpack.c.l.b16 %v2888
  %v2910 = vunpack.c.h.b16 %v2888
  %v2911 = vunpack.c.l.b16 %v2889
  %v2912 = vunpack.c.h.b16 %v2889
  %v2913 = vunpack.c.l.b16 %v2890
  %v2914 = vunpack.c.h.b16 %v2890
  %v2915 = vpack.c.b16 %v2899, %v2899
  %v2916 = vpack.c.b16 %v2900, %v2900
  %v2917 = vpack.c.b16 %v2901, %v2901
  %v2918 = vpack.c.b16 %v2902, %v2902
  %v2919 = vpack.c.b16 %v2903, %v2903
  %v2920 = vpack.c.b16 %v2904, %v2904
  %v2921 = vpack.c.b16 %v2905, %v2905
  %v2922 = vpack.c.b16 %v2906, %v2906
  %v2923 = vpack.c.b16 %v2907, %v2907
  %v2924 = vpack.c.b16 %v2908, %v2908
  %v2925 = vpack.c.b16 %v2909, %v2909
  %v2926 = vpack.c.b16 %v2910, %v2910
  %v2927 = vpack.c.b16 %v2911, %v2911
  %v2928 = vpack.c.b16 %v2912, %v2912
  %v2929 = vpack.c.b16 %v2913, %v2913
  %v2930 = vpack.c.b16 %v2914, %v2914
  %2947 = vst [vmem:[%s8 + $0x8] sm:$0xf] %v2915
  %2948 = vst [vmem:[%s8 + $0x1c] sm:$0xf] %v2916
  %2949 = vst [vmem:[%s8 + $0x30] sm:$0xf] %v2917
  %2950 = vst [vmem:[%s8 + $0x44] sm:$0xf] %v2918
  %2951 = vst [vmem:[%s8 + $0x58] sm:$0xf] %v2919
  %2952 = vst [vmem:[%s8 + $0x6c] sm:$0xf] %v2920
  %2953 = vst [vmem:[%s8 + $0x80] sm:$0xf] %v2921
  %2954 = vst [vmem:[%s8 + $0x94] sm:$0xf] %v2922
  %2955 = vst [vmem:[%s8 + $0xa8] sm:$0xf] %v2923
  %2956 = vst [vmem:[%s8 + $0xbc] sm:$0xf] %v2924
  %2957 = vst [vmem:[%s8 + $0xd0] sm:$0xf] %v2925
  %2958 = vst [vmem:[%s8 + $0xe4] sm:$0xf] %v2926
  %2959 = vst [vmem:[%s8 + $0xf8] sm:$0xf] %v2927
  %2960 = vst [vmem:[%s8 + $0x10c] sm:$0xf] %v2928
  %2961 = vst [vmem:[%s8 + $0x120] sm:$0xf] %v2929
  %2962 = vst [vmem:[%s8 + $0x134] sm:$0xf] %v2930
  %v2963 = vrcp.pop %v2788
  %v2964 = vmul.f32 1.0, %v2963
  %v2965 = vrcp.pop %v2790
  %v2966 = vmul.f32 1.0, %v2965
  %v2967 = vrcp.pop %v2792
  %v2968 = vmul.f32 1.0, %v2967
  %v2969 = vrcp.pop %v2794
  %v2970 = vmul.f32 1.0, %v2969
  %v2971 = vrcp.pop %v2796
  %v2972 = vmul.f32 1.0, %v2971
  %v2973 = vrcp.pop %v2798
  %v2974 = vmul.f32 1.0, %v2973
  %v2975 = vrcp.pop %v2800
  %v2976 = vmul.f32 1.0, %v2975
  %v2977 = vrcp.pop %v2802
  %v2978 = vmul.f32 1.0, %v2977
  %v2979 = vrcp.pop %v2804
  %v2980 = vmul.f32 1.0, %v2979
  %v2981 = vrcp.pop %v2806
  %v2982 = vmul.f32 1.0, %v2981
  %v2983 = vrcp.pop %v2808
  %v2984 = vmul.f32 1.0, %v2983
  %v2985 = vrcp.pop %v2810
  %v2986 = vmul.f32 1.0, %v2985
  %v2987 = vrcp.pop %v2812
  %v2988 = vmul.f32 1.0, %v2987
  %v2989 = vrcp.pop %v2814
  %v2990 = vmul.f32 1.0, %v2989
  %v2991 = vrcp.pop %v2816
  %v2992 = vmul.f32 1.0, %v2991
  %v2993 = vrcp.pop %v2818
  %v2994 = vmul.f32 1.0, %v2993
  %v2995 = vmul.f32 %v2756, %v2964
  %v2996 = vmul.f32 %v2758, %v2966
  %v2997 = vmul.f32 %v2760, %v2968
  %v2998 = vmul.f32 %v2762, %v2970
  %v2999 = vmul.f32 %v2764, %v2972
  %v3000 = vmul.f32 %v2766, %v2974
  %v3001 = vmul.f32 %v2768, %v2976
  %v3002 = vmul.f32 %v2770, %v2978
  %v3003 = vmul.f32 %v2772, %v2980
  %v3004 = vmul.f32 %v2774, %v2982
  %v3005 = vmul.f32 %v2776, %v2984
  %v3006 = vmul.f32 %v2778, %v2986
  %v3007 = vmul.f32 %v2780, %v2988
  %v3008 = vmul.f32 %v2782, %v2990
  %v3009 = vmul.f32 %v2784, %v2992
  %v3010 = vmul.f32 %v2786, %v2994
  %v3011 = vld [vmem:[%s5 + $0x2] sm:$0x1]
  %v3013 = vlaneseq
  %v3014 = vshrl.u32 %v3013, 7
  %v3015 = vsub.s32 0, %v3014
  %v3016 = vrot.slane %v3011, %v3015
  %v3018 = vmul.f32 %v2995, %v3016
  %v3019 = vmul.f32 %v2996, %v3016
  %v3020 = vmul.f32 %v2997, %v3016
  %v3021 = vmul.f32 %v2998, %v3016
  %v3022 = vmul.f32 %v2999, %v3016
  %v3023 = vmul.f32 %v3000, %v3016
  %v3024 = vmul.f32 %v3001, %v3016
  %v3025 = vmul.f32 %v3002, %v3016
  %v3026 = vmul.f32 %v3003, %v3016
  %v3027 = vmul.f32 %v3004, %v3016
  %v3028 = vmul.f32 %v3005, %v3016
  %v3029 = vmul.f32 %v3006, %v3016
  %v3030 = vmul.f32 %v3007, %v3016
  %v3031 = vmul.f32 %v3008, %v3016
  %v3032 = vmul.f32 %v3009, %v3016
  %v3033 = vmul.f32 %v3010, %v3016
  %v3034 = vadd.f32 %v2523, %v3018
  %v3035 = vadd.f32 %v2524, %v3019
  %v3036 = vadd.f32 %v2525, %v3020
  %v3037 = vadd.f32 %v2526, %v3021
  %v3038 = vadd.f32 %v2527, %v3022
  %v3039 = vadd.f32 %v2528, %v3023
  %v3040 = vadd.f32 %v2529, %v3024
  %v3041 = vadd.f32 %v2530, %v3025
  %v3042 = vadd.f32 %v2531, %v3026
  %v3043 = vadd.f32 %v2532, %v3027
  %v3044 = vadd.f32 %v2533, %v3028
  %v3045 = vadd.f32 %v2534, %v3029
  %v3046 = vadd.f32 %v2535, %v3030
  %v3047 = vadd.f32 %v2536, %v3031
  %v3048 = vadd.f32 %v2537, %v3032
  %v3049 = vadd.f32 %v2538, %v3033
  %v3050 = vld [vmem:[%s3 + $0xc] sm:$0xf]
  %v3051 = vld [vmem:[%s3 + $0x20] sm:$0xf]
  %v3052 = vld [vmem:[%s3 + $0x34] sm:$0xf]
  %v3053 = vld [vmem:[%s3 + $0x48] sm:$0xf]
  %v3054 = vld [vmem:[%s3 + $0x5c] sm:$0xf]
  %v3055 = vld [vmem:[%s3 + $0x70] sm:$0xf]
  %v3056 = vld [vmem:[%s3 + $0x84] sm:$0xf]
  %v3057 = vld [vmem:[%s3 + $0x98] sm:$0xf]
  %v3058 = vld [vmem:[%s3 + $0xac] sm:$0xf]
  %v3059 = vld [vmem:[%s3 + $0xc0] sm:$0xf]
  %v3060 = vld [vmem:[%s3 + $0xd4] sm:$0xf]
  %v3061 = vld [vmem:[%s3 + $0xe8] sm:$0xf]
  %v3062 = vld [vmem:[%s3 + $0xfc] sm:$0xf]
  %v3063 = vld [vmem:[%s3 + $0x110] sm:$0xf]
  %v3064 = vld [vmem:[%s3 + $0x124] sm:$0xf]
  %v3065 = vld [vmem:[%s3 + $0x138] sm:$0xf]
  %v3066 = vld [vmem:[%s4 + $0x3] sm:$0x1]
  %v3068 = vlaneseq
  %v3069 = vshrl.u32 %v3068, 7
  %v3070 = vsub.s32 0, %v3069
  %v3071 = vrot.slane %v3066, %v3070
  %v3089 = vunpack.c.l.b16 %v3050
  %v3090 = vunpack.c.l.b16 %v3051
  %v3091 = vunpack.c.l.b16 %v3052
  %v3092 = vunpack.c.l.b16 %v3053
  %v3093 = vunpack.c.l.b16 %v3054
  %v3094 = vunpack.c.l.b16 %v3055
  %v3095 = vunpack.c.l.b16 %v3056
  %v3096 = vunpack.c.l.b16 %v3057
  %v3097 = vunpack.c.l.b16 %v3058
  %v3098 = vunpack.c.l.b16 %v3059
  %v3099 = vunpack.c.l.b16 %v3060
  %v3100 = vunpack.c.l.b16 %v3061
  %v3101 = vunpack.c.l.b16 %v3062
  %v3102 = vunpack.c.l.b16 %v3063
  %v3103 = vunpack.c.l.b16 %v3064
  %v3104 = vunpack.c.l.b16 %v3065
  %v3105 = vpack.c.b16 %v3090, %v3089
  %v3106 = vpack.c.b16 %v3092, %v3091
  %v3107 = vpack.c.b16 %v3094, %v3093
  %v3108 = vpack.c.b16 %v3096, %v3095
  %v3109 = vpack.c.b16 %v3098, %v3097
  %v3110 = vpack.c.b16 %v3100, %v3099
  %v3111 = vpack.c.b16 %v3102, %v3101
  %v3112 = vpack.c.b16 %v3104, %v3103
  %3121 = vmatprep.subr.bf16.mxu0 0
  %3122 = vmatpush1.bf16.msra.mxu0 %v3105
  %3123 = vmatprep.subr.bf16.mxu0 0
  %3124 = vmatpush1.bf16.msra.mxu0 %v3106
  %3125 = vmatprep.subr.bf16.mxu0 0
  %3126 = vmatpush1.bf16.msra.mxu0 %v3107
  %3127 = vmatprep.subr.bf16.mxu0 0
  %3128 = vmatpush1.bf16.msra.mxu0 %v3108
  %3129 = vmatprep.subr.bf16.mxu0 0
  %3130 = vmatpush1.bf16.msra.mxu0 %v3109
  %3131 = vmatprep.subr.bf16.mxu0 0
  %3132 = vmatpush1.bf16.msra.mxu0 %v3110
  %3133 = vmatprep.subr.bf16.mxu0 0
  %3134 = vmatpush1.bf16.msra.mxu0 %v3111
  %3135 = vmatprep.subr.bf16.mxu0 0
  %3136 = vmatpush1.bf16.msra.mxu0 %v3112
  %3137 = vmatprep.subr.bf16.mxu0 0
  %3138 = vmatpush1.bf16.msra.mxu0 0
  %3139 = vmatprep.subr.bf16.mxu0 0
  %3140 = vmatpush1.bf16.msra.mxu0 0
  %3141 = vmatprep.subr.bf16.mxu0 0
  %3142 = vmatpush1.bf16.msra.mxu0 0
  %3143 = vmatprep.subr.bf16.mxu0 0
  %3144 = vmatpush1.bf16.msra.mxu0 0
  %3145 = vmatprep.subr.bf16.mxu0 0
  %3146 = vmatpush1.bf16.msra.mxu0 0
  %3147 = vmatprep.subr.bf16.mxu0 0
  %3148 = vmatpush1.bf16.msra.mxu0 0
  %3149 = vmatprep.subr.bf16.mxu0 0
  %3150 = vmatpush1.bf16.msra.mxu0 0
  %3151 = vmatprep.subr.bf16.mxu0 0
  %3152 = vmatpush1.bf16.msra.mxu0 0
  %3153 = vmatprep.mubr.bf16.mxu0 0
  %3154 = vmatmul.mubr.bf16.gmra.mrb[0].mxu0 %v1335
  %v3155 = vpop.f32.mrb[0].mxu0
  %v3156 = vadd.f32 %v3071, %v3155
  %v3157 = vpop.f32.mrb[0].mxu0
  %v3158 = vpop.f32.mrb[0].mxu0
  %v3159 = vadd.f32 %v3071, %v3158
  %v3160 = vpop.f32.mrb[0].mxu0
  %3161 = vmatprep.mubr.bf16.mxu0 0
  %3162 = vmatmul.mubr.bf16.gmra.mrb[0].mxu0 %v1336
  %v3163 = vpop.f32.mrb[0].mxu0
  %v3164 = vadd.f32 %v3071, %v3163
  %v3165 = vpop.f32.mrb[0].mxu0
  %v3166 = vpop.f32.mrb[0].mxu0
  %v3167 = vadd.f32 %v3071, %v3166
  %v3168 = vpop.f32.mrb[0].mxu0
  %3169 = vmatprep.mubr.bf16.mxu0 0
  %3170 = vmatmul.mubr.bf16.gmra.mrb[0].mxu0 %v1337
  %v3171 = vpop.f32.mrb[0].mxu0
  %v3172 = vadd.f32 %v3071, %v3171
  %v3173 = vpop.f32.mrb[0].mxu0
  %v3174 = vpop.f32.mrb[0].mxu0
  %v3175 = vadd.f32 %v3071, %v3174
  %v3176 = vpop.f32.mrb[0].mxu0
  %3177 = vmatprep.mubr.bf16.mxu0 0
  %3178 = vmatmul.mubr.bf16.gmra.mrb[0].mxu0 %v1338
  %v3179 = vpop.f32.mrb[0].mxu0
  %v3180 = vadd.f32 %v3071, %v3179
  %v3181 = vpop.f32.mrb[0].mxu0
  %v3182 = vpop.f32.mrb[0].mxu0
  %v3183 = vadd.f32 %v3071, %v3182
  %v3184 = vpop.f32.mrb[0].mxu0
  %3185 = vmatprep.mubr.bf16.mxu0 0
  %3186 = vmatmul.mubr.bf16.gmra.mrb[0].mxu0 %v1339
  %v3187 = vpop.f32.mrb[0].mxu0
  %v3188 = vadd.f32 %v3071, %v3187
  %v3189 = vpop.f32.mrb[0].mxu0
  %v3190 = vpop.f32.mrb[0].mxu0
  %v3191 = vadd.f32 %v3071, %v3190
  %v3192 = vpop.f32.mrb[0].mxu0
  %3193 = vmatprep.mubr.bf16.mxu0 0
  %3194 = vmatmul.mubr.bf16.gmra.mrb[0].mxu0 %v1340
  %v3195 = vpop.f32.mrb[0].mxu0
  %v3196 = vadd.f32 %v3071, %v3195
  %v3197 = vpop.f32.mrb[0].mxu0
  %v3198 = vpop.f32.mrb[0].mxu0
  %v3199 = vadd.f32 %v3071, %v3198
  %v3200 = vpop.f32.mrb[0].mxu0
  %3201 = vmatprep.mubr.bf16.mxu0 0
  %3202 = vmatmul.mubr.bf16.gmra.mrb[0].mxu0 %v1341
  %v3203 = vpop.f32.mrb[0].mxu0
  %v3204 = vadd.f32 %v3071, %v3203
  %v3205 = vpop.f32.mrb[0].mxu0
  %v3206 = vpop.f32.mrb[0].mxu0
  %v3207 = vadd.f32 %v3071, %v3206
  %v3208 = vpop.f32.mrb[0].mxu0
  %3209 = vmatprep.mubr.bf16.mxu0 0
  %3210 = vmatmul.mubr.bf16.gmra.mrb[0].mxu0 %v1342
  %v3211 = vpop.f32.mrb[0].mxu0
  %v3212 = vadd.f32 %v3071, %v3211
  %v3213 = vpop.f32.mrb[0].mxu0
  %v3214 = vpop.f32.mrb[0].mxu0
  %v3215 = vadd.f32 %v3071, %v3214
  %v3216 = vpop.f32.mrb[0].mxu0
  %3217 = vdwg.mxu0
  %3218 = vmax.xlane.f32.xlu0 %v3156
  %v3219 = vpop.xlane.xlu0 %3218
  %3220 = vmax.xlane.f32.xlu0 %v3159
  %v3221 = vpop.xlane.xlu0 %3220
  %3222 = vmax.xlane.f32.xlu0 %v3164
  %v3223 = vpop.xlane.xlu0 %3222
  %3224 = vmax.xlane.f32.xlu0 %v3167
  %v3225 = vpop.xlane.xlu0 %3224
  %3226 = vmax.xlane.f32.xlu0 %v3172
  %v3227 = vpop.xlane.xlu0 %3226
  %3228 = vmax.xlane.f32.xlu0 %v3175
  %v3229 = vpop.xlane.xlu0 %3228
  %3230 = vmax.xlane.f32.xlu0 %v3180
  %v3231 = vpop.xlane.xlu0 %3230
  %3232 = vmax.xlane.f32.xlu0 %v3183
  %v3233 = vpop.xlane.xlu0 %3232
  %3234 = vmax.xlane.f32.xlu0 %v3188
  %v3235 = vpop.xlane.xlu0 %3234
  %3236 = vmax.xlane.f32.xlu0 %v3191
  %v3237 = vpop.xlane.xlu0 %3236
  %3238 = vmax.xlane.f32.xlu0 %v3196
  %v3239 = vpop.xlane.xlu0 %3238
  %3240 = vmax.xlane.f32.xlu0 %v3199
  %v3241 = vpop.xlane.xlu0 %3240
  %3242 = vmax.xlane.f32.xlu0 %v3204
  %v3243 = vpop.xlane.xlu0 %3242
  %3244 = vmax.xlane.f32.xlu0 %v3207
  %v3245 = vpop.xlane.xlu0 %3244
  %3246 = vmax.xlane.f32.xlu0 %v3212
  %v3247 = vpop.xlane.xlu0 %3246
  %3248 = vmax.xlane.f32.xlu0 %v3215
  %v3249 = vpop.xlane.xlu0 %3248
  %v3250 = vsub.f32 %v3156, %v3219
  %v3251 = vsub.f32 %v3159, %v3221
  %v3252 = vsub.f32 %v3164, %v3223
  %v3253 = vsub.f32 %v3167, %v3225
  %v3254 = vsub.f32 %v3172, %v3227
  %v3255 = vsub.f32 %v3175, %v3229
  %v3256 = vsub.f32 %v3180, %v3231
  %v3257 = vsub.f32 %v3183, %v3233
  %v3258 = vsub.f32 %v3188, %v3235
  %v3259 = vsub.f32 %v3191, %v3237
  %v3260 = vsub.f32 %v3196, %v3239
  %v3261 = vsub.f32 %v3199, %v3241
  %v3262 = vsub.f32 %v3204, %v3243
  %v3263 = vsub.f32 %v3207, %v3245
  %v3264 = vsub.f32 %v3212, %v3247
  %v3265 = vsub.f32 %v3215, %v3249
  %v3266 = vmul.f32 %v3250, 1.442695
  %v3267 = vpow.pop %v3266
  %v3268 = vmul.f32 %v3251, 1.442695
  %v3269 = vpow.pop %v3268
  %v3270 = vmul.f32 %v3252, 1.442695
  %v3271 = vpow.pop %v3270
  %v3272 = vmul.f32 %v3253, 1.442695
  %v3273 = vpow.pop %v3272
  %v3274 = vmul.f32 %v3254, 1.442695
  %v3275 = vpow.pop %v3274
  %v3276 = vmul.f32 %v3255, 1.442695
  %v3277 = vpow.pop %v3276
  %v3278 = vmul.f32 %v3256, 1.442695
  %v3279 = vpow.pop %v3278
  %v3280 = vmul.f32 %v3257, 1.442695
  %v3281 = vpow.pop %v3280
  %v3282 = vmul.f32 %v3258, 1.442695
  %v3283 = vpow.pop %v3282
  %v3284 = vmul.f32 %v3259, 1.442695
  %v3285 = vpow.pop %v3284
  %v3286 = vmul.f32 %v3260, 1.442695
  %v3287 = vpow.pop %v3286
  %v3288 = vmul.f32 %v3261, 1.442695
  %v3289 = vpow.pop %v3288
  %v3290 = vmul.f32 %v3262, 1.442695
  %v3291 = vpow.pop %v3290
  %v3292 = vmul.f32 %v3263, 1.442695
  %v3293 = vpow.pop %v3292
  %v3294 = vmul.f32 %v3264, 1.442695
  %v3295 = vpow.pop %v3294
  %v3296 = vmul.f32 %v3265, 1.442695
  %v3297 = vpow.pop %v3296
  %3298 = vadd.xlane.f32.xlu0 %v3267
  %v3299 = vpop.xlane.xlu0 %3298
  %3300 = vadd.xlane.f32.xlu0 %v3269
  %v3301 = vpop.xlane.xlu0 %3300
  %3302 = vadd.xlane.f32.xlu0 %v3271
  %v3303 = vpop.xlane.xlu0 %3302
  %3304 = vadd.xlane.f32.xlu0 %v3273
  %v3305 = vpop.xlane.xlu0 %3304
  %3306 = vadd.xlane.f32.xlu0 %v3275
  %v3307 = vpop.xlane.xlu0 %3306
  %3308 = vadd.xlane.f32.xlu0 %v3277
  %v3309 = vpop.xlane.xlu0 %3308
  %3310 = vadd.xlane.f32.xlu0 %v3279
  %v3311 = vpop.xlane.xlu0 %3310
  %3312 = vadd.xlane.f32.xlu0 %v3281
  %v3313 = vpop.xlane.xlu0 %3312
  %3314 = vadd.xlane.f32.xlu0 %v3283
  %v3315 = vpop.xlane.xlu0 %3314
  %3316 = vadd.xlane.f32.xlu0 %v3285
  %v3317 = vpop.xlane.xlu0 %3316
  %3318 = vadd.xlane.f32.xlu0 %v3287
  %v3319 = vpop.xlane.xlu0 %3318
  %3320 = vadd.xlane.f32.xlu0 %v3289
  %v3321 = vpop.xlane.xlu0 %3320
  %3322 = vadd.xlane.f32.xlu0 %v3291
  %v3323 = vpop.xlane.xlu0 %3322
  %3324 = vadd.xlane.f32.xlu0 %v3293
  %v3325 = vpop.xlane.xlu0 %3324
  %3326 = vadd.xlane.f32.xlu0 %v3295
  %v3327 = vpop.xlane.xlu0 %3326
  %3328 = vadd.xlane.f32.xlu0 %v3297
  %v3329 = vpop.xlane.xlu0 %3328
  %v3330 = vlog2.pop %v3299
  %v3331 = vmul.f32 %v3330, 0.6931472
  %v3332 = vlog2.pop %v3301
  %v3333 = vmul.f32 %v3332, 0.6931472
  %v3334 = vlog2.pop %v3303
  %v3335 = vmul.f32 %v3334, 0.6931472
  %v3336 = vlog2.pop %v3305
  %v3337 = vmul.f32 %v3336, 0.6931472
  %v3338 = vlog2.pop %v3307
  %v3339 = vmul.f32 %v3338, 0.6931472
  %v3340 = vlog2.pop %v3309
  %v3341 = vmul.f32 %v3340, 0.6931472
  %v3342 = vlog2.pop %v3311
  %v3343 = vmul.f32 %v3342, 0.6931472
  %v3344 = vlog2.pop %v3313
  %v3345 = vmul.f32 %v3344, 0.6931472
  %v3346 = vlog2.pop %v3315
  %v3347 = vmul.f32 %v3346, 0.6931472
  %v3348 = vlog2.pop %v3317
  %v3349 = vmul.f32 %v3348, 0.6931472
  %v3350 = vlog2.pop %v3319
  %v3351 = vmul.f32 %v3350, 0.6931472
  %v3352 = vlog2.pop %v3321
  %v3353 = vmul.f32 %v3352, 0.6931472
  %v3354 = vlog2.pop %v3323
  %v3355 = vmul.f32 %v3354, 0.6931472
  %v3356 = vlog2.pop %v3325
  %v3357 = vmul.f32 %v3356, 0.6931472
  %v3358 = vlog2.pop %v3327
  %v3359 = vmul.f32 %v3358, 0.6931472
  %v3360 = vlog2.pop %v3329
  %v3361 = vmul.f32 %v3360, 0.6931472
  %v3362 = vadd.f32 %v3219, %v3331
  %v3363 = vadd.f32 %v3221, %v3333
  %v3364 = vadd.f32 %v3223, %v3335
  %v3365 = vadd.f32 %v3225, %v3337
  %v3366 = vadd.f32 %v3227, %v3339
  %v3367 = vadd.f32 %v3229, %v3341
  %v3368 = vadd.f32 %v3231, %v3343
  %v3369 = vadd.f32 %v3233, %v3345
  %v3370 = vadd.f32 %v3235, %v3347
  %v3371 = vadd.f32 %v3237, %v3349
  %v3372 = vadd.f32 %v3239, %v3351
  %v3373 = vadd.f32 %v3241, %v3353
  %v3374 = vadd.f32 %v3243, %v3355
  %v3375 = vadd.f32 %v3245, %v3357
  %v3376 = vadd.f32 %v3247, %v3359
  %v3377 = vadd.f32 %v3249, %v3361
  %v3378 = vsub.f32 %v3156, %v3362
  %v3379 = vsub.f32 %v3159, %v3363
  %v3380 = vsub.f32 %v3164, %v3364
  %v3381 = vsub.f32 %v3167, %v3365
  %v3382 = vsub.f32 %v3172, %v3366
  %v3383 = vsub.f32 %v3175, %v3367
  %v3384 = vsub.f32 %v3180, %v3368
  %v3385 = vsub.f32 %v3183, %v3369
  %v3386 = vsub.f32 %v3188, %v3370
  %v3387 = vsub.f32 %v3191, %v3371
  %v3388 = vsub.f32 %v3196, %v3372
  %v3389 = vsub.f32 %v3199, %v3373
  %v3390 = vsub.f32 %v3204, %v3374
  %v3391 = vsub.f32 %v3207, %v3375
  %v3392 = vsub.f32 %v3212, %v3376
  %v3393 = vsub.f32 %v3215, %v3377
  %v3394 = vpack.c.bf16 %v3379, %v3378
  %v3395 = vpack.c.bf16 %v3381, %v3380
  %v3396 = vpack.c.bf16 %v3383, %v3382
  %v3397 = vpack.c.bf16 %v3385, %v3384
  %v3398 = vpack.c.bf16 %v3387, %v3386
  %v3399 = vpack.c.bf16 %v3389, %v3388
  %v3400 = vpack.c.bf16 %v3391, %v3390
  %v3401 = vpack.c.bf16 %v3393, %v3392
  %v3410 = vunpack.c.l.b16 %v3394
  %v3411 = vunpack.c.h.b16 %v3394
  %v3412 = vunpack.c.l.b16 %v3395
  %v3413 = vunpack.c.h.b16 %v3395
  %v3414 = vunpack.c.l.b16 %v3396
  %v3415 = vunpack.c.h.b16 %v3396
  %v3416 = vunpack.c.l.b16 %v3397
  %v3417 = vunpack.c.h.b16 %v3397
  %v3418 = vunpack.c.l.b16 %v3398
  %v3419 = vunpack.c.h.b16 %v3398
  %v3420 = vunpack.c.l.b16 %v3399
  %v3421 = vunpack.c.h.b16 %v3399
  %v3422 = vunpack.c.l.b16 %v3400
  %v3423 = vunpack.c.h.b16 %v3400
  %v3424 = vunpack.c.l.b16 %v3401
  %v3425 = vunpack.c.h.b16 %v3401
  %v3426 = vpack.c.b16 %v3410, %v3410
  %v3427 = vpack.c.b16 %v3411, %v3411
  %v3428 = vpack.c.b16 %v3412, %v3412
  %v3429 = vpack.c.b16 %v3413, %v3413
  %v3430 = vpack.c.b16 %v3414, %v3414
  %v3431 = vpack.c.b16 %v3415, %v3415
  %v3432 = vpack.c.b16 %v3416, %v3416
  %v3433 = vpack.c.b16 %v3417, %v3417
  %v3434 = vpack.c.b16 %v3418, %v3418
  %v3435 = vpack.c.b16 %v3419, %v3419
  %v3436 = vpack.c.b16 %v3420, %v3420
  %v3437 = vpack.c.b16 %v3421, %v3421
  %v3438 = vpack.c.b16 %v3422, %v3422
  %v3439 = vpack.c.b16 %v3423, %v3423
  %v3440 = vpack.c.b16 %v3424, %v3424
  %v3441 = vpack.c.b16 %v3425, %v3425
  %3458 = vst [vmem:[%s8 + $0xc] sm:$0xf] %v3426
  %3459 = vst [vmem:[%s8 + $0x20] sm:$0xf] %v3427
  %3460 = vst [vmem:[%s8 + $0x34] sm:$0xf] %v3428
  %3461 = vst [vmem:[%s8 + $0x48] sm:$0xf] %v3429
  %3462 = vst [vmem:[%s8 + $0x5c] sm:$0xf] %v3430
  %3463 = vst [vmem:[%s8 + $0x70] sm:$0xf] %v3431
  %3464 = vst [vmem:[%s8 + $0x84] sm:$0xf] %v3432
  %3465 = vst [vmem:[%s8 + $0x98] sm:$0xf] %v3433
  %3466 = vst [vmem:[%s8 + $0xac] sm:$0xf] %v3434
  %3467 = vst [vmem:[%s8 + $0xc0] sm:$0xf] %v3435
  %3468 = vst [vmem:[%s8 + $0xd4] sm:$0xf] %v3436
  %3469 = vst [vmem:[%s8 + $0xe8] sm:$0xf] %v3437
  %3470 = vst [vmem:[%s8 + $0xfc] sm:$0xf] %v3438
  %3471 = vst [vmem:[%s8 + $0x110] sm:$0xf] %v3439
  %3472 = vst [vmem:[%s8 + $0x124] sm:$0xf] %v3440
  %3473 = vst [vmem:[%s8 + $0x138] sm:$0xf] %v3441
  %v3474 = vrcp.pop %v3299
  %v3475 = vmul.f32 1.0, %v3474
  %v3476 = vrcp.pop %v3301
  %v3477 = vmul.f32 1.0, %v3476
  %v3478 = vrcp.pop %v3303
  %v3479 = vmul.f32 1.0, %v3478
  %v3480 = vrcp.pop %v3305
  %v3481 = vmul.f32 1.0, %v3480
  %v3482 = vrcp.pop %v3307
  %v3483 = vmul.f32 1.0, %v3482
  %v3484 = vrcp.pop %v3309
  %v3485 = vmul.f32 1.0, %v3484
  %v3486 = vrcp.pop %v3311
  %v3487 = vmul.f32 1.0, %v3486
  %v3488 = vrcp.pop %v3313
  %v3489 = vmul.f32 1.0, %v3488
  %v3490 = vrcp.pop %v3315
  %v3491 = vmul.f32 1.0, %v3490
  %v3492 = vrcp.pop %v3317
  %v3493 = vmul.f32 1.0, %v3492
  %v3494 = vrcp.pop %v3319
  %v3495 = vmul.f32 1.0, %v3494
  %v3496 = vrcp.pop %v3321
  %v3497 = vmul.f32 1.0, %v3496
  %v3498 = vrcp.pop %v3323
  %v3499 = vmul.f32 1.0, %v3498
  %v3500 = vrcp.pop %v3325
  %v3501 = vmul.f32 1.0, %v3500
  %v3502 = vrcp.pop %v3327
  %v3503 = vmul.f32 1.0, %v3502
  %v3504 = vrcp.pop %v3329
  %v3505 = vmul.f32 1.0, %v3504
  %v3506 = vmul.f32 %v3267, %v3475
  %v3507 = vmul.f32 %v3269, %v3477
  %v3508 = vmul.f32 %v3271, %v3479
  %v3509 = vmul.f32 %v3273, %v3481
  %v3510 = vmul.f32 %v3275, %v3483
  %v3511 = vmul.f32 %v3277, %v3485
  %v3512 = vmul.f32 %v3279, %v3487
  %v3513 = vmul.f32 %v3281, %v3489
  %v3514 = vmul.f32 %v3283, %v3491
  %v3515 = vmul.f32 %v3285, %v3493
  %v3516 = vmul.f32 %v3287, %v3495
  %v3517 = vmul.f32 %v3289, %v3497
  %v3518 = vmul.f32 %v3291, %v3499
  %v3519 = vmul.f32 %v3293, %v3501
  %v3520 = vmul.f32 %v3295, %v3503
  %v3521 = vmul.f32 %v3297, %v3505
  %v3522 = vld [vmem:[%s5 + $0x3] sm:$0x1]
  %v3524 = vlaneseq
  %v3525 = vshrl.u32 %v3524, 7
  %v3526 = vsub.s32 0, %v3525
  %v3527 = vrot.slane %v3522, %v3526
  %v3529 = vmul.f32 %v3506, %v3527
  %v3530 = vmul.f32 %v3507, %v3527
  %v3531 = vmul.f32 %v3508, %v3527
  %v3532 = vmul.f32 %v3509, %v3527
  %v3533 = vmul.f32 %v3510, %v3527
  %v3534 = vmul.f32 %v3511, %v3527
  %v3535 = vmul.f32 %v3512, %v3527
  %v3536 = vmul.f32 %v3513, %v3527
  %v3537 = vmul.f32 %v3514, %v3527
  %v3538 = vmul.f32 %v3515, %v3527
  %v3539 = vmul.f32 %v3516, %v3527
  %v3540 = vmul.f32 %v3517, %v3527
  %v3541 = vmul.f32 %v3518, %v3527
  %v3542 = vmul.f32 %v3519, %v3527
  %v3543 = vmul.f32 %v3520, %v3527
  %v3544 = vmul.f32 %v3521, %v3527
  %v3545 = vadd.f32 %v3034, %v3529
  %v3546 = vadd.f32 %v3035, %v3530
  %v3547 = vadd.f32 %v3036, %v3531
  %v3548 = vadd.f32 %v3037, %v3532
  %v3549 = vadd.f32 %v3038, %v3533
  %v3550 = vadd.f32 %v3039, %v3534
  %v3551 = vadd.f32 %v3040, %v3535
  %v3552 = vadd.f32 %v3041, %v3536
  %v3553 = vadd.f32 %v3042, %v3537
  %v3554 = vadd.f32 %v3043, %v3538
  %v3555 = vadd.f32 %v3044, %v3539
  %v3556 = vadd.f32 %v3045, %v3540
  %v3557 = vadd.f32 %v3046, %v3541
  %v3558 = vadd.f32 %v3047, %v3542
  %v3559 = vadd.f32 %v3048, %v3543
  %v3560 = vadd.f32 %v3049, %v3544
  %v3561 = vld [vmem:[%s3 + $0x10] sm:$0xf]
  %v3562 = vld [vmem:[%s3 + $0x24] sm:$0xf]
  %v3563 = vld [vmem:[%s3 + $0x38] sm:$0xf]
  %v3564 = vld [vmem:[%s3 + $0x4c] sm:$0xf]
  %v3565 = vld [vmem:[%s3 + $0x60] sm:$0xf]
  %v3566 = vld [vmem:[%s3 + $0x74] sm:$0xf]
  %v3567 = vld [vmem:[%s3 + $0x88] sm:$0xf]
  %v3568 = vld [vmem:[%s3 + $0x9c] sm:$0xf]
  %v3569 = vld [vmem:[%s3 + $0xb0] sm:$0xf]
  %v3570 = vld [vmem:[%s3 + $0xc4] sm:$0xf]
  %v3571 = vld [vmem:[%s3 + $0xd8] sm:$0xf]
  %v3572 = vld [vmem:[%s3 + $0xec] sm:$0xf]
  %v3573 = vld [vmem:[%s3 + $0x100] sm:$0xf]
  %v3574 = vld [vmem:[%s3 + $0x114] sm:$0xf]
  %v3575 = vld [vmem:[%s3 + $0x128] sm:$0xf]
  %v3576 = vld [vmem:[%s3 + $0x13c] sm:$0xf]
  %v3577 = vld [vmem:[%s4 + $0x4] sm:$0x1]
  %v3579 = vlaneseq
  %v3580 = vshrl.u32 %v3579, 7
  %v3581 = vsub.s32 0, %v3580
  %v3582 = vrot.slane %v3577, %v3581
  %v3600 = vunpack.c.l.b16 %v3561
  %v3601 = vunpack.c.l.b16 %v3562
  %v3602 = vunpack.c.l.b16 %v3563
  %v3603 = vunpack.c.l.b16 %v3564
  %v3604 = vunpack.c.l.b16 %v3565
  %v3605 = vunpack.c.l.b16 %v3566
  %v3606 = vunpack.c.l.b16 %v3567
  %v3607 = vunpack.c.l.b16 %v3568
  %v3608 = vunpack.c.l.b16 %v3569
  %v3609 = vunpack.c.l.b16 %v3570
  %v3610 = vunpack.c.l.b16 %v3571
  %v3611 = vunpack.c.l.b16 %v3572
  %v3612 = vunpack.c.l.b16 %v3573
  %v3613 = vunpack.c.l.b16 %v3574
  %v3614 = vunpack.c.l.b16 %v3575
  %v3615 = vunpack.c.l.b16 %v3576
  %v3616 = vpack.c.b16 %v3601, %v3600
  %v3617 = vpack.c.b16 %v3603, %v3602
  %v3618 = vpack.c.b16 %v3605, %v3604
  %v3619 = vpack.c.b16 %v3607, %v3606
  %v3620 = vpack.c.b16 %v3609, %v3608
  %v3621 = vpack.c.b16 %v3611, %v3610
  %v3622 = vpack.c.b16 %v3613, %v3612
  %v3623 = vpack.c.b16 %v3615, %v3614
  %3632 = vmatprep.subr.bf16.mxu0 0
  %3633 = vmatpush1.bf16.msra.mxu0 %v3616
  %3634 = vmatprep.subr.bf16.mxu0 0
  %3635 = vmatpush1.bf16.msra.mxu0 %v3617
  %3636 = vmatprep.subr.bf16.mxu0 0
  %3637 = vmatpush1.bf16.msra.mxu0 %v3618
  %3638 = vmatprep.subr.bf16.mxu0 0
  %3639 = vmatpush1.bf16.msra.mxu0 %v3619
  %3640 = vmatprep.subr.bf16.mxu0 0
  %3641 = vmatpush1.bf16.msra.mxu0 %v3620
  %3642 = vmatprep.subr.bf16.mxu0 0
  %3643 = vmatpush1.bf16.msra.mxu0 %v3621
  %3644 = vmatprep.subr.bf16.mxu0 0
  %3645 = vmatpush1.bf16.msra.mxu0 %v3622
  %3646 = vmatprep.subr.bf16.mxu0 0
  %3647 = vmatpush1.bf16.msra.mxu0 %v3623
  %3648 = vmatprep.subr.bf16.mxu0 0
  %3649 = vmatpush1.bf16.msra.mxu0 0
  %3650 = vmatprep.subr.bf16.mxu0 0
  %3651 = vmatpush1.bf16.msra.mxu0 0
  %3652 = vmatprep.subr.bf16.mxu0 0
  %3653 = vmatpush1.bf16.msra.mxu0 0
  %3654 = vmatprep.subr.bf16.mxu0 0
  %3655 = vmatpush1.bf16.msra.mxu0 0
  %3656 = vmatprep.subr.bf16.mxu0 0
  %3657 = vmatpush1.bf16.msra.mxu0 0
  %3658 = vmatprep.subr.bf16.mxu0 0
  %3659 = vmatpush1.bf16.msra.mxu0 0
  %3660 = vmatprep.subr.bf16.mxu0 0
  %3661 = vmatpush1.bf16.msra.mxu0 0
  %3662 = vmatprep.subr.bf16.mxu0 0
  %3663 = vmatpush1.bf16.msra.mxu0 0
  %3664 = vmatprep.mubr.bf16.mxu0 0
  %3665 = vmatmul.mubr.bf16.gmra.mrb[0].mxu0 %v1335
  %v3666 = vpop.f32.mrb[0].mxu0
  %v3667 = vadd.f32 %v3582, %v3666
  %v3668 = vpop.f32.mrb[0].mxu0
  %v3669 = vpop.f32.mrb[0].mxu0
  %v3670 = vadd.f32 %v3582, %v3669
  %v3671 = vpop.f32.mrb[0].mxu0
  %3672 = vmatprep.mubr.bf16.mxu0 0
  %3673 = vmatmul.mubr.bf16.gmra.mrb[0].mxu0 %v1336
  %v3674 = vpop.f32.mrb[0].mxu0
  %v3675 = vadd.f32 %v3582, %v3674
  %v3676 = vpop.f32.mrb[0].mxu0
  %v3677 = vpop.f32.mrb[0].mxu0
  %v3678 = vadd.f32 %v3582, %v3677
  %v3679 = vpop.f32.mrb[0].mxu0
  %3680 = vmatprep.mubr.bf16.mxu0 0
  %3681 = vmatmul.mubr.bf16.gmra.mrb[0].mxu0 %v1337
  %v3682 = vpop.f32.mrb[0].mxu0
  %v3683 = vadd.f32 %v3582, %v3682
  %v3684 = vpop.f32.mrb[0].mxu0
  %v3685 = vpop.f32.mrb[0].mxu0
  %v3686 = vadd.f32 %v3582, %v3685
  %v3687 = vpop.f32.mrb[0].mxu0
  %3688 = vmatprep.mubr.bf16.mxu0 0
  %3689 = vmatmul.mubr.bf16.gmra.mrb[0].mxu0 %v1338
  %v3690 = vpop.f32.mrb[0].mxu0
  %v3691 = vadd.f32 %v3582, %v3690
  %v3692 = vpop.f32.mrb[0].mxu0
  %v3693 = vpop.f32.mrb[0].mxu0
  %v3694 = vadd.f32 %v3582, %v3693
  %v3695 = vpop.f32.mrb[0].mxu0
  %3696 = vmatprep.mubr.bf16.mxu0 0
  %3697 = vmatmul.mubr.bf16.gmra.mrb[0].mxu0 %v1339
  %v3698 = vpop.f32.mrb[0].mxu0
  %v3699 = vadd.f32 %v3582, %v3698
  %v3700 = vpop.f32.mrb[0].mxu0
  %v3701 = vpop.f32.mrb[0].mxu0
  %v3702 = vadd.f32 %v3582, %v3701
  %v3703 = vpop.f32.mrb[0].mxu0
  %3704 = vmatprep.mubr.bf16.mxu0 0
  %3705 = vmatmul.mubr.bf16.gmra.mrb[0].mxu0 %v1340
  %v3706 = vpop.f32.mrb[0].mxu0
  %v3707 = vadd.f32 %v3582, %v3706
  %v3708 = vpop.f32.mrb[0].mxu0
  %v3709 = vpop.f32.mrb[0].mxu0
  %v3710 = vadd.f32 %v3582, %v3709
  %v3711 = vpop.f32.mrb[0].mxu0
  %3712 = vmatprep.mubr.bf16.mxu0 0
  %3713 = vmatmul.mubr.bf16.gmra.mrb[0].mxu0 %v1341
  %v3714 = vpop.f32.mrb[0].mxu0
  %v3715 = vadd.f32 %v3582, %v3714
  %v3716 = vpop.f32.mrb[0].mxu0
  %v3717 = vpop.f32.mrb[0].mxu0
  %v3718 = vadd.f32 %v3582, %v3717
  %v3719 = vpop.f32.mrb[0].mxu0
  %3720 = vmatprep.mubr.bf16.mxu0 0
  %3721 = vmatmul.mubr.bf16.gmra.mrb[0].mxu0 %v1342
  %v3722 = vpop.f32.mrb[0].mxu0
  %v3723 = vadd.f32 %v3582, %v3722
  %v3724 = vpop.f32.mrb[0].mxu0
  %v3725 = vpop.f32.mrb[0].mxu0
  %v3726 = vadd.f32 %v3582, %v3725
  %v3727 = vpop.f32.mrb[0].mxu0
  %3728 = vdwg.mxu0
  %3729 = vmax.xlane.f32.xlu0 %v3667
  %v3730 = vpop.xlane.xlu0 %3729
  %3731 = vmax.xlane.f32.xlu0 %v3670
  %v3732 = vpop.xlane.xlu0 %3731
  %3733 = vmax.xlane.f32.xlu0 %v3675
  %v3734 = vpop.xlane.xlu0 %3733
  %3735 = vmax.xlane.f32.xlu0 %v3678
  %v3736 = vpop.xlane.xlu0 %3735
  %3737 = vmax.xlane.f32.xlu0 %v3683
  %v3738 = vpop.xlane.xlu0 %3737
  %3739 = vmax.xlane.f32.xlu0 %v3686
  %v3740 = vpop.xlane.xlu0 %3739
  %3741 = vmax.xlane.f32.xlu0 %v3691
  %v3742 = vpop.xlane.xlu0 %3741
  %3743 = vmax.xlane.f32.xlu0 %v3694
  %v3744 = vpop.xlane.xlu0 %3743
  %3745 = vmax.xlane.f32.xlu0 %v3699
  %v3746 = vpop.xlane.xlu0 %3745
  %3747 = vmax.xlane.f32.xlu0 %v3702
  %v3748 = vpop.xlane.xlu0 %3747
  %3749 = vmax.xlane.f32.xlu0 %v3707
  %v3750 = vpop.xlane.xlu0 %3749
  %3751 = vmax.xlane.f32.xlu0 %v3710
  %v3752 = vpop.xlane.xlu0 %3751
  %3753 = vmax.xlane.f32.xlu0 %v3715
  %v3754 = vpop.xlane.xlu0 %3753
  %3755 = vmax.xlane.f32.xlu0 %v3718
  %v3756 = vpop.xlane.xlu0 %3755
  %3757 = vmax.xlane.f32.xlu0 %v3723
  %v3758 = vpop.xlane.xlu0 %3757
  %3759 = vmax.xlane.f32.xlu0 %v3726
  %v3760 = vpop.xlane.xlu0 %3759
  %v3761 = vsub.f32 %v3667, %v3730
  %v3762 = vsub.f32 %v3670, %v3732
  %v3763 = vsub.f32 %v3675, %v3734
  %v3764 = vsub.f32 %v3678, %v3736
  %v3765 = vsub.f32 %v3683, %v3738
  %v3766 = vsub.f32 %v3686, %v3740
  %v3767 = vsub.f32 %v3691, %v3742
  %v3768 = vsub.f32 %v3694, %v3744
  %v3769 = vsub.f32 %v3699, %v3746
  %v3770 = vsub.f32 %v3702, %v3748
  %v3771 = vsub.f32 %v3707, %v3750
  %v3772 = vsub.f32 %v3710, %v3752
  %v3773 = vsub.f32 %v3715, %v3754
  %v3774 = vsub.f32 %v3718, %v3756
  %v3775 = vsub.f32 %v3723, %v3758
  %v3776 = vsub.f32 %v3726, %v3760
  %v3777 = vmul.f32 %v3761, 1.442695
  %v3778 = vpow.pop %v3777
  %v3779 = vmul.f32 %v3762, 1.442695
  %v3780 = vpow.pop %v3779
  %v3781 = vmul.f32 %v3763, 1.442695
  %v3782 = vpow.pop %v3781
  %v3783 = vmul.f32 %v3764, 1.442695
  %v3784 = vpow.pop %v3783
  %v3785 = vmul.f32 %v3765, 1.442695
  %v3786 = vpow.pop %v3785
  %v3787 = vmul.f32 %v3766, 1.442695
  %v3788 = vpow.pop %v3787
  %v3789 = vmul.f32 %v3767, 1.442695
  %v3790 = vpow.pop %v3789
  %v3791 = vmul.f32 %v3768, 1.442695
  %v3792 = vpow.pop %v3791
  %v3793 = vmul.f32 %v3769, 1.442695
  %v3794 = vpow.pop %v3793
  %v3795 = vmul.f32 %v3770, 1.442695
  %v3796 = vpow.pop %v3795
  %v3797 = vmul.f32 %v3771, 1.442695
  %v3798 = vpow.pop %v3797
  %v3799 = vmul.f32 %v3772, 1.442695
  %v3800 = vpow.pop %v3799
  %v3801 = vmul.f32 %v3773, 1.442695
  %v3802 = vpow.pop %v3801
  %v3803 = vmul.f32 %v3774, 1.442695
  %v3804 = vpow.pop %v3803
  %v3805 = vmul.f32 %v3775, 1.442695
  %v3806 = vpow.pop %v3805
  %v3807 = vmul.f32 %v3776, 1.442695
  %v3808 = vpow.pop %v3807
  %3809 = vadd.xlane.f32.xlu0 %v3778
  %v3810 = vpop.xlane.xlu0 %3809
  %3811 = vadd.xlane.f32.xlu0 %v3780
  %v3812 = vpop.xlane.xlu0 %3811
  %3813 = vadd.xlane.f32.xlu0 %v3782
  %v3814 = vpop.xlane.xlu0 %3813
  %3815 = vadd.xlane.f32.xlu0 %v3784
  %v3816 = vpop.xlane.xlu0 %3815
  %3817 = vadd.xlane.f32.xlu0 %v3786
  %v3818 = vpop.xlane.xlu0 %3817
  %3819 = vadd.xlane.f32.xlu0 %v3788
  %v3820 = vpop.xlane.xlu0 %3819
  %3821 = vadd.xlane.f32.xlu0 %v3790
  %v3822 = vpop.xlane.xlu0 %3821
  %3823 = vadd.xlane.f32.xlu0 %v3792
  %v3824 = vpop.xlane.xlu0 %3823
  %3825 = vadd.xlane.f32.xlu0 %v3794
  %v3826 = vpop.xlane.xlu0 %3825
  %3827 = vadd.xlane.f32.xlu0 %v3796
  %v3828 = vpop.xlane.xlu0 %3827
  %3829 = vadd.xlane.f32.xlu0 %v3798
  %v3830 = vpop.xlane.xlu0 %3829
  %3831 = vadd.xlane.f32.xlu0 %v3800
  %v3832 = vpop.xlane.xlu0 %3831
  %3833 = vadd.xlane.f32.xlu0 %v3802
  %v3834 = vpop.xlane.xlu0 %3833
  %3835 = vadd.xlane.f32.xlu0 %v3804
  %v3836 = vpop.xlane.xlu0 %3835
  %3837 = vadd.xlane.f32.xlu0 %v3806
  %v3838 = vpop.xlane.xlu0 %3837
  %3839 = vadd.xlane.f32.xlu0 %v3808
  %v3840 = vpop.xlane.xlu0 %3839
  %v3841 = vlog2.pop %v3810
  %v3842 = vmul.f32 %v3841, 0.6931472
  %v3843 = vlog2.pop %v3812
  %v3844 = vmul.f32 %v3843, 0.6931472
  %v3845 = vlog2.pop %v3814
  %v3846 = vmul.f32 %v3845, 0.6931472
  %v3847 = vlog2.pop %v3816
  %v3848 = vmul.f32 %v3847, 0.6931472
  %v3849 = vlog2.pop %v3818
  %v3850 = vmul.f32 %v3849, 0.6931472
  %v3851 = vlog2.pop %v3820
  %v3852 = vmul.f32 %v3851, 0.6931472
  %v3853 = vlog2.pop %v3822
  %v3854 = vmul.f32 %v3853, 0.6931472
  %v3855 = vlog2.pop %v3824
  %v3856 = vmul.f32 %v3855, 0.6931472
  %v3857 = vlog2.pop %v3826
  %v3858 = vmul.f32 %v3857, 0.6931472
  %v3859 = vlog2.pop %v3828
  %v3860 = vmul.f32 %v3859, 0.6931472
  %v3861 = vlog2.pop %v3830
  %v3862 = vmul.f32 %v3861, 0.6931472
  %v3863 = vlog2.pop %v3832
  %v3864 = vmul.f32 %v3863, 0.6931472
  %v3865 = vlog2.pop %v3834
  %v3866 = vmul.f32 %v3865, 0.6931472
  %v3867 = vlog2.pop %v3836
  %v3868 = vmul.f32 %v3867, 0.6931472
  %v3869 = vlog2.pop %v3838
  %v3870 = vmul.f32 %v3869, 0.6931472
  %v3871 = vlog2.pop %v3840
  %v3872 = vmul.f32 %v3871, 0.6931472
  %v3873 = vadd.f32 %v3730, %v3842
  %v3874 = vadd.f32 %v3732, %v3844
  %v3875 = vadd.f32 %v3734, %v3846
  %v3876 = vadd.f32 %v3736, %v3848
  %v3877 = vadd.f32 %v3738, %v3850
  %v3878 = vadd.f32 %v3740, %v3852
  %v3879 = vadd.f32 %v3742, %v3854
  %v3880 = vadd.f32 %v3744, %v3856
  %v3881 = vadd.f32 %v3746, %v3858
  %v3882 = vadd.f32 %v3748, %v3860
  %v3883 = vadd.f32 %v3750, %v3862
  %v3884 = vadd.f32 %v3752, %v3864
  %v3885 = vadd.f32 %v3754, %v3866
  %v3886 = vadd.f32 %v3756, %v3868
  %v3887 = vadd.f32 %v3758, %v3870
  %v3888 = vadd.f32 %v3760, %v3872
  %v3889 = vsub.f32 %v3667, %v3873
  %v3890 = vsub.f32 %v3670, %v3874
  %v3891 = vsub.f32 %v3675, %v3875
  %v3892 = vsub.f32 %v3678, %v3876
  %v3893 = vsub.f32 %v3683, %v3877
  %v3894 = vsub.f32 %v3686, %v3878
  %v3895 = vsub.f32 %v3691, %v3879
  %v3896 = vsub.f32 %v3694, %v3880
  %v3897 = vsub.f32 %v3699, %v3881
  %v3898 = vsub.f32 %v3702, %v3882
  %v3899 = vsub.f32 %v3707, %v3883
  %v3900 = vsub.f32 %v3710, %v3884
  %v3901 = vsub.f32 %v3715, %v3885
  %v3902 = vsub.f32 %v3718, %v3886
  %v3903 = vsub.f32 %v3723, %v3887
  %v3904 = vsub.f32 %v3726, %v3888
  %v3905 = vpack.c.bf16 %v3890, %v3889
  %v3906 = vpack.c.bf16 %v3892, %v3891
  %v3907 = vpack.c.bf16 %v3894, %v3893
  %v3908 = vpack.c.bf16 %v3896, %v3895
  %v3909 = vpack.c.bf16 %v3898, %v3897
  %v3910 = vpack.c.bf16 %v3900, %v3899
  %v3911 = vpack.c.bf16 %v3902, %v3901
  %v3912 = vpack.c.bf16 %v3904, %v3903
  %v3921 = vunpack.c.l.b16 %v3905
  %v3922 = vunpack.c.h.b16 %v3905
  %v3923 = vunpack.c.l.b16 %v3906
  %v3924 = vunpack.c.h.b16 %v3906
  %v3925 = vunpack.c.l.b16 %v3907
  %v3926 = vunpack.c.h.b16 %v3907
  %v3927 = vunpack.c.l.b16 %v3908
  %v3928 = vunpack.c.h.b16 %v3908
  %v3929 = vunpack.c.l.b16 %v3909
  %v3930 = vunpack.c.h.b16 %v3909
  %v3931 = vunpack.c.l.b16 %v3910
  %v3932 = vunpack.c.h.b16 %v3910
  %v3933 = vunpack.c.l.b16 %v3911
  %v3934 = vunpack.c.h.b16 %v3911
  %v3935 = vunpack.c.l.b16 %v3912
  %v3936 = vunpack.c.h.b16 %v3912
  %v3937 = vpack.c.b16 %v3921, %v3921
  %v3938 = vpack.c.b16 %v3922, %v3922
  %v3939 = vpack.c.b16 %v3923, %v3923
  %v3940 = vpack.c.b16 %v3924, %v3924
  %v3941 = vpack.c.b16 %v3925, %v3925
  %v3942 = vpack.c.b16 %v3926, %v3926
  %v3943 = vpack.c.b16 %v3927, %v3927
  %v3944 = vpack.c.b16 %v3928, %v3928
  %v3945 = vpack.c.b16 %v3929, %v3929
  %v3946 = vpack.c.b16 %v3930, %v3930
  %v3947 = vpack.c.b16 %v3931, %v3931
  %v3948 = vpack.c.b16 %v3932, %v3932
  %v3949 = vpack.c.b16 %v3933, %v3933
  %v3950 = vpack.c.b16 %v3934, %v3934
  %v3951 = vpack.c.b16 %v3935, %v3935
  %v3952 = vpack.c.b16 %v3936, %v3936
  %3969 = vst [vmem:[%s8 + $0x10] sm:$0xf] %v3937
  %3970 = vst [vmem:[%s8 + $0x24] sm:$0xf] %v3938
  %3971 = vst [vmem:[%s8 + $0x38] sm:$0xf] %v3939
  %3972 = vst [vmem:[%s8 + $0x4c] sm:$0xf] %v3940
  %3973 = vst [vmem:[%s8 + $0x60] sm:$0xf] %v3941
  %3974 = vst [vmem:[%s8 + $0x74] sm:$0xf] %v3942
  %3975 = vst [vmem:[%s8 + $0x88] sm:$0xf] %v3943
  %3976 = vst [vmem:[%s8 + $0x9c] sm:$0xf] %v3944
  %3977 = vst [vmem:[%s8 + $0xb0] sm:$0xf] %v3945
  %3978 = vst [vmem:[%s8 + $0xc4] sm:$0xf] %v3946
  %3979 = vst [vmem:[%s8 + $0xd8] sm:$0xf] %v3947
  %3980 = vst [vmem:[%s8 + $0xec] sm:$0xf] %v3948
  %3981 = vst [vmem:[%s8 + $0x100] sm:$0xf] %v3949
  %3982 = vst [vmem:[%s8 + $0x114] sm:$0xf] %v3950
  %3983 = vst [vmem:[%s8 + $0x128] sm:$0xf] %v3951
  %3984 = vst [vmem:[%s8 + $0x13c] sm:$0xf] %v3952
  %v3985 = vrcp.pop %v3810
  %v3986 = vmul.f32 1.0, %v3985
  %v3987 = vrcp.pop %v3812
  %v3988 = vmul.f32 1.0, %v3987
  %v3989 = vrcp.pop %v3814
  %v3990 = vmul.f32 1.0, %v3989
  %v3991 = vrcp.pop %v3816
  %v3992 = vmul.f32 1.0, %v3991
  %v3993 = vrcp.pop %v3818
  %v3994 = vmul.f32 1.0, %v3993
  %v3995 = vrcp.pop %v3820
  %v3996 = vmul.f32 1.0, %v3995
  %v3997 = vrcp.pop %v3822
  %v3998 = vmul.f32 1.0, %v3997
  %v3999 = vrcp.pop %v3824
  %v4000 = vmul.f32 1.0, %v3999
  %v4001 = vrcp.pop %v3826
  %v4002 = vmul.f32 1.0, %v4001
  %v4003 = vrcp.pop %v3828
  %v4004 = vmul.f32 1.0, %v4003
  %v4005 = vrcp.pop %v3830
  %v4006 = vmul.f32 1.0, %v4005
  %v4007 = vrcp.pop %v3832
  %v4008 = vmul.f32 1.0, %v4007
  %v4009 = vrcp.pop %v3834
  %v4010 = vmul.f32 1.0, %v4009
  %v4011 = vrcp.pop %v3836
  %v4012 = vmul.f32 1.0, %v4011
  %v4013 = vrcp.pop %v3838
  %v4014 = vmul.f32 1.0, %v4013
  %v4015 = vrcp.pop %v3840
  %v4016 = vmul.f32 1.0, %v4015
  %v4017 = vmul.f32 %v3778, %v3986
  %v4018 = vmul.f32 %v3780, %v3988
  %v4019 = vmul.f32 %v3782, %v3990
  %v4020 = vmul.f32 %v3784, %v3992
  %v4021 = vmul.f32 %v3786, %v3994
  %v4022 = vmul.f32 %v3788, %v3996
  %v4023 = vmul.f32 %v3790, %v3998
  %v4024 = vmul.f32 %v3792, %v4000
  %v4025 = vmul.f32 %v3794, %v4002
  %v4026 = vmul.f32 %v3796, %v4004
  %v4027 = vmul.f32 %v3798, %v4006
  %v4028 = vmul.f32 %v3800, %v4008
  %v4029 = vmul.f32 %v3802, %v4010
  %v4030 = vmul.f32 %v3804, %v4012
  %v4031 = vmul.f32 %v3806, %v4014
  %v4032 = vmul.f32 %v3808, %v4016
  %v4033 = vld [vmem:[%s5 + $0x4] sm:$0x1]
  %v4035 = vlaneseq
  %v4036 = vshrl.u32 %v4035, 7
  %v4037 = vsub.s32 0, %v4036
  %v4038 = vrot.slane %v4033, %v4037
  %v4040 = vmul.f32 %v4017, %v4038
  %v4041 = vmul.f32 %v4018, %v4038
  %v4042 = vmul.f32 %v4019, %v4038
  %v4043 = vmul.f32 %v4020, %v4038
  %v4044 = vmul.f32 %v4021, %v4038
  %v4045 = vmul.f32 %v4022, %v4038
  %v4046 = vmul.f32 %v4023, %v4038
  %v4047 = vmul.f32 %v4024, %v4038
  %v4048 = vmul.f32 %v4025, %v4038
  %v4049 = vmul.f32 %v4026, %v4038
  %v4050 = vmul.f32 %v4027, %v4038
  %v4051 = vmul.f32 %v4028, %v4038
  %v4052 = vmul.f32 %v4029, %v4038
  %v4053 = vmul.f32 %v4030, %v4038
  %v4054 = vmul.f32 %v4031, %v4038
  %v4055 = vmul.f32 %v4032, %v4038
  %v4056 = vadd.f32 %v3545, %v4040
  %v4057 = vadd.f32 %v3546, %v4041
  %v4058 = vadd.f32 %v3547, %v4042
  %v4059 = vadd.f32 %v3548, %v4043
  %v4060 = vadd.f32 %v3549, %v4044
  %v4061 = vadd.f32 %v3550, %v4045
  %v4062 = vadd.f32 %v3551, %v4046
  %v4063 = vadd.f32 %v3552, %v4047
  %v4064 = vadd.f32 %v3553, %v4048
  %v4065 = vadd.f32 %v3554, %v4049
  %v4066 = vadd.f32 %v3555, %v4050
  %v4067 = vadd.f32 %v3556, %v4051
  %v4068 = vadd.f32 %v3557, %v4052
  %v4069 = vadd.f32 %v3558, %v4053
  %v4070 = vadd.f32 %v3559, %v4054
  %v4071 = vadd.f32 %v3560, %v4055
  %v4072 = vlog2.pop %v4056
  %v4073 = vmul.f32 %v4072, 0.6931472
  %v4074 = vlog2.pop %v4057
  %v4075 = vmul.f32 %v4074, 0.6931472
  %v4076 = vlog2.pop %v4058
  %v4077 = vmul.f32 %v4076, 0.6931472
  %v4078 = vlog2.pop %v4059
  %v4079 = vmul.f32 %v4078, 0.6931472
  %v4080 = vlog2.pop %v4060
  %v4081 = vmul.f32 %v4080, 0.6931472
  %v4082 = vlog2.pop %v4061
  %v4083 = vmul.f32 %v4082, 0.6931472
  %v4084 = vlog2.pop %v4062
  %v4085 = vmul.f32 %v4084, 0.6931472
  %v4086 = vlog2.pop %v4063
  %v4087 = vmul.f32 %v4086, 0.6931472
  %v4088 = vlog2.pop %v4064
  %v4089 = vmul.f32 %v4088, 0.6931472
  %v4090 = vlog2.pop %v4065
  %v4091 = vmul.f32 %v4090, 0.6931472
  %v4092 = vlog2.pop %v4066
  %v4093 = vmul.f32 %v4092, 0.6931472
  %v4094 = vlog2.pop %v4067
  %v4095 = vmul.f32 %v4094, 0.6931472
  %v4096 = vlog2.pop %v4068
  %v4097 = vmul.f32 %v4096, 0.6931472
  %v4098 = vlog2.pop %v4069
  %v4099 = vmul.f32 %v4098, 0.6931472
  %v4100 = vlog2.pop %v4070
  %v4101 = vmul.f32 %v4100, 0.6931472
  %v4102 = vlog2.pop %v4071
  %v4103 = vmul.f32 %v4102, 0.6931472
  %4104 = vst [vmem:[%s6] sm:$0xff] %v4073
  %4105 = vst [vmem:[%s6 + $0x8] sm:$0xff] %v4075
  %4106 = vst [vmem:[%s6 + $0x10] sm:$0xff] %v4077
  %4107 = vst [vmem:[%s6 + $0x18] sm:$0xff] %v4079
  %4108 = vst [vmem:[%s6 + $0x20] sm:$0xff] %v4081
  %4109 = vst [vmem:[%s6 + $0x28] sm:$0xff] %v4083
  %4110 = vst [vmem:[%s6 + $0x30] sm:$0xff] %v4085
  %4111 = vst [vmem:[%s6 + $0x38] sm:$0xff] %v4087
  %4112 = vst [vmem:[%s6 + $0x40] sm:$0xff] %v4089
  %4113 = vst [vmem:[%s6 + $0x48] sm:$0xff] %v4091
  %4114 = vst [vmem:[%s6 + $0x50] sm:$0xff] %v4093
  %4115 = vst [vmem:[%s6 + $0x58] sm:$0xff] %v4095
  %4116 = vst [vmem:[%s6 + $0x60] sm:$0xff] %v4097
  %4117 = vst [vmem:[%s6 + $0x68] sm:$0xff] %v4099
  %4118 = vst [vmem:[%s6 + $0x70] sm:$0xff] %v4101
  %4119 = vst [vmem:[%s6 + $0x78] sm:$0xff] %v4103
  // Predicated region
  $region26: #{_alrao_forward_impl.1} parent=0 // pred_check
    _
  $region27: #{_alrao_forward_impl.1} parent=0 // pred_check_branch
    %4121 = sbr.rel (0) target = $region29
  $region28: #{_alrao_forward_impl.1} parent=0 // pred_region
    _
  $region29: #{_alrao_forward_impl.1} parent=0 // pred_fallthru
    _
  // Predicated region
  $region30: #{_alrao_forward_impl.1} parent=0 // pred_check
    _
  $region31: #{_alrao_forward_impl.1} parent=0 // pred_check_branch
    %4123 = sbr.rel (0) target = $region33
  $region32: #{_alrao_forward_impl.1} parent=0 // pred_region
    _
  $region33: #{_alrao_forward_impl.1} parent=0 // pred_fallthru
    _
  // Predicated region
  $region34: #{_alrao_forward_impl.1} parent=0 // pred_check
    _
  $region35: #{_alrao_forward_impl.1} parent=0 // pred_check_branch
    %4125 = sbr.rel (0) target = $region37
  $region36: #{_alrao_forward_impl.1} parent=0 // pred_region
    _
  $region37: #{_alrao_forward_impl.1} parent=0 // pred_fallthru
    _
  // Predicated region
  $region38: #{_alrao_forward_impl.1} parent=0 // pred_check
    _
  $region39: #{_alrao_forward_impl.1} parent=0 // pred_check_branch
    %4127 = sbr.rel (0) target = $region41
  $region40: #{_alrao_forward_impl.1} parent=0 // pred_region
    _
  $region41: #{_alrao_forward_impl.1} parent=0 // pred_fallthru
    _
  // Predicated region
  $region42: #{_alrao_forward_impl.1} parent=0 // pred_check
    _
  $region43: #{_alrao_forward_impl.1} parent=0 // pred_check_branch
    %4129 = sbr.rel (0) target = $region45
  $region44: #{_alrao_forward_impl.1} parent=0 // pred_region
    _
  $region45: #{_alrao_forward_impl.1} parent=0 // pred_fallthru
    _
  // Predicated region
  $region46: #{_alrao_forward_impl.1} parent=0 // pred_check
    _
  $region47: #{_alrao_forward_impl.1} parent=0 // pred_check_branch
    %4131 = sbr.rel (0) target = $region49
  $region48: #{_alrao_forward_impl.1} parent=0 // pred_region
    _
  $region49: #{_alrao_forward_impl.1} parent=0 // pred_fallthru
    _
  // Predicated region
  $region50: #{_alrao_forward_impl.1} parent=0 // pred_check
    _
  $region51: #{_alrao_forward_impl.1} parent=0 // pred_check_branch
    %4133 = sbr.rel (0) target = $region53
  $region52: #{_alrao_forward_impl.1} parent=0 // pred_region
    _
  $region53: #{_alrao_forward_impl.1} parent=0 // pred_fallthru
    _
  // Predicated region
  $region54: #{_alrao_forward_impl.1} parent=0 // pred_check
    _
  $region55: #{_alrao_forward_impl.1} parent=0 // pred_check_branch
    %4135 = sbr.rel (0) target = $region57
  $region56: #{_alrao_forward_impl.1} parent=0 // pred_region
    _
  $region57: #{_alrao_forward_impl.1} parent=0 // pred_fallthru
    _

// kernel: _alrao_forward_impl.1
$region0: #{_alrao_forward_impl.1}
  #allocation0 [shape = 'u32[]', space=smem, size = 0x4, offset = 0x4, fixed_abs, tag = 'smem constant byte address 0x4 - core index']
  #allocation1 [shape = 'u32[144,128]{1,0:T(1,128)}', space=vmem, size = 0x12000, scoped, tag = 'internal scratch']
  %s0 = inlined_call_operand.vmem [shape: bf16[128,1024], index: 0, kind: input, shape index: {}]
  %s1 = inlined_call_operand.vmem [shape: bf16[1024,128], index: 1, kind: input, shape index: {}]
  %s2 = inlined_call_operand.vmem [shape: f32[1,128], index: 2, kind: input, shape index: {}]
  %s3 = inlined_call_operand.vmem [shape: bf16[128,640], index: 3, kind: input, shape index: {}]
  %s4 = inlined_call_operand.vmem [shape: f32[1,640], index: 4, kind: input, shape index: {}]
  %s5 = inlined_call_operand.vmem [shape: f32[1,640], index: 5, kind: input, shape index: {}]
  %s6 = inlined_call_operand.vmem [shape: f32[128,128], index: 6, kind: output, shape index: {0}]
  %s7 = inlined_call_operand.vmem [shape: bf16[128,128], index: 7, kind: output, shape index: {1}]
  %s8 = inlined_call_operand.vmem [shape: bf16[128,640], index: 8, kind: output, shape index: {2}]
  %s9 = inlined_call_operand.vmem [shape: f32[8,128], index: 9, kind: output, shape index: {3}]
  %10 = xla_tuple %s6, %s7, %s8, %s9
  %s11 = sld [smem:[#allocation0]]
  $region58: #{_alrao_forward_impl.1} parent=0
    _
  %s13 = ssub.s32 1, %s11
  %s14 = scalar_select 0, %s13, %s11
  // Predicated region
  $region2: #{_alrao_forward_impl.1} parent=0 // pred_check
    _
  $region3: #{_alrao_forward_impl.1} parent=0 // pred_check_branch
    %16 = sbr.rel (0) target = $region5
  $region4: #{_alrao_forward_impl.1} parent=0 // pred_region
    _
  $region5: #{_alrao_forward_impl.1} parent=0 // pred_fallthru
    _
  // Predicated region
  $region6: #{_alrao_forward_impl.1} parent=0 // pred_check
    _
  $region7: #{_alrao_forward_impl.1} parent=0 // pred_check_branch
    %18 = sbr.rel (0) target = $region9
  $region8: #{_alrao_forward_impl.1} parent=0 // pred_region
    _
  $region9: #{_alrao_forward_impl.1} parent=0 // pred_fallthru
    _
  // Predicated region
  $region10: #{_alrao_forward_impl.1} parent=0 // pred_check
    _
  $region11: #{_alrao_forward_impl.1} parent=0 // pred_check_branch
    %20 = sbr.rel (0) target = $region13
  $region12: #{_alrao_forward_impl.1} parent=0 // pred_region
    _
  $region13: #{_alrao_forward_impl.1} parent=0 // pred_fallthru
    _
  // Predicated region
  $region14: #{_alrao_forward_impl.1} parent=0 // pred_check
    _
  $region15: #{_alrao_forward_impl.1} parent=0 // pred_check_branch
    %22 = sbr.rel (0) target = $region17
  $region16: #{_alrao_forward_impl.1} parent=0 // pred_region
    _
  $region17: #{_alrao_forward_impl.1} parent=0 // pred_fallthru
    _
  // Predicated region
  $region18: #{_alrao_forward_impl.1} parent=0 // pred_check
    _
  $region19: #{_alrao_forward_impl.1} parent=0 // pred_check_branch
    %24 = sbr.rel (0) target = $region21
  $region20: #{_alrao_forward_impl.1} parent=0 // pred_region
    _
  $region21: #{_alrao_forward_impl.1} parent=0 // pred_fallthru
    _
  // Predicated region
  $region22: #{_alrao_forward_impl.1} parent=0 // pred_check
    _
  $region23: #{_alrao_forward_impl.1} parent=0 // pred_check_branch
    %26 = sbr.rel (0) target = $region25
  $region24: #{_alrao_forward_impl.1} parent=0 // pred_region
    _
  $region25: #{_alrao_forward_impl.1} parent=0 // pred_fallthru
    _
  %v28 = vld [vmem:[%s0] sm:$0xff]
  %v29 = vld [vmem:[%s0 + $0x8] sm:$0xff]
  %v30 = vld [vmem:[%s0 + $0x10] sm:$0xff]
  %v31 = vld [vmem:[%s0 + $0x18] sm:$0xff]
  %v32 = vld [vmem:[%s0 + $0x20] sm:$0xff]
  %v33 = vld [vmem:[%s0 + $0x28] sm:$0xff]
  %v34 = vld [vmem:[%s0 + $0x30] sm:$0xff]
  %v35 = vld [vmem:[%s0 + $0x38] sm:$0xff]
  %v36 = vld [vmem:[%s0 + $0x40] sm:$0xff]
  %v37 = vld [vmem:[%s0 + $0x48] sm:$0xff]
  %v38 = vld [vmem:[%s0 + $0x50] sm:$0xff]
  %v39 = vld [vmem:[%s0 + $0x58] sm:$0xff]
  %v40 = vld [vmem:[%s0 + $0x60] sm:$0xff]
  %v41 = vld [vmem:[%s0 + $0x68] sm:$0xff]
  %v42 = vld [vmem:[%s0 + $0x70] sm:$0xff]
  %v43 = vld [vmem:[%s0 + $0x78] sm:$0xff]
  %v44 = vld [vmem:[%s0 + $0x80] sm:$0xff]
  %v45 = vld [vmem:[%s0 + $0x88] sm:$0xff]
  %v46 = vld [vmem:[%s0 + $0x90] sm:$0xff]
  %v47 = vld [vmem:[%s0 + $0x98] sm:$0xff]
  %v48 = vld [vmem:[%s0 + $0xa0] sm:$0xff]
  %v49 = vld [vmem:[%s0 + $0xa8] sm:$0xff]
  %v50 = vld [vmem:[%s0 + $0xb0] sm:$0xff]
  %v51 = vld [vmem:[%s0 + $0xb8] sm:$0xff]
  %v52 = vld [vmem:[%s0 + $0xc0] sm:$0xff]
  %v53 = vld [vmem:[%s0 + $0xc8] sm:$0xff]
  %v54 = vld [vmem:[%s0 + $0xd0] sm:$0xff]
  %v55 = vld [vmem:[%s0 + $0xd8] sm:$0xff]
  %v56 = vld [vmem:[%s0 + $0xe0] sm:$0xff]
  %v57 = vld [vmem:[%s0 + $0xe8] sm:$0xff]
  %v58 = vld [vmem:[%s0 + $0xf0] sm:$0xff]
  %v59 = vld [vmem:[%s0 + $0xf8] sm:$0xff]
  %v60 = vld [vmem:[%s0 + $0x100] sm:$0xff]
  %v61 = vld [vmem:[%s0 + $0x108] sm:$0xff]
  %v62 = vld [vmem:[%s0 + $0x110] sm:$0xff]
  %v63 = vld [vmem:[%s0 + $0x118] sm:$0xff]
  %v64 = vld [vmem:[%s0 + $0x120] sm:$0xff]
  %v65 = vld [vmem:[%s0 + $0x128] sm:$0xff]
  %v66 = vld [vmem:[%s0 + $0x130] sm:$0xff]
  %v67 = vld [vmem:[%s0 + $0x138] sm:$0xff]
  %v68 = vld [vmem:[%s0 + $0x140] sm:$0xff]
  %v69 = vld [vmem:[%s0 + $0x148] sm:$0xff]
  %v70 = vld [vmem:[%s0 + $0x150] sm:$0xff]
  %v71 = vld [vmem:[%s0 + $0x158] sm:$0xff]
  %v72 = vld [vmem:[%s0 + $0x160] sm:$0xff]
  %v73 = vld [vmem:[%s0 + $0x168] sm:$0xff]
  %v74 = vld [vmem:[%s0 + $0x170] sm:$0xff]
  %v75 = vld [vmem:[%s0 + $0x178] sm:$0xff]
  %v76 = vld [vmem:[%s0 + $0x180] sm:$0xff]
  %v77 = vld [vmem:[%s0 + $0x188] sm:$0xff]
  %v78 = vld [vmem:[%s0 + $0x190] sm:$0xff]
  %v79 = vld [vmem:[%s0 + $0x198] sm:$0xff]
  %v80 = vld [vmem:[%s0 + $0x1a0] sm:$0xff]
  %v81 = vld [vmem:[%s0 + $0x1a8] sm:$0xff]
  %v82 = vld [vmem:[%s0 + $0x1b0] sm:$0xff]
  %v83 = vld [vmem:[%s0 + $0x1b8] sm:$0xff]
  %v84 = vld [vmem:[%s0 + $0x1c0] sm:$0xff]
  %v85 = vld [vmem:[%s0 + $0x1c8] sm:$0xff]
  %v86 = vld [vmem:[%s0 + $0x1d0] sm:$0xff]
  %v87 = vld [vmem:[%s0 + $0x1d8] sm:$0xff]
  %v88 = vld [vmem:[%s0 + $0x1e0] sm:$0xff]
  %v89 = vld [vmem:[%s0 + $0x1e8] sm:$0xff]
  %v90 = vld [vmem:[%s0 + $0x1f0] sm:$0xff]
  %v91 = vld [vmem:[%s0 + $0x1f8] sm:$0xff]
  %v92 = vld [vmem:[%s1] sm:$0xf]
  %v93 = vld [vmem:[%s1 + $0x4] sm:$0xf]
  %v94 = vld [vmem:[%s1 + $0x8] sm:$0xf]
  %v95 = vld [vmem:[%s1 + $0xc] sm:$0xf]
  %v96 = vld [vmem:[%s1 + $0x10] sm:$0xf]
  %v97 = vld [vmem:[%s1 + $0x14] sm:$0xf]
  %v98 = vld [vmem:[%s1 + $0x18] sm:$0xf]
  %v99 = vld [vmem:[%s1 + $0x1c] sm:$0xf]
  %v100 = vld [vmem:[%s1 + $0x20] sm:$0xf]
  %v101 = vld [vmem:[%s1 + $0x24] sm:$0xf]
  %v102 = vld [vmem:[%s1 + $0x28] sm:$0xf]
  %v103 = vld [vmem:[%s1 + $0x2c] sm:$0xf]
  %v104 = vld [vmem:[%s1 + $0x30] sm:$0xf]
  %v105 = vld [vmem:[%s1 + $0x34] sm:$0xf]
  %v106 = vld [vmem:[%s1 + $0x38] sm:$0xf]
  %v107 = vld [vmem:[%s1 + $0x3c] sm:$0xf]
  %v108 = vld [vmem:[%s1 + $0x40] sm:$0xf]
  %v109 = vld [vmem:[%s1 + $0x44] sm:$0xf]
  %v110 = vld [vmem:[%s1 + $0x48] sm:$0xf]
  %v111 = vld [vmem:[%s1 + $0x4c] sm:$0xf]
  %v112 = vld [vmem:[%s1 + $0x50] sm:$0xf]
  %v113 = vld [vmem:[%s1 + $0x54] sm:$0xf]
  %v114 = vld [vmem:[%s1 + $0x58] sm:$0xf]
  %v115 = vld [vmem:[%s1 + $0x5c] sm:$0xf]
  %v116 = vld [vmem:[%s1 + $0x60] sm:$0xf]
  %v117 = vld [vmem:[%s1 + $0x64] sm:$0xf]
  %v118 = vld [vmem:[%s1 + $0x68] sm:$0xf]
  %v119 = vld [vmem:[%s1 + $0x6c] sm:$0xf]
  %v120 = vld [vmem:[%s1 + $0x70] sm:$0xf]
  %v121 = vld [vmem:[%s1 + $0x74] sm:$0xf]
  %v122 = vld [vmem:[%s1 + $0x78] sm:$0xf]
  %v123 = vld [vmem:[%s1 + $0x7c] sm:$0xf]
  %v124 = vld [vmem:[%s1 + $0x80] sm:$0xf]
  %v125 = vld [vmem:[%s1 + $0x84] sm:$0xf]
  %v126 = vld [vmem:[%s1 + $0x88] sm:$0xf]
  %v127 = vld [vmem:[%s1 + $0x8c] sm:$0xf]
  %v128 = vld [vmem:[%s1 + $0x90] sm:$0xf]
  %v129 = vld [vmem:[%s1 + $0x94] sm:$0xf]
  %v130 = vld [vmem:[%s1 + $0x98] sm:$0xf]
  %v131 = vld [vmem:[%s1 + $0x9c] sm:$0xf]
  %v132 = vld [vmem:[%s1 + $0xa0] sm:$0xf]
  %v133 = vld [vmem:[%s1 + $0xa4] sm:$0xf]
  %v134 = vld [vmem:[%s1 + $0xa8] sm:$0xf]
  %v135 = vld [vmem:[%s1 + $0xac] sm:$0xf]
  %v136 = vld [vmem:[%s1 + $0xb0] sm:$0xf]
  %v137 = vld [vmem:[%s1 + $0xb4] sm:$0xf]
  %v138 = vld [vmem:[%s1 + $0xb8] sm:$0xf]
  %v139 = vld [vmem:[%s1 + $0xbc] sm:$0xf]
  %v140 = vld [vmem:[%s1 + $0xc0] sm:$0xf]
  %v141 = vld [vmem:[%s1 + $0xc4] sm:$0xf]
  %v142 = vld [vmem:[%s1 + $0xc8] sm:$0xf]
  %v143 = vld [vmem:[%s1 + $0xcc] sm:$0xf]
  %v144 = vld [vmem:[%s1 + $0xd0] sm:$0xf]
  %v145 = vld [vmem:[%s1 + $0xd4] sm:$0xf]
  %v146 = vld [vmem:[%s1 + $0xd8] sm:$0xf]
  %v147 = vld [vmem:[%s1 + $0xdc] sm:$0xf]
  %v148 = vld [vmem:[%s1 + $0xe0] sm:$0xf]
  %v149 = vld [vmem:[%s1 + $0xe4] sm:$0xf]
  %v150 = vld [vmem:[%s1 + $0xe8] sm:$0xf]
  %v151 = vld [vmem:[%s1 + $0xec] sm:$0xf]
  %v152 = vld [vmem:[%s1 + $0xf0] sm:$0xf]
  %v153 = vld [vmem:[%s1 + $0xf4] sm:$0xf]
  %v154 = vld [vmem:[%s1 + $0xf8] sm:$0xf]
  %v155 = vld [vmem:[%s1 + $0xfc] sm:$0xf]
  %v156 = vld [vmem:[%s1 + $0x100] sm:$0xf]
  %v157 = vld [vmem:[%s1 + $0x104] sm:$0xf]
  %v158 = vld [vmem:[%s1 + $0x108] sm:$0xf]
  %v159 = vld [vmem:[%s1 + $0x10c] sm:$0xf]
  %v160 = vld [vmem:[%s1 + $0x110] sm:$0xf]
  %v161 = vld [vmem:[%s1 + $0x114] sm:$0xf]
  %v162 = vld [vmem:[%s1 + $0x118] sm:$0xf]
  %v163 = vld [vmem:[%s1 + $0x11c] sm:$0xf]
  %v164 = vld [vmem:[%s1 + $0x120] sm:$0xf]
  %v165 = vld [vmem:[%s1 + $0x124] sm:$0xf]
  %v166 = vld [vmem:[%s1 + $0x128] sm:$0xf]
  %v167 = vld [vmem:[%s1 + $0x12c] sm:$0xf]
  %v168 = vld [vmem:[%s1 + $0x130] sm:$0xf]
  %v169 = vld [vmem:[%s1 + $0x134] sm:$0xf]
  %v170 = vld [vmem:[%s1 + $0x138] sm:$0xf]
  %v171 = vld [vmem:[%s1 + $0x13c] sm:$0xf]
  %v172 = vld [vmem:[%s1 + $0x140] sm:$0xf]
  %v173 = vld [vmem:[%s1 + $0x144] sm:$0xf]
  %v174 = vld [vmem:[%s1 + $0x148] sm:$0xf]
  %v175 = vld [vmem:[%s1 + $0x14c] sm:$0xf]
  %v176 = vld [vmem:[%s1 + $0x150] sm:$0xf]
  %v177 = vld [vmem:[%s1 + $0x154] sm:$0xf]
  %v178 = vld [vmem:[%s1 + $0x158] sm:$0xf]
  %v179 = vld [vmem:[%s1 + $0x15c] sm:$0xf]
  %v180 = vld [vmem:[%s1 + $0x160] sm:$0xf]
  %v181 = vld [vmem:[%s1 + $0x164] sm:$0xf]
  %v182 = vld [vmem:[%s1 + $0x168] sm:$0xf]
  %v183 = vld [vmem:[%s1 + $0x16c] sm:$0xf]
  %v184 = vld [vmem:[%s1 + $0x170] sm:$0xf]
  %v185 = vld [vmem:[%s1 + $0x174] sm:$0xf]
  %v186 = vld [vmem:[%s1 + $0x178] sm:$0xf]
  %v187 = vld [vmem:[%s1 + $0x17c] sm:$0xf]
  %v188 = vld [vmem:[%s1 + $0x180] sm:$0xf]
  %v189 = vld [vmem:[%s1 + $0x184] sm:$0xf]
  %v190 = vld [vmem:[%s1 + $0x188] sm:$0xf]
  %v191 = vld [vmem:[%s1 + $0x18c] sm:$0xf]
  %v192 = vld [vmem:[%s1 + $0x190] sm:$0xf]
  %v193 = vld [vmem:[%s1 + $0x194] sm:$0xf]
  %v194 = vld [vmem:[%s1 + $0x198] sm:$0xf]
  %v195 = vld [vmem:[%s1 + $0x19c] sm:$0xf]
  %v196 = vld [vmem:[%s1 + $0x1a0] sm:$0xf]
  %v197 = vld [vmem:[%s1 + $0x1a4] sm:$0xf]
  %v198 = vld [vmem:[%s1 + $0x1a8] sm:$0xf]
  %v199 = vld [vmem:[%s1 + $0x1ac] sm:$0xf]
  %v200 = vld [vmem:[%s1 + $0x1b0] sm:$0xf]
  %v201 = vld [vmem:[%s1 + $0x1b4] sm:$0xf]
  %v202 = vld [vmem:[%s1 + $0x1b8] sm:$0xf]
  %v203 = vld [vmem:[%s1 + $0x1bc] sm:$0xf]
  %v204 = vld [vmem:[%s1 + $0x1c0] sm:$0xf]
  %v205 = vld [vmem:[%s1 + $0x1c4] sm:$0xf]
  %v206 = vld [vmem:[%s1 + $0x1c8] sm:$0xf]
  %v207 = vld [vmem:[%s1 + $0x1cc] sm:$0xf]
  %v208 = vld [vmem:[%s1 + $0x1d0] sm:$0xf]
  %v209 = vld [vmem:[%s1 + $0x1d4] sm:$0xf]
  %v210 = vld [vmem:[%s1 + $0x1d8] sm:$0xf]
  %v211 = vld [vmem:[%s1 + $0x1dc] sm:$0xf]
  %v212 = vld [vmem:[%s1 + $0x1e0] sm:$0xf]
  %v213 = vld [vmem:[%s1 + $0x1e4] sm:$0xf]
  %v214 = vld [vmem:[%s1 + $0x1e8] sm:$0xf]
  %v215 = vld [vmem:[%s1 + $0x1ec] sm:$0xf]
  %v216 = vld [vmem:[%s1 + $0x1f0] sm:$0xf]
  %v217 = vld [vmem:[%s1 + $0x1f4] sm:$0xf]
  %v218 = vld [vmem:[%s1 + $0x1f8] sm:$0xf]
  %v219 = vld [vmem:[%s1 + $0x1fc] sm:$0xf]
  %v220 = vld [vmem:[%s2] sm:$0x1]
  %v222 = vlaneseq
  %v223 = vshrl.u32 %v222, 7
  %v224 = vsub.s32 0, %v223
  %v225 = vrot.slane %v220, %v224
  %v291 = vunpack.c.l.b16 %v28
  %v292 = vunpack.c.h.b16 %v28
  %v293 = vunpack.c.l.b16 %v29
  %v294 = vunpack.c.h.b16 %v29
  %v295 = vunpack.c.l.b16 %v30
  %v296 = vunpack.c.h.b16 %v30
  %v297 = vunpack.c.l.b16 %v31
  %v298 = vunpack.c.h.b16 %v31
  %v299 = vunpack.c.l.b16 %v32
  %v300 = vunpack.c.h.b16 %v32
  %v301 = vunpack.c.l.b16 %v33
  %v302 = vunpack.c.h.b16 %v33
  %v303 = vunpack.c.l.b16 %v34
  %v304 = vunpack.c.h.b16 %v34
  %v305 = vunpack.c.l.b16 %v35
  %v306 = vunpack.c.h.b16 %v35
  %v307 = vunpack.c.l.b16 %v36
  %v308 = vunpack.c.h.b16 %v36
  %v309 = vunpack.c.l.b16 %v37
  %v310 = vunpack.c.h.b16 %v37
  %v311 = vunpack.c.l.b16 %v38
  %v312 = vunpack.c.h.b16 %v38
  %v313 = vunpack.c.l.b16 %v39
  %v314 = vunpack.c.h.b16 %v39
  %v315 = vunpack.c.l.b16 %v40
  %v316 = vunpack.c.h.b16 %v40
  %v317 = vunpack.c.l.b16 %v41
  %v318 = vunpack.c.h.b16 %v41
  %v319 = vunpack.c.l.b16 %v42
  %v320 = vunpack.c.h.b16 %v42
  %v321 = vunpack.c.l.b16 %v43
  %v322 = vunpack.c.h.b16 %v43
  %v323 = vunpack.c.l.b16 %v44
  %v324 = vunpack.c.h.b16 %v44
  %v325 = vunpack.c.l.b16 %v45
  %v326 = vunpack.c.h.b16 %v45
  %v327 = vunpack.c.l.b16 %v46
  %v328 = vunpack.c.h.b16 %v46
  %v329 = vunpack.c.l.b16 %v47
  %v330 = vunpack.c.h.b16 %v47
  %v331 = vunpack.c.l.b16 %v48
  %v332 = vunpack.c.h.b16 %v48
  %v333 = vunpack.c.l.b16 %v49
  %v334 = vunpack.c.h.b16 %v49
  %v335 = vunpack.c.l.b16 %v50
  %v336 = vunpack.c.h.b16 %v50
  %v337 = vunpack.c.l.b16 %v51
  %v338 = vunpack.c.h.b16 %v51
  %v339 = vunpack.c.l.b16 %v52
  %v340 = vunpack.c.h.b16 %v52
  %v341 = vunpack.c.l.b16 %v53
  %v342 = vunpack.c.h.b16 %v53
  %v343 = vunpack.c.l.b16 %v54
  %v344 = vunpack.c.h.b16 %v54
  %v345 = vunpack.c.l.b16 %v55
  %v346 = vunpack.c.h.b16 %v55
  %v347 = vunpack.c.l.b16 %v56
  %v348 = vunpack.c.h.b16 %v56
  %v349 = vunpack.c.l.b16 %v57
  %v350 = vunpack.c.h.b16 %v57
  %v351 = vunpack.c.l.b16 %v58
  %v352 = vunpack.c.h.b16 %v58
  %v353 = vunpack.c.l.b16 %v59
  %v354 = vunpack.c.h.b16 %v59
  %v355 = vunpack.c.l.b16 %v60
  %v356 = vunpack.c.h.b16 %v60
  %v357 = vunpack.c.l.b16 %v61
  %v358 = vunpack.c.h.b16 %v61
  %v359 = vunpack.c.l.b16 %v62
  %v360 = vunpack.c.h.b16 %v62
  %v361 = vunpack.c.l.b16 %v63
  %v362 = vunpack.c.h.b16 %v63
  %v363 = vunpack.c.l.b16 %v64
  %v364 = vunpack.c.h.b16 %v64
  %v365 = vunpack.c.l.b16 %v65
  %v366 = vunpack.c.h.b16 %v65
  %v367 = vunpack.c.l.b16 %v66
  %v368 = vunpack.c.h.b16 %v66
  %v369 = vunpack.c.l.b16 %v67
  %v370 = vunpack.c.h.b16 %v67
  %v371 = vunpack.c.l.b16 %v68
  %v372 = vunpack.c.h.b16 %v68
  %v373 = vunpack.c.l.b16 %v69
  %v374 = vunpack.c.h.b16 %v69
  %v375 = vunpack.c.l.b16 %v70
  %v376 = vunpack.c.h.b16 %v70
  %v377 = vunpack.c.l.b16 %v71
  %v378 = vunpack.c.h.b16 %v71
  %v379 = vunpack.c.l.b16 %v72
  %v380 = vunpack.c.h.b16 %v72
  %v381 = vunpack.c.l.b16 %v73
  %v382 = vunpack.c.h.b16 %v73
  %v383 = vunpack.c.l.b16 %v74
  %v384 = vunpack.c.h.b16 %v74
  %v385 = vunpack.c.l.b16 %v75
  %v386 = vunpack.c.h.b16 %v75
  %v387 = vunpack.c.l.b16 %v76
  %v388 = vunpack.c.h.b16 %v76
  %v389 = vunpack.c.l.b16 %v77
  %v390 = vunpack.c.h.b16 %v77
  %v391 = vunpack.c.l.b16 %v78
  %v392 = vunpack.c.h.b16 %v78
  %v393 = vunpack.c.l.b16 %v79
  %v394 = vunpack.c.h.b16 %v79
  %v395 = vunpack.c.l.b16 %v80
  %v396 = vunpack.c.h.b16 %v80
  %v397 = vunpack.c.l.b16 %v81
  %v398 = vunpack.c.h.b16 %v81
  %v399 = vunpack.c.l.b16 %v82
  %v400 = vunpack.c.h.b16 %v82
  %v401 = vunpack.c.l.b16 %v83
  %v402 = vunpack.c.h.b16 %v83
  %v403 = vunpack.c.l.b16 %v84
  %v404 = vunpack.c.h.b16 %v84
  %v405 = vunpack.c.l.b16 %v85
  %v406 = vunpack.c.h.b16 %v85
  %v407 = vunpack.c.l.b16 %v86
  %v408 = vunpack.c.h.b16 %v86
  %v409 = vunpack.c.l.b16 %v87
  %v410 = vunpack.c.h.b16 %v87
  %v411 = vunpack.c.l.b16 %v88
  %v412 = vunpack.c.h.b16 %v88
  %v413 = vunpack.c.l.b16 %v89
  %v414 = vunpack.c.h.b16 %v89
  %v415 = vunpack.c.l.b16 %v90
  %v416 = vunpack.c.h.b16 %v90
  %v417 = vunpack.c.l.b16 %v91
  %v418 = vunpack.c.h.b16 %v91
  %v419 = vpack.c.b16 %v299, %v291
  %v420 = vpack.c.b16 %v300, %v292
  %v421 = vpack.c.b16 %v301, %v293
  %v422 = vpack.c.b16 %v302, %v294
  %v423 = vpack.c.b16 %v303, %v295
  %v424 = vpack.c.b16 %v304, %v296
  %v425 = vpack.c.b16 %v305, %v297
  %v426 = vpack.c.b16 %v306, %v298
  %v427 = vpack.c.b16 %v315, %v307
  %v428 = vpack.c.b16 %v316, %v308
  %v429 = vpack.c.b16 %v317, %v309
  %v430 = vpack.c.b16 %v318, %v310
  %v431 = vpack.c.b16 %v319, %v311
  %v432 = vpack.c.b16 %v320, %v312
  %v433 = vpack.c.b16 %v321, %v313
  %v434 = vpack.c.b16 %v322, %v314
  %v435 = vpack.c.b16 %v331, %v323
  %v436 = vpack.c.b16 %v332, %v324
  %v437 = vpack.c.b16 %v333, %v325
  %v438 = vpack.c.b16 %v334, %v326
  %v439 = vpack.c.b16 %v335, %v327
  %v440 = vpack.c.b16 %v336, %v328
  %v441 = vpack.c.b16 %v337, %v329
  %v442 = vpack.c.b16 %v338, %v330
  %v443 = vpack.c.b16 %v347, %v339
  %v444 = vpack.c.b16 %v348, %v340
  %v445 = vpack.c.b16 %v349, %v341
  %v446 = vpack.c.b16 %v350, %v342
  %v447 = vpack.c.b16 %v351, %v343
  %v448 = vpack.c.b16 %v352, %v344
  %v449 = vpack.c.b16 %v353, %v345
  %v450 = vpack.c.b16 %v354, %v346
  %v451 = vpack.c.b16 %v363, %v355
  %v452 = vpack.c.b16 %v364, %v356
  %v453 = vpack.c.b16 %v365, %v357
  %v454 = vpack.c.b16 %v366, %v358
  %v455 = vpack.c.b16 %v367, %v359
  %v456 = vpack.c.b16 %v368, %v360
  %v457 = vpack.c.b16 %v369, %v361
  %v458 = vpack.c.b16 %v370, %v362
  %v459 = vpack.c.b16 %v379, %v371
  %v460 = vpack.c.b16 %v380, %v372
  %v461 = vpack.c.b16 %v381, %v373
  %v462 = vpack.c.b16 %v382, %v374
  %v463 = vpack.c.b16 %v383, %v375
  %v464 = vpack.c.b16 %v384, %v376
  %v465 = vpack.c.b16 %v385, %v377
  %v466 = vpack.c.b16 %v386, %v378
  %v467 = vpack.c.b16 %v395, %v387
  %v468 = vpack.c.b16 %v396, %v388
  %v469 = vpack.c.b16 %v397, %v389
  %v470 = vpack.c.b16 %v398, %v390
  %v471 = vpack.c.b16 %v399, %v391
  %v472 = vpack.c.b16 %v400, %v392
  %v473 = vpack.c.b16 %v401, %v393
  %v474 = vpack.c.b16 %v402, %v394
  %v475 = vpack.c.b16 %v411, %v403
  %v476 = vpack.c.b16 %v412, %v404
  %v477 = vpack.c.b16 %v413, %v405
  %v478 = vpack.c.b16 %v414, %v406
  %v479 = vpack.c.b16 %v415, %v407
  %v480 = vpack.c.b16 %v416, %v408
  %v481 = vpack.c.b16 %v417, %v409
  %v482 = vpack.c.b16 %v418, %v410
  %v675 = vunpack.c.l.b16 %v92
  %v676 = vunpack.c.l.b16 %v93
  %v677 = vunpack.c.l.b16 %v94
  %v678 = vunpack.c.l.b16 %v95
  %v679 = vunpack.c.l.b16 %v96
  %v680 = vunpack.c.l.b16 %v97
  %v681 = vunpack.c.l.b16 %v98
  %v682 = vunpack.c.l.b16 %v99
  %v683 = vunpack.c.l.b16 %v100
  %v684 = vunpack.c.l.b16 %v101
  %v685 = vunpack.c.l.b16 %v102
  %v686 = vunpack.c.l.b16 %v103
  %v687 = vunpack.c.l.b16 %v104
  %v688 = vunpack.c.l.b16 %v105
  %v689 = vunpack.c.l.b16 %v106
  %v690 = vunpack.c.l.b16 %v107
  %v691 = vunpack.c.l.b16 %v108
  %v692 = vunpack.c.l.b16 %v109
  %v693 = vunpack.c.l.b16 %v110
  %v694 = vunpack.c.l.b16 %v111
  %v695 = vunpack.c.l.b16 %v112
  %v696 = vunpack.c.l.b16 %v113
  %v697 = vunpack.c.l.b16 %v114
  %v698 = vunpack.c.l.b16 %v115
  %v699 = vunpack.c.l.b16 %v116
  %v700 = vunpack.c.l.b16 %v117
  %v701 = vunpack.c.l.b16 %v118
  %v702 = vunpack.c.l.b16 %v119
  %v703 = vunpack.c.l.b16 %v120
  %v704 = vunpack.c.l.b16 %v121
  %v705 = vunpack.c.l.b16 %v122
  %v706 = vunpack.c.l.b16 %v123
  %v707 = vunpack.c.l.b16 %v124
  %v708 = vunpack.c.l.b16 %v125
  %v709 = vunpack.c.l.b16 %v126
  %v710 = vunpack.c.l.b16 %v127
  %v711 = vunpack.c.l.b16 %v128
  %v712 = vunpack.c.l.b16 %v129
  %v713 = vunpack.c.l.b16 %v130
  %v714 = vunpack.c.l.b16 %v131
  %v715 = vunpack.c.l.b16 %v132
  %v716 = vunpack.c.l.b16 %v133
  %v717 = vunpack.c.l.b16 %v134
  %v718 = vunpack.c.l.b16 %v135
  %v719 = vunpack.c.l.b16 %v136
  %v720 = vunpack.c.l.b16 %v137
  %v721 = vunpack.c.l.b16 %v138
  %v722 = vunpack.c.l.b16 %v139
  %v723 = vunpack.c.l.b16 %v140
  %v724 = vunpack.c.l.b16 %v141
  %v725 = vunpack.c.l.b16 %v142
  %v726 = vunpack.c.l.b16 %v143
  %v727 = vunpack.c.l.b16 %v144
  %v728 = vunpack.c.l.b16 %v145
  %v729 = vunpack.c.l.b16 %v146
  %v730 = vunpack.c.l.b16 %v147
  %v731 = vunpack.c.l.b16 %v148
  %v732 = vunpack.c.l.b16 %v149
  %v733 = vunpack.c.l.b16 %v150
  %v734 = vunpack.c.l.b16 %v151
  %v735 = vunpack.c.l.b16 %v152
  %v736 = vunpack.c.l.b16 %v153
  %v737 = vunpack.c.l.b16 %v154
  %v738 = vunpack.c.l.b16 %v155
  %v739 = vunpack.c.l.b16 %v156
  %v740 = vunpack.c.l.b16 %v157
  %v741 = vunpack.c.l.b16 %v158
  %v742 = vunpack.c.l.b16 %v159
  %v743 = vunpack.c.l.b16 %v160
  %v744 = vunpack.c.l.b16 %v161
  %v745 = vunpack.c.l.b16 %v162
  %v746 = vunpack.c.l.b16 %v163
  %v747 = vunpack.c.l.b16 %v164
  %v748 = vunpack.c.l.b16 %v165
  %v749 = vunpack.c.l.b16 %v166
  %v750 = vunpack.c.l.b16 %v167
  %v751 = vunpack.c.l.b16 %v168
  %v752 = vunpack.c.l.b16 %v169
  %v753 = vunpack.c.l.b16 %v170
  %v754 = vunpack.c.l.b16 %v171
  %v755 = vunpack.c.l.b16 %v172
  %v756 = vunpack.c.l.b16 %v173
  %v757 = vunpack.c.l.b16 %v174
  %v758 = vunpack.c.l.b16 %v175
  %v759 = vunpack.c.l.b16 %v176
  %v760 = vunpack.c.l.b16 %v177
  %v761 = vunpack.c.l.b16 %v178
  %v762 = vunpack.c.l.b16 %v179
  %v763 = vunpack.c.l.b16 %v180
  %v764 = vunpack.c.l.b16 %v181
  %v765 = vunpack.c.l.b16 %v182
  %v766 = vunpack.c.l.b16 %v183
  %v767 = vunpack.c.l.b16 %v184
  %v768 = vunpack.c.l.b16 %v185
  %v769 = vunpack.c.l.b16 %v186
  %v770 = vunpack.c.l.b16 %v187
  %v771 = vunpack.c.l.b16 %v188
  %v772 = vunpack.c.l.b16 %v189
  %v773 = vunpack.c.l.b16 %v190
  %v774 = vunpack.c.l.b16 %v191
  %v775 = vunpack.c.l.b16 %v192
  %v776 = vunpack.c.l.b16 %v193
  %v777 = vunpack.c.l.b16 %v194
  %v778 = vunpack.c.l.b16 %v195
  %v779 = vunpack.c.l.b16 %v196
  %v780 = vunpack.c.l.b16 %v197
  %v781 = vunpack.c.l.b16 %v198
  %v782 = vunpack.c.l.b16 %v199
  %v783 = vunpack.c.l.b16 %v200
  %v784 = vunpack.c.l.b16 %v201
  %v785 = vunpack.c.l.b16 %v202
  %v786 = vunpack.c.l.b16 %v203
  %v787 = vunpack.c.l.b16 %v204
  %v788 = vunpack.c.l.b16 %v205
  %v789 = vunpack.c.l.b16 %v206
  %v790 = vunpack.c.l.b16 %v207
  %v791 = vunpack.c.l.b16 %v208
  %v792 = vunpack.c.l.b16 %v209
  %v793 = vunpack.c.l.b16 %v210
  %v794 = vunpack.c.l.b16 %v211
  %v795 = vunpack.c.l.b16 %v212
  %v796 = vunpack.c.l.b16 %v213
  %v797 = vunpack.c.l.b16 %v214
  %v798 = vunpack.c.l.b16 %v215
  %v799 = vunpack.c.l.b16 %v216
  %v800 = vunpack.c.l.b16 %v217
  %v801 = vunpack.c.l.b16 %v218
  %v802 = vunpack.c.l.b16 %v219
  %v803 = vpack.c.b16 %v676, %v675
  %v804 = vpack.c.b16 %v678, %v677
  %v805 = vpack.c.b16 %v680, %v679
  %v806 = vpack.c.b16 %v682, %v681
  %v807 = vpack.c.b16 %v684, %v683
  %v808 = vpack.c.b16 %v686, %v685
  %v809 = vpack.c.b16 %v688, %v687
  %v810 = vpack.c.b16 %v690, %v689
  %v811 = vpack.c.b16 %v692, %v691
  %v812 = vpack.c.b16 %v694, %v693
  %v813 = vpack.c.b16 %v696, %v695
  %v814 = vpack.c.b16 %v698, %v697
  %v815 = vpack.c.b16 %v700, %v699
  %v816 = vpack.c.b16 %v702, %v701
  %v817 = vpack.c.b16 %v704, %v703
  %v818 = vpack.c.b16 %v706, %v705
  %v819 = vpack.c.b16 %v708, %v707
  %v820 = vpack.c.b16 %v710, %v709
  %v821 = vpack.c.b16 %v712, %v711
  %v822 = vpack.c.b16 %v714, %v713
  %v823 = vpack.c.b16 %v716, %v715
  %v824 = vpack.c.b16 %v718, %v717
  %v825 = vpack.c.b16 %v720, %v719
  %v826 = vpack.c.b16 %v722, %v721
  %v827 = vpack.c.b16 %v724, %v723
  %v828 = vpack.c.b16 %v726, %v725
  %v829 = vpack.c.b16 %v728, %v727
  %v830 = vpack.c.b16 %v730, %v729
  %v831 = vpack.c.b16 %v732, %v731
  %v832 = vpack.c.b16 %v734, %v733
  %v833 = vpack.c.b16 %v736, %v735
  %v834 = vpack.c.b16 %v738, %v737
  %v835 = vpack.c.b16 %v740, %v739
  %v836 = vpack.c.b16 %v742, %v741
  %v837 = vpack.c.b16 %v744, %v743
  %v838 = vpack.c.b16 %v746, %v745
  %v839 = vpack.c.b16 %v748, %v747
  %v840 = vpack.c.b16 %v750, %v749
  %v841 = vpack.c.b16 %v752, %v751
  %v842 = vpack.c.b16 %v754, %v753
  %v843 = vpack.c.b16 %v756, %v755
  %v844 = vpack.c.b16 %v758, %v757
  %v845 = vpack.c.b16 %v760, %v759
  %v846 = vpack.c.b16 %v762, %v761
  %v847 = vpack.c.b16 %v764, %v763
  %v848 = vpack.c.b16 %v766, %v765
  %v849 = vpack.c.b16 %v768, %v767
  %v850 = vpack.c.b16 %v770, %v769
  %v851 = vpack.c.b16 %v772, %v771
  %v852 = vpack.c.b16 %v774, %v773
  %v853 = vpack.c.b16 %v776, %v775
  %v854 = vpack.c.b16 %v778, %v777
  %v855 = vpack.c.b16 %v780, %v779
  %v856 = vpack.c.b16 %v782, %v781
  %v857 = vpack.c.b16 %v784, %v783
  %v858 = vpack.c.b16 %v786, %v785
  %v859 = vpack.c.b16 %v788, %v787
  %v860 = vpack.c.b16 %v790, %v789
  %v861 = vpack.c.b16 %v792, %v791
  %v862 = vpack.c.b16 %v794, %v793
  %v863 = vpack.c.b16 %v796, %v795
  %v864 = vpack.c.b16 %v798, %v797
  %v865 = vpack.c.b16 %v800, %v799
  %v866 = vpack.c.b16 %v802, %v801
  %931 = vmatprep.subr.bf16.mxu0 0
  %932 = vmatpush1.bf16.msra.mxu0 %v803
  %933 = vmatprep.subr.bf16.mxu0 0
  %934 = vmatpush1.bf16.msra.mxu0 %v804
  %935 = vmatprep.subr.bf16.mxu0 0
  %936 = vmatpush1.bf16.msra.mxu0 %v805
  %937 = vmatprep.subr.bf16.mxu0 0
  %938 = vmatpush1.bf16.msra.mxu0 %v806
  %939 = vmatprep.subr.bf16.mxu0 0
  %940 = vmatpush1.bf16.msra.mxu0 %v807
  %941 = vmatprep.subr.bf16.mxu0 0
  %942 = vmatpush1.bf16.msra.mxu0 %v808
  %943 = vmatprep.subr.bf16.mxu0 0
  %944 = vmatpush1.bf16.msra.mxu0 %v809
  %945 = vmatprep.subr.bf16.mxu0 0
  %946 = vmatpush1.bf16.msra.mxu0 %v810
  %947 = vmatprep.subr.bf16.mxu0 0
  %948 = vmatpush1.bf16.msra.mxu0 %v811
  %949 = vmatprep.subr.bf16.mxu0 0
  %950 = vmatpush1.bf16.msra.mxu0 %v812
  %951 = vmatprep.subr.bf16.mxu0 0
  %952 = vmatpush1.bf16.msra.mxu0 %v813
  %953 = vmatprep.subr.bf16.mxu0 0
  %954 = vmatpush1.bf16.msra.mxu0 %v814
  %955 = vmatprep.subr.bf16.mxu0 0
  %956 = vmatpush1.bf16.msra.mxu0 %v815
  %957 = vmatprep.subr.bf16.mxu0 0
  %958 = vmatpush1.bf16.msra.mxu0 %v816
  %959 = vmatprep.subr.bf16.mxu0 0
  %960 = vmatpush1.bf16.msra.mxu0 %v817
  %961 = vmatprep.subr.bf16.mxu0 0
  %962 = vmatpush1.bf16.msra.mxu0 %v818
  %963 = vmatprep.mubr.bf16.mxu0 %v420
  %964 = vmatmul.mubr.bf16.gmra.mrb[0].mxu0 %v419
  %v965 = vpop.f32.mrb[0].mxu0
  %v966 = vadd.f32 %v225, %v965
  %v967 = vpop.f32.mrb[0].mxu0
  %v968 = vpop.f32.mrb[0].mxu0
  %v969 = vadd.f32 %v225, %v968
  %v970 = vpop.f32.mrb[0].mxu0
  %971 = vmatprep.mubr.bf16.mxu0 %v428
  %972 = vmatmul.mubr.bf16.gmra.mrb[0].mxu0 %v427
  %v973 = vpop.f32.mrb[0].mxu0
  %v974 = vadd.f32 %v225, %v973
  %v975 = vpop.f32.mrb[0].mxu0
  %v976 = vpop.f32.mrb[0].mxu0
  %v977 = vadd.f32 %v225, %v976
  %v978 = vpop.f32.mrb[0].mxu0
  %979 = vmatprep.mubr.bf16.mxu0 %v436
  %980 = vmatmul.mubr.bf16.gmra.mrb[0].mxu0 %v435
  %v981 = vpop.f32.mrb[0].mxu0
  %v982 = vadd.f32 %v225, %v981
  %v983 = vpop.f32.mrb[0].mxu0
  %v984 = vpop.f32.mrb[0].mxu0
  %v985 = vadd.f32 %v225, %v984
  %v986 = vpop.f32.mrb[0].mxu0
  %987 = vmatprep.mubr.bf16.mxu0 %v444
  %988 = vmatmul.mubr.bf16.gmra.mrb[0].mxu0 %v443
  %v989 = vpop.f32.mrb[0].mxu0
  %v990 = vadd.f32 %v225, %v989
  %v991 = vpop.f32.mrb[0].mxu0
  %v992 = vpop.f32.mrb[0].mxu0
  %v993 = vadd.f32 %v225, %v992
  %v994 = vpop.f32.mrb[0].mxu0
  %995 = vmatprep.mubr.bf16.mxu0 %v452
  %996 = vmatmul.mubr.bf16.gmra.mrb[0].mxu0 %v451
  %v997 = vpop.f32.mrb[0].mxu0
  %v998 = vadd.f32 %v225, %v997
  %v999 = vpop.f32.mrb[0].mxu0
  %v1000 = vpop.f32.mrb[0].mxu0
  %v1001 = vadd.f32 %v225, %v1000
  %v1002 = vpop.f32.mrb[0].mxu0
  %1003 = vmatprep.mubr.bf16.mxu0 %v460
  %1004 = vmatmul.mubr.bf16.gmra.mrb[0].mxu0 %v459
  %v1005 = vpop.f32.mrb[0].mxu0
  %v1006 = vadd.f32 %v225, %v1005
  %v1007 = vpop.f32.mrb[0].mxu0
  %v1008 = vpop.f32.mrb[0].mxu0
  %v1009 = vadd.f32 %v225, %v1008
  %v1010 = vpop.f32.mrb[0].mxu0
  %1011 = vmatprep.mubr.bf16.mxu0 %v468
  %1012 = vmatmul.mubr.bf16.gmra.mrb[0].mxu0 %v467
  %v1013 = vpop.f32.mrb[0].mxu0
  %v1014 = vadd.f32 %v225, %v1013
  %v1015 = vpop.f32.mrb[0].mxu0
  %v1016 = vpop.f32.mrb[0].mxu0
  %v1017 = vadd.f32 %v225, %v1016
  %v1018 = vpop.f32.mrb[0].mxu0
  %1019 = vmatprep.mubr.bf16.mxu0 %v476
  %1020 = vmatmul.mubr.bf16.gmra.mrb[0].mxu0 %v475
  %v1021 = vpop.f32.mrb[0].mxu0
  %v1022 = vadd.f32 %v225, %v1021
  %v1023 = vpop.f32.mrb[0].mxu0
  %v1024 = vpop.f32.mrb[0].mxu0
  %v1025 = vadd.f32 %v225, %v1024
  %v1026 = vpop.f32.mrb[0].mxu0
  %1027 = vdwg.mxu0
  %1028 = vmatprep.subr.bf16.mxu0 0
  %1029 = vmatpush1.bf16.msra.mxu0 %v819
  %1030 = vmatprep.subr.bf16.mxu0 0
  %1031 = vmatpush1.bf16.msra.mxu0 %v820
  %1032 = vmatprep.subr.bf16.mxu0 0
  %1033 = vmatpush1.bf16.msra.mxu0 %v821
  %1034 = vmatprep.subr.bf16.mxu0 0
  %1035 = vmatpush1.bf16.msra.mxu0 %v822
  %1036 = vmatprep.subr.bf16.mxu0 0
  %1037 = vmatpush1.bf16.msra.mxu0 %v823
  %1038 = vmatprep.subr.bf16.mxu0 0
  %1039 = vmatpush1.bf16.msra.mxu0 %v824
  %1040 = vmatprep.subr.bf16.mxu0 0
  %1041 = vmatpush1.bf16.msra.mxu0 %v825
  %1042 = vmatprep.subr.bf16.mxu0 0
  %1043 = vmatpush1.bf16.msra.mxu0 %v826
  %1044 = vmatprep.subr.bf16.mxu0 0
  %1045 = vmatpush1.bf16.msra.mxu0 %v827
  %1046 = vmatprep.subr.bf16.mxu0 0
  %1047 = vmatpush1.bf16.msra.mxu0 %v828
  %1048 = vmatprep.subr.bf16.mxu0 0
  %1049 = vmatpush1.bf16.msra.mxu0 %v829
  %1050 = vmatprep.subr.bf16.mxu0 0
  %1051 = vmatpush1.bf16.msra.mxu0 %v830
  %1052 = vmatprep.subr.bf16.mxu0 0
  %1053 = vmatpush1.bf16.msra.mxu0 %v831
  %1054 = vmatprep.subr.bf16.mxu0 0
  %1055 = vmatpush1.bf16.msra.mxu0 %v832
  %1056 = vmatprep.subr.bf16.mxu0 0
  %1057 = vmatpush1.bf16.msra.mxu0 %v833
  %1058 = vmatprep.subr.bf16.mxu0 0
  %1059 = vmatpush1.bf16.msra.mxu0 %v834
  %1060 = vmatprep.mubr.bf16.mxu0 %v422
  %1061 = vmatmul.mubr.bf16.gmra.mrb[0].mxu0 %v421
  %v1062 = vpop.f32.mrb[0].mxu0
  %v1063 = vadd.f32 %v966, %v1062
  %v1064 = vpop.f32.mrb[0].mxu0
  %v1065 = vpop.f32.mrb[0].mxu0
  %v1066 = vadd.f32 %v969, %v1065
  %v1067 = vpop.f32.mrb[0].mxu0
  %1068 = vmatprep.mubr.bf16.mxu0 %v430
  %1069 = vmatmul.mubr.bf16.gmra.mrb[0].mxu0 %v429
  %v1070 = vpop.f32.mrb[0].mxu0
  %v1071 = vadd.f32 %v974, %v1070
  %v1072 = vpop.f32.mrb[0].mxu0
  %v1073 = vpop.f32.mrb[0].mxu0
  %v1074 = vadd.f32 %v977, %v1073
  %v1075 = vpop.f32.mrb[0].mxu0
  %1076 = vmatprep.mubr.bf16.mxu0 %v438
  %1077 = vmatmul.mubr.bf16.gmra.mrb[0].mxu0 %v437
  %v1078 = vpop.f32.mrb[0].mxu0
  %v1079 = vadd.f32 %v982, %v1078
  %v1080 = vpop.f32.mrb[0].mxu0
  %v1081 = vpop.f32.mrb[0].mxu0
  %v1082 = vadd.f32 %v985, %v1081
  %v1083 = vpop.f32.mrb[0].mxu0
  %1084 = vmatprep.mubr.bf16.mxu0 %v446
  %1085 = vmatmul.mubr.bf16.gmra.mrb[0].mxu0 %v445
  %v1086 = vpop.f32.mrb[0].mxu0
  %v1087 = vadd.f32 %v990, %v1086
  %v1088 = vpop.f32.mrb[0].mxu0
  %v1089 = vpop.f32.mrb[0].mxu0
  %v1090 = vadd.f32 %v993, %v1089
  %v1091 = vpop.f32.mrb[0].mxu0
  %1092 = vmatprep.mubr.bf16.mxu0 %v454
  %1093 = vmatmul.mubr.bf16.gmra.mrb[0].mxu0 %v453
  %v1094 = vpop.f32.mrb[0].mxu0
  %v1095 = vadd.f32 %v998, %v1094
  %v1096 = vpop.f32.mrb[0].mxu0
  %v1097 = vpop.f32.mrb[0].mxu0
  %v1098 = vadd.f32 %v1001, %v1097
  %v1099 = vpop.f32.mrb[0].mxu0
  %1100 = vmatprep.mubr.bf16.mxu0 %v462
  %1101 = vmatmul.mubr.bf16.gmra.mrb[0].mxu0 %v461
  %v1102 = vpop.f32.mrb[0].mxu0
  %v1103 = vadd.f32 %v1006, %v1102
  %v1104 = vpop.f32.mrb[0].mxu0
  %v1105 = vpop.f32.mrb[0].mxu0
  %v1106 = vadd.f32 %v1009, %v1105
  %v1107 = vpop.f32.mrb[0].mxu0
  %1108 = vmatprep.mubr.bf16.mxu0 %v470
  %1109 = vmatmul.mubr.bf16.gmra.mrb[0].mxu0 %v469
  %v1110 = vpop.f32.mrb[0].mxu0
  %v1111 = vadd.f32 %v1014, %v1110
  %v1112 = vpop.f32.mrb[0].mxu0
  %v1113 = vpop.f32.mrb[0].mxu0
  %v1114 = vadd.f32 %v1017, %v1113
  %v1115 = vpop.f32.mrb[0].mxu0
  %1116 = vmatprep.mubr.bf16.mxu0 %v478
  %1117 = vmatmul.mubr.bf16.gmra.mrb[0].mxu0 %v477
  %v1118 = vpop.f32.mrb[0].mxu0
  %v1119 = vadd.f32 %v1022, %v1118
  %v1120 = vpop.f32.mrb[0].mxu0
  %v1121 = vpop.f32.mrb[0].mxu0
  %v1122 = vadd.f32 %v1025, %v1121
  %v1123 = vpop.f32.mrb[0].mxu0
  %1124 = vdwg.mxu0
  %1125 = vmatprep.subr.bf16.mxu0 0
  %1126 = vmatpush1.bf16.msra.mxu0 %v835
  %1127 = vmatprep.subr.bf16.mxu0 0
  %1128 = vmatpush1.bf16.msra.mxu0 %v836
  %1129 = vmatprep.subr.bf16.mxu0 0
  %1130 = vmatpush1.bf16.msra.mxu0 %v837
  %1131 = vmatprep.subr.bf16.mxu0 0
  %1132 = vmatpush1.bf16.msra.mxu0 %v838
  %1133 = vmatprep.subr.bf16.mxu0 0
  %1134 = vmatpush1.bf16.msra.mxu0 %v839
  %1135 = vmatprep.subr.bf16.mxu0 0
  %1136 = vmatpush1.bf16.msra.mxu0 %v840
  %1137 = vmatprep.subr.bf16.mxu0 0
  %1138 = vmatpush1.bf16.msra.mxu0 %v841
  %1139 = vmatprep.subr.bf16.mxu0 0
  %1140 = vmatpush1.bf16.msra.mxu0 %v842
  %1141 = vmatprep.subr.bf16.mxu0 0
  %1142 = vmatpush1.bf16.msra.mxu0 %v843
  %1143 = vmatprep.subr.bf16.mxu0 0
  %1144 = vmatpush1.bf16.msra.mxu0 %v844
  %1145 = vmatprep.subr.bf16.mxu0 0
  %1146 = vmatpush1.bf16.msra.mxu0 %v845
  %1147 = vmatprep.subr.bf16.mxu0 0
  %1148 = vmatpush1.bf16.msra.mxu0 %v846
  %1149 = vmatprep.subr.bf16.mxu0 0
  %1150 = vmatpush1.bf16.msra.mxu0 %v847
  %1151 = vmatprep.subr.bf16.mxu0 0
  %1152 = vmatpush1.bf16.msra.mxu0 %v848
  %1153 = vmatprep.subr.bf16.mxu0 0
  %1154 = vmatpush1.bf16.msra.mxu0 %v849
  %1155 = vmatprep.subr.bf16.mxu0 0
  %1156 = vmatpush1.bf16.msra.mxu0 %v850
  %1157 = vmatprep.mubr.bf16.mxu0 %v424
  %1158 = vmatmul.mubr.bf16.gmra.mrb[0].mxu0 %v423
  %v1159 = vpop.f32.mrb[0].mxu0
  %v1160 = vadd.f32 %v1063, %v1159
  %v1161 = vpop.f32.mrb[0].mxu0
  %v1162 = vpop.f32.mrb[0].mxu0
  %v1163 = vadd.f32 %v1066, %v1162
  %v1164 = vpop.f32.mrb[0].mxu0
  %1165 = vmatprep.mubr.bf16.mxu0 %v432
  %1166 = vmatmul.mubr.bf16.gmra.mrb[0].mxu0 %v431
  %v1167 = vpop.f32.mrb[0].mxu0
  %v1168 = vadd.f32 %v1071, %v1167
  %v1169 = vpop.f32.mrb[0].mxu0
  %v1170 = vpop.f32.mrb[0].mxu0
  %v1171 = vadd.f32 %v1074, %v1170
  %v1172 = vpop.f32.mrb[0].mxu0
  %1173 = vmatprep.mubr.bf16.mxu0 %v440
  %1174 = vmatmul.mubr.bf16.gmra.mrb[0].mxu0 %v439
  %v1175 = vpop.f32.mrb[0].mxu0
  %v1176 = vadd.f32 %v1079, %v1175
  %v1177 = vpop.f32.mrb[0].mxu0
  %v1178 = vpop.f32.mrb[0].mxu0
  %v1179 = vadd.f32 %v1082, %v1178
  %v1180 = vpop.f32.mrb[0].mxu0
  %1181 = vmatprep.mubr.bf16.mxu0 %v448
  %1182 = vmatmul.mubr.bf16.gmra.mrb[0].mxu0 %v447
  %v1183 = vpop.f32.mrb[0].mxu0
  %v1184 = vadd.f32 %v1087, %v1183
  %v1185 = vpop.f32.mrb[0].mxu0
  %v1186 = vpop.f32.mrb[0].mxu0
  %v1187 = vadd.f32 %v1090, %v1186
  %v1188 = vpop.f32.mrb[0].mxu0
  %1189 = vmatprep.mubr.bf16.mxu0 %v456
  %1190 = vmatmul.mubr.bf16.gmra.mrb[0].mxu0 %v455
  %v1191 = vpop.f32.mrb[0].mxu0
  %v1192 = vadd.f32 %v1095, %v1191
  %v1193 = vpop.f32.mrb[0].mxu0
  %v1194 = vpop.f32.mrb[0].mxu0
  %v1195 = vadd.f32 %v1098, %v1194
  %v1196 = vpop.f32.mrb[0].mxu0
  %1197 = vmatprep.mubr.bf16.mxu0 %v464
  %1198 = vmatmul.mubr.bf16.gmra.mrb[0].mxu0 %v463
  %v1199 = vpop.f32.mrb[0].mxu0
  %v1200 = vadd.f32 %v1103, %v1199
  %v1201 = vpop.f32.mrb[0].mxu0
  %v1202 = vpop.f32.mrb[0].mxu0
  %v1203 = vadd.f32 %v1106, %v1202
  %v1204 = vpop.f32.mrb[0].mxu0
  %1205 = vmatprep.mubr.bf16.mxu0 %v472
  %1206 = vmatmul.mubr.bf16.gmra.mrb[0].mxu0 %v471
  %v1207 = vpop.f32.mrb[0].mxu0
  %v1208 = vadd.f32 %v1111, %v1207
  %v1209 = vpop.f32.mrb[0].mxu0
  %v1210 = vpop.f32.mrb[0].mxu0
  %v1211 = vadd.f32 %v1114, %v1210
  %v1212 = vpop.f32.mrb[0].mxu0
  %1213 = vmatprep.mubr.bf16.mxu0 %v480
  %1214 = vmatmul.mubr.bf16.gmra.mrb[0].mxu0 %v479
  %v1215 = vpop.f32.mrb[0].mxu0
  %v1216 = vadd.f32 %v1119, %v1215
  %v1217 = vpop.f32.mrb[0].mxu0
  %v1218 = vpop.f32.mrb[0].mxu0
  %v1219 = vadd.f32 %v1122, %v1218
  %v1220 = vpop.f32.mrb[0].mxu0
  %1221 = vdwg.mxu0
  %1222 = vmatprep.subr.bf16.mxu0 0
  %1223 = vmatpush1.bf16.msra.mxu0 %v851
  %1224 = vmatprep.subr.bf16.mxu0 0
  %1225 = vmatpush1.bf16.msra.mxu0 %v852
  %1226 = vmatprep.subr.bf16.mxu0 0
  %1227 = vmatpush1.bf16.msra.mxu0 %v853
  %1228 = vmatprep.subr.bf16.mxu0 0
  %1229 = vmatpush1.bf16.msra.mxu0 %v854
  %1230 = vmatprep.subr.bf16.mxu0 0
  %1231 = vmatpush1.bf16.msra.mxu0 %v855
  %1232 = vmatprep.subr.bf16.mxu0 0
  %1233 = vmatpush1.bf16.msra.mxu0 %v856
  %1234 = vmatprep.subr.bf16.mxu0 0
  %1235 = vmatpush1.bf16.msra.mxu0 %v857
  %1236 = vmatprep.subr.bf16.mxu0 0
  %1237 = vmatpush1.bf16.msra.mxu0 %v858
  %1238 = vmatprep.subr.bf16.mxu0 0
  %1239 = vmatpush1.bf16.msra.mxu0 %v859
  %1240 = vmatprep.subr.bf16.mxu0 0
  %1241 = vmatpush1.bf16.msra.mxu0 %v860
  %1242 = vmatprep.subr.bf16.mxu0 0
  %1243 = vmatpush1.bf16.msra.mxu0 %v861
  %1244 = vmatprep.subr.bf16.mxu0 0
  %1245 = vmatpush1.bf16.msra.mxu0 %v862
  %1246 = vmatprep.subr.bf16.mxu0 0
  %1247 = vmatpush1.bf16.msra.mxu0 %v863
  %1248 = vmatprep.subr.bf16.mxu0 0
  %1249 = vmatpush1.bf16.msra.mxu0 %v864
  %1250 = vmatprep.subr.bf16.mxu0 0
  %1251 = vmatpush1.bf16.msra.mxu0 %v865
  %1252 = vmatprep.subr.bf16.mxu0 0
  %1253 = vmatpush1.bf16.msra.mxu0 %v866
  %1254 = vmatprep.mubr.bf16.mxu0 %v426
  %1255 = vmatmul.mubr.bf16.gmra.mrb[0].mxu0 %v425
  %v1256 = vpop.f32.mrb[0].mxu0
  %v1257 = vadd.f32 %v1160, %v1256
  %v1258 = vpop.f32.mrb[0].mxu0
  %v1259 = vpop.f32.mrb[0].mxu0
  %v1260 = vadd.f32 %v1163, %v1259
  %v1261 = vpop.f32.mrb[0].mxu0
  %1262 = vmatprep.mubr.bf16.mxu0 %v434
  %1263 = vmatmul.mubr.bf16.gmra.mrb[0].mxu0 %v433
  %v1264 = vpop.f32.mrb[0].mxu0
  %v1265 = vadd.f32 %v1168, %v1264
  %v1266 = vpop.f32.mrb[0].mxu0
  %v1267 = vpop.f32.mrb[0].mxu0
  %v1268 = vadd.f32 %v1171, %v1267
  %v1269 = vpop.f32.mrb[0].mxu0
  %1270 = vmatprep.mubr.bf16.mxu0 %v442
  %1271 = vmatmul.mubr.bf16.gmra.mrb[0].mxu0 %v441
  %v1272 = vpop.f32.mrb[0].mxu0
  %v1273 = vadd.f32 %v1176, %v1272
  %v1274 = vpop.f32.mrb[0].mxu0
  %v1275 = vpop.f32.mrb[0].mxu0
  %v1276 = vadd.f32 %v1179, %v1275
  %v1277 = vpop.f32.mrb[0].mxu0
  %1278 = vmatprep.mubr.bf16.mxu0 %v450
  %1279 = vmatmul.mubr.bf16.gmra.mrb[0].mxu0 %v449
  %v1280 = vpop.f32.mrb[0].mxu0
  %v1281 = vadd.f32 %v1184, %v1280
  %v1282 = vpop.f32.mrb[0].mxu0
  %v1283 = vpop.f32.mrb[0].mxu0
  %v1284 = vadd.f32 %v1187, %v1283
  %v1285 = vpop.f32.mrb[0].mxu0
  %1286 = vmatprep.mubr.bf16.mxu0 %v458
  %1287 = vmatmul.mubr.bf16.gmra.mrb[0].mxu0 %v457
  %v1288 = vpop.f32.mrb[0].mxu0
  %v1289 = vadd.f32 %v1192, %v1288
  %v1290 = vpop.f32.mrb[0].mxu0
  %v1291 = vpop.f32.mrb[0].mxu0
  %v1292 = vadd.f32 %v1195, %v1291
  %v1293 = vpop.f32.mrb[0].mxu0
  %1294 = vmatprep.mubr.bf16.mxu0 %v466
  %1295 = vmatmul.mubr.bf16.gmra.mrb[0].mxu0 %v465
  %v1296 = vpop.f32.mrb[0].mxu0
  %v1297 = vadd.f32 %v1200, %v1296
  %v1298 = vpop.f32.mrb[0].mxu0
  %v1299 = vpop.f32.mrb[0].mxu0
  %v1300 = vadd.f32 %v1203, %v1299
  %v1301 = vpop.f32.mrb[0].mxu0
  %1302 = vmatprep.mubr.bf16.mxu0 %v474
  %1303 = vmatmul.mubr.bf16.gmra.mrb[0].mxu0 %v473
  %v1304 = vpop.f32.mrb[0].mxu0
  %v1305 = vadd.f32 %v1208, %v1304
  %v1306 = vpop.f32.mrb[0].mxu0
  %v1307 = vpop.f32.mrb[0].mxu0
  %v1308 = vadd.f32 %v1211, %v1307
  %v1309 = vpop.f32.mrb[0].mxu0
  %1310 = vmatprep.mubr.bf16.mxu0 %v482
  %1311 = vmatmul.mubr.bf16.gmra.mrb[0].mxu0 %v481
  %v1312 = vpop.f32.mrb[0].mxu0
  %v1313 = vadd.f32 %v1216, %v1312
  %v1314 = vpop.f32.mrb[0].mxu0
  %v1315 = vpop.f32.mrb[0].mxu0
  %v1316 = vadd.f32 %v1219, %v1315
  %v1317 = vpop.f32.mrb[0].mxu0
  %1318 = vdwg.mxu0
  %v1319 = vmax.f32 %v1257, 0.0
  %v1320 = vmax.f32 %v1260, 0.0
  %v1321 = vmax.f32 %v1265, 0.0
  %v1322 = vmax.f32 %v1268, 0.0
  %v1323 = vmax.f32 %v1273, 0.0
  %v1324 = vmax.f32 %v1276, 0.0
  %v1325 = vmax.f32 %v1281, 0.0
  %v1326 = vmax.f32 %v1284, 0.0
  %v1327 = vmax.f32 %v1289, 0.0
  %v1328 = vmax.f32 %v1292, 0.0
  %v1329 = vmax.f32 %v1297, 0.0
  %v1330 = vmax.f32 %v1300, 0.0
  %v1331 = vmax.f32 %v1305, 0.0
  %v1332 = vmax.f32 %v1308, 0.0
  %v1333 = vmax.f32 %v1313, 0.0
  %v1334 = vmax.f32 %v1316, 0.0
  %v1335 = vpack.c.bf16 %v1320, %v1319
  %v1336 = vpack.c.bf16 %v1322, %v1321
  %v1337 = vpack.c.bf16 %v1324, %v1323
  %v1338 = vpack.c.bf16 %v1326, %v1325
  %v1339 = vpack.c.bf16 %v1328, %v1327
  %v1340 = vpack.c.bf16 %v1330, %v1329
  %v1341 = vpack.c.bf16 %v1332, %v1331
  %v1342 = vpack.c.bf16 %v1334, %v1333
  %v1351 = vunpack.c.l.b16 %v1335
  %v1352 = vunpack.c.h.b16 %v1335
  %v1353 = vunpack.c.l.b16 %v1336
  %v1354 = vunpack.c.h.b16 %v1336
  %v1355 = vunpack.c.l.b16 %v1337
  %v1356 = vunpack.c.h.b16 %v1337
  %v1357 = vunpack.c.l.b16 %v1338
  %v1358 = vunpack.c.h.b16 %v1338
  %v1359 = vunpack.c.l.b16 %v1339
  %v1360 = vunpack.c.h.b16 %v1339
  %v1361 = vunpack.c.l.b16 %v1340
  %v1362 = vunpack.c.h.b16 %v1340
  %v1363 = vunpack.c.l.b16 %v1341
  %v1364 = vunpack.c.h.b16 %v1341
  %v1365 = vunpack.c.l.b16 %v1342
  %v1366 = vunpack.c.h.b16 %v1342
  %v1367 = vpack.c.b16 %v1351, %v1351
  %v1368 = vpack.c.b16 %v1352, %v1352
  %v1369 = vpack.c.b16 %v1353, %v1353
  %v1370 = vpack.c.b16 %v1354, %v1354
  %v1371 = vpack.c.b16 %v1355, %v1355
  %v1372 = vpack.c.b16 %v1356, %v1356
  %v1373 = vpack.c.b16 %v1357, %v1357
  %v1374 = vpack.c.b16 %v1358, %v1358
  %v1375 = vpack.c.b16 %v1359, %v1359
  %v1376 = vpack.c.b16 %v1360, %v1360
  %v1377 = vpack.c.b16 %v1361, %v1361
  %v1378 = vpack.c.b16 %v1362, %v1362
  %v1379 = vpack.c.b16 %v1363, %v1363
  %v1380 = vpack.c.b16 %v1364, %v1364
  %v1381 = vpack.c.b16 %v1365, %v1365
  %v1382 = vpack.c.b16 %v1366, %v1366
  %1399 = vst [vmem:[%s7] sm:$0xf] %v1367
  %1400 = vst [vmem:[%s7 + $0x4] sm:$0xf] %v1368
  %1401 = vst [vmem:[%s7 + $0x8] sm:$0xf] %v1369
  %1402 = vst [vmem:[%s7 + $0xc] sm:$0xf] %v1370
  %1403 = vst [vmem:[%s7 + $0x10] sm:$0xf] %v1371
  %1404 = vst [vmem:[%s7 + $0x14] sm:$0xf] %v1372
  %1405 = vst [vmem:[%s7 + $0x18] sm:$0xf] %v1373
  %1406 = vst [vmem:[%s7 + $0x1c] sm:$0xf] %v1374
  %1407 = vst [vmem:[%s7 + $0x20] sm:$0xf] %v1375
  %1408 = vst [vmem:[%s7 + $0x24] sm:$0xf] %v1376
  %1409 = vst [vmem:[%s7 + $0x28] sm:$0xf] %v1377
  %1410 = vst [vmem:[%s7 + $0x2c] sm:$0xf] %v1378
  %1411 = vst [vmem:[%s7 + $0x30] sm:$0xf] %v1379
  %1412 = vst [vmem:[%s7 + $0x34] sm:$0xf] %v1380
  %1413 = vst [vmem:[%s7 + $0x38] sm:$0xf] %v1381
  %1414 = vst [vmem:[%s7 + $0x3c] sm:$0xf] %v1382
  %v1415 = vand.u32 2147483647, %v1319
  %v1416 = vand.u32 2147483647, %v1320
  %v1417 = vand.u32 2147483647, %v1321
  %v1418 = vand.u32 2147483647, %v1322
  %v1419 = vand.u32 2147483647, %v1323
  %v1420 = vand.u32 2147483647, %v1324
  %v1421 = vand.u32 2147483647, %v1325
  %v1422 = vand.u32 2147483647, %v1326
  %v1423 = vand.u32 2147483647, %v1327
  %v1424 = vand.u32 2147483647, %v1328
  %v1425 = vand.u32 2147483647, %v1329
  %v1426 = vand.u32 2147483647, %v1330
  %v1427 = vand.u32 2147483647, %v1331
  %v1428 = vand.u32 2147483647, %v1332
  %v1429 = vand.u32 2147483647, %v1333
  %v1430 = vand.u32 2147483647, %v1334
  %vm1431 = vcmp.lt.f32.partialorder %v1415, 3e+38
  %vm1432 = vcmp.lt.f32.partialorder %v1416, 3e+38
  %vm1433 = vcmp.lt.f32.partialorder %v1417, 3e+38
  %vm1434 = vcmp.lt.f32.partialorder %v1418, 3e+38
  %vm1435 = vcmp.lt.f32.partialorder %v1419, 3e+38
  %vm1436 = vcmp.lt.f32.partialorder %v1420, 3e+38
  %vm1437 = vcmp.lt.f32.partialorder %v1421, 3e+38
  %vm1438 = vcmp.lt.f32.partialorder %v1422, 3e+38
  %vm1439 = vcmp.lt.f32.partialorder %v1423, 3e+38
  %vm1440 = vcmp.lt.f32.partialorder %v1424, 3e+38
  %vm1441 = vcmp.lt.f32.partialorder %v1425, 3e+38
  %vm1442 = vcmp.lt.f32.partialorder %v1426, 3e+38
  %vm1443 = vcmp.lt.f32.partialorder %v1427, 3e+38
  %vm1444 = vcmp.lt.f32.partialorder %v1428, 3e+38
  %vm1445 = vcmp.lt.f32.partialorder %v1429, 3e+38
  %vm1446 = vcmp.lt.f32.partialorder %v1430, 3e+38
  %v1447 = vsel %vm1431, 1.0, 0.0
  %v1448 = vsel %vm1432, 1.0, 0.0
  %v1449 = vsel %vm1433, 1.0, 0.0
  %v1450 = vsel %vm1434, 1.0, 0.0
  %v1451 = vsel %vm1435, 1.0, 0.0
  %v1452 = vsel %vm1436, 1.0, 0.0
  %v1453 = vsel %vm1437, 1.0, 0.0
  %v1454 = vsel %vm1438, 1.0, 0.0
  %v1455 = vsel %vm1439, 1.0, 0.0
  %v1456 = vsel %vm1440, 1.0, 0.0
  %v1457 = vsel %vm1441, 1.0, 0.0
  %v1458 = vsel %vm1442, 1.0, 0.0
  %v1459 = vsel %vm1443, 1.0, 0.0
  %v1460 = vsel %vm1444, 1.0, 0.0
  %v1461 = vsel %vm1445, 1.0, 0.0
  %v1462 = vsel %vm1446, 1.0, 0.0
  %1463 = vmin.xlane.f32.xlu0 %v1447
  %v1464 = vpop.xlane.xlu0 %1463
  %1465 = vmin.xlane.f32.xlu0 %v1448
  %v1466 = vpop.xlane.xlu0 %1465
  %1467 = vmin.xlane.f32.xlu0 %v1449
  %v1468 = vpop.xlane.xlu0 %1467
  %1469 = vmin.xlane.f32.xlu0 %v1450
  %v1470 = vpop.xlane.xlu0 %1469
  %1471 = vmin.xlane.f32.xlu0 %v1451
  %v1472 = vpop.xlane.xlu0 %1471
  %1473 = vmin.xlane.f32.xlu0 %v1452
  %v1474 = vpop.xlane.xlu0 %1473
  %1475 = vmin.xlane.f32.xlu0 %v1453
  %v1476 = vpop.xlane.xlu0 %1475
  %1477 = vmin.xlane.f32.xlu0 %v1454
  %v1478 = vpop.xlane.xlu0 %1477
  %1479 = vmin.xlane.f32.xlu0 %v1455
  %v1480 = vpop.xlane.xlu0 %1479
  %1481 = vmin.xlane.f32.xlu0 %v1456
  %v1482 = vpop.xlane.xlu0 %1481
  %1483 = vmin.xlane.f32.xlu0 %v1457
  %v1484 = vpop.xlane.xlu0 %1483
  %1485 = vmin.xlane.f32.xlu0 %v1458
  %v1486 = vpop.xlane.xlu0 %1485
  %1487 = vmin.xlane.f32.xlu0 %v1459
  %v1488 = vpop.xlane.xlu0 %1487
  %1489 = vmin.xlane.f32.xlu0 %v1460
  %v1490 = vpop.xlane.xlu0 %1489
  %1491 = vmin.xlane.f32.xlu0 %v1461
  %v1492 = vpop.xlane.xlu0 %1491
  %1493 = vmin.xlane.f32.xlu0 %v1462
  %v1494 = vpop.xlane.xlu0 %1493
  %v1495 = vmin.f32 %v1464, %v1472
  %v1496 = vmin.f32 %v1466, %v1474
  %v1497 = vmin.f32 %v1468, %v1476
  %v1498 = vmin.f32 %v1470, %v1478
  %v1499 = vmin.f32 %v1495, %v1480
  %v1500 = vmin.f32 %v1496, %v1482
  %v1501 = vmin.f32 %v1497, %v1484
  %v1502 = vmin.f32 %v1498, %v1486
  %v1503 = vmin.f32 %v1499, %v1488
  %v1504 = vmin.f32 %v1500, %v1490
  %v1505 = vmin.f32 %v1501, %v1492
  %v1506 = vmin.f32 %v1502, %v1494
  %v1507 = vmin.f32 %v1503, %v1504
  %v1508 = vmin.f32 %v1505, %v1506
  %v1509 = vmin.f32 %v1507, %v1508
  %v1510 = vrot.slane %v1509, 4
  %v1511 = vmin.f32 %v1509, %v1510
  %v1512 = vrot.slane %v1511, 2
  %v1513 = vmin.f32 %v1511, %v1512
  %v1514 = vrot.slane %v1513, 1
  %v1515 = vmin.f32 %v1513, %v1514
  %1516 = vst [vmem:[%s9] sm:$0xff] %v1515
  %v1517 = vld [vmem:[%s3] sm:$0xf]
  %v1518 = vld [vmem:[%s3 + $0x14] sm:$0xf]
  %v1519 = vld [vmem:[%s3 + $0x28] sm:$0xf]
  %v1520 = vld [vmem:[%s3 + $0x3c] sm:$0xf]
  %v1521 = vld [vmem:[%s3 + $0x50] sm:$0xf]
  %v1522 = vld [vmem:[%s3 + $0x64] sm:$0xf]
  %v1523 = vld [vmem:[%s3 + $0x78] sm:$0xf]
  %v1524 = vld [vmem:[%s3 + $0x8c] sm:$0xf]
  %v1525 = vld [vmem:[%s3 + $0xa0] sm:$0xf]
  %v1526 = vld [vmem:[%s3 + $0xb4] sm:$0xf]
  %v1527 = vld [vmem:[%s3 + $0xc8] sm:$0xf]
  %v1528 = vld [vmem:[%s3 + $0xdc] sm:$0xf]
  %v1529 = vld [vmem:[%s3 + $0xf0] sm:$0xf]
  %v1530 = vld [vmem:[%s3 + $0x104] sm:$0xf]
  %v1531 = vld [vmem:[%s3 + $0x118] sm:$0xf]
  %v1532 = vld [vmem:[%s3 + $0x12c] sm:$0xf]
  %v1533 = vld [vmem:[%s4] sm:$0x1]
  %v1535 = vlaneseq
  %v1536 = vshrl.u32 %v1535, 7
  %v1537 = vsub.s32 0, %v1536
  %v1538 = vrot.slane %v1533, %v1537
  %v1556 = vunpack.c.l.b16 %v1517
  %v1557 = vunpack.c.l.b16 %v1518
  %v1558 = vunpack.c.l.b16 %v1519
  %v1559 = vunpack.c.l.b16 %v1520
  %v1560 = vunpack.c.l.b16 %v1521
  %v1561 = vunpack.c.l.b16 %v1522
  %v1562 = vunpack.c.l.b16 %v1523
  %v1563 = vunpack.c.l.b16 %v1524
  %v1564 = vunpack.c.l.b16 %v1525
  %v1565 = vunpack.c.l.b16 %v1526
  %v1566 = vunpack.c.l.b16 %v1527
  %v1567 = vunpack.c.l.b16 %v1528
  %v1568 = vunpack.c.l.b16 %v1529
  %v1569 = vunpack.c.l.b16 %v1530
  %v1570 = vunpack.c.l.b16 %v1531
  %v1571 = vunpack.c.l.b16 %v1532
  %v1572 = vpack.c.b16 %v1557, %v1556
  %v1573 = vpack.c.b16 %v1559, %v1558
  %v1574 = vpack.c.b16 %v1561, %v1560
  %v1575 = vpack.c.b16 %v1563, %v1562
  %v1576 = vpack.c.b16 %v1565, %v1564
  %v1577 = vpack.c.b16 %v1567, %v1566
  %v1578 = vpack.c.b16 %v1569, %v1568
  %v1579 = vpack.c.b16 %v1571, %v1570
  %1588 = vmatprep.subr.bf16.mxu0 0
  %1589 = vmatpush1.bf16.msra.mxu0 %v1572
  %1590 = vmatprep.subr.bf16.mxu0 0
  %1591 = vmatpush1.bf16.msra.mxu0 %v1573
  %1592 = vmatprep.subr.bf16.mxu0 0
  %1593 = vmatpush1.bf16.msra.mxu0 %v1574
  %1594 = vmatprep.subr.bf16.mxu0 0
  %1595 = vmatpush1.bf16.msra.mxu0 %v1575
  %1596 = vmatprep.subr.bf16.mxu0 0
  %1597 = vmatpush1.bf16.msra.mxu0 %v1576
  %1598 = vmatprep.subr.bf16.mxu0 0
  %1599 = vmatpush1.bf16.msra.mxu0 %v1577
  %1600 = vmatprep.subr.bf16.mxu0 0
  %1601 = vmatpush1.bf16.msra.mxu0 %v1578
  %1602 = vmatprep.subr.bf16.mxu0 0
  %1603 = vmatpush1.bf16.msra.mxu0 %v1579
  %1604 = vmatprep.subr.bf16.mxu0 0
  %1605 = vmatpush1.bf16.msra.mxu0 0
  %1606 = vmatprep.subr.bf16.mxu0 0
  %1607 = vmatpush1.bf16.msra.mxu0 0
  %1608 = vmatprep.subr.bf16.mxu0 0
  %1609 = vmatpush1.bf16.msra.mxu0 0
  %1610 = vmatprep.subr.bf16.mxu0 0
  %1611 = vmatpush1.bf16.msra.mxu0 0
  %1612 = vmatprep.subr.bf16.mxu0 0
  %1613 = vmatpush1.bf16.msra.mxu0 0
  %1614 = vmatprep.subr.bf16.mxu0 0
  %1615 = vmatpush1.bf16.msra.mxu0 0
  %1616 = vmatprep.subr.bf16.mxu0 0
  %1617 = vmatpush1.bf16.msra.mxu0 0
  %1618 = vmatprep.subr.bf16.mxu0 0
  %1619 = vmatpush1.bf16.msra.mxu0 0
  %1620 = vmatprep.mubr.bf16.mxu0 0
  %1621 = vmatmul.mubr.bf16.gmra.mrb[0].mxu0 %v1335
  %v1622 = vpop.f32.mrb[0].mxu0
  %v1623 = vadd.f32 %v1538, %v1622
  %v1624 = vpop.f32.mrb[0].mxu0
  %v1625 = vpop.f32.mrb[0].mxu0
  %v1626 = vadd.f32 %v1538, %v1625
  %v1627 = vpop.f32.mrb[0].mxu0
  %1628 = vmatprep.mubr.bf16.mxu0 0
  %1629 = vmatmul.mubr.bf16.gmra.mrb[0].mxu0 %v1336
  %v1630 = vpop.f32.mrb[0].mxu0
  %v1631 = vadd.f32 %v1538, %v1630
  %v1632 = vpop.f32.mrb[0].mxu0
  %v1633 = vpop.f32.mrb[0].mxu0
  %v1634 = vadd.f32 %v1538, %v1633
  %v1635 = vpop.f32.mrb[0].mxu0
  %1636 = vmatprep.mubr.bf16.mxu0 0
  %1637 = vmatmul.mubr.bf16.gmra.mrb[0].mxu0 %v1337
  %v1638 = vpop.f32.mrb[0].mxu0
  %v1639 = vadd.f32 %v1538, %v1638
  %v1640 = vpop.f32.mrb[0].mxu0
  %v1641 = vpop.f32.mrb[0].mxu0
  %v1642 = vadd.f32 %v1538, %v1641
  %v1643 = vpop.f32.mrb[0].mxu0
  %1644 = vmatprep.mubr.bf16.mxu0 0
  %1645 = vmatmul.mubr.bf16.gmra.mrb[0].mxu0 %v1338
  %v1646 = vpop.f32.mrb[0].mxu0
  %v1647 = vadd.f32 %v1538, %v1646
  %v1648 = vpop.f32.mrb[0].mxu0
  %v1649 = vpop.f32.mrb[0].mxu0
  %v1650 = vadd.f32 %v1538, %v1649
  %v1651 = vpop.f32.mrb[0].mxu0
  %1652 = vmatprep.mubr.bf16.mxu0 0
  %1653 = vmatmul.mubr.bf16.gmra.mrb[0].mxu0 %v1339
  %v1654 = vpop.f32.mrb[0].mxu0
  %v1655 = vadd.f32 %v1538, %v1654
  %v1656 = vpop.f32.mrb[0].mxu0
  %v1657 = vpop.f32.mrb[0].mxu0
  %v1658 = vadd.f32 %v1538, %v1657
  %v1659 = vpop.f32.mrb[0].mxu0
  %1660 = vmatprep.mubr.bf16.mxu0 0
  %1661 = vmatmul.mubr.bf16.gmra.mrb[0].mxu0 %v1340
  %v1662 = vpop.f32.mrb[0].mxu0
  %v1663 = vadd.f32 %v1538, %v1662
  %v1664 = vpop.f32.mrb[0].mxu0
  %v1665 = vpop.f32.mrb[0].mxu0
  %v1666 = vadd.f32 %v1538, %v1665
  %v1667 = vpop.f32.mrb[0].mxu0
  %1668 = vmatprep.mubr.bf16.mxu0 0
  %1669 = vmatmul.mubr.bf16.gmra.mrb[0].mxu0 %v1341
  %v1670 = vpop.f32.mrb[0].mxu0
  %v1671 = vadd.f32 %v1538, %v1670
  %v1672 = vpop.f32.mrb[0].mxu0
  %v1673 = vpop.f32.mrb[0].mxu0
  %v1674 = vadd.f32 %v1538, %v1673
  %v1675 = vpop.f32.mrb[0].mxu0
  %1676 = vmatprep.mubr.bf16.mxu0 0
  %1677 = vmatmul.mubr.bf16.gmra.mrb[0].mxu0 %v1342
  %v1678 = vpop.f32.mrb[0].mxu0
  %v1679 = vadd.f32 %v1538, %v1678
  %v1680 = vpop.f32.mrb[0].mxu0
  %v1681 = vpop.f32.mrb[0].mxu0
  %v1682 = vadd.f32 %v1538, %v1681
  %v1683 = vpop.f32.mrb[0].mxu0
  %1684 = vdwg.mxu0
  %1685 = vmax.xlane.f32.xlu0 %v1623
  %v1686 = vpop.xlane.xlu0 %1685
  %1687 = vmax.xlane.f32.xlu0 %v1626
  %v1688 = vpop.xlane.xlu0 %1687
  %1689 = vmax.xlane.f32.xlu0 %v1631
  %v1690 = vpop.xlane.xlu0 %1689
  %1691 = vmax.xlane.f32.xlu0 %v1634
  %v1692 = vpop.xlane.xlu0 %1691
  %1693 = vmax.xlane.f32.xlu0 %v1639
  %v1694 = vpop.xlane.xlu0 %1693
  %1695 = vmax.xlane.f32.xlu0 %v1642
  %v1696 = vpop.xlane.xlu0 %1695
  %1697 = vmax.xlane.f32.xlu0 %v1647
  %v1698 = vpop.xlane.xlu0 %1697
  %1699 = vmax.xlane.f32.xlu0 %v1650
  %v1700 = vpop.xlane.xlu0 %1699
  %1701 = vmax.xlane.f32.xlu0 %v1655
  %v1702 = vpop.xlane.xlu0 %1701
  %1703 = vmax.xlane.f32.xlu0 %v1658
  %v1704 = vpop.xlane.xlu0 %1703
  %1705 = vmax.xlane.f32.xlu0 %v1663
  %v1706 = vpop.xlane.xlu0 %1705
  %1707 = vmax.xlane.f32.xlu0 %v1666
  %v1708 = vpop.xlane.xlu0 %1707
  %1709 = vmax.xlane.f32.xlu0 %v1671
  %v1710 = vpop.xlane.xlu0 %1709
  %1711 = vmax.xlane.f32.xlu0 %v1674
  %v1712 = vpop.xlane.xlu0 %1711
  %1713 = vmax.xlane.f32.xlu0 %v1679
  %v1714 = vpop.xlane.xlu0 %1713
  %1715 = vmax.xlane.f32.xlu0 %v1682
  %v1716 = vpop.xlane.xlu0 %1715
  %v1717 = vsub.f32 %v1623, %v1686
  %v1718 = vsub.f32 %v1626, %v1688
  %v1719 = vsub.f32 %v1631, %v1690
  %v1720 = vsub.f32 %v1634, %v1692
  %v1721 = vsub.f32 %v1639, %v1694
  %v1722 = vsub.f32 %v1642, %v1696
  %v1723 = vsub.f32 %v1647, %v1698
  %v1724 = vsub.f32 %v1650, %v1700
  %v1725 = vsub.f32 %v1655, %v1702
  %v1726 = vsub.f32 %v1658, %v1704
  %v1727 = vsub.f32 %v1663, %v1706
  %v1728 = vsub.f32 %v1666, %v1708
  %v1729 = vsub.f32 %v1671, %v1710
  %v1730 = vsub.f32 %v1674, %v1712
  %v1731 = vsub.f32 %v1679, %v1714
  %v1732 = vsub.f32 %v1682, %v1716
  %v1733 = vmul.f32 %v1717, 1.442695
  %v1734 = vpow.pop %v1733
  %v1735 = vmul.f32 %v1718, 1.442695
  %v1736 = vpow.pop %v1735
  %v1737 = vmul.f32 %v1719, 1.442695
  %v1738 = vpow.pop %v1737
  %v1739 = vmul.f32 %v1720, 1.442695
  %v1740 = vpow.pop %v1739
  %v1741 = vmul.f32 %v1721, 1.442695
  %v1742 = vpow.pop %v1741
  %v1743 = vmul.f32 %v1722, 1.442695
  %v1744 = vpow.pop %v1743
  %v1745 = vmul.f32 %v1723, 1.442695
  %v1746 = vpow.pop %v1745
  %v1747 = vmul.f32 %v1724, 1.442695
  %v1748 = vpow.pop %v1747
  %v1749 = vmul.f32 %v1725, 1.442695
  %v1750 = vpow.pop %v1749
  %v1751 = vmul.f32 %v1726, 1.442695
  %v1752 = vpow.pop %v1751
  %v1753 = vmul.f32 %v1727, 1.442695
  %v1754 = vpow.pop %v1753
  %v1755 = vmul.f32 %v1728, 1.442695
  %v1756 = vpow.pop %v1755
  %v1757 = vmul.f32 %v1729, 1.442695
  %v1758 = vpow.pop %v1757
  %v1759 = vmul.f32 %v1730, 1.442695
  %v1760 = vpow.pop %v1759
  %v1761 = vmul.f32 %v1731, 1.442695
  %v1762 = vpow.pop %v1761
  %v1763 = vmul.f32 %v1732, 1.442695
  %v1764 = vpow.pop %v1763
  %1765 = vadd.xlane.f32.xlu0 %v1734
  %v1766 = vpop.xlane.xlu0 %1765
  %1767 = vadd.xlane.f32.xlu0 %v1736
  %v1768 = vpop.xlane.xlu0 %1767
  %1769 = vadd.xlane.f32.xlu0 %v1738
  %v1770 = vpop.xlane.xlu0 %1769
  %1771 = vadd.xlane.f32.xlu0 %v1740
  %v1772 = vpop.xlane.xlu0 %1771
  %1773 = vadd.xlane.f32.xlu0 %v1742
  %v1774 = vpop.xlane.xlu0 %1773
  %1775 = vadd.xlane.f32.xlu0 %v1744
  %v1776 = vpop.xlane.xlu0 %1775
  %1777 = vadd.xlane.f32.xlu0 %v1746
  %v1778 = vpop.xlane.xlu0 %1777
  %1779 = vadd.xlane.f32.xlu0 %v1748
  %v1780 = vpop.xlane.xlu0 %1779
  %1781 = vadd.xlane.f32.xlu0 %v1750
  %v1782 = vpop.xlane.xlu0 %1781
  %1783 = vadd.xlane.f32.xlu0 %v1752
  %v1784 = vpop.xlane.xlu0 %1783
  %1785 = vadd.xlane.f32.xlu0 %v1754
  %v1786 = vpop.xlane.xlu0 %1785
  %1787 = vadd.xlane.f32.xlu0 %v1756
  %v1788 = vpop.xlane.xlu0 %1787
  %1789 = vadd.xlane.f32.xlu0 %v1758
  %v1790 = vpop.xlane.xlu0 %1789
  %1791 = vadd.xlane.f32.xlu0 %v1760
  %v1792 = vpop.xlane.xlu0 %1791
  %1793 = vadd.xlane.f32.xlu0 %v1762
  %v1794 = vpop.xlane.xlu0 %1793
  %1795 = vadd.xlane.f32.xlu0 %v1764
  %v1796 = vpop.xlane.xlu0 %1795
  %v1797 = vlog2.pop %v1766
  %v1798 = vmul.f32 %v1797, 0.6931472
  %v1799 = vlog2.pop %v1768
  %v1800 = vmul.f32 %v1799, 0.6931472
  %v1801 = vlog2.pop %v1770
  %v1802 = vmul.f32 %v1801, 0.6931472
  %v1803 = vlog2.pop %v1772
  %v1804 = vmul.f32 %v1803, 0.6931472
  %v1805 = vlog2.pop %v1774
  %v1806 = vmul.f32 %v1805, 0.6931472
  %v1807 = vlog2.pop %v1776
  %v1808 = vmul.f32 %v1807, 0.6931472
  %v1809 = vlog2.pop %v1778
  %v1810 = vmul.f32 %v1809, 0.6931472
  %v1811 = vlog2.pop %v1780
  %v1812 = vmul.f32 %v1811, 0.6931472
  %v1813 = vlog2.pop %v1782
  %v1814 = vmul.f32 %v1813, 0.6931472
  %v1815 = vlog2.pop %v1784
  %v1816 = vmul.f32 %v1815, 0.6931472
  %v1817 = vlog2.pop %v1786
  %v1818 = vmul.f32 %v1817, 0.6931472
  %v1819 = vlog2.pop %v1788
  %v1820 = vmul.f32 %v1819, 0.6931472
  %v1821 = vlog2.pop %v1790
  %v1822 = vmul.f32 %v1821, 0.6931472
  %v1823 = vlog2.pop %v1792
  %v1824 = vmul.f32 %v1823, 0.6931472
  %v1825 = vlog2.pop %v1794
  %v1826 = vmul.f32 %v1825, 0.6931472
  %v1827 = vlog2.pop %v1796
  %v1828 = vmul.f32 %v1827, 0.6931472
  %v1829 = vadd.f32 %v1686, %v1798
  %v1830 = vadd.f32 %v1688, %v1800
  %v1831 = vadd.f32 %v1690, %v1802
  %v1832 = vadd.f32 %v1692, %v1804
  %v1833 = vadd.f32 %v1694, %v1806
  %v1834 = vadd.f32 %v1696, %v1808
  %v1835 = vadd.f32 %v1698, %v1810
  %v1836 = vadd.f32 %v1700, %v1812
  %v1837 = vadd.f32 %v1702, %v1814
  %v1838 = vadd.f32 %v1704, %v1816
  %v1839 = vadd.f32 %v1706, %v1818
  %v1840 = vadd.f32 %v1708, %v1820
  %v1841 = vadd.f32 %v1710, %v1822
  %v1842 = vadd.f32 %v1712, %v1824
  %v1843 = vadd.f32 %v1714, %v1826
  %v1844 = vadd.f32 %v1716, %v1828
  %v1845 = vsub.f32 %v1623, %v1829
  %v1846 = vsub.f32 %v1626, %v1830
  %v1847 = vsub.f32 %v1631, %v1831
  %v1848 = vsub.f32 %v1634, %v1832
  %v1849 = vsub.f32 %v1639, %v1833
  %v1850 = vsub.f32 %v1642, %v1834
  %v1851 = vsub.f32 %v1647, %v1835
  %v1852 = vsub.f32 %v1650, %v1836
  %v1853 = vsub.f32 %v1655, %v1837
  %v1854 = vsub.f32 %v1658, %v1838
  %v1855 = vsub.f32 %v1663, %v1839
  %v1856 = vsub.f32 %v1666, %v1840
  %v1857 = vsub.f32 %v1671, %v1841
  %v1858 = vsub.f32 %v1674, %v1842
  %v1859 = vsub.f32 %v1679, %v1843
  %v1860 = vsub.f32 %v1682, %v1844
  %v1861 = vpack.c.bf16 %v1846, %v1845
  %v1862 = vpack.c.bf16 %v1848, %v1847
  %v1863 = vpack.c.bf16 %v1850, %v1849
  %v1864 = vpack.c.bf16 %v1852, %v1851
  %v1865 = vpack.c.bf16 %v1854, %v1853
  %v1866 = vpack.c.bf16 %v1856, %v1855
  %v1867 = vpack.c.bf16 %v1858, %v1857
  %v1868 = vpack.c.bf16 %v1860, %v1859
  %v1877 = vunpack.c.l.b16 %v1861
  %v1878 = vunpack.c.h.b16 %v1861
  %v1879 = vunpack.c.l.b16 %v1862
  %v1880 = vunpack.c.h.b16 %v1862
  %v1881 = vunpack.c.l.b16 %v1863
  %v1882 = vunpack.c.h.b16 %v1863
  %v1883 = vunpack.c.l.b16 %v1864
  %v1884 = vunpack.c.h.b16 %v1864
  %v1885 = vunpack.c.l.b16 %v1865
  %v1886 = vunpack.c.h.b16 %v1865
  %v1887 = vunpack.c.l.b16 %v1866
  %v1888 = vunpack.c.h.b16 %v1866
  %v1889 = vunpack.c.l.b16 %v1867
  %v1890 = vunpack.c.h.b16 %v1867
  %v1891 = vunpack.c.l.b16 %v1868
  %v1892 = vunpack.c.h.b16 %v1868
  %v1893 = vpack.c.b16 %v1877, %v1877
  %v1894 = vpack.c.b16 %v1878, %v1878
  %v1895 = vpack.c.b16 %v1879, %v1879
  %v1896 = vpack.c.b16 %v1880, %v1880
  %v1897 = vpack.c.b16 %v1881, %v1881
  %v1898 = vpack.c.b16 %v1882, %v1882
  %v1899 = vpack.c.b16 %v1883, %v1883
  %v1900 = vpack.c.b16 %v1884, %v1884
  %v1901 = vpack.c.b16 %v1885, %v1885
  %v1902 = vpack.c.b16 %v1886, %v1886
  %v1903 = vpack.c.b16 %v1887, %v1887
  %v1904 = vpack.c.b16 %v1888, %v1888
  %v1905 = vpack.c.b16 %v1889, %v1889
  %v1906 = vpack.c.b16 %v1890, %v1890
  %v1907 = vpack.c.b16 %v1891, %v1891
  %v1908 = vpack.c.b16 %v1892, %v1892
  %1925 = vst [vmem:[%s8] sm:$0xf] %v1893
  %1926 = vst [vmem:[%s8 + $0x14] sm:$0xf] %v1894
  %1927 = vst [vmem:[%s8 + $0x28] sm:$0xf] %v1895
  %1928 = vst [vmem:[%s8 + $0x3c] sm:$0xf] %v1896
  %1929 = vst [vmem:[%s8 + $0x50] sm:$0xf] %v1897
  %1930 = vst [vmem:[%s8 + $0x64] sm:$0xf] %v1898
  %1931 = vst [vmem:[%s8 + $0x78] sm:$0xf] %v1899
  %1932 = vst [vmem:[%s8 + $0x8c] sm:$0xf] %v1900
  %1933 = vst [vmem:[%s8 + $0xa0] sm:$0xf] %v1901
  %1934 = vst [vmem:[%s8 + $0xb4] sm:$0xf] %v1902
  %1935 = vst [vmem:[%s8 + $0xc8] sm:$0xf] %v1903
  %1936 = vst [vmem:[%s8 + $0xdc] sm:$0xf] %v1904
  %1937 = vst [vmem:[%s8 + $0xf0] sm:$0xf] %v1905
  %1938 = vst [vmem:[%s8 + $0x104] sm:$0xf] %v1906
  %1939 = vst [vmem:[%s8 + $0x118] sm:$0xf] %v1907
  %1940 = vst [vmem:[%s8 + $0x12c] sm:$0xf] %v1908
  %v1941 = vrcp.pop %v1766
  %v1942 = vmul.f32 1.0, %v1941
  %v1943 = vrcp.pop %v1768
  %v1944 = vmul.f32 1.0, %v1943
  %v1945 = vrcp.pop %v1770
  %v1946 = vmul.f32 1.0, %v1945
  %v1947 = vrcp.pop %v1772
  %v1948 = vmul.f32 1.0, %v1947
  %v1949 = vrcp.pop %v1774
  %v1950 = vmul.f32 1.0, %v1949
  %v1951 = vrcp.pop %v1776
  %v1952 = vmul.f32 1.0, %v1951
  %v1953 = vrcp.pop %v1778
  %v1954 = vmul.f32 1.0, %v1953
  %v1955 = vrcp.pop %v1780
  %v1956 = vmul.f32 1.0, %v1955
  %v1957 = vrcp.pop %v1782
  %v1958 = vmul.f32 1.0, %v1957
  %v1959 = vrcp.pop %v1784
  %v1960 = vmul.f32 1.0, %v1959
  %v1961 = vrcp.pop %v1786
  %v1962 = vmul.f32 1.0, %v1961
  %v1963 = vrcp.pop %v1788
  %v1964 = vmul.f32 1.0, %v1963
  %v1965 = vrcp.pop %v1790
  %v1966 = vmul.f32 1.0, %v1965
  %v1967 = vrcp.pop %v1792
  %v1968 = vmul.f32 1.0, %v1967
  %v1969 = vrcp.pop %v1794
  %v1970 = vmul.f32 1.0, %v1969
  %v1971 = vrcp.pop %v1796
  %v1972 = vmul.f32 1.0, %v1971
  %v1973 = vmul.f32 %v1734, %v1942
  %v1974 = vmul.f32 %v1736, %v1944
  %v1975 = vmul.f32 %v1738, %v1946
  %v1976 = vmul.f32 %v1740, %v1948
  %v1977 = vmul.f32 %v1742, %v1950
  %v1978 = vmul.f32 %v1744, %v1952
  %v1979 = vmul.f32 %v1746, %v1954
  %v1980 = vmul.f32 %v1748, %v1956
  %v1981 = vmul.f32 %v1750, %v1958
  %v1982 = vmul.f32 %v1752, %v1960
  %v1983 = vmul.f32 %v1754, %v1962
  %v1984 = vmul.f32 %v1756, %v1964
  %v1985 = vmul.f32 %v1758, %v1966
  %v1986 = vmul.f32 %v1760, %v1968
  %v1987 = vmul.f32 %v1762, %v1970
  %v1988 = vmul.f32 %v1764, %v1972
  %v1989 = vld [vmem:[%s5] sm:$0x1]
  %v1991 = vlaneseq
  %v1992 = vshrl.u32 %v1991, 7
  %v1993 = vsub.s32 0, %v1992
  %v1994 = vrot.slane %v1989, %v1993
  %v1996 = vmul.f32 %v1973, %v1994
  %v1997 = vmul.f32 %v1974, %v1994
  %v1998 = vmul.f32 %v1975, %v1994
  %v1999 = vmul.f32 %v1976, %v1994
  %v2000 = vmul.f32 %v1977, %v1994
  %v2001 = vmul.f32 %v1978, %v1994
  %v2002 = vmul.f32 %v1979, %v1994
  %v2003 = vmul.f32 %v1980, %v1994
  %v2004 = vmul.f32 %v1981, %v1994
  %v2005 = vmul.f32 %v1982, %v1994
  %v2006 = vmul.f32 %v1983, %v1994
  %v2007 = vmul.f32 %v1984, %v1994
  %v2008 = vmul.f32 %v1985, %v1994
  %v2009 = vmul.f32 %v1986, %v1994
  %v2010 = vmul.f32 %v1987, %v1994
  %v2011 = vmul.f32 %v1988, %v1994
  %v2012 = vadd.f32 %v1996, 0.0
  %v2013 = vadd.f32 %v1997, 0.0
  %v2014 = vadd.f32 %v1998, 0.0
  %v2015 = vadd.f32 %v1999, 0.0
  %v2016 = vadd.f32 %v2000, 0.0
  %v2017 = vadd.f32 %v2001, 0.0
  %v2018 = vadd.f32 %v2002, 0.0
  %v2019 = vadd.f32 %v2003, 0.0
  %v2020 = vadd.f32 %v2004, 0.0
  %v2021 = vadd.f32 %v2005, 0.0
  %v2022 = vadd.f32 %v2006, 0.0
  %v2023 = vadd.f32 %v2007, 0.0
  %v2024 = vadd.f32 %v2008, 0.0
  %v2025 = vadd.f32 %v2009, 0.0
  %v2026 = vadd.f32 %v2010, 0.0
  %v2027 = vadd.f32 %v2011, 0.0
  %v2028 = vld [vmem:[%s3 + $0x4] sm:$0xf]
  %v2029 = vld [vmem:[%s3 + $0x18] sm:$0xf]
  %v2030 = vld [vmem:[%s3 + $0x2c] sm:$0xf]
  %v2031 = vld [vmem:[%s3 + $0x40] sm:$0xf]
  %v2032 = vld [vmem:[%s3 + $0x54] sm:$0xf]
  %v2033 = vld [vmem:[%s3 + $0x68] sm:$0xf]
  %v2034 = vld [vmem:[%s3 + $0x7c] sm:$0xf]
  %v2035 = vld [vmem:[%s3 + $0x90] sm:$0xf]
  %v2036 = vld [vmem:[%s3 + $0xa4] sm:$0xf]
  %v2037 = vld [vmem:[%s3 + $0xb8] sm:$0xf]
  %v2038 = vld [vmem:[%s3 + $0xcc] sm:$0xf]
  %v2039 = vld [vmem:[%s3 + $0xe0] sm:$0xf]
  %v2040 = vld [vmem:[%s3 + $0xf4] sm:$0xf]
  %v2041 = vld [vmem:[%s3 + $0x108] sm:$0xf]
  %v2042 = vld [vmem:[%s3 + $0x11c] sm:$0xf]
  %v2043 = vld [vmem:[%s3 + $0x130] sm:$0xf]
  %v2044 = vld [vmem:[%s4 + $0x1] sm:$0x1]
  %v2046 = vlaneseq
  %v2047 = vshrl.u32 %v2046, 7
  %v2048 = vsub.s32 0, %v2047
  %v2049 = vrot.slane %v2044, %v2048
  %v2067 = vunpack.c.l.b16 %v2028
  %v2068 = vunpack.c.l.b16 %v2029
  %v2069 = vunpack.c.l.b16 %v2030
  %v2070 = vunpack.c.l.b16 %v2031
  %v2071 = vunpack.c.l.b16 %v2032
  %v2072 = vunpack.c.l.b16 %v2033
  %v2073 = vunpack.c.l.b16 %v2034
  %v2074 = vunpack.c.l.b16 %v2035
  %v2075 = vunpack.c.l.b16 %v2036
  %v2076 = vunpack.c.l.b16 %v2037
  %v2077 = vunpack.c.l.b16 %v2038
  %v2078 = vunpack.c.l.b16 %v2039
  %v2079 = vunpack.c.l.b16 %v2040
  %v2080 = vunpack.c.l.b16 %v2041
  %v2081 = vunpack.c.l.b16 %v2042
  %v2082 = vunpack.c.l.b16 %v2043
  %v2083 = vpack.c.b16 %v2068, %v2067
  %v2084 = vpack.c.b16 %v2070, %v2069
  %v2085 = vpack.c.b16 %v2072, %v2071
  %v2086 = vpack.c.b16 %v2074, %v2073
  %v2087 = vpack.c.b16 %v2076, %v2075
  %v2088 = vpack.c.b16 %v2078, %v2077
  %v2089 = vpack.c.b16 %v2080, %v2079
  %v2090 = vpack.c.b16 %v2082, %v2081
  %2099 = vmatprep.subr.bf16.mxu0 0
  %2100 = vmatpush1.bf16.msra.mxu0 %v2083
  %2101 = vmatprep.subr.bf16.mxu0 0
  %2102 = vmatpush1.bf16.msra.mxu0 %v2084
  %2103 = vmatprep.subr.bf16.mxu0 0
  %2104 = vmatpush1.bf16.msra.mxu0 %v2085
  %2105 = vmatprep.subr.bf16.mxu0 0
  %2106 = vmatpush1.bf16.msra.mxu0 %v2086
  %2107 = vmatprep.subr.bf16.mxu0 0
  %2108 = vmatpush1.bf16.msra.mxu0 %v2087
  %2109 = vmatprep.subr.bf16.mxu0 0
  %2110 = vmatpush1.bf16.msra.mxu0 %v2088
  %2111 = vmatprep.subr.bf16.mxu0 0
  %2112 = vmatpush1.bf16.msra.mxu0 %v2089
  %2113 = vmatprep.subr.bf16.mxu0 0
  %2114 = vmatpush1.bf16.msra.mxu0 %v2090
  %2115 = vmatprep.subr.bf16.mxu0 0
  %2116 = vmatpush1.bf16.msra.mxu0 0
  %2117 = vmatprep.subr.bf16.mxu0 0
  %2118 = vmatpush1.bf16.msra.mxu0 0
  %2119 = vmatprep.subr.bf16.mxu0 0
  %2120 = vmatpush1.bf16.msra.mxu0 0
  %2121 = vmatprep.subr.bf16.mxu0 0
  %2122 = vmatpush1.bf16.msra.mxu0 0
  %2123 = vmatprep.subr.bf16.mxu0 0
  %2124 = vmatpush1.bf16.msra.mxu0 0
  %2125 = vmatprep.subr.bf16.mxu0 0
  %2126 = vmatpush1.bf16.msra.mxu0 0
  %2127 = vmatprep.subr.bf16.mxu0 0
  %2128 = vmatpush1.bf16.msra.mxu0 0
  %2129 = vmatprep.subr.bf16.mxu0 0
  %2130 = vmatpush1.bf16.msra.mxu0 0
  %2131 = vmatprep.mubr.bf16.mxu0 0
  %2132 = vmatmul.mubr.bf16.gmra.mrb[0].mxu0 %v1335
  %v2133 = vpop.f32.mrb[0].mxu0
  %v2134 = vadd.f32 %v2049, %v2133
  %v2135 = vpop.f32.mrb[0].mxu0
  %v2136 = vpop.f32.mrb[0].mxu0
  %v2137 = vadd.f32 %v2049, %v2136
  %v2138 = vpop.f32.mrb[0].mxu0
  %2139 = vmatprep.mubr.bf16.mxu0 0
  %2140 = vmatmul.mubr.bf16.gmra.mrb[0].mxu0 %v1336
  %v2141 = vpop.f32.mrb[0].mxu0
  %v2142 = vadd.f32 %v2049, %v2141
  %v2143 = vpop.f32.mrb[0].mxu0
  %v2144 = vpop.f32.mrb[0].mxu0
  %v2145 = vadd.f32 %v2049, %v2144
  %v2146 = vpop.f32.mrb[0].mxu0
  %2147 = vmatprep.mubr.bf16.mxu0 0
  %2148 = vmatmul.mubr.bf16.gmra.mrb[0].mxu0 %v1337
  %v2149 = vpop.f32.mrb[0].mxu0
  %v2150 = vadd.f32 %v2049, %v2149
  %v2151 = vpop.f32.mrb[0].mxu0
  %v2152 = vpop.f32.mrb[0].mxu0
  %v2153 = vadd.f32 %v2049, %v2152
  %v2154 = vpop.f32.mrb[0].mxu0
  %2155 = vmatprep.mubr.bf16.mxu0 0
  %2156 = vmatmul.mubr.bf16.gmra.mrb[0].mxu0 %v1338
  %v2157 = vpop.f32.mrb[0].mxu0
  %v2158 = vadd.f32 %v2049, %v2157
  %v2159 = vpop.f32.mrb[0].mxu0
  %v2160 = vpop.f32.mrb[0].mxu0
  %v2161 = vadd.f32 %v2049, %v2160
  %v2162 = vpop.f32.mrb[0].mxu0
  %2163 = vmatprep.mubr.bf16.mxu0 0
  %2164 = vmatmul.mubr.bf16.gmra.mrb[0].mxu0 %v1339
  %v2165 = vpop.f32.mrb[0].mxu0
  %v2166 = vadd.f32 %v2049, %v2165
  %v2167 = vpop.f32.mrb[0].mxu0
  %v2168 = vpop.f32.mrb[0].mxu0
  %v2169 = vadd.f32 %v2049, %v2168
  %v2170 = vpop.f32.mrb[0].mxu0
  %2171 = vmatprep.mubr.bf16.mxu0 0
  %2172 = vmatmul.mubr.bf16.gmra.mrb[0].mxu0 %v1340
  %v2173 = vpop.f32.mrb[0].mxu0
  %v2174 = vadd.f32 %v2049, %v2173
  %v2175 = vpop.f32.mrb[0].mxu0
  %v2176 = vpop.f32.mrb[0].mxu0
  %v2177 = vadd.f32 %v2049, %v2176
  %v2178 = vpop.f32.mrb[0].mxu0
  %2179 = vmatprep.mubr.bf16.mxu0 0
  %2180 = vmatmul.mubr.bf16.gmra.mrb[0].mxu0 %v1341
  %v2181 = vpop.f32.mrb[0].mxu0
  %v2182 = vadd.f32 %v2049, %v2181
  %v2183 = vpop.f32.mrb[0].mxu0
  %v2184 = vpop.f32.mrb[0].mxu0
  %v2185 = vadd.f32 %v2049, %v2184
  %v2186 = vpop.f32.mrb[0].mxu0
  %2187 = vmatprep.mubr.bf16.mxu0 0
  %2188 = vmatmul.mubr.bf16.gmra.mrb[0].mxu0 %v1342
  %v2189 = vpop.f32.mrb[0].mxu0
  %v2190 = vadd.f32 %v2049, %v2189
  %v2191 = vpop.f32.mrb[0].mxu0
  %v2192 = vpop.f32.mrb[0].mxu0
  %v2193 = vadd.f32 %v2049, %v2192
  %v2194 = vpop.f32.mrb[0].mxu0
  %2195 = vdwg.mxu0
  %2196 = vmax.xlane.f32.xlu0 %v2134
  %v2197 = vpop.xlane.xlu0 %2196
  %2198 = vmax.xlane.f32.xlu0 %v2137
  %v2199 = vpop.xlane.xlu0 %2198
  %2200 = vmax.xlane.f32.xlu0 %v2142
  %v2201 = vpop.xlane.xlu0 %2200
  %2202 = vmax.xlane.f32.xlu0 %v2145
  %v2203 = vpop.xlane.xlu0 %2202
  %2204 = vmax.xlane.f32.xlu0 %v2150
  %v2205 = vpop.xlane.xlu0 %2204
  %2206 = vmax.xlane.f32.xlu0 %v2153
  %v2207 = vpop.xlane.xlu0 %2206
  %2208 = vmax.xlane.f32.xlu0 %v2158
  %v2209 = vpop.xlane.xlu0 %2208
  %2210 = vmax.xlane.f32.xlu0 %v2161
  %v2211 = vpop.xlane.xlu0 %2210
  %2212 = vmax.xlane.f32.xlu0 %v2166
  %v2213 = vpop.xlane.xlu0 %2212
  %2214 = vmax.xlane.f32.xlu0 %v2169
  %v2215 = vpop.xlane.xlu0 %2214
  %2216 = vmax.xlane.f32.xlu0 %v2174
  %v2217 = vpop.xlane.xlu0 %2216
  %2218 = vmax.xlane.f32.xlu0 %v2177
  %v2219 = vpop.xlane.xlu0 %2218
  %2220 = vmax.xlane.f32.xlu0 %v2182
  %v2221 = vpop.xlane.xlu0 %2220
  %2222 = vmax.xlane.f32.xlu0 %v2185
  %v2223 = vpop.xlane.xlu0 %2222
  %2224 = vmax.xlane.f32.xlu0 %v2190
  %v2225 = vpop.xlane.xlu0 %2224
  %2226 = vmax.xlane.f32.xlu0 %v2193
  %v2227 = vpop.xlane.xlu0 %2226
  %v2228 = vsub.f32 %v2134, %v2197
  %v2229 = vsub.f32 %v2137, %v2199
  %v2230 = vsub.f32 %v2142, %v2201
  %v2231 = vsub.f32 %v2145, %v2203
  %v2232 = vsub.f32 %v2150, %v2205
  %v2233 = vsub.f32 %v2153, %v2207
  %v2234 = vsub.f32 %v2158, %v2209
  %v2235 = vsub.f32 %v2161, %v2211
  %v2236 = vsub.f32 %v2166, %v2213
  %v2237 = vsub.f32 %v2169, %v2215
  %v2238 = vsub.f32 %v2174, %v2217
  %v2239 = vsub.f32 %v2177, %v2219
  %v2240 = vsub.f32 %v2182, %v2221
  %v2241 = vsub.f32 %v2185, %v2223
  %v2242 = vsub.f32 %v2190, %v2225
  %v2243 = vsub.f32 %v2193, %v2227
  %v2244 = vmul.f32 %v2228, 1.442695
  %v2245 = vpow.pop %v2244
  %v2246 = vmul.f32 %v2229, 1.442695
  %v2247 = vpow.pop %v2246
  %v2248 = vmul.f32 %v2230, 1.442695
  %v2249 = vpow.pop %v2248
  %v2250 = vmul.f32 %v2231, 1.442695
  %v2251 = vpow.pop %v2250
  %v2252 = vmul.f32 %v2232, 1.442695
  %v2253 = vpow.pop %v2252
  %v2254 = vmul.f32 %v2233, 1.442695
  %v2255 = vpow.pop %v2254
  %v2256 = vmul.f32 %v2234, 1.442695
  %v2257 = vpow.pop %v2256
  %v2258 = vmul.f32 %v2235, 1.442695
  %v2259 = vpow.pop %v2258
  %v2260 = vmul.f32 %v2236, 1.442695
  %v2261 = vpow.pop %v2260
  %v2262 = vmul.f32 %v2237, 1.442695
  %v2263 = vpow.pop %v2262
  %v2264 = vmul.f32 %v2238, 1.442695
  %v2265 = vpow.pop %v2264
  %v2266 = vmul.f32 %v2239, 1.442695
  %v2267 = vpow.pop %v2266
  %v2268 = vmul.f32 %v2240, 1.442695
  %v2269 = vpow.pop %v2268
  %v2270 = vmul.f32 %v2241, 1.442695
  %v2271 = vpow.pop %v2270
  %v2272 = vmul.f32 %v2242, 1.442695
  %v2273 = vpow.pop %v2272
  %v2274 = vmul.f32 %v2243, 1.442695
  %v2275 = vpow.pop %v2274
  %2276 = vadd.xlane.f32.xlu0 %v2245
  %v2277 = vpop.xlane.xlu0 %2276
  %2278 = vadd.xlane.f32.xlu0 %v2247
  %v2279 = vpop.xlane.xlu0 %2278
  %2280 = vadd.xlane.f32.xlu0 %v2249
  %v2281 = vpop.xlane.xlu0 %2280
  %2282 = vadd.xlane.f32.xlu0 %v2251
  %v2283 = vpop.xlane.xlu0 %2282
  %2284 = vadd.xlane.f32.xlu0 %v2253
  %v2285 = vpop.xlane.xlu0 %2284
  %2286 = vadd.xlane.f32.xlu0 %v2255
  %v2287 = vpop.xlane.xlu0 %2286
  %2288 = vadd.xlane.f32.xlu0 %v2257
  %v2289 = vpop.xlane.xlu0 %2288
  %2290 = vadd.xlane.f32.xlu0 %v2259
  %v2291 = vpop.xlane.xlu0 %2290
  %2292 = vadd.xlane.f32.xlu0 %v2261
  %v2293 = vpop.xlane.xlu0 %2292
  %2294 = vadd.xlane.f32.xlu0 %v2263
  %v2295 = vpop.xlane.xlu0 %2294
  %2296 = vadd.xlane.f32.xlu0 %v2265
  %v2297 = vpop.xlane.xlu0 %2296
  %2298 = vadd.xlane.f32.xlu0 %v2267
  %v2299 = vpop.xlane.xlu0 %2298
  %2300 = vadd.xlane.f32.xlu0 %v2269
  %v2301 = vpop.xlane.xlu0 %2300
  %2302 = vadd.xlane.f32.xlu0 %v2271
  %v2303 = vpop.xlane.xlu0 %2302
  %2304 = vadd.xlane.f32.xlu0 %v2273
  %v2305 = vpop.xlane.xlu0 %2304
  %2306 = vadd.xlane.f32.xlu0 %v2275
  %v2307 = vpop.xlane.xlu0 %2306
  %v2308 = vlog2.pop %v2277
  %v2309 = vmul.f32 %v2308, 0.6931472
  %v2310 = vlog2.pop %v2279
  %v2311 = vmul.f32 %v2310, 0.6931472
  %v2312 = vlog2.pop %v2281
  %v2313 = vmul.f32 %v2312, 0.6931472
  %v2314 = vlog2.pop %v2283
  %v2315 = vmul.f32 %v2314, 0.6931472
  %v2316 = vlog2.pop %v2285
  %v2317 = vmul.f32 %v2316, 0.6931472
  %v2318 = vlog2.pop %v2287
  %v2319 = vmul.f32 %v2318, 0.6931472
  %v2320 = vlog2.pop %v2289
  %v2321 = vmul.f32 %v2320, 0.6931472
  %v2322 = vlog2.pop %v2291
  %v2323 = vmul.f32 %v2322, 0.6931472
  %v2324 = vlog2.pop %v2293
  %v2325 = vmul.f32 %v2324, 0.6931472
  %v2326 = vlog2.pop %v2295
  %v2327 = vmul.f32 %v2326, 0.6931472
  %v2328 = vlog2.pop %v2297
  %v2329 = vmul.f32 %v2328, 0.6931472
  %v2330 = vlog2.pop %v2299
  %v2331 = vmul.f32 %v2330, 0.6931472
  %v2332 = vlog2.pop %v2301
  %v2333 = vmul.f32 %v2332, 0.6931472
  %v2334 = vlog2.pop %v2303
  %v2335 = vmul.f32 %v2334, 0.6931472
  %v2336 = vlog2.pop %v2305
  %v2337 = vmul.f32 %v2336, 0.6931472
  %v2338 = vlog2.pop %v2307
  %v2339 = vmul.f32 %v2338, 0.6931472
  %v2340 = vadd.f32 %v2197, %v2309
  %v2341 = vadd.f32 %v2199, %v2311
  %v2342 = vadd.f32 %v2201, %v2313
  %v2343 = vadd.f32 %v2203, %v2315
  %v2344 = vadd.f32 %v2205, %v2317
  %v2345 = vadd.f32 %v2207, %v2319
  %v2346 = vadd.f32 %v2209, %v2321
  %v2347 = vadd.f32 %v2211, %v2323
  %v2348 = vadd.f32 %v2213, %v2325
  %v2349 = vadd.f32 %v2215, %v2327
  %v2350 = vadd.f32 %v2217, %v2329
  %v2351 = vadd.f32 %v2219, %v2331
  %v2352 = vadd.f32 %v2221, %v2333
  %v2353 = vadd.f32 %v2223, %v2335
  %v2354 = vadd.f32 %v2225, %v2337
  %v2355 = vadd.f32 %v2227, %v2339
  %v2356 = vsub.f32 %v2134, %v2340
  %v2357 = vsub.f32 %v2137, %v2341
  %v2358 = vsub.f32 %v2142, %v2342
  %v2359 = vsub.f32 %v2145, %v2343
  %v2360 = vsub.f32 %v2150, %v2344
  %v2361 = vsub.f32 %v2153, %v2345
  %v2362 = vsub.f32 %v2158, %v2346
  %v2363 = vsub.f32 %v2161, %v2347
  %v2364 = vsub.f32 %v2166, %v2348
  %v2365 = vsub.f32 %v2169, %v2349
  %v2366 = vsub.f32 %v2174, %v2350
  %v2367 = vsub.f32 %v2177, %v2351
  %v2368 = vsub.f32 %v2182, %v2352
  %v2369 = vsub.f32 %v2185, %v2353
  %v2370 = vsub.f32 %v2190, %v2354
  %v2371 = vsub.f32 %v2193, %v2355
  %v2372 = vpack.c.bf16 %v2357, %v2356
  %v2373 = vpack.c.bf16 %v2359, %v2358
  %v2374 = vpack.c.bf16 %v2361, %v2360
  %v2375 = vpack.c.bf16 %v2363, %v2362
  %v2376 = vpack.c.bf16 %v2365, %v2364
  %v2377 = vpack.c.bf16 %v2367, %v2366
  %v2378 = vpack.c.bf16 %v2369, %v2368
  %v2379 = vpack.c.bf16 %v2371, %v2370
  %v2388 = vunpack.c.l.b16 %v2372
  %v2389 = vunpack.c.h.b16 %v2372
  %v2390 = vunpack.c.l.b16 %v2373
  %v2391 = vunpack.c.h.b16 %v2373
  %v2392 = vunpack.c.l.b16 %v2374
  %v2393 = vunpack.c.h.b16 %v2374
  %v2394 = vunpack.c.l.b16 %v2375
  %v2395 = vunpack.c.h.b16 %v2375
  %v2396 = vunpack.c.l.b16 %v2376
  %v2397 = vunpack.c.h.b16 %v2376
  %v2398 = vunpack.c.l.b16 %v2377
  %v2399 = vunpack.c.h.b16 %v2377
  %v2400 = vunpack.c.l.b16 %v2378
  %v2401 = vunpack.c.h.b16 %v2378
  %v2402 = vunpack.c.l.b16 %v2379
  %v2403 = vunpack.c.h.b16 %v2379
  %v2404 = vpack.c.b16 %v2388, %v2388
  %v2405 = vpack.c.b16 %v2389, %v2389
  %v2406 = vpack.c.b16 %v2390, %v2390
  %v2407 = vpack.c.b16 %v2391, %v2391
  %v2408 = vpack.c.b16 %v2392, %v2392
  %v2409 = vpack.c.b16 %v2393, %v2393
  %v2410 = vpack.c.b16 %v2394, %v2394
  %v2411 = vpack.c.b16 %v2395, %v2395
  %v2412 = vpack.c.b16 %v2396, %v2396
  %v2413 = vpack.c.b16 %v2397, %v2397
  %v2414 = vpack.c.b16 %v2398, %v2398
  %v2415 = vpack.c.b16 %v2399, %v2399
  %v2416 = vpack.c.b16 %v2400, %v2400
  %v2417 = vpack.c.b16 %v2401, %v2401
  %v2418 = vpack.c.b16 %v2402, %v2402
  %v2419 = vpack.c.b16 %v2403, %v2403
  %2436 = vst [vmem:[%s8 + $0x4] sm:$0xf] %v2404
  %2437 = vst [vmem:[%s8 + $0x18] sm:$0xf] %v2405
  %2438 = vst [vmem:[%s8 + $0x2c] sm:$0xf] %v2406
  %2439 = vst [vmem:[%s8 + $0x40] sm:$0xf] %v2407
  %2440 = vst [vmem:[%s8 + $0x54] sm:$0xf] %v2408
  %2441 = vst [vmem:[%s8 + $0x68] sm:$0xf] %v2409
  %2442 = vst [vmem:[%s8 + $0x7c] sm:$0xf] %v2410
  %2443 = vst [vmem:[%s8 + $0x90] sm:$0xf] %v2411
  %2444 = vst [vmem:[%s8 + $0xa4] sm:$0xf] %v2412
  %2445 = vst [vmem:[%s8 + $0xb8] sm:$0xf] %v2413
  %2446 = vst [vmem:[%s8 + $0xcc] sm:$0xf] %v2414
  %2447 = vst [vmem:[%s8 + $0xe0] sm:$0xf] %v2415
  %2448 = vst [vmem:[%s8 + $0xf4] sm:$0xf] %v2416
  %2449 = vst [vmem:[%s8 + $0x108] sm:$0xf] %v2417
  %2450 = vst [vmem:[%s8 + $0x11c] sm:$0xf] %v2418
  %2451 = vst [vmem:[%s8 + $0x130] sm:$0xf] %v2419
  %v2452 = vrcp.pop %v2277
  %v2453 = vmul.f32 1.0, %v2452
  %v2454 = vrcp.pop %v2279
  %v2455 = vmul.f32 1.0, %v2454
  %v2456 = vrcp.pop %v2281
  %v2457 = vmul.f32 1.0, %v2456
  %v2458 = vrcp.pop %v2283
  %v2459 = vmul.f32 1.0, %v2458
  %v2460 = vrcp.pop %v2285
  %v2461 = vmul.f32 1.0, %v2460
  %v2462 = vrcp.pop %v2287
  %v2463 = vmul.f32 1.0, %v2462
  %v2464 = vrcp.pop %v2289
  %v2465 = vmul.f32 1.0, %v2464
  %v2466 = vrcp.pop %v2291
  %v2467 = vmul.f32 1.0, %v2466
  %v2468 = vrcp.pop %v2293
  %v2469 = vmul.f32 1.0, %v2468
  %v2470 = vrcp.pop %v2295
  %v2471 = vmul.f32 1.0, %v2470
  %v2472 = vrcp.pop %v2297
  %v2473 = vmul.f32 1.0, %v2472
  %v2474 = vrcp.pop %v2299
  %v2475 = vmul.f32 1.0, %v2474
  %v2476 = vrcp.pop %v2301
  %v2477 = vmul.f32 1.0, %v2476
  %v2478 = vrcp.pop %v2303
  %v2479 = vmul.f32 1.0, %v2478
  %v2480 = vrcp.pop %v2305
  %v2481 = vmul.f32 1.0, %v2480
  %v2482 = vrcp.pop %v2307
  %v2483 = vmul.f32 1.0, %v2482
  %v2484 = vmul.f32 %v2245, %v2453
  %v2485 = vmul.f32 %v2247, %v2455
  %v2486 = vmul.f32 %v2249, %v2457
  %v2487 = vmul.f32 %v2251, %v2459
  %v2488 = vmul.f32 %v2253, %v2461
  %v2489 = vmul.f32 %v2255, %v2463
  %v2490 = vmul.f32 %v2257, %v2465
  %v2491 = vmul.f32 %v2259, %v2467
  %v2492 = vmul.f32 %v2261, %v2469
  %v2493 = vmul.f32 %v2263, %v2471
  %v2494 = vmul.f32 %v2265, %v2473
  %v2495 = vmul.f32 %v2267, %v2475
  %v2496 = vmul.f32 %v2269, %v2477
  %v2497 = vmul.f32 %v2271, %v2479
  %v2498 = vmul.f32 %v2273, %v2481
  %v2499 = vmul.f32 %v2275, %v2483
  %v2500 = vld [vmem:[%s5 + $0x1] sm:$0x1]
  %v2502 = vlaneseq
  %v2503 = vshrl.u32 %v2502, 7
  %v2504 = vsub.s32 0, %v2503
  %v2505 = vrot.slane %v2500, %v2504
  %v2507 = vmul.f32 %v2484, %v2505
  %v2508 = vmul.f32 %v2485, %v2505
  %v2509 = vmul.f32 %v2486, %v2505
  %v2510 = vmul.f32 %v2487, %v2505
  %v2511 = vmul.f32 %v2488, %v2505
  %v2512 = vmul.f32 %v2489, %v2505
  %v2513 = vmul.f32 %v2490, %v2505
  %v2514 = vmul.f32 %v2491, %v2505
  %v2515 = vmul.f32 %v2492, %v2505
  %v2516 = vmul.f32 %v2493, %v2505
  %v2517 = vmul.f32 %v2494, %v2505
  %v2518 = vmul.f32 %v2495, %v2505
  %v2519 = vmul.f32 %v2496, %v2505
  %v2520 = vmul.f32 %v2497, %v2505
  %v2521 = vmul.f32 %v2498, %v2505
  %v2522 = vmul.f32 %v2499, %v2505
  %v2523 = vadd.f32 %v2012, %v2507
  %v2524 = vadd.f32 %v2013, %v2508
  %v2525 = vadd.f32 %v2014, %v2509
  %v2526 = vadd.f32 %v2015, %v2510
  %v2527 = vadd.f32 %v2016, %v2511
  %v2528 = vadd.f32 %v2017, %v2512
  %v2529 = vadd.f32 %v2018, %v2513
  %v2530 = vadd.f32 %v2019, %v2514
  %v2531 = vadd.f32 %v2020, %v2515
  %v2532 = vadd.f32 %v2021, %v2516
  %v2533 = vadd.f32 %v2022, %v2517
  %v2534 = vadd.f32 %v2023, %v2518
  %v2535 = vadd.f32 %v2024, %v2519
  %v2536 = vadd.f32 %v2025, %v2520
  %v2537 = vadd.f32 %v2026, %v2521
  %v2538 = vadd.f32 %v2027, %v2522
  %v2539 = vld [vmem:[%s3 + $0x8] sm:$0xf]
  %v2540 = vld [vmem:[%s3 + $0x1c] sm:$0xf]
  %v2541 = vld [vmem:[%s3 + $0x30] sm:$0xf]
  %v2542 = vld [vmem:[%s3 + $0x44] sm:$0xf]
  %v2543 = vld [vmem:[%s3 + $0x58] sm:$0xf]
  %v2544 = vld [vmem:[%s3 + $0x6c] sm:$0xf]
  %v2545 = vld [vmem:[%s3 + $0x80] sm:$0xf]
  %v2546 = vld [vmem:[%s3 + $0x94] sm:$0xf]
  %v2547 = vld [vmem:[%s3 + $0xa8] sm:$0xf]
  %v2548 = vld [vmem:[%s3 + $0xbc] sm:$0xf]
  %v2549 = vld [vmem:[%s3 + $0xd0] sm:$0xf]
  %v2550 = vld [vmem:[%s3 + $0xe4] sm:$0xf]
  %v2551 = vld [vmem:[%s3 + $0xf8] sm:$0xf]
  %v2552 = vld [vmem:[%s3 + $0x10c] sm:$0xf]
  %v2553 = vld [vmem:[%s3 + $0x120] sm:$0xf]
  %v2554 = vld [vmem:[%s3 + $0x134] sm:$0xf]
  %v2555 = vld [vmem:[%s4 + $0x2] sm:$0x1]
  %v2557 = vlaneseq
  %v2558 = vshrl.u32 %v2557, 7
  %v2559 = vsub.s32 0, %v2558
  %v2560 = vrot.slane %v2555, %v2559
  %v2578 = vunpack.c.l.b16 %v2539
  %v2579 = vunpack.c.l.b16 %v2540
  %v2580 = vunpack.c.l.b16 %v2541
  %v2581 = vunpack.c.l.b16 %v2542
  %v2582 = vunpack.c.l.b16 %v2543
  %v2583 = vunpack.c.l.b16 %v2544
  %v2584 = vunpack.c.l.b16 %v2545
  %v2585 = vunpack.c.l.b16 %v2546
  %v2586 = vunpack.c.l.b16 %v2547
  %v2587 = vunpack.c.l.b16 %v2548
  %v2588 = vunpack.c.l.b16 %v2549
  %v2589 = vunpack.c.l.b16 %v2550
  %v2590 = vunpack.c.l.b16 %v2551
  %v2591 = vunpack.c.l.b16 %v2552
  %v2592 = vunpack.c.l.b16 %v2553
  %v2593 = vunpack.c.l.b16 %v2554
  %v2594 = vpack.c.b16 %v2579, %v2578
  %v2595 = vpack.c.b16 %v2581, %v2580
  %v2596 = vpack.c.b16 %v2583, %v2582
  %v2597 = vpack.c.b16 %v2585, %v2584
  %v2598 = vpack.c.b16 %v2587, %v2586
  %v2599 = vpack.c.b16 %v2589, %v2588
  %v2600 = vpack.c.b16 %v2591, %v2590
  %v2601 = vpack.c.b16 %v2593, %v2592
  %2610 = vmatprep.subr.bf16.mxu0 0
  %2611 = vmatpush1.bf16.msra.mxu0 %v2594
  %2612 = vmatprep.subr.bf16.mxu0 0
  %2613 = vmatpush1.bf16.msra.mxu0 %v2595
  %2614 = vmatprep.subr.bf16.mxu0 0
  %2615 = vmatpush1.bf16.msra.mxu0 %v2596
  %2616 = vmatprep.subr.bf16.mxu0 0
  %2617 = vmatpush1.bf16.msra.mxu0 %v2597
  %2618 = vmatprep.subr.bf16.mxu0 0
  %2619 = vmatpush1.bf16.msra.mxu0 %v2598
  %2620 = vmatprep.subr.bf16.mxu0 0
  %2621 = vmatpush1.bf16.msra.mxu0 %v2599
  %2622 = vmatprep.subr.bf16.mxu0 0
  %2623 = vmatpush1.bf16.msra.mxu0 %v2600
  %2624 = vmatprep.subr.bf16.mxu0 0
  %2625 = vmatpush1.bf16.msra.mxu0 %v2601
  %2626 = vmatprep.subr.bf16.mxu0 0
  %2627 = vmatpush1.bf16.msra.mxu0 0
  %2628 = vmatprep.subr.bf16.mxu0 0
  %2629 = vmatpush1.bf16.msra.mxu0 0
  %2630 = vmatprep.subr.bf16.mxu0 0
  %2631 = vmatpush1.bf16.msra.mxu0 0
  %2632 = vmatprep.subr.bf16.mxu0 0
  %2633 = vmatpush1.bf16.msra.mxu0 0
  %2634 = vmatprep.subr.bf16.mxu0 0
  %2635 = vmatpush1.bf16.msra.mxu0 0
  %2636 = vmatprep.subr.bf16.mxu0 0
  %2637 = vmatpush1.bf16.msra.mxu0 0
  %2638 = vmatprep.subr.bf16.mxu0 0
  %2639 = vmatpush1.bf16.msra.mxu0 0
  %2640 = vmatprep.subr.bf16.mxu0 0
  %2641 = vmatpush1.bf16.msra.mxu0 0
  %2642 = vmatprep.mubr.bf16.mxu0 0
  %2643 = vmatmul.mubr.bf16.gmra.mrb[0].mxu0 %v1335
  %v2644 = vpop.f32.mrb[0].mxu0
  %v2645 = vadd.f32 %v2560, %v2644
  %v2646 = vpop.f32.mrb[0].mxu0
  %v2647 = vpop.f32.mrb[0].mxu0
  %v2648 = vadd.f32 %v2560, %v2647
  %v2649 = vpop.f32.mrb[0].mxu0
  %2650 = vmatprep.mubr.bf16.mxu0 0
  %2651 = vmatmul.mubr.bf16.gmra.mrb[0].mxu0 %v1336
  %v2652 = vpop.f32.mrb[0].mxu0
  %v2653 = vadd.f32 %v2560, %v2652
  %v2654 = vpop.f32.mrb[0].mxu0
  %v2655 = vpop.f32.mrb[0].mxu0
  %v2656 = vadd.f32 %v2560, %v2655
  %v2657 = vpop.f32.mrb[0].mxu0
  %2658 = vmatprep.mubr.bf16.mxu0 0
  %2659 = vmatmul.mubr.bf16.gmra.mrb[0].mxu0 %v1337
  %v2660 = vpop.f32.mrb[0].mxu0
  %v2661 = vadd.f32 %v2560, %v2660
  %v2662 = vpop.f32.mrb[0].mxu0
  %v2663 = vpop.f32.mrb[0].mxu0
  %v2664 = vadd.f32 %v2560, %v2663
  %v2665 = vpop.f32.mrb[0].mxu0
  %2666 = vmatprep.mubr.bf16.mxu0 0
  %2667 = vmatmul.mubr.bf16.gmra.mrb[0].mxu0 %v1338
  %v2668 = vpop.f32.mrb[0].mxu0
  %v2669 = vadd.f32 %v2560, %v2668
  %v2670 = vpop.f32.mrb[0].mxu0
  %v2671 = vpop.f32.mrb[0].mxu0
  %v2672 = vadd.f32 %v2560, %v2671
  %v2673 = vpop.f32.mrb[0].mxu0
  %2674 = vmatprep.mubr.bf16.mxu0 0
  %2675 = vmatmul.mubr.bf16.gmra.mrb[0].mxu0 %v1339
  %v2676 = vpop.f32.mrb[0].mxu0
  %v2677 = vadd.f32 %v2560, %v2676
  %v2678 = vpop.f32.mrb[0].mxu0
  %v2679 = vpop.f32.mrb[0].mxu0
  %v2680 = vadd.f32 %v2560, %v2679
  %v2681 = vpop.f32.mrb[0].mxu0
  %2682 = vmatprep.mubr.bf16.mxu0 0
  %2683 = vmatmul.mubr.bf16.gmra.mrb[0].mxu0 %v1340
  %v2684 = vpop.f32.mrb[0].mxu0
  %v2685 = vadd.f32 %v2560, %v2684
  %v2686 = vpop.f32.mrb[0].mxu0
  %v2687 = vpop.f32.mrb[0].mxu0
  %v2688 = vadd.f32 %v2560, %v2687
  %v2689 = vpop.f32.mrb[0].mxu0
  %2690 = vmatprep.mubr.bf16.mxu0 0
  %2691 = vmatmul.mubr.bf16.gmra.mrb[0].mxu0 %v1341
  %v2692 = vpop.f32.mrb[0].mxu0
  %v2693 = vadd.f32 %v2560, %v2692
  %v2694 = vpop.f32.mrb[0].mxu0
  %v2695 = vpop.f32.mrb[0].mxu0
  %v2696 = vadd.f32 %v2560, %v2695
  %v2697 = vpop.f32.mrb[0].mxu0
  %2698 = vmatprep.mubr.bf16.mxu0 0
  %2699 = vmatmul.mubr.bf16.gmra.mrb[0].mxu0 %v1342
  %v2700 = vpop.f32.mrb[0].mxu0
  %v2701 = vadd.f32 %v2560, %v2700
  %v2702 = vpop.f32.mrb[0].mxu0
  %v2703 = vpop.f32.mrb[0].mxu0
  %v2704 = vadd.f32 %v2560, %v2703
  %v2705 = vpop.f32.mrb[0].mxu0
  %2706 = vdwg.mxu0
  %2707 = vmax.xlane.f32.xlu0 %v2645
  %v2708 = vpop.xlane.xlu0 %2707
  %2709 = vmax.xlane.f32.xlu0 %v2648
  %v2710 = vpop.xlane.xlu0 %2709
  %2711 = vmax.xlane.f32.xlu0 %v2653
  %v2712 = vpop.xlane.xlu0 %2711
  %2713 = vmax.xlane.f32.xlu0 %v2656
  %v2714 = vpop.xlane.xlu0 %2713
  %2715 = vmax.xlane.f32.xlu0 %v2661
  %v2716 = vpop.xlane.xlu0 %2715
  %2717 = vmax.xlane.f32.xlu0 %v2664
  %v2718 = vpop.xlane.xlu0 %2717
  %2719 = vmax.xlane.f32.xlu0 %v2669
  %v2720 = vpop.xlane.xlu0 %2719
  %2721 = vmax.xlane.f32.xlu0 %v2672
  %v2722 = vpop.xlane.xlu0 %2721
  %2723 = vmax.xlane.f32.xlu0 %v2677
  %v2724 = vpop.xlane.xlu0 %2723
  %2725 = vmax.xlane.f32.xlu0 %v2680
  %v2726 = vpop.xlane.xlu0 %2725
  %2727 = vmax.xlane.f32.xlu0 %v2685
  %v2728 = vpop.xlane.xlu0 %2727
  %2729 = vmax.xlane.f32.xlu0 %v2688
  %v2730 = vpop.xlane.xlu0 %2729
  %2731 = vmax.xlane.f32.xlu0 %v2693
  %v2732 = vpop.xlane.xlu0 %2731
  %2733 = vmax.xlane.f32.xlu0 %v2696
  %v2734 = vpop.xlane.xlu0 %2733
  %2735 = vmax.xlane.f32.xlu0 %v2701
  %v2736 = vpop.xlane.xlu0 %2735
  %2737 = vmax.xlane.f32.xlu0 %v2704
  %v2738 = vpop.xlane.xlu0 %2737
  %v2739 = vsub.f32 %v2645, %v2708
  %v2740 = vsub.f32 %v2648, %v2710
  %v2741 = vsub.f32 %v2653, %v2712
  %v2742 = vsub.f32 %v2656, %v2714
  %v2743 = vsub.f32 %v2661, %v2716
  %v2744 = vsub.f32 %v2664, %v2718
  %v2745 = vsub.f32 %v2669, %v2720
  %v2746 = vsub.f32 %v2672, %v2722
  %v2747 = vsub.f32 %v2677, %v2724
  %v2748 = vsub.f32 %v2680, %v2726
  %v2749 = vsub.f32 %v2685, %v2728
  %v2750 = vsub.f32 %v2688, %v2730
  %v2751 = vsub.f32 %v2693, %v2732
  %v2752 = vsub.f32 %v2696, %v2734
  %v2753 = vsub.f32 %v2701, %v2736
  %v2754 = vsub.f32 %v2704, %v2738
  %v2755 = vmul.f32 %v2739, 1.442695
  %v2756 = vpow.pop %v2755
  %v2757 = vmul.f32 %v2740, 1.442695
  %v2758 = vpow.pop %v2757
  %v2759 = vmul.f32 %v2741, 1.442695
  %v2760 = vpow.pop %v2759
  %v2761 = vmul.f32 %v2742, 1.442695
  %v2762 = vpow.pop %v2761
  %v2763 = vmul.f32 %v2743, 1.442695
  %v2764 = vpow.pop %v2763
  %v2765 = vmul.f32 %v2744, 1.442695
  %v2766 = vpow.pop %v2765
  %v2767 = vmul.f32 %v2745, 1.442695
  %v2768 = vpow.pop %v2767
  %v2769 = vmul.f32 %v2746, 1.442695
  %v2770 = vpow.pop %v2769
  %v2771 = vmul.f32 %v2747, 1.442695
  %v2772 = vpow.pop %v2771
  %v2773 = vmul.f32 %v2748, 1.442695
  %v2774 = vpow.pop %v2773
  %v2775 = vmul.f32 %v2749, 1.442695
  %v2776 = vpow.pop %v2775
  %v2777 = vmul.f32 %v2750, 1.442695
  %v2778 = vpow.pop %v2777
  %v2779 = vmul.f32 %v2751, 1.442695
  %v2780 = vpow.pop %v2779
  %v2781 = vmul.f32 %v2752, 1.442695
  %v2782 = vpow.pop %v2781
  %v2783 = vmul.f32 %v2753, 1.442695
  %v2784 = vpow.pop %v2783
  %v2785 = vmul.f32 %v2754, 1.442695
  %v2786 = vpow.pop %v2785
  %2787 = vadd.xlane.f32.xlu0 %v2756
  %v2788 = vpop.xlane.xlu0 %2787
  %2789 = vadd.xlane.f32.xlu0 %v2758
  %v2790 = vpop.xlane.xlu0 %2789
  %2791 = vadd.xlane.f32.xlu0 %v2760
  %v2792 = vpop.xlane.xlu0 %2791
  %2793 = vadd.xlane.f32.xlu0 %v2762
  %v2794 = vpop.xlane.xlu0 %2793
  %2795 = vadd.xlane.f32.xlu0 %v2764
  %v2796 = vpop.xlane.xlu0 %2795
  %2797 = vadd.xlane.f32.xlu0 %v2766
  %v2798 = vpop.xlane.xlu0 %2797
  %2799 = vadd.xlane.f32.xlu0 %v2768
  %v2800 = vpop.xlane.xlu0 %2799
  %2801 = vadd.xlane.f32.xlu0 %v2770
  %v2802 = vpop.xlane.xlu0 %2801
  %2803 = vadd.xlane.f32.xlu0 %v2772
  %v2804 = vpop.xlane.xlu0 %2803
  %2805 = vadd.xlane.f32.xlu0 %v2774
  %v2806 = vpop.xlane.xlu0 %2805
  %2807 = vadd.xlane.f32.xlu0 %v2776
  %v2808 = vpop.xlane.xlu0 %2807
  %2809 = vadd.xlane.f32.xlu0 %v2778
  %v2810 = vpop.xlane.xlu0 %2809
  %2811 = vadd.xlane.f32.xlu0 %v2780
  %v2812 = vpop.xlane.xlu0 %2811
  %2813 = vadd.xlane.f32.xlu0 %v2782
  %v2814 = vpop.xlane.xlu0 %2813
  %2815 = vadd.xlane.f32.xlu0 %v2784
  %v2816 = vpop.xlane.xlu0 %2815
  %2817 = vadd.xlane.f32.xlu0 %v2786
  %v2818 = vpop.xlane.xlu0 %2817
  %v2819 = vlog2.pop %v2788
  %v2820 = vmul.f32 %v2819, 0.6931472
  %v2821 = vlog2.pop %v2790
  %v2822 = vmul.f32 %v2821, 0.6931472
  %v2823 = vlog2.pop %v2792
  %v2824 = vmul.f32 %v2823, 0.6931472
  %v2825 = vlog2.pop %v2794
  %v2826 = vmul.f32 %v2825, 0.6931472
  %v2827 = vlog2.pop %v2796
  %v2828 = vmul.f32 %v2827, 0.6931472
  %v2829 = vlog2.pop %v2798
  %v2830 = vmul.f32 %v2829, 0.6931472
  %v2831 = vlog2.pop %v2800
  %v2832 = vmul.f32 %v2831, 0.6931472
  %v2833 = vlog2.pop %v2802
  %v2834 = vmul.f32 %v2833, 0.6931472
  %v2835 = vlog2.pop %v2804
  %v2836 = vmul.f32 %v2835, 0.6931472
  %v2837 = vlog2.pop %v2806
  %v2838 = vmul.f32 %v2837, 0.6931472
  %v2839 = vlog2.pop %v2808
  %v2840 = vmul.f32 %v2839, 0.6931472
  %v2841 = vlog2.pop %v2810
  %v2842 = vmul.f32 %v2841, 0.6931472
  %v2843 = vlog2.pop %v2812
  %v2844 = vmul.f32 %v2843, 0.6931472
  %v2845 = vlog2.pop %v2814
  %v2846 = vmul.f32 %v2845, 0.6931472
  %v2847 = vlog2.pop %v2816
  %v2848 = vmul.f32 %v2847, 0.6931472
  %v2849 = vlog2.pop %v2818
  %v2850 = vmul.f32 %v2849, 0.6931472
  %v2851 = vadd.f32 %v2708, %v2820
  %v2852 = vadd.f32 %v2710, %v2822
  %v2853 = vadd.f32 %v2712, %v2824
  %v2854 = vadd.f32 %v2714, %v2826
  %v2855 = vadd.f32 %v2716, %v2828
  %v2856 = vadd.f32 %v2718, %v2830
  %v2857 = vadd.f32 %v2720, %v2832
  %v2858 = vadd.f32 %v2722, %v2834
  %v2859 = vadd.f32 %v2724, %v2836
  %v2860 = vadd.f32 %v2726, %v2838
  %v2861 = vadd.f32 %v2728, %v2840
  %v2862 = vadd.f32 %v2730, %v2842
  %v2863 = vadd.f32 %v2732, %v2844
  %v2864 = vadd.f32 %v2734, %v2846
  %v2865 = vadd.f32 %v2736, %v2848
  %v2866 = vadd.f32 %v2738, %v2850
  %v2867 = vsub.f32 %v2645, %v2851
  %v2868 = vsub.f32 %v2648, %v2852
  %v2869 = vsub.f32 %v2653, %v2853
  %v2870 = vsub.f32 %v2656, %v2854
  %v2871 = vsub.f32 %v2661, %v2855
  %v2872 = vsub.f32 %v2664, %v2856
  %v2873 = vsub.f32 %v2669, %v2857
  %v2874 = vsub.f32 %v2672, %v2858
  %v2875 = vsub.f32 %v2677, %v2859
  %v2876 = vsub.f32 %v2680, %v2860
  %v2877 = vsub.f32 %v2685, %v2861
  %v2878 = vsub.f32 %v2688, %v2862
  %v2879 = vsub.f32 %v2693, %v2863
  %v2880 = vsub.f32 %v2696, %v2864
  %v2881 = vsub.f32 %v2701, %v2865
  %v2882 = vsub.f32 %v2704, %v2866
  %v2883 = vpack.c.bf16 %v2868, %v2867
  %v2884 = vpack.c.bf16 %v2870, %v2869
  %v2885 = vpack.c.bf16 %v2872, %v2871
  %v2886 = vpack.c.bf16 %v2874, %v2873
  %v2887 = vpack.c.bf16 %v2876, %v2875
  %v2888 = vpack.c.bf16 %v2878, %v2877
  %v2889 = vpack.c.bf16 %v2880, %v2879
  %v2890 = vpack.c.bf16 %v2882, %v2881
  %v2899 = vunpack.c.l.b16 %v2883
  %v2900 = vunpack.c.h.b16 %v2883
  %v2901 = vunpack.c.l.b16 %v2884
  %v2902 = vunpack.c.h.b16 %v2884
  %v2903 = vunpack.c.l.b16 %v2885
  %v2904 = vunpack.c.h.b16 %v2885
  %v2905 = vunpack.c.l.b16 %v2886
  %v2906 = vunpack.c.h.b16 %v2886
  %v2907 = vunpack.c.l.b16 %v2887
  %v2908 = vunpack.c.h.b16 %v2887
  %v2909 = vunpack.c.l.b16 %v2888
  %v2910 = vunpack.c.h.b16 %v2888
  %v2911 = vunpack.c.l.b16 %v2889
  %v2912 = vunpack.c.h.b16 %v2889
  %v2913 = vunpack.c.l.b16 %v2890
  %v2914 = vunpack.c.h.b16 %v2890
  %v2915 = vpack.c.b16 %v2899, %v2899
  %v2916 = vpack.c.b16 %v2900, %v2900
  %v2917 = vpack.c.b16 %v2901, %v2901
  %v2918 = vpack.c.b16 %v2902, %v2902
  %v2919 = vpack.c.b16 %v2903, %v2903
  %v2920 = vpack.c.b16 %v2904, %v2904
  %v2921 = vpack.c.b16 %v2905, %v2905
  %v2922 = vpack.c.b16 %v2906, %v2906
  %v2923 = vpack.c.b16 %v2907, %v2907
  %v2924 = vpack.c.b16 %v2908, %v2908
  %v2925 = vpack.c.b16 %v2909, %v2909
  %v2926 = vpack.c.b16 %v2910, %v2910
  %v2927 = vpack.c.b16 %v2911, %v2911
  %v2928 = vpack.c.b16 %v2912, %v2912
  %v2929 = vpack.c.b16 %v2913, %v2913
  %v2930 = vpack.c.b16 %v2914, %v2914
  %2947 = vst [vmem:[%s8 + $0x8] sm:$0xf] %v2915
  %2948 = vst [vmem:[%s8 + $0x1c] sm:$0xf] %v2916
  %2949 = vst [vmem:[%s8 + $0x30] sm:$0xf] %v2917
  %2950 = vst [vmem:[%s8 + $0x44] sm:$0xf] %v2918
  %2951 = vst [vmem:[%s8 + $0x58] sm:$0xf] %v2919
  %2952 = vst [vmem:[%s8 + $0x6c] sm:$0xf] %v2920
  %2953 = vst [vmem:[%s8 + $0x80] sm:$0xf] %v2921
  %2954 = vst [vmem:[%s8 + $0x94] sm:$0xf] %v2922
  %2955 = vst [vmem:[%s8 + $0xa8] sm:$0xf] %v2923
  %2956 = vst [vmem:[%s8 + $0xbc] sm:$0xf] %v2924
  %2957 = vst [vmem:[%s8 + $0xd0] sm:$0xf] %v2925
  %2958 = vst [vmem:[%s8 + $0xe4] sm:$0xf] %v2926
  %2959 = vst [vmem:[%s8 + $0xf8] sm:$0xf] %v2927
  %2960 = vst [vmem:[%s8 + $0x10c] sm:$0xf] %v2928
  %2961 = vst [vmem:[%s8 + $0x120] sm:$0xf] %v2929
  %2962 = vst [vmem:[%s8 + $0x134] sm:$0xf] %v2930
  %v2963 = vrcp.pop %v2788
  %v2964 = vmul.f32 1.0, %v2963
  %v2965 = vrcp.pop %v2790
  %v2966 = vmul.f32 1.0, %v2965
  %v2967 = vrcp.pop %v2792
  %v2968 = vmul.f32 1.0, %v2967
  %v2969 = vrcp.pop %v2794
  %v2970 = vmul.f32 1.0, %v2969
  %v2971 = vrcp.pop %v2796
  %v2972 = vmul.f32 1.0, %v2971
  %v2973 = vrcp.pop %v2798
  %v2974 = vmul.f32 1.0, %v2973
  %v2975 = vrcp.pop %v2800
  %v2976 = vmul.f32 1.0, %v2975
  %v2977 = vrcp.pop %v2802
  %v2978 = vmul.f32 1.0, %v2977
  %v2979 = vrcp.pop %v2804
  %v2980 = vmul.f32 1.0, %v2979
  %v2981 = vrcp.pop %v2806
  %v2982 = vmul.f32 1.0, %v2981
  %v2983 = vrcp.pop %v2808
  %v2984 = vmul.f32 1.0, %v2983
  %v2985 = vrcp.pop %v2810
  %v2986 = vmul.f32 1.0, %v2985
  %v2987 = vrcp.pop %v2812
  %v2988 = vmul.f32 1.0, %v2987
  %v2989 = vrcp.pop %v2814
  %v2990 = vmul.f32 1.0, %v2989
  %v2991 = vrcp.pop %v2816
  %v2992 = vmul.f32 1.0, %v2991
  %v2993 = vrcp.pop %v2818
  %v2994 = vmul.f32 1.0, %v2993
  %v2995 = vmul.f32 %v2756, %v2964
  %v2996 = vmul.f32 %v2758, %v2966
  %v2997 = vmul.f32 %v2760, %v2968
  %v2998 = vmul.f32 %v2762, %v2970
  %v2999 = vmul.f32 %v2764, %v2972
  %v3000 = vmul.f32 %v2766, %v2974
  %v3001 = vmul.f32 %v2768, %v2976
  %v3002 = vmul.f32 %v2770, %v2978
  %v3003 = vmul.f32 %v2772, %v2980
  %v3004 = vmul.f32 %v2774, %v2982
  %v3005 = vmul.f32 %v2776, %v2984
  %v3006 = vmul.f32 %v2778, %v2986
  %v3007 = vmul.f32 %v2780, %v2988
  %v3008 = vmul.f32 %v2782, %v2990
  %v3009 = vmul.f32 %v2784, %v2992
  %v3010 = vmul.f32 %v2786, %v2994
  %v3011 = vld [vmem:[%s5 + $0x2] sm:$0x1]
  %v3013 = vlaneseq
  %v3014 = vshrl.u32 %v3013, 7
  %v3015 = vsub.s32 0, %v3014
  %v3016 = vrot.slane %v3011, %v3015
  %v3018 = vmul.f32 %v2995, %v3016
  %v3019 = vmul.f32 %v2996, %v3016
  %v3020 = vmul.f32 %v2997, %v3016
  %v3021 = vmul.f32 %v2998, %v3016
  %v3022 = vmul.f32 %v2999, %v3016
  %v3023 = vmul.f32 %v3000, %v3016
  %v3024 = vmul.f32 %v3001, %v3016
  %v3025 = vmul.f32 %v3002, %v3016
  %v3026 = vmul.f32 %v3003, %v3016
  %v3027 = vmul.f32 %v3004, %v3016
  %v3028 = vmul.f32 %v3005, %v3016
  %v3029 = vmul.f32 %v3006, %v3016
  %v3030 = vmul.f32 %v3007, %v3016
  %v3031 = vmul.f32 %v3008, %v3016
  %v3032 = vmul.f32 %v3009, %v3016
  %v3033 = vmul.f32 %v3010, %v3016
  %v3034 = vadd.f32 %v2523, %v3018
  %v3035 = vadd.f32 %v2524, %v3019
  %v3036 = vadd.f32 %v2525, %v3020
  %v3037 = vadd.f32 %v2526, %v3021
  %v3038 = vadd.f32 %v2527, %v3022
  %v3039 = vadd.f32 %v2528, %v3023
  %v3040 = vadd.f32 %v2529, %v3024
  %v3041 = vadd.f32 %v2530, %v3025
  %v3042 = vadd.f32 %v2531, %v3026
  %v3043 = vadd.f32 %v2532, %v3027
  %v3044 = vadd.f32 %v2533, %v3028
  %v3045 = vadd.f32 %v2534, %v3029
  %v3046 = vadd.f32 %v2535, %v3030
  %v3047 = vadd.f32 %v2536, %v3031
  %v3048 = vadd.f32 %v2537, %v3032
  %v3049 = vadd.f32 %v2538, %v3033
  %v3050 = vld [vmem:[%s3 + $0xc] sm:$0xf]
  %v3051 = vld [vmem:[%s3 + $0x20] sm:$0xf]
  %v3052 = vld [vmem:[%s3 + $0x34] sm:$0xf]
  %v3053 = vld [vmem:[%s3 + $0x48] sm:$0xf]
  %v3054 = vld [vmem:[%s3 + $0x5c] sm:$0xf]
  %v3055 = vld [vmem:[%s3 + $0x70] sm:$0xf]
  %v3056 = vld [vmem:[%s3 + $0x84] sm:$0xf]
  %v3057 = vld [vmem:[%s3 + $0x98] sm:$0xf]
  %v3058 = vld [vmem:[%s3 + $0xac] sm:$0xf]
  %v3059 = vld [vmem:[%s3 + $0xc0] sm:$0xf]
  %v3060 = vld [vmem:[%s3 + $0xd4] sm:$0xf]
  %v3061 = vld [vmem:[%s3 + $0xe8] sm:$0xf]
  %v3062 = vld [vmem:[%s3 + $0xfc] sm:$0xf]
  %v3063 = vld [vmem:[%s3 + $0x110] sm:$0xf]
  %v3064 = vld [vmem:[%s3 + $0x124] sm:$0xf]
  %v3065 = vld [vmem:[%s3 + $0x138] sm:$0xf]
  %v3066 = vld [vmem:[%s4 + $0x3] sm:$0x1]
  %v3068 = vlaneseq
  %v3069 = vshrl.u32 %v3068, 7
  %v3070 = vsub.s32 0, %v3069
  %v3071 = vrot.slane %v3066, %v3070
  %v3089 = vunpack.c.l.b16 %v3050
  %v3090 = vunpack.c.l.b16 %v3051
  %v3091 = vunpack.c.l.b16 %v3052
  %v3092 = vunpack.c.l.b16 %v3053
  %v3093 = vunpack.c.l.b16 %v3054
  %v3094 = vunpack.c.l.b16 %v3055
  %v3095 = vunpack.c.l.b16 %v3056
  %v3096 = vunpack.c.l.b16 %v3057
  %v3097 = vunpack.c.l.b16 %v3058
  %v3098 = vunpack.c.l.b16 %v3059
  %v3099 = vunpack.c.l.b16 %v3060
  %v3100 = vunpack.c.l.b16 %v3061
  %v3101 = vunpack.c.l.b16 %v3062
  %v3102 = vunpack.c.l.b16 %v3063
  %v3103 = vunpack.c.l.b16 %v3064
  %v3104 = vunpack.c.l.b16 %v3065
  %v3105 = vpack.c.b16 %v3090, %v3089
  %v3106 = vpack.c.b16 %v3092, %v3091
  %v3107 = vpack.c.b16 %v3094, %v3093
  %v3108 = vpack.c.b16 %v3096, %v3095
  %v3109 = vpack.c.b16 %v3098, %v3097
  %v3110 = vpack.c.b16 %v3100, %v3099
  %v3111 = vpack.c.b16 %v3102, %v3101
  %v3112 = vpack.c.b16 %v3104, %v3103
  %3121 = vmatprep.subr.bf16.mxu0 0
  %3122 = vmatpush1.bf16.msra.mxu0 %v3105
  %3123 = vmatprep.subr.bf16.mxu0 0
  %3124 = vmatpush1.bf16.msra.mxu0 %v3106
  %3125 = vmatprep.subr.bf16.mxu0 0
  %3126 = vmatpush1.bf16.msra.mxu0 %v3107
  %3127 = vmatprep.subr.bf16.mxu0 0
  %3128 = vmatpush1.bf16.msra.mxu0 %v3108
  %3129 = vmatprep.subr.bf16.mxu0 0
  %3130 = vmatpush1.bf16.msra.mxu0 %v3109
  %3131 = vmatprep.subr.bf16.mxu0 0
  %3132 = vmatpush1.bf16.msra.mxu0 %v3110
  %3133 = vmatprep.subr.bf16.mxu0 0
  %3134 = vmatpush1.bf16.msra.mxu0 %v3111
  %3135 = vmatprep.subr.bf16.mxu0 0
  %3136 = vmatpush1.bf16.msra.mxu0 %v3112
  %3137 = vmatprep.subr.bf16.mxu0 0
  %3138 = vmatpush1.bf16.msra.mxu0 0
  %3139 = vmatprep.subr.bf16.mxu0 0
  %3140 = vmatpush1.bf16.msra.mxu0 0
  %3141 = vmatprep.subr.bf16.mxu0 0
  %3142 = vmatpush1.bf16.msra.mxu0 0
  %3143 = vmatprep.subr.bf16.mxu0 0
  %3144 = vmatpush1.bf16.msra.mxu0 0
  %3145 = vmatprep.subr.bf16.mxu0 0
  %3146 = vmatpush1.bf16.msra.mxu0 0
  %3147 = vmatprep.subr.bf16.mxu0 0
  %3148 = vmatpush1.bf16.msra.mxu0 0
  %3149 = vmatprep.subr.bf16.mxu0 0
  %3150 = vmatpush1.bf16.msra.mxu0 0
  %3151 = vmatprep.subr.bf16.mxu0 0
  %3152 = vmatpush1.bf16.msra.mxu0 0
  %3153 = vmatprep.mubr.bf16.mxu0 0
  %3154 = vmatmul.mubr.bf16.gmra.mrb[0].mxu0 %v1335
  %v3155 = vpop.f32.mrb[0].mxu0
  %v3156 = vadd.f32 %v3071, %v3155
  %v3157 = vpop.f32.mrb[0].mxu0
  %v3158 = vpop.f32.mrb[0].mxu0
  %v3159 = vadd.f32 %v3071, %v3158
  %v3160 = vpop.f32.mrb[0].mxu0
  %3161 = vmatprep.mubr.bf16.mxu0 0
  %3162 = vmatmul.mubr.bf16.gmra.mrb[0].mxu0 %v1336
  %v3163 = vpop.f32.mrb[0].mxu0
  %v3164 = vadd.f32 %v3071, %v3163
  %v3165 = vpop.f32.mrb[0].mxu0
  %v3166 = vpop.f32.mrb[0].mxu0
  %v3167 = vadd.f32 %v3071, %v3166
  %v3168 = vpop.f32.mrb[0].mxu0
  %3169 = vmatprep.mubr.bf16.mxu0 0
  %3170 = vmatmul.mubr.bf16.gmra.mrb[0].mxu0 %v1337
  %v3171 = vpop.f32.mrb[0].mxu0
  %v3172 = vadd.f32 %v3071, %v3171
  %v3173 = vpop.f32.mrb[0].mxu0
  %v3174 = vpop.f32.mrb[0].mxu0
  %v3175 = vadd.f32 %v3071, %v3174
  %v3176 = vpop.f32.mrb[0].mxu0
  %3177 = vmatprep.mubr.bf16.mxu0 0
  %3178 = vmatmul.mubr.bf16.gmra.mrb[0].mxu0 %v1338
  %v3179 = vpop.f32.mrb[0].mxu0
  %v3180 = vadd.f32 %v3071, %v3179
  %v3181 = vpop.f32.mrb[0].mxu0
  %v3182 = vpop.f32.mrb[0].mxu0
  %v3183 = vadd.f32 %v3071, %v3182
  %v3184 = vpop.f32.mrb[0].mxu0
  %3185 = vmatprep.mubr.bf16.mxu0 0
  %3186 = vmatmul.mubr.bf16.gmra.mrb[0].mxu0 %v1339
  %v3187 = vpop.f32.mrb[0].mxu0
  %v3188 = vadd.f32 %v3071, %v3187
  %v3189 = vpop.f32.mrb[0].mxu0
  %v3190 = vpop.f32.mrb[0].mxu0
  %v3191 = vadd.f32 %v3071, %v3190
  %v3192 = vpop.f32.mrb[0].mxu0
  %3193 = vmatprep.mubr.bf16.mxu0 0
  %3194 = vmatmul.mubr.bf16.gmra.mrb[0].mxu0 %v1340
  %v3195 = vpop.f32.mrb[0].mxu0
  %v3196 = vadd.f32 %v3071, %v3195
  %v3197 = vpop.f32.mrb[0].mxu0
  %v3198 = vpop.f32.mrb[0].mxu0
  %v3199 = vadd.f32 %v3071, %v3198
  %v3200 = vpop.f32.mrb[0].mxu0
  %3201 = vmatprep.mubr.bf16.mxu0 0
  %3202 = vmatmul.mubr.bf16.gmra.mrb[0].mxu0 %v1341
  %v3203 = vpop.f32.mrb[0].mxu0
  %v3204 = vadd.f32 %v3071, %v3203
  %v3205 = vpop.f32.mrb[0].mxu0
  %v3206 = vpop.f32.mrb[0].mxu0
  %v3207 = vadd.f32 %v3071, %v3206
  %v3208 = vpop.f32.mrb[0].mxu0
  %3209 = vmatprep.mubr.bf16.mxu0 0
  %3210 = vmatmul.mubr.bf16.gmra.mrb[0].mxu0 %v1342
  %v3211 = vpop.f32.mrb[0].mxu0
  %v3212 = vadd.f32 %v3071, %v3211
  %v3213 = vpop.f32.mrb[0].mxu0
  %v3214 = vpop.f32.mrb[0].mxu0
  %v3215 = vadd.f32 %v3071, %v3214
  %v3216 = vpop.f32.mrb[0].mxu0
  %3217 = vdwg.mxu0
  %3218 = vmax.xlane.f32.xlu0 %v3156
  %v3219 = vpop.xlane.xlu0 %3218
  %3220 = vmax.xlane.f32.xlu0 %v3159
  %v3221 = vpop.xlane.xlu0 %3220
  %3222 = vmax.xlane.f32.xlu0 %v3164
  %v3223 = vpop.xlane.xlu0 %3222
  %3224 = vmax.xlane.f32.xlu0 %v3167
  %v3225 = vpop.xlane.xlu0 %3224
  %3226 = vmax.xlane.f32.xlu0 %v3172
  %v3227 = vpop.xlane.xlu0 %3226
  %3228 = vmax.xlane.f32.xlu0 %v3175
  %v3229 = vpop.xlane.xlu0 %3228
  %3230 = vmax.xlane.f32.xlu0 %v3180
  %v3231 = vpop.xlane.xlu0 %3230
  %3232 = vmax.xlane.f32.xlu0 %v3183
  %v3233 = vpop.xlane.xlu0 %3232
  %3234 = vmax.xlane.f32.xlu0 %v3188
  %v3235 = vpop.xlane.xlu0 %3234
  %3236 = vmax.xlane.f32.xlu0 %v3191
  %v3237 = vpop.xlane.xlu0 %3236
  %3238 = vmax.xlane.f32.xlu0 %v3196
  %v3239 = vpop.xlane.xlu0 %3238
  %3240 = vmax.xlane.f32.xlu0 %v3199
  %v3241 = vpop.xlane.xlu0 %3240
  %3242 = vmax.xlane.f32.xlu0 %v3204
  %v3243 = vpop.xlane.xlu0 %3242
  %3244 = vmax.xlane.f32.xlu0 %v3207
  %v3245 = vpop.xlane.xlu0 %3244
  %3246 = vmax.xlane.f32.xlu0 %v3212
  %v3247 = vpop.xlane.xlu0 %3246
  %3248 = vmax.xlane.f32.xlu0 %v3215
  %v3249 = vpop.xlane.xlu0 %3248
  %v3250 = vsub.f32 %v3156, %v3219
  %v3251 = vsub.f32 %v3159, %v3221
  %v3252 = vsub.f32 %v3164, %v3223
  %v3253 = vsub.f32 %v3167, %v3225
  %v3254 = vsub.f32 %v3172, %v3227
  %v3255 = vsub.f32 %v3175, %v3229
  %v3256 = vsub.f32 %v3180, %v3231
  %v3257 = vsub.f32 %v3183, %v3233
  %v3258 = vsub.f32 %v3188, %v3235
  %v3259 = vsub.f32 %v3191, %v3237
  %v3260 = vsub.f32 %v3196, %v3239
  %v3261 = vsub.f32 %v3199, %v3241
  %v3262 = vsub.f32 %v3204, %v3243
  %v3263 = vsub.f32 %v3207, %v3245
  %v3264 = vsub.f32 %v3212, %v3247
  %v3265 = vsub.f32 %v3215, %v3249
  %v3266 = vmul.f32 %v3250, 1.442695
  %v3267 = vpow.pop %v3266
  %v3268 = vmul.f32 %v3251, 1.442695
  %v3269 = vpow.pop %v3268
  %v3270 = vmul.f32 %v3252, 1.442695
  %v3271 = vpow.pop %v3270
  %v3272 = vmul.f32 %v3253, 1.442695
  %v3273 = vpow.pop %v3272
  %v3274 = vmul.f32 %v3254, 1.442695
  %v3275 = vpow.pop %v3274
  %v3276 = vmul.f32 %v3255, 1.442695
  %v3277 = vpow.pop %v3276
  %v3278 = vmul.f32 %v3256, 1.442695
  %v3279 = vpow.pop %v3278
  %v3280 = vmul.f32 %v3257, 1.442695
  %v3281 = vpow.pop %v3280
  %v3282 = vmul.f32 %v3258, 1.442695
  %v3283 = vpow.pop %v3282
  %v3284 = vmul.f32 %v3259, 1.442695
  %v3285 = vpow.pop %v3284
  %v3286 = vmul.f32 %v3260, 1.442695
  %v3287 = vpow.pop %v3286
  %v3288 = vmul.f32 %v3261, 1.442695
  %v3289 = vpow.pop %v3288
  %v3290 = vmul.f32 %v3262, 1.442695
  %v3291 = vpow.pop %v3290
  %v3292 = vmul.f32 %v3263, 1.442695
  %v3293 = vpow.pop %v3292
  %v3294 = vmul.f32 %v3264, 1.442695
  %v3295 = vpow.pop %v3294
  %v3296 = vmul.f32 %v3265, 1.442695
  %v3297 = vpow.pop %v3296
  %3298 = vadd.xlane.f32.xlu0 %v3267
  %v3299 = vpop.xlane.xlu0 %3298
  %3300 = vadd.xlane.f32.xlu0 %v3269
  %v3301 = vpop.xlane.xlu0 %3300
  %3302 = vadd.xlane.f32.xlu0 %v3271
  %v3303 = vpop.xlane.xlu0 %3302
  %3304 = vadd.xlane.f32.xlu0 %v3273
  %v3305 = vpop.xlane.xlu0 %3304
  %3306 = vadd.xlane.f32.xlu0 %v3275
  %v3307 = vpop.xlane.xlu0 %3306
  %3308 = vadd.xlane.f32.xlu0 %v3277
  %v3309 = vpop.xlane.xlu0 %3308
  %3310 = vadd.xlane.f32.xlu0 %v3279
  %v3311 = vpop.xlane.xlu0 %3310
  %3312 = vadd.xlane.f32.xlu0 %v3281
  %v3313 = vpop.xlane.xlu0 %3312
  %3314 = vadd.xlane.f32.xlu0 %v3283
  %v3315 = vpop.xlane.xlu0 %3314
  %3316 = vadd.xlane.f32.xlu0 %v3285
  %v3317 = vpop.xlane.xlu0 %3316
  %3318 = vadd.xlane.f32.xlu0 %v3287
  %v3319 = vpop.xlane.xlu0 %3318
  %3320 = vadd.xlane.f32.xlu0 %v3289
  %v3321 = vpop.xlane.xlu0 %3320
  %3322 = vadd.xlane.f32.xlu0 %v3291
  %v3323 = vpop.xlane.xlu0 %3322
  %3324 = vadd.xlane.f32.xlu0 %v3293
  %v3325 = vpop.xlane.xlu0 %3324
  %3326 = vadd.xlane.f32.xlu0 %v3295
  %v3327 = vpop.xlane.xlu0 %3326
  %3328 = vadd.xlane.f32.xlu0 %v3297
  %v3329 = vpop.xlane.xlu0 %3328
  %v3330 = vlog2.pop %v3299
  %v3331 = vmul.f32 %v3330, 0.6931472
  %v3332 = vlog2.pop %v3301
  %v3333 = vmul.f32 %v3332, 0.6931472
  %v3334 = vlog2.pop %v3303
  %v3335 = vmul.f32 %v3334, 0.6931472
  %v3336 = vlog2.pop %v3305
  %v3337 = vmul.f32 %v3336, 0.6931472
  %v3338 = vlog2.pop %v3307
  %v3339 = vmul.f32 %v3338, 0.6931472
  %v3340 = vlog2.pop %v3309
  %v3341 = vmul.f32 %v3340, 0.6931472
  %v3342 = vlog2.pop %v3311
  %v3343 = vmul.f32 %v3342, 0.6931472
  %v3344 = vlog2.pop %v3313
  %v3345 = vmul.f32 %v3344, 0.6931472
  %v3346 = vlog2.pop %v3315
  %v3347 = vmul.f32 %v3346, 0.6931472
  %v3348 = vlog2.pop %v3317
  %v3349 = vmul.f32 %v3348, 0.6931472
  %v3350 = vlog2.pop %v3319
  %v3351 = vmul.f32 %v3350, 0.6931472
  %v3352 = vlog2.pop %v3321
  %v3353 = vmul.f32 %v3352, 0.6931472
  %v3354 = vlog2.pop %v3323
  %v3355 = vmul.f32 %v3354, 0.6931472
  %v3356 = vlog2.pop %v3325
  %v3357 = vmul.f32 %v3356, 0.6931472
  %v3358 = vlog2.pop %v3327
  %v3359 = vmul.f32 %v3358, 0.6931472
  %v3360 = vlog2.pop %v3329
  %v3361 = vmul.f32 %v3360, 0.6931472
  %v3362 = vadd.f32 %v3219, %v3331
  %v3363 = vadd.f32 %v3221, %v3333
  %v3364 = vadd.f32 %v3223, %v3335
  %v3365 = vadd.f32 %v3225, %v3337
  %v3366 = vadd.f32 %v3227, %v3339
  %v3367 = vadd.f32 %v3229, %v3341
  %v3368 = vadd.f32 %v3231, %v3343
  %v3369 = vadd.f32 %v3233, %v3345
  %v3370 = vadd.f32 %v3235, %v3347
  %v3371 = vadd.f32 %v3237, %v3349
  %v3372 = vadd.f32 %v3239, %v3351
  %v3373 = vadd.f32 %v3241, %v3353
  %v3374 = vadd.f32 %v3243, %v3355
  %v3375 = vadd.f32 %v3245, %v3357
  %v3376 = vadd.f32 %v3247, %v3359
  %v3377 = vadd.f32 %v3249, %v3361
  %v3378 = vsub.f32 %v3156, %v3362
  %v3379 = vsub.f32 %v3159, %v3363
  %v3380 = vsub.f32 %v3164, %v3364
  %v3381 = vsub.f32 %v3167, %v3365
  %v3382 = vsub.f32 %v3172, %v3366
  %v3383 = vsub.f32 %v3175, %v3367
  %v3384 = vsub.f32 %v3180, %v3368
  %v3385 = vsub.f32 %v3183, %v3369
  %v3386 = vsub.f32 %v3188, %v3370
  %v3387 = vsub.f32 %v3191, %v3371
  %v3388 = vsub.f32 %v3196, %v3372
  %v3389 = vsub.f32 %v3199, %v3373
  %v3390 = vsub.f32 %v3204, %v3374
  %v3391 = vsub.f32 %v3207, %v3375
  %v3392 = vsub.f32 %v3212, %v3376
  %v3393 = vsub.f32 %v3215, %v3377
  %v3394 = vpack.c.bf16 %v3379, %v3378
  %v3395 = vpack.c.bf16 %v3381, %v3380
  %v3396 = vpack.c.bf16 %v3383, %v3382
  %v3397 = vpack.c.bf16 %v3385, %v3384
  %v3398 = vpack.c.bf16 %v3387, %v3386
  %v3399 = vpack.c.bf16 %v3389, %v3388
  %v3400 = vpack.c.bf16 %v3391, %v3390
  %v3401 = vpack.c.bf16 %v3393, %v3392
  %v3410 = vunpack.c.l.b16 %v3394
  %v3411 = vunpack.c.h.b16 %v3394
  %v3412 = vunpack.c.l.b16 %v3395
  %v3413 = vunpack.c.h.b16 %v3395
  %v3414 = vunpack.c.l.b16 %v3396
  %v3415 = vunpack.c.h.b16 %v3396
  %v3416 = vunpack.c.l.b16 %v3397
  %v3417 = vunpack.c.h.b16 %v3397
  %v3418 = vunpack.c.l.b16 %v3398
  %v3419 = vunpack.c.h.b16 %v3398
  %v3420 = vunpack.c.l.b16 %v3399
  %v3421 = vunpack.c.h.b16 %v3399
  %v3422 = vunpack.c.l.b16 %v3400
  %v3423 = vunpack.c.h.b16 %v3400
  %v3424 = vunpack.c.l.b16 %v3401
  %v3425 = vunpack.c.h.b16 %v3401
  %v3426 = vpack.c.b16 %v3410, %v3410
  %v3427 = vpack.c.b16 %v3411, %v3411
  %v3428 = vpack.c.b16 %v3412, %v3412
  %v3429 = vpack.c.b16 %v3413, %v3413
  %v3430 = vpack.c.b16 %v3414, %v3414
  %v3431 = vpack.c.b16 %v3415, %v3415
  %v3432 = vpack.c.b16 %v3416, %v3416
  %v3433 = vpack.c.b16 %v3417, %v3417
  %v3434 = vpack.c.b16 %v3418, %v3418
  %v3435 = vpack.c.b16 %v3419, %v3419
  %v3436 = vpack.c.b16 %v3420, %v3420
  %v3437 = vpack.c.b16 %v3421, %v3421
  %v3438 = vpack.c.b16 %v3422, %v3422
  %v3439 = vpack.c.b16 %v3423, %v3423
  %v3440 = vpack.c.b16 %v3424, %v3424
  %v3441 = vpack.c.b16 %v3425, %v3425
  %3458 = vst [vmem:[%s8 + $0xc] sm:$0xf] %v3426
  %3459 = vst [vmem:[%s8 + $0x20] sm:$0xf] %v3427
  %3460 = vst [vmem:[%s8 + $0x34] sm:$0xf] %v3428
  %3461 = vst [vmem:[%s8 + $0x48] sm:$0xf] %v3429
  %3462 = vst [vmem:[%s8 + $0x5c] sm:$0xf] %v3430
  %3463 = vst [vmem:[%s8 + $0x70] sm:$0xf] %v3431
  %3464 = vst [vmem:[%s8 + $0x84] sm:$0xf] %v3432
  %3465 = vst [vmem:[%s8 + $0x98] sm:$0xf] %v3433
  %3466 = vst [vmem:[%s8 + $0xac] sm:$0xf] %v3434
  %3467 = vst [vmem:[%s8 + $0xc0] sm:$0xf] %v3435
  %3468 = vst [vmem:[%s8 + $0xd4] sm:$0xf] %v3436
  %3469 = vst [vmem:[%s8 + $0xe8] sm:$0xf] %v3437
  %3470 = vst [vmem:[%s8 + $0xfc] sm:$0xf] %v3438
  %3471 = vst [vmem:[%s8 + $0x110] sm:$0xf] %v3439
  %3472 = vst [vmem:[%s8 + $0x124] sm:$0xf] %v3440
  %3473 = vst [vmem:[%s8 + $0x138] sm:$0xf] %v3441
  %v3474 = vrcp.pop %v3299
  %v3475 = vmul.f32 1.0, %v3474
  %v3476 = vrcp.pop %v3301
  %v3477 = vmul.f32 1.0, %v3476
  %v3478 = vrcp.pop %v3303
  %v3479 = vmul.f32 1.0, %v3478
  %v3480 = vrcp.pop %v3305
  %v3481 = vmul.f32 1.0, %v3480
  %v3482 = vrcp.pop %v3307
  %v3483 = vmul.f32 1.0, %v3482
  %v3484 = vrcp.pop %v3309
  %v3485 = vmul.f32 1.0, %v3484
  %v3486 = vrcp.pop %v3311
  %v3487 = vmul.f32 1.0, %v3486
  %v3488 = vrcp.pop %v3313
  %v3489 = vmul.f32 1.0, %v3488
  %v3490 = vrcp.pop %v3315
  %v3491 = vmul.f32 1.0, %v3490
  %v3492 = vrcp.pop %v3317
  %v3493 = vmul.f32 1.0, %v3492
  %v3494 = vrcp.pop %v3319
  %v3495 = vmul.f32 1.0, %v3494
  %v3496 = vrcp.pop %v3321
  %v3497 = vmul.f32 1.0, %v3496
  %v3498 = vrcp.pop %v3323
  %v3499 = vmul.f32 1.0, %v3498
  %v3500 = vrcp.pop %v3325
  %v3501 = vmul.f32 1.0, %v3500
  %v3502 = vrcp.pop %v3327
  %v3503 = vmul.f32 1.0, %v3502
  %v3504 = vrcp.pop %v3329
  %v3505 = vmul.f32 1.0, %v3504
  %v3506 = vmul.f32 %v3267, %v3475
  %v3507 = vmul.f32 %v3269, %v3477
  %v3508 = vmul.f32 %v3271, %v3479
  %v3509 = vmul.f32 %v3273, %v3481
  %v3510 = vmul.f32 %v3275, %v3483
  %v3511 = vmul.f32 %v3277, %v3485
  %v3512 = vmul.f32 %v3279, %v3487
  %v3513 = vmul.f32 %v3281, %v3489
  %v3514 = vmul.f32 %v3283, %v3491
  %v3515 = vmul.f32 %v3285, %v3493
  %v3516 = vmul.f32 %v3287, %v3495
  %v3517 = vmul.f32 %v3289, %v3497
  %v3518 = vmul.f32 %v3291, %v3499
  %v3519 = vmul.f32 %v3293, %v3501
  %v3520 = vmul.f32 %v3295, %v3503
  %v3521 = vmul.f32 %v3297, %v3505
  %v3522 = vld [vmem:[%s5 + $0x3] sm:$0x1]
  %v3524 = vlaneseq
  %v3525 = vshrl.u32 %v3524, 7
  %v3526 = vsub.s32 0, %v3525
  %v3527 = vrot.slane %v3522, %v3526
  %v3529 = vmul.f32 %v3506, %v3527
  %v3530 = vmul.f32 %v3507, %v3527
  %v3531 = vmul.f32 %v3508, %v3527
  %v3532 = vmul.f32 %v3509, %v3527
  %v3533 = vmul.f32 %v3510, %v3527
  %v3534 = vmul.f32 %v3511, %v3527
  %v3535 = vmul.f32 %v3512, %v3527
  %v3536 = vmul.f32 %v3513, %v3527
  %v3537 = vmul.f32 %v3514, %v3527
  %v3538 = vmul.f32 %v3515, %v3527
  %v3539 = vmul.f32 %v3516, %v3527
  %v3540 = vmul.f32 %v3517, %v3527
  %v3541 = vmul.f32 %v3518, %v3527
  %v3542 = vmul.f32 %v3519, %v3527
  %v3543 = vmul.f32 %v3520, %v3527
  %v3544 = vmul.f32 %v3521, %v3527
  %v3545 = vadd.f32 %v3034, %v3529
  %v3546 = vadd.f32 %v3035, %v3530
  %v3547 = vadd.f32 %v3036, %v3531
  %v3548 = vadd.f32 %v3037, %v3532
  %v3549 = vadd.f32 %v3038, %v3533
  %v3550 = vadd.f32 %v3039, %v3534
  %v3551 = vadd.f32 %v3040, %v3535
  %v3552 = vadd.f32 %v3041, %v3536
  %v3553 = vadd.f32 %v3042, %v3537
  %v3554 = vadd.f32 %v3043, %v3538
  %v3555 = vadd.f32 %v3044, %v3539
  %v3556 = vadd.f32 %v3045, %v3540
  %v3557 = vadd.f32 %v3046, %v3541
  %v3558 = vadd.f32 %v3047, %v3542
  %v3559 = vadd.f32 %v3048, %v3543
  %v3560 = vadd.f32 %v3049, %v3544
  %v3561 = vld [vmem:[%s3 + $0x10] sm:$0xf]
  %v3562 = vld [vmem:[%s3 + $0x24] sm:$0xf]
  %v3563 = vld [vmem:[%s3 + $0x38] sm:$0xf]
  %v3564 = vld [vmem:[%s3 + $0x4c] sm:$0xf]
  %v3565 = vld [vmem:[%s3 + $0x60] sm:$0xf]
  %v3566 = vld [vmem:[%s3 + $0x74] sm:$0xf]
  %v3567 = vld [vmem:[%s3 + $0x88] sm:$0xf]
  %v3568 = vld [vmem:[%s3 + $0x9c] sm:$0xf]
  %v3569 = vld [vmem:[%s3 + $0xb0] sm:$0xf]
  %v3570 = vld [vmem:[%s3 + $0xc4] sm:$0xf]
  %v3571 = vld [vmem:[%s3 + $0xd8] sm:$0xf]
  %v3572 = vld [vmem:[%s3 + $0xec] sm:$0xf]
  %v3573 = vld [vmem:[%s3 + $0x100] sm:$0xf]
  %v3574 = vld [vmem:[%s3 + $0x114] sm:$0xf]
  %v3575 = vld [vmem:[%s3 + $0x128] sm:$0xf]
  %v3576 = vld [vmem:[%s3 + $0x13c] sm:$0xf]
  %v3577 = vld [vmem:[%s4 + $0x4] sm:$0x1]
  %v3579 = vlaneseq
  %v3580 = vshrl.u32 %v3579, 7
  %v3581 = vsub.s32 0, %v3580
  %v3582 = vrot.slane %v3577, %v3581
  %v3600 = vunpack.c.l.b16 %v3561
  %v3601 = vunpack.c.l.b16 %v3562
  %v3602 = vunpack.c.l.b16 %v3563
  %v3603 = vunpack.c.l.b16 %v3564
  %v3604 = vunpack.c.l.b16 %v3565
  %v3605 = vunpack.c.l.b16 %v3566
  %v3606 = vunpack.c.l.b16 %v3567
  %v3607 = vunpack.c.l.b16 %v3568
  %v3608 = vunpack.c.l.b16 %v3569
  %v3609 = vunpack.c.l.b16 %v3570
  %v3610 = vunpack.c.l.b16 %v3571
  %v3611 = vunpack.c.l.b16 %v3572
  %v3612 = vunpack.c.l.b16 %v3573
  %v3613 = vunpack.c.l.b16 %v3574
  %v3614 = vunpack.c.l.b16 %v3575
  %v3615 = vunpack.c.l.b16 %v3576
  %v3616 = vpack.c.b16 %v3601, %v3600
  %v3617 = vpack.c.b16 %v3603, %v3602
  %v3618 = vpack.c.b16 %v3605, %v3604
  %v3619 = vpack.c.b16 %v3607, %v3606
  %v3620 = vpack.c.b16 %v3609, %v3608
  %v3621 = vpack.c.b16 %v3611, %v3610
  %v3622 = vpack.c.b16 %v3613, %v3612
  %v3623 = vpack.c.b16 %v3615, %v3614
  %3632 = vmatprep.subr.bf16.mxu0 0
  %3633 = vmatpush1.bf16.msra.mxu0 %v3616
  %3634 = vmatprep.subr.bf16.mxu0 0
  %3635 = vmatpush1.bf16.msra.mxu0 %v3617
  %3636 = vmatprep.subr.bf16.mxu0 0
  %3637 = vmatpush1.bf16.msra.mxu0 %v3618
  %3638 = vmatprep.subr.bf16.mxu0 0
  %3639 = vmatpush1.bf16.msra.mxu0 %v3619
  %3640 = vmatprep.subr.bf16.mxu0 0
  %3641 = vmatpush1.bf16.msra.mxu0 %v3620
  %3642 = vmatprep.subr.bf16.mxu0 0
  %3643 = vmatpush1.bf16.msra.mxu0 %v3621
  %3644 = vmatprep.subr.bf16.mxu0 0
  %3645 = vmatpush1.bf16.msra.mxu0 %v3622
  %3646 = vmatprep.subr.bf16.mxu0 0
  %3647 = vmatpush1.bf16.msra.mxu0 %v3623
  %3648 = vmatprep.subr.bf16.mxu0 0
  %3649 = vmatpush1.bf16.msra.mxu0 0
  %3650 = vmatprep.subr.bf16.mxu0 0
  %3651 = vmatpush1.bf16.msra.mxu0 0
  %3652 = vmatprep.subr.bf16.mxu0 0
  %3653 = vmatpush1.bf16.msra.mxu0 0
  %3654 = vmatprep.subr.bf16.mxu0 0
  %3655 = vmatpush1.bf16.msra.mxu0 0
  %3656 = vmatprep.subr.bf16.mxu0 0
  %3657 = vmatpush1.bf16.msra.mxu0 0
  %3658 = vmatprep.subr.bf16.mxu0 0
  %3659 = vmatpush1.bf16.msra.mxu0 0
  %3660 = vmatprep.subr.bf16.mxu0 0
  %3661 = vmatpush1.bf16.msra.mxu0 0
  %3662 = vmatprep.subr.bf16.mxu0 0
  %3663 = vmatpush1.bf16.msra.mxu0 0
  %3664 = vmatprep.mubr.bf16.mxu0 0
  %3665 = vmatmul.mubr.bf16.gmra.mrb[0].mxu0 %v1335
  %v3666 = vpop.f32.mrb[0].mxu0
  %v3667 = vadd.f32 %v3582, %v3666
  %v3668 = vpop.f32.mrb[0].mxu0
  %v3669 = vpop.f32.mrb[0].mxu0
  %v3670 = vadd.f32 %v3582, %v3669
  %v3671 = vpop.f32.mrb[0].mxu0
  %3672 = vmatprep.mubr.bf16.mxu0 0
  %3673 = vmatmul.mubr.bf16.gmra.mrb[0].mxu0 %v1336
  %v3674 = vpop.f32.mrb[0].mxu0
  %v3675 = vadd.f32 %v3582, %v3674
  %v3676 = vpop.f32.mrb[0].mxu0
  %v3677 = vpop.f32.mrb[0].mxu0
  %v3678 = vadd.f32 %v3582, %v3677
  %v3679 = vpop.f32.mrb[0].mxu0
  %3680 = vmatprep.mubr.bf16.mxu0 0
  %3681 = vmatmul.mubr.bf16.gmra.mrb[0].mxu0 %v1337
  %v3682 = vpop.f32.mrb[0].mxu0
  %v3683 = vadd.f32 %v3582, %v3682
  %v3684 = vpop.f32.mrb[0].mxu0
  %v3685 = vpop.f32.mrb[0].mxu0
  %v3686 = vadd.f32 %v3582, %v3685
  %v3687 = vpop.f32.mrb[0].mxu0
  %3688 = vmatprep.mubr.bf16.mxu0 0
  %3689 = vmatmul.mubr.bf16.gmra.mrb[0].mxu0 %v1338
  %v3690 = vpop.f32.mrb[0].mxu0
  %v3691 = vadd.f32 %v3582, %v3690
  %v3692 = vpop.f32.mrb[0].mxu0
  %v3693 = vpop.f32.mrb[0].mxu0
  %v3694 = vadd.f32 %v3582, %v3693
  %v3695 = vpop.f32.mrb[0].mxu0
  %3696 = vmatprep.mubr.bf16.mxu0 0
  %3697 = vmatmul.mubr.bf16.gmra.mrb[0].mxu0 %v1339
  %v3698 = vpop.f32.mrb[0].mxu0
  %v3699 = vadd.f32 %v3582, %v3698
  %v3700 = vpop.f32.mrb[0].mxu0
  %v3701 = vpop.f32.mrb[0].mxu0
  %v3702 = vadd.f32 %v3582, %v3701
  %v3703 = vpop.f32.mrb[0].mxu0
  %3704 = vmatprep.mubr.bf16.mxu0 0
  %3705 = vmatmul.mubr.bf16.gmra.mrb[0].mxu0 %v1340
  %v3706 = vpop.f32.mrb[0].mxu0
  %v3707 = vadd.f32 %v3582, %v3706
  %v3708 = vpop.f32.mrb[0].mxu0
  %v3709 = vpop.f32.mrb[0].mxu0
  %v3710 = vadd.f32 %v3582, %v3709
  %v3711 = vpop.f32.mrb[0].mxu0
  %3712 = vmatprep.mubr.bf16.mxu0 0
  %3713 = vmatmul.mubr.bf16.gmra.mrb[0].mxu0 %v1341
  %v3714 = vpop.f32.mrb[0].mxu0
  %v3715 = vadd.f32 %v3582, %v3714
  %v3716 = vpop.f32.mrb[0].mxu0
  %v3717 = vpop.f32.mrb[0].mxu0
  %v3718 = vadd.f32 %v3582, %v3717
  %v3719 = vpop.f32.mrb[0].mxu0
  %3720 = vmatprep.mubr.bf16.mxu0 0
  %3721 = vmatmul.mubr.bf16.gmra.mrb[0].mxu0 %v1342
  %v3722 = vpop.f32.mrb[0].mxu0
  %v3723 = vadd.f32 %v3582, %v3722
  %v3724 = vpop.f32.mrb[0].mxu0
  %v3725 = vpop.f32.mrb[0].mxu0
  %v3726 = vadd.f32 %v3582, %v3725
  %v3727 = vpop.f32.mrb[0].mxu0
  %3728 = vdwg.mxu0
  %3729 = vmax.xlane.f32.xlu0 %v3667
  %v3730 = vpop.xlane.xlu0 %3729
  %3731 = vmax.xlane.f32.xlu0 %v3670
  %v3732 = vpop.xlane.xlu0 %3731
  %3733 = vmax.xlane.f32.xlu0 %v3675
  %v3734 = vpop.xlane.xlu0 %3733
  %3735 = vmax.xlane.f32.xlu0 %v3678
  %v3736 = vpop.xlane.xlu0 %3735
  %3737 = vmax.xlane.f32.xlu0 %v3683
  %v3738 = vpop.xlane.xlu0 %3737
  %3739 = vmax.xlane.f32.xlu0 %v3686
  %v3740 = vpop.xlane.xlu0 %3739
  %3741 = vmax.xlane.f32.xlu0 %v3691
  %v3742 = vpop.xlane.xlu0 %3741
  %3743 = vmax.xlane.f32.xlu0 %v3694
  %v3744 = vpop.xlane.xlu0 %3743
  %3745 = vmax.xlane.f32.xlu0 %v3699
  %v3746 = vpop.xlane.xlu0 %3745
  %3747 = vmax.xlane.f32.xlu0 %v3702
  %v3748 = vpop.xlane.xlu0 %3747
  %3749 = vmax.xlane.f32.xlu0 %v3707
  %v3750 = vpop.xlane.xlu0 %3749
  %3751 = vmax.xlane.f32.xlu0 %v3710
  %v3752 = vpop.xlane.xlu0 %3751
  %3753 = vmax.xlane.f32.xlu0 %v3715
  %v3754 = vpop.xlane.xlu0 %3753
  %3755 = vmax.xlane.f32.xlu0 %v3718
  %v3756 = vpop.xlane.xlu0 %3755
  %3757 = vmax.xlane.f32.xlu0 %v3723
  %v3758 = vpop.xlane.xlu0 %3757
  %3759 = vmax.xlane.f32.xlu0 %v3726
  %v3760 = vpop.xlane.xlu0 %3759
  %v3761 = vsub.f32 %v3667, %v3730
  %v3762 = vsub.f32 %v3670, %v3732
  %v3763 = vsub.f32 %v3675, %v3734
  %v3764 = vsub.f32 %v3678, %v3736
  %v3765 = vsub.f32 %v3683, %v3738
  %v3766 = vsub.f32 %v3686, %v3740
  %v3767 = vsub.f32 %v3691, %v3742
  %v3768 = vsub.f32 %v3694, %v3744
  %v3769 = vsub.f32 %v3699, %v3746
  %v3770 = vsub.f32 %v3702, %v3748
  %v3771 = vsub.f32 %v3707, %v3750
  %v3772 = vsub.f32 %v3710, %v3752
  %v3773 = vsub.f32 %v3715, %v3754
  %v3774 = vsub.f32 %v3718, %v3756
  %v3775 = vsub.f32 %v3723, %v3758
  %v3776 = vsub.f32 %v3726, %v3760
  %v3777 = vmul.f32 %v3761, 1.442695
  %v3778 = vpow.pop %v3777
  %v3779 = vmul.f32 %v3762, 1.442695
  %v3780 = vpow.pop %v3779
  %v3781 = vmul.f32 %v3763, 1.442695
  %v3782 = vpow.pop %v3781
  %v3783 = vmul.f32 %v3764, 1.442695
  %v3784 = vpow.pop %v3783
  %v3785 = vmul.f32 %v3765, 1.442695
  %v3786 = vpow.pop %v3785
  %v3787 = vmul.f32 %v3766, 1.442695
  %v3788 = vpow.pop %v3787
  %v3789 = vmul.f32 %v3767, 1.442695
  %v3790 = vpow.pop %v3789
  %v3791 = vmul.f32 %v3768, 1.442695
  %v3792 = vpow.pop %v3791
  %v3793 = vmul.f32 %v3769, 1.442695
  %v3794 = vpow.pop %v3793
  %v3795 = vmul.f32 %v3770, 1.442695
  %v3796 = vpow.pop %v3795
  %v3797 = vmul.f32 %v3771, 1.442695
  %v3798 = vpow.pop %v3797
  %v3799 = vmul.f32 %v3772, 1.442695
  %v3800 = vpow.pop %v3799
  %v3801 = vmul.f32 %v3773, 1.442695
  %v3802 = vpow.pop %v3801
  %v3803 = vmul.f32 %v3774, 1.442695
  %v3804 = vpow.pop %v3803
  %v3805 = vmul.f32 %v3775, 1.442695
  %v3806 = vpow.pop %v3805
  %v3807 = vmul.f32 %v3776, 1.442695
  %v3808 = vpow.pop %v3807
  %3809 = vadd.xlane.f32.xlu0 %v3778
  %v3810 = vpop.xlane.xlu0 %3809
  %3811 = vadd.xlane.f32.xlu0 %v3780
  %v3812 = vpop.xlane.xlu0 %3811
  %3813 = vadd.xlane.f32.xlu0 %v3782
  %v3814 = vpop.xlane.xlu0 %3813
  %3815 = vadd.xlane.f32.xlu0 %v3784
  %v3816 = vpop.xlane.xlu0 %3815
  %3817 = vadd.xlane.f32.xlu0 %v3786
  %v3818 = vpop.xlane.xlu0 %3817
  %3819 = vadd.xlane.f32.xlu0 %v3788
  %v3820 = vpop.xlane.xlu0 %3819
  %3821 = vadd.xlane.f32.xlu0 %v3790
  %v3822 = vpop.xlane.xlu0 %3821
  %3823 = vadd.xlane.f32.xlu0 %v3792
  %v3824 = vpop.xlane.xlu0 %3823
  %3825 = vadd.xlane.f32.xlu0 %v3794
  %v3826 = vpop.xlane.xlu0 %3825
  %3827 = vadd.xlane.f32.xlu0 %v3796
  %v3828 = vpop.xlane.xlu0 %3827
  %3829 = vadd.xlane.f32.xlu0 %v3798
  %v3830 = vpop.xlane.xlu0 %3829
  %3831 = vadd.xlane.f32.xlu0 %v3800
  %v3832 = vpop.xlane.xlu0 %3831
  %3833 = vadd.xlane.f32.xlu0 %v3802
  %v3834 = vpop.xlane.xlu0 %3833
  %3835 = vadd.xlane.f32.xlu0 %v3804
  %v3836 = vpop.xlane.xlu0 %3835
  %3837 = vadd.xlane.f32.xlu0 %v3806
  %v3838 = vpop.xlane.xlu0 %3837
  %3839 = vadd.xlane.f32.xlu0 %v3808
  %v3840 = vpop.xlane.xlu0 %3839
  %v3841 = vlog2.pop %v3810
  %v3842 = vmul.f32 %v3841, 0.6931472
  %v3843 = vlog2.pop %v3812
  %v3844 = vmul.f32 %v3843, 0.6931472
  %v3845 = vlog2.pop %v3814
  %v3846 = vmul.f32 %v3845, 0.6931472
  %v3847 = vlog2.pop %v3816
  %v3848 = vmul.f32 %v3847, 0.6931472
  %v3849 = vlog2.pop %v3818
  %v3850 = vmul.f32 %v3849, 0.6931472
  %v3851 = vlog2.pop %v3820
  %v3852 = vmul.f32 %v3851, 0.6931472
  %v3853 = vlog2.pop %v3822
  %v3854 = vmul.f32 %v3853, 0.6931472
  %v3855 = vlog2.pop %v3824
  %v3856 = vmul.f32 %v3855, 0.6931472
  %v3857 = vlog2.pop %v3826
  %v3858 = vmul.f32 %v3857, 0.6931472
  %v3859 = vlog2.pop %v3828
  %v3860 = vmul.f32 %v3859, 0.6931472
  %v3861 = vlog2.pop %v3830
  %v3862 = vmul.f32 %v3861, 0.6931472
  %v3863 = vlog2.pop %v3832
  %v3864 = vmul.f32 %v3863, 0.6931472
  %v3865 = vlog2.pop %v3834
  %v3866 = vmul.f32 %v3865, 0.6931472
  %v3867 = vlog2.pop %v3836
  %v3868 = vmul.f32 %v3867, 0.6931472
  %v3869 = vlog2.pop %v3838
  %v3870 = vmul.f32 %v3869, 0.6931472
  %v3871 = vlog2.pop %v3840
  %v3872 = vmul.f32 %v3871, 0.6931472
  %v3873 = vadd.f32 %v3730, %v3842
  %v3874 = vadd.f32 %v3732, %v3844
  %v3875 = vadd.f32 %v3734, %v3846
  %v3876 = vadd.f32 %v3736, %v3848
  %v3877 = vadd.f32 %v3738, %v3850
  %v3878 = vadd.f32 %v3740, %v3852
  %v3879 = vadd.f32 %v3742, %v3854
  %v3880 = vadd.f32 %v3744, %v3856
  %v3881 = vadd.f32 %v3746, %v3858
  %v3882 = vadd.f32 %v3748, %v3860
  %v3883 = vadd.f32 %v3750, %v3862
  %v3884 = vadd.f32 %v3752, %v3864
  %v3885 = vadd.f32 %v3754, %v3866
  %v3886 = vadd.f32 %v3756, %v3868
  %v3887 = vadd.f32 %v3758, %v3870
  %v3888 = vadd.f32 %v3760, %v3872
  %v3889 = vsub.f32 %v3667, %v3873
  %v3890 = vsub.f32 %v3670, %v3874
  %v3891 = vsub.f32 %v3675, %v3875
  %v3892 = vsub.f32 %v3678, %v3876
  %v3893 = vsub.f32 %v3683, %v3877
  %v3894 = vsub.f32 %v3686, %v3878
  %v3895 = vsub.f32 %v3691, %v3879
  %v3896 = vsub.f32 %v3694, %v3880
  %v3897 = vsub.f32 %v3699, %v3881
  %v3898 = vsub.f32 %v3702, %v3882
  %v3899 = vsub.f32 %v3707, %v3883
  %v3900 = vsub.f32 %v3710, %v3884
  %v3901 = vsub.f32 %v3715, %v3885
  %v3902 = vsub.f32 %v3718, %v3886
  %v3903 = vsub.f32 %v3723, %v3887
  %v3904 = vsub.f32 %v3726, %v3888
  %v3905 = vpack.c.bf16 %v3890, %v3889
  %v3906 = vpack.c.bf16 %v3892, %v3891
  %v3907 = vpack.c.bf16 %v3894, %v3893
  %v3908 = vpack.c.bf16 %v3896, %v3895
  %v3909 = vpack.c.bf16 %v3898, %v3897
  %v3910 = vpack.c.bf16 %v3900, %v3899
  %v3911 = vpack.c.bf16 %v3902, %v3901
  %v3912 = vpack.c.bf16 %v3904, %v3903
  %v3921 = vunpack.c.l.b16 %v3905
  %v3922 = vunpack.c.h.b16 %v3905
  %v3923 = vunpack.c.l.b16 %v3906
  %v3924 = vunpack.c.h.b16 %v3906
  %v3925 = vunpack.c.l.b16 %v3907
  %v3926 = vunpack.c.h.b16 %v3907
  %v3927 = vunpack.c.l.b16 %v3908
  %v3928 = vunpack.c.h.b16 %v3908
  %v3929 = vunpack.c.l.b16 %v3909
  %v3930 = vunpack.c.h.b16 %v3909
  %v3931 = vunpack.c.l.b16 %v3910
  %v3932 = vunpack.c.h.b16 %v3910
  %v3933 = vunpack.c.l.b16 %v3911
  %v3934 = vunpack.c.h.b16 %v3911
  %v3935 = vunpack.c.l.b16 %v3912
  %v3936 = vunpack.c.h.b16 %v3912
  %v3937 = vpack.c.b16 %v3921, %v3921
  %v3938 = vpack.c.b16 %v3922, %v3922
  %v3939 = vpack.c.b16 %v3923, %v3923
  %v3940 = vpack.c.b16 %v3924, %v3924
  %v3941 = vpack.c.b16 %v3925, %v3925
  %v3942 = vpack.c.b16 %v3926, %v3926
  %v3943 = vpack.c.b16 %v3927, %v3927
  %v3944 = vpack.c.b16 %v3928, %v3928
  %v3945 = vpack.c.b16 %v3929, %v3929
  %v3946 = vpack.c.b16 %v3930, %v3930
  %v3947 = vpack.c.b16 %v3931, %v3931
  %v3948 = vpack.c.b16 %v3932, %v3932
  %v3949 = vpack.c.b16 %v3933, %v3933
  %v3950 = vpack.c.b16 %v3934, %v3934
  %v3951 = vpack.c.b16 %v3935, %v3935
  %v3952 = vpack.c.b16 %v3936, %v3936
  %3969 = vst [vmem:[%s8 + $0x10] sm:$0xf] %v3937
  %3970 = vst [vmem:[%s8 + $0x24] sm:$0xf] %v3938
  %3971 = vst [vmem:[%s8 + $0x38] sm:$0xf] %v3939
  %3972 = vst [vmem:[%s8 + $0x4c] sm:$0xf] %v3940
  %3973 = vst [vmem:[%s8 + $0x60] sm:$0xf] %v3941
  %3974 = vst [vmem:[%s8 + $0x74] sm:$0xf] %v3942
  %3975 = vst [vmem:[%s8 + $0x88] sm:$0xf] %v3943
  %3976 = vst [vmem:[%s8 + $0x9c] sm:$0xf] %v3944
  %3977 = vst [vmem:[%s8 + $0xb0] sm:$0xf] %v3945
  %3978 = vst [vmem:[%s8 + $0xc4] sm:$0xf] %v3946
  %3979 = vst [vmem:[%s8 + $0xd8] sm:$0xf] %v3947
  %3980 = vst [vmem:[%s8 + $0xec] sm:$0xf] %v3948
  %3981 = vst [vmem:[%s8 + $0x100] sm:$0xf] %v3949
  %3982 = vst [vmem:[%s8 + $0x114] sm:$0xf] %v3950
  %3983 = vst [vmem:[%s8 + $0x128] sm:$0xf] %v3951
  %3984 = vst [vmem:[%s8 + $0x13c] sm:$0xf] %v3952
  %v3985 = vrcp.pop %v3810
  %v3986 = vmul.f32 1.0, %v3985
  %v3987 = vrcp.pop %v3812
  %v3988 = vmul.f32 1.0, %v3987
  %v3989 = vrcp.pop %v3814
  %v3990 = vmul.f32 1.0, %v3989
  %v3991 = vrcp.pop %v3816
  %v3992 = vmul.f32 1.0, %v3991
  %v3993 = vrcp.pop %v3818
  %v3994 = vmul.f32 1.0, %v3993
  %v3995 = vrcp.pop %v3820
  %v3996 = vmul.f32 1.0, %v3995
  %v3997 = vrcp.pop %v3822
  %v3998 = vmul.f32 1.0, %v3997
  %v3999 = vrcp.pop %v3824
  %v4000 = vmul.f32 1.0, %v3999
  %v4001 = vrcp.pop %v3826
  %v4002 = vmul.f32 1.0, %v4001
  %v4003 = vrcp.pop %v3828
  %v4004 = vmul.f32 1.0, %v4003
  %v4005 = vrcp.pop %v3830
  %v4006 = vmul.f32 1.0, %v4005
  %v4007 = vrcp.pop %v3832
  %v4008 = vmul.f32 1.0, %v4007
  %v4009 = vrcp.pop %v3834
  %v4010 = vmul.f32 1.0, %v4009
  %v4011 = vrcp.pop %v3836
  %v4012 = vmul.f32 1.0, %v4011
  %v4013 = vrcp.pop %v3838
  %v4014 = vmul.f32 1.0, %v4013
  %v4015 = vrcp.pop %v3840
  %v4016 = vmul.f32 1.0, %v4015
  %v4017 = vmul.f32 %v3778, %v3986
  %v4018 = vmul.f32 %v3780, %v3988
  %v4019 = vmul.f32 %v3782, %v3990
  %v4020 = vmul.f32 %v3784, %v3992
  %v4021 = vmul.f32 %v3786, %v3994
  %v4022 = vmul.f32 %v3788, %v3996
  %v4023 = vmul.f32 %v3790, %v3998
  %v4024 = vmul.f32 %v3792, %v4000
  %v4025 = vmul.f32 %v3794, %v4002
  %v4026 = vmul.f32 %v3796, %v4004
  %v4027 = vmul.f32 %v3798, %v4006
  %v4028 = vmul.f32 %v3800, %v4008
  %v4029 = vmul.f32 %v3802, %v4010
  %v4030 = vmul.f32 %v3804, %v4012
  %v4031 = vmul.f32 %v3806, %v4014
  %v4032 = vmul.f32 %v3808, %v4016
  %v4033 = vld [vmem:[%s5 + $0x4] sm:$0x1]
  %v4035 = vlaneseq
  %v4036 = vshrl.u32 %v4035, 7
  %v4037 = vsub.s32 0, %v4036
  %v4038 = vrot.slane %v4033, %v4037
  %v4040 = vmul.f32 %v4017, %v4038
  %v4041 = vmul.f32 %v4018, %v4038
  %v4042 = vmul.f32 %v4019, %v4038
  %v4043 = vmul.f32 %v4020, %v4038
  %v4044 = vmul.f32 %v4021, %v4038
  %v4045 = vmul.f32 %v4022, %v4038
  %v4046 = vmul.f32 %v4023, %v4038
  %v4047 = vmul.f32 %v4024, %v4038
  %v4048 = vmul.f32 %v4025, %v4038
  %v4049 = vmul.f32 %v4026, %v4038
  %v4050 = vmul.f32 %v4027, %v4038
  %v4051 = vmul.f32 %v4028, %v4038
  %v4052 = vmul.f32 %v4029, %v4038
  %v4053 = vmul.f32 %v4030, %v4038
  %v4054 = vmul.f32 %v4031, %v4038
  %v4055 = vmul.f32 %v4032, %v4038
  %v4056 = vadd.f32 %v3545, %v4040
  %v4057 = vadd.f32 %v3546, %v4041
  %v4058 = vadd.f32 %v3547, %v4042
  %v4059 = vadd.f32 %v3548, %v4043
  %v4060 = vadd.f32 %v3549, %v4044
  %v4061 = vadd.f32 %v3550, %v4045
  %v4062 = vadd.f32 %v3551, %v4046
  %v4063 = vadd.f32 %v3552, %v4047
  %v4064 = vadd.f32 %v3553, %v4048
  %v4065 = vadd.f32 %v3554, %v4049
  %v4066 = vadd.f32 %v3555, %v4050
  %v4067 = vadd.f32 %v3556, %v4051
  %v4068 = vadd.f32 %v3557, %v4052
  %v4069 = vadd.f32 %v3558, %v4053
  %v4070 = vadd.f32 %v3559, %v4054
  %v4071 = vadd.f32 %v3560, %v4055
  %v4072 = vlog2.pop %v4056
  %v4073 = vmul.f32 %v4072, 0.6931472
  %v4074 = vlog2.pop %v4057
  %v4075 = vmul.f32 %v4074, 0.6931472
  %v4076 = vlog2.pop %v4058
  %v4077 = vmul.f32 %v4076, 0.6931472
  %v4078 = vlog2.pop %v4059
  %v4079 = vmul.f32 %v4078, 0.6931472
  %v4080 = vlog2.pop %v4060
  %v4081 = vmul.f32 %v4080, 0.6931472
  %v4082 = vlog2.pop %v4061
  %v4083 = vmul.f32 %v4082, 0.6931472
  %v4084 = vlog2.pop %v4062
  %v4085 = vmul.f32 %v4084, 0.6931472
  %v4086 = vlog2.pop %v4063
  %v4087 = vmul.f32 %v4086, 0.6931472
  %v4088 = vlog2.pop %v4064
  %v4089 = vmul.f32 %v4088, 0.6931472
  %v4090 = vlog2.pop %v4065
  %v4091 = vmul.f32 %v4090, 0.6931472
  %v4092 = vlog2.pop %v4066
  %v4093 = vmul.f32 %v4092, 0.6931472
  %v4094 = vlog2.pop %v4067
  %v4095 = vmul.f32 %v4094, 0.6931472
  %v4096 = vlog2.pop %v4068
  %v4097 = vmul.f32 %v4096, 0.6931472
  %v4098 = vlog2.pop %v4069
  %v4099 = vmul.f32 %v4098, 0.6931472
  %v4100 = vlog2.pop %v4070
  %v4101 = vmul.f32 %v4100, 0.6931472
  %v4102 = vlog2.pop %v4071
  %v4103 = vmul.f32 %v4102, 0.6931472
  %4104 = vst [vmem:[%s6] sm:$0xff] %v4073
  %4105 = vst [vmem:[%s6 + $0x8] sm:$0xff] %v4075
  %4106 = vst [vmem:[%s6 + $0x10] sm:$0xff] %v4077
  %4107 = vst [vmem:[%s6 + $0x18] sm:$0xff] %v4079
  %4108 = vst [vmem:[%s6 + $0x20] sm:$0xff] %v4081
  %4109 = vst [vmem:[%s6 + $0x28] sm:$0xff] %v4083
  %4110 = vst [vmem:[%s6 + $0x30] sm:$0xff] %v4085
  %4111 = vst [vmem:[%s6 + $0x38] sm:$0xff] %v4087
  %4112 = vst [vmem:[%s6 + $0x40] sm:$0xff] %v4089
  %4113 = vst [vmem:[%s6 + $0x48] sm:$0xff] %v4091
  %4114 = vst [vmem:[%s6 + $0x50] sm:$0xff] %v4093
  %4115 = vst [vmem:[%s6 + $0x58] sm:$0xff] %v4095
  %4116 = vst [vmem:[%s6 + $0x60] sm:$0xff] %v4097
  %4117 = vst [vmem:[%s6 + $0x68] sm:$0xff] %v4099
  %4118 = vst [vmem:[%s6 + $0x70] sm:$0xff] %v4101
  %4119 = vst [vmem:[%s6 + $0x78] sm:$0xff] %v4103
  // Predicated region
  $region26: #{_alrao_forward_impl.1} parent=0 // pred_check
    _
  $region27: #{_alrao_forward_impl.1} parent=0 // pred_check_branch
    %4121 = sbr.rel (0) target = $region29
  $region28: #{_alrao_forward_impl.1} parent=0 // pred_region
    _
  $region29: #{_alrao_forward_impl.1} parent=0 // pred_fallthru
    _
  // Predicated region
  $region30: #{_alrao_forward_impl.1} parent=0 // pred_check
    _
  $region31: #{_alrao_forward_impl.1} parent=0 // pred_check_branch
    %4123 = sbr.rel (0) target = $region33
  $region32: #{_alrao_forward_impl.1} parent=0 // pred_region
    _
  $region33: #{_alrao_forward_impl.1} parent=0 // pred_fallthru
    _
  // Predicated region
  $region34: #{_alrao_forward_impl.1} parent=0 // pred_check
    _
  $region35: #{_alrao_forward_impl.1} parent=0 // pred_check_branch
    %4125 = sbr.rel (0) target = $region37
  $region36: #{_alrao_forward_impl.1} parent=0 // pred_region
    _
  $region37: #{_alrao_forward_impl.1} parent=0 // pred_fallthru
    _
  // Predicated region
  $region38: #{_alrao_forward_impl.1} parent=0 // pred_check
    _
  $region39: #{_alrao_forward_impl.1} parent=0 // pred_check_branch
    %4127 = sbr.rel (0) target = $region41
  $region40: #{_alrao_forward_impl.1} parent=0 // pred_region
    _
  $region41: #{_alrao_forward_impl.1} parent=0 // pred_fallthru
    _
  // Predicated region
  $region42: #{_alrao_forward_impl.1} parent=0 // pred_check
    _
  $region43: #{_alrao_forward_impl.1} parent=0 // pred_check_branch
    %4129 = sbr.rel (0) target = $region45
  $region44: #{_alrao_forward_impl.1} parent=0 // pred_region
    _
  $region45: #{_alrao_forward_impl.1} parent=0 // pred_fallthru
    _
  // Predicated region
  $region46: #{_alrao_forward_impl.1} parent=0 // pred_check
    _
  $region47: #{_alrao_forward_impl.1} parent=0 // pred_check_branch
    %4131 = sbr.rel (0) target = $region49
  $region48: #{_alrao_forward_impl.1} parent=0 // pred_region
    _
  $region49: #{_alrao_forward_impl.1} parent=0 // pred_fallthru
    _
  // Predicated region
  $region50: #{_alrao_forward_impl.1} parent=0 // pred_check
    _
  $region51: #{_alrao_forward_impl.1} parent=0 // pred_check_branch
    %4133 = sbr.rel (0) target = $region53
  $region52: #{_alrao_forward_impl.1} parent=0 // pred_region
    _
  $region53: #{_alrao_forward_impl.1} parent=0 // pred_fallthru
    _
  // Predicated region
  $region54: #{_alrao_forward_impl.1} parent=0 // pred_check
    _
  $region55: #{_alrao_forward_impl.1} parent=0 // pred_check_branch
    %4135 = sbr.rel (0) target = $region57
  $region56: #{_alrao_forward_impl.1} parent=0 // pred_region
    _
  $region57: #{_alrao_forward_impl.1} parent=0 // pred_fallthru
    _

</llo_original>
